<compile_context>
chip_gen: v7x
topology: tpu7x:2x2x1
jax: 0.10.0
libtpu: 0.0.40
codegen_flags: <defaults>
</compile_context>

<pallas_src>
import functools

import jax
import jax.numpy as jnp
from jax.experimental import pallas as pl
from jax.experimental.pallas import tpu as pltpu


def _round_up(x, m):
    return ((x + m - 1) // m) * m


def _elu_f32(x):
    # ELU(alpha=1): x if x > 0 else exp(x) - 1 (overflow-safe form).
    return jnp.where(x > 0.0, x, jnp.exp(jnp.minimum(x, 0.0)) - 1.0)


# ---------------------------------------------------------------------------
# Pallas kernel: one conv-as-GEMM tile  (bf16 x bf16 -> f32 acc -> bias/ELU)
# ---------------------------------------------------------------------------
def _conv_gemm_kernel(x_ref, w_ref, b_ref, o_ref, *, apply_elu):
    acc = jnp.dot(x_ref[...], w_ref[...], preferred_element_type=jnp.float32)
    acc = acc + b_ref[...]                      # (bm, Np) + (1, Np)
    if apply_elu:
        acc = _elu_f32(acc)
    o_ref[...] = acc.astype(o_ref.dtype)


def conv_gemm(cols, w, b, apply_elu, max_block_m=1024):
    """act(cols @ w + b) for the im2col GEMM of one conv layer.

    cols: (M, K) bf16; w: (Kp, Np) bf16 pre-padded at init; b: (1, Np) f32.
    Only the activation is padded here (one jnp.pad, minimal M padding).
    Returns (M, Np) bf16.
    """
    M, K = cols.shape
    Kp, Np = w.shape
    bm = min(max_block_m, _round_up(M, 16))
    Mp = _round_up(M, bm)
    if (Mp, Kp) != (M, K):
        cols = jnp.pad(cols, ((0, Mp - M), (0, Kp - K)))

    out = pl.pallas_call(
        functools.partial(_conv_gemm_kernel, apply_elu=apply_elu),
        out_shape=jax.ShapeDtypeStruct((Mp, Np), jnp.bfloat16),
        grid=(Mp // bm,),
        in_specs=[
            pl.BlockSpec((bm, Kp), lambda i: (i, 0)),
            pl.BlockSpec((Kp, Np), lambda i: (0, 0)),   # resident across grid
            pl.BlockSpec((1, Np), lambda i: (0, 0)),
        ],
        out_specs=pl.BlockSpec((bm, Np), lambda i: (i, 0)),
        compiler_params=pltpu.CompilerParams(
            dimension_semantics=("parallel",),
            vmem_limit_bytes=32 * 1024 * 1024),
    )(cols, w, b)
    return out[:M]


# ---------------------------------------------------------------------------
# Conv2d (valid padding) via im2col (bf16) + Pallas GEMM
# ---------------------------------------------------------------------------
def _im2col(x_nhwc, kh, kw, stride):
    B, H, W, C = x_nhwc.shape
    Ho = (H - kh) // stride + 1
    Wo = (W - kw) // stride + 1
    patches = []
    for i in range(kh):
        for j in range(kw):
            patches.append(
                x_nhwc[:, i:i + stride * Ho:stride, j:j + stride * Wo:stride, :])
    # (B, Ho, Wo, kh*kw, C): K ordered (i, j, c) to match the weight prep.
    p = jnp.stack(patches, axis=3)
    return p.reshape(B * Ho * Wo, kh * kw * C), Ho, Wo


def conv2d_pallas(x_nhwc, w_pad, b_pad, kh, kw, stride, cout, apply_elu):
    B = x_nhwc.shape[0]
    cols, Ho, Wo = _im2col(x_nhwc, kh, kw, stride)
    out = conv_gemm(cols, w_pad, b_pad, apply_elu)   # (M, Np) bf16
    return out[:, :cout].reshape(B, Ho, Wo, cout)


# ---------------------------------------------------------------------------
# Pallas kernel: fused FC stack  l1 -> ELU -> l2 -> ELU -> l3 -> ELU -> l4
# All FC weights are 128-lane padded at init and stay resident in VMEM.
# ---------------------------------------------------------------------------
def _fc_fused_kernel(x_ref, w1_ref, b1_ref, w2_ref, b2_ref,
                     w3_ref, b3_ref, w4_ref, b4_ref, o_ref):
    def dense(h_bf16, w_ref, b_ref, act):
        acc = jnp.dot(h_bf16, w_ref[...], preferred_element_type=jnp.float32)
        acc = acc + b_ref[...]
        return _elu_f32(acc) if act else acc

    h = dense(x_ref[...], w1_ref, b1_ref, True)
    h = dense(h.astype(jnp.bfloat16), w2_ref, b2_ref, True)
    h = dense(h.astype(jnp.bfloat16), w3_ref, b3_ref, True)
    h = dense(h.astype(jnp.bfloat16), w4_ref, b4_ref, False)
    o_ref[...] = h


def fc_stack_pallas(x_flat_bf16, pp):
    B = x_flat_bf16.shape[0]
    Bp = _round_up(B, 16)
    if Bp != B:
        x_flat_bf16 = jnp.pad(x_flat_bf16, ((0, Bp - B), (0, 0)))
    out = pl.pallas_call(
        _fc_fused_kernel,
        out_shape=jax.ShapeDtypeStruct((Bp, 128), jnp.float32),
        compiler_params=pltpu.CompilerParams(
            vmem_limit_bytes=32 * 1024 * 1024),
    )(x_flat_bf16,
      pp["l1w"], pp["l1b"], pp["l2w"], pp["l2b"],
      pp["l3w"], pp["l3b"], pp["l4w"], pp["l4b"])
    return out[:B, :1]


# ---------------------------------------------------------------------------
# Parameters (deterministic, PyTorch default-style uniform init) and one-time
# kernel-layout preparation (transpose / pad / bf16 cast).
# ---------------------------------------------------------------------------
def init_params(key):
    def conv_p(key, cout, cin, k):
        k1, k2 = jax.random.split(key)
        bound = 1.0 / (cin * k * k) ** 0.5
        w = jax.random.uniform(k1, (cout, cin, k, k), jnp.float32, -bound, bound)
        b = jax.random.uniform(k2, (cout,), jnp.float32, -bound, bound)
        return w, b

    def lin_p(key, out_f, in_f):
        k1, k2 = jax.random.split(key)
        bound = 1.0 / in_f ** 0.5
        w = jax.random.uniform(k1, (out_f, in_f), jnp.float32, -bound, bound)
        b = jax.random.uniform(k2, (out_f,), jnp.float32, -bound, bound)
        return w, b

    keys = jax.random.split(key, 9)
    p = {}
    p["c1w"], p["c1b"] = conv_p(keys[0], 24, 3, 5)
    p["c2w"], p["c2b"] = conv_p(keys[1], 36, 24, 5)
    p["c3w"], p["c3b"] = conv_p(keys[2], 48, 36, 5)
    p["c4w"], p["c4b"] = conv_p(keys[3], 64, 48, 3)
    p["c5w"], p["c5b"] = conv_p(keys[4], 64, 64, 3)
    p["l1w"], p["l1b"] = lin_p(keys[5], 100, 64 * 1 * 18)
    p["l2w"], p["l2b"] = lin_p(keys[6], 50, 100)
    p["l3w"], p["l3b"] = lin_p(keys[7], 10, 50)
    p["l4w"], p["l4b"] = lin_p(keys[8], 1, 10)
    return p


def prepare_params(p, conv_out_hwc=(1, 18, 64)):
    """One-time conversion of PyTorch-layout params into kernel layout."""
    def conv_prep(w, b):
        cout, cin, kh, kw = w.shape
        k = kh * kw * cin
        kp, np_ = _round_up(k, 128), _round_up(cout, 128)
        # (Cout,Cin,kh,kw) -> (kh,kw,Cin,Cout) -> (K,Cout): K ordered (i,j,c).
        wk = jnp.transpose(w, (2, 3, 1, 0)).reshape(k, cout)
        wp = jnp.zeros((kp, np_), jnp.float32).at[:k, :cout].set(wk)
        bp = jnp.zeros((1, np_), jnp.float32).at[0, :cout].set(b)
        return wp.astype(jnp.bfloat16), bp

    def lin_prep(w, b):
        out_f, in_f = w.shape
        kp = _round_up(in_f, 128)
        wp = jnp.zeros((kp, 128), jnp.float32).at[:in_f, :out_f].set(w.T)
        bp = jnp.zeros((1, 128), jnp.float32).at[0, :out_f].set(b)
        return wp.astype(jnp.bfloat16), bp

    H, W, C = conv_out_hwc
    pp = {}
    pp["c1w"], pp["c1b"] = conv_prep(p["c1w"], p["c1b"])
    pp["c2w"], pp["c2b"] = conv_prep(p["c2w"], p["c2b"])
    pp["c3w"], pp["c3b"] = conv_prep(p["c3w"], p["c3b"])
    pp["c4w"], pp["c4b"] = conv_prep(p["c4w"], p["c4b"])
    pp["c5w"], pp["c5b"] = conv_prep(p["c5w"], p["c5b"])

    # PyTorch flattens the conv output in NCHW (c,h,w) order; the conv kernel
    # produces NHWC (h,w,c). Permute l1's input axis once so the forward needs
    # no NHWC->NCHW transpose before the FC stack.
    l1w_nhwc = (p["l1w"].reshape(-1, C, H, W)
                .transpose(0, 2, 3, 1)
                .reshape(-1, H * W * C))
    pp["l1w"], pp["l1b"] = lin_prep(l1w_nhwc, p["l1b"])
    pp["l2w"], pp["l2b"] = lin_prep(p["l2w"], p["l2b"])
    pp["l3w"], pp["l3b"] = lin_prep(p["l3w"], p["l3b"])
    pp["l4w"], pp["l4b"] = lin_prep(p["l4w"], p["l4b"])
    return pp


# ---------------------------------------------------------------------------
# Full forward pass
# ---------------------------------------------------------------------------
def end2end_forward(x_nchw, pp):
    # NCHW -> NHWC, bf16 for the conv stage (f32 accumulation in the kernels).
    x = jnp.transpose(x_nchw, (0, 2, 3, 1)).astype(jnp.bfloat16)

    x = conv2d_pallas(x, pp["c1w"], pp["c1b"], 5, 5, 2, 24, apply_elu=True)
    x = conv2d_pallas(x, pp["c2w"], pp["c2b"], 5, 5, 2, 36, apply_elu=True)
    x = conv2d_pallas(x, pp["c3w"], pp["c3b"], 5, 5, 2, 48, apply_elu=True)
    x = conv2d_pallas(x, pp["c4w"], pp["c4b"], 3, 3, 1, 64, apply_elu=True)
    # NOTE: the PyTorch Sequential has NO ELU after the 5th conv.
    x = conv2d_pallas(x, pp["c5w"], pp["c5b"], 3, 3, 1, 64, apply_elu=False)

    # TODO(synk): nn.Dropout(0.5) is identity at inference; training-mode
    # dropout masking is not implemented.

    # Flatten in NHWC order; l1's weight rows were permuted at init so this is
    # equivalent to PyTorch's output.view(B, -1) on the NCHW tensor.
    B = x_nchw.shape[0]
    x = x.reshape(B, -1)                       # (B, 1*18*64) bf16

    # Fused FC stack: one Pallas kernel, all weights resident in VMEM.
    return fc_stack_pallas(x, pp)              # (B, 1) f32


if __name__ == "__main__":
    # Input spatial size 66x200 is required by Linear(in_features=64*1*18).
    x = jax.random.normal(jax.random.PRNGKey(0), (2, 3, 66, 200), jnp.float32)
    params = prepare_params(init_params(jax.random.PRNGKey(1)))

    out = jax.jit(end2end_forward)(x, params)
    out = jax.block_until_ready(out)
    assert out.shape == (2, 1), out.shape
    assert bool(jnp.all(jnp.isfinite(out)))
    print("KERNEL_OK")
</pallas_src>

<mosaic_0001>
module attributes {stable_mosaic.version = 11 : i64} {
  func.func @_conv_gemm_kernel(%arg0: i32, %arg1: memref<1024x128xbf16, #tpu.memory_space<vmem>>, %arg2: memref<128x128xbf16, #tpu.memory_space<vmem>>, %arg3: memref<1x128xf32, #tpu.memory_space<vmem>>, %arg4: memref<1024x128xbf16, #tpu.memory_space<vmem>>) attributes {dimension_semantics = [#tpu.dimension_semantics<parallel>], iteration_bounds = array<i64: 6>, scalar_prefetch = 0 : i64, scratch_operands = 0 : i64, tpu.core_type = #tpu.core_type<tc>, window_params = [{transform_indices = @transform_0, window_bounds = array<i64: 1024, 128>}, {pipeline_mode = #tpu.pipeline_mode<synchronous>, transform_indices = @transform_1, window_bounds = array<i64: 128, 128>}, {pipeline_mode = #tpu.pipeline_mode<synchronous>, transform_indices = @transform_2, window_bounds = array<i64: 1, 128>}, {transform_indices = @transform_3, window_bounds = array<i64: 1024, 128>}]} {
    %c0 = arith.constant 0 : index
    %c0_0 = arith.constant 0 : index
    %0 = vector.load %arg1[%c0, %c0_0] : memref<1024x128xbf16, #tpu.memory_space<vmem>>, vector<1024x128xbf16>
    %c0_1 = arith.constant 0 : index
    %c0_2 = arith.constant 0 : index
    %1 = vector.load %arg2[%c0_1, %c0_2] : memref<128x128xbf16, #tpu.memory_space<vmem>>, vector<128x128xbf16>
    %cst = arith.constant dense<0.000000e+00> : vector<1024x128xf32>
    %2 = tpu.matmul %0, %1, %cst {dimension_numbers = #tpu.dot_dimension_numbers<[1], [0], [0], [1], [0, 0, 1, 1], [], []>} : vector<1024x128xbf16>, vector<128x128xbf16>, vector<1024x128xf32> -> vector<1024x128xf32>
    %c0_3 = arith.constant 0 : index
    %c0_4 = arith.constant 0 : index
    %3 = vector.load %arg3[%c0_3, %c0_4] : memref<1x128xf32, #tpu.memory_space<vmem>>, vector<1x128xf32>
    %4 = vector.broadcast %3 : vector<1x128xf32> to vector<1024x128xf32>
    %5 = arith.addf %2, %4 : vector<1024x128xf32>
    %cst_5 = arith.constant 0.000000e+00 : f32
    %6 = vector.broadcast %cst_5 : f32 to vector<1024x128xf32>
    %7 = arith.cmpf ogt, %5, %6 : vector<1024x128xf32>
    %cst_6 = arith.constant 0.000000e+00 : f32
    %8 = vector.broadcast %cst_6 : f32 to vector<1024x128xf32>
    %9 = arith.minimumf %5, %8 : vector<1024x128xf32>
    %10 = math.exp %9 : vector<1024x128xf32>
    %cst_7 = arith.constant 1.000000e+00 : f32
    %11 = vector.broadcast %cst_7 : f32 to vector<1024x128xf32>
    %12 = arith.subf %10, %11 : vector<1024x128xf32>
    %13 = arith.select %7, %5, %12 : vector<1024x128xi1>, vector<1024x128xf32>
    %14 = arith.truncf %13 : vector<1024x128xf32> to vector<1024x128xbf16>
    %c0_8 = arith.constant 0 : index
    %c0_9 = arith.constant 0 : index
    %15 = vector.load %arg4[%c0_8, %c0_9] : memref<1024x128xbf16, #tpu.memory_space<vmem>>, vector<1024x128xbf16>
    tpu.vector_store %arg4[%c0_8, %c0_9], %14 {strides = array<i32>} : memref<1024x128xbf16, #tpu.memory_space<vmem>>, vector<1024x128xbf16>,
    return
  }
  func.func @transform_0(%arg0: i32) -> (i32, i32) {
    %c0_i32 = arith.constant 0 : i32
    %c0_i32_0 = arith.constant 0 : i32
    return %arg0, %c0_i32 : i32, i32
  }
  func.func @transform_1(%arg0: i32) -> (i32, i32) {
    %c0_i32 = arith.constant 0 : i32
    %c0_i32_0 = arith.constant 0 : i32
    %c0_i32_1 = arith.constant 0 : i32
    return %c0_i32, %c0_i32_0 : i32, i32
  }
  func.func @transform_2(%arg0: i32) -> (i32, i32) {
    %c0_i32 = arith.constant 0 : i32
    %c0_i32_0 = arith.constant 0 : i32
    %c0_i32_1 = arith.constant 0 : i32
    return %c0_i32, %c0_i32_0 : i32, i32
  }
  func.func @transform_3(%arg0: i32) -> (i32, i32) {
    %c0_i32 = arith.constant 0 : i32
    %c0_i32_0 = arith.constant 0 : i32
    return %arg0, %c0_i32 : i32, i32
  }
}

module attributes {stable_mosaic.version = 11 : i64} {
  func.func @_conv_gemm_kernel(%arg0: i32, %arg1: memref<1024x640xbf16, #tpu.memory_space<vmem>>, %arg2: memref<640x128xbf16, #tpu.memory_space<vmem>>, %arg3: memref<1x128xf32, #tpu.memory_space<vmem>>, %arg4: memref<1024x128xbf16, #tpu.memory_space<vmem>>) attributes {dimension_semantics = [#tpu.dimension_semantics<parallel>], iteration_bounds = array<i64: 2>, scalar_prefetch = 0 : i64, scratch_operands = 0 : i64, tpu.core_type = #tpu.core_type<tc>, window_params = [{transform_indices = @transform_0, window_bounds = array<i64: 1024, 640>}, {pipeline_mode = #tpu.pipeline_mode<synchronous>, transform_indices = @transform_1, window_bounds = array<i64: 640, 128>}, {pipeline_mode = #tpu.pipeline_mode<synchronous>, transform_indices = @transform_2, window_bounds = array<i64: 1, 128>}, {transform_indices = @transform_3, window_bounds = array<i64: 1024, 128>}]} {
    %c0 = arith.constant 0 : index
    %c0_0 = arith.constant 0 : index
    %0 = vector.load %arg1[%c0, %c0_0] : memref<1024x640xbf16, #tpu.memory_space<vmem>>, vector<1024x640xbf16>
    %c0_1 = arith.constant 0 : index
    %c0_2 = arith.constant 0 : index
    %1 = vector.load %arg2[%c0_1, %c0_2] : memref<640x128xbf16, #tpu.memory_space<vmem>>, vector<640x128xbf16>
    %cst = arith.constant dense<0.000000e+00> : vector<1024x128xf32>
    %2 = tpu.matmul %0, %1, %cst {dimension_numbers = #tpu.dot_dimension_numbers<[1], [0], [0], [1], [0, 0, 1, 1], [], []>} : vector<1024x640xbf16>, vector<640x128xbf16>, vector<1024x128xf32> -> vector<1024x128xf32>
    %c0_3 = arith.constant 0 : index
    %c0_4 = arith.constant 0 : index
    %3 = vector.load %arg3[%c0_3, %c0_4] : memref<1x128xf32, #tpu.memory_space<vmem>>, vector<1x128xf32>
    %4 = vector.broadcast %3 : vector<1x128xf32> to vector<1024x128xf32>
    %5 = arith.addf %2, %4 : vector<1024x128xf32>
    %cst_5 = arith.constant 0.000000e+00 : f32
    %6 = vector.broadcast %cst_5 : f32 to vector<1024x128xf32>
    %7 = arith.cmpf ogt, %5, %6 : vector<1024x128xf32>
    %cst_6 = arith.constant 0.000000e+00 : f32
    %8 = vector.broadcast %cst_6 : f32 to vector<1024x128xf32>
    %9 = arith.minimumf %5, %8 : vector<1024x128xf32>
    %10 = math.exp %9 : vector<1024x128xf32>
    %cst_7 = arith.constant 1.000000e+00 : f32
    %11 = vector.broadcast %cst_7 : f32 to vector<1024x128xf32>
    %12 = arith.subf %10, %11 : vector<1024x128xf32>
    %13 = arith.select %7, %5, %12 : vector<1024x128xi1>, vector<1024x128xf32>
    %14 = arith.truncf %13 : vector<1024x128xf32> to vector<1024x128xbf16>
    %c0_8 = arith.constant 0 : index
    %c0_9 = arith.constant 0 : index
    %15 = vector.load %arg4[%c0_8, %c0_9] : memref<1024x128xbf16, #tpu.memory_space<vmem>>, vector<1024x128xbf16>
    tpu.vector_store %arg4[%c0_8, %c0_9], %14 {strides = array<i32>} : memref<1024x128xbf16, #tpu.memory_space<vmem>>, vector<1024x128xbf16>,
    return
  }
  func.func @transform_0(%arg0: i32) -> (i32, i32) {
    %c0_i32 = arith.constant 0 : i32
    %c0_i32_0 = arith.constant 0 : i32
    return %arg0, %c0_i32 : i32, i32
  }
  func.func @transform_1(%arg0: i32) -> (i32, i32) {
    %c0_i32 = arith.constant 0 : i32
    %c0_i32_0 = arith.constant 0 : i32
    %c0_i32_1 = arith.constant 0 : i32
    return %c0_i32, %c0_i32_0 : i32, i32
  }
  func.func @transform_2(%arg0: i32) -> (i32, i32) {
    %c0_i32 = arith.constant 0 : i32
    %c0_i32_0 = arith.constant 0 : i32
    %c0_i32_1 = arith.constant 0 : i32
    return %c0_i32, %c0_i32_0 : i32, i32
  }
  func.func @transform_3(%arg0: i32) -> (i32, i32) {
    %c0_i32 = arith.constant 0 : i32
    %c0_i32_0 = arith.constant 0 : i32
    return %arg0, %c0_i32 : i32, i32
  }
}

module attributes {stable_mosaic.version = 11 : i64} {
  func.func @_conv_gemm_kernel(%arg0: i32, %arg1: memref<224x1024xbf16, #tpu.memory_space<vmem>>, %arg2: memref<1024x128xbf16, #tpu.memory_space<vmem>>, %arg3: memref<1x128xf32, #tpu.memory_space<vmem>>, %arg4: memref<224x128xbf16, #tpu.memory_space<vmem>>) attributes {dimension_semantics = [#tpu.dimension_semantics<parallel>], iteration_bounds = array<i64: 1>, scalar_prefetch = 0 : i64, scratch_operands = 0 : i64, tpu.core_type = #tpu.core_type<tc>, window_params = [{transform_indices = @transform_0, window_bounds = array<i64: 224, 1024>}, {pipeline_mode = #tpu.pipeline_mode<synchronous>, transform_indices = @transform_1, window_bounds = array<i64: 1024, 128>}, {pipeline_mode = #tpu.pipeline_mode<synchronous>, transform_indices = @transform_2, window_bounds = array<i64: 1, 128>}, {transform_indices = @transform_3, window_bounds = array<i64: 224, 128>}]} {
    %c0 = arith.constant 0 : index
    %c0_0 = arith.constant 0 : index
    %0 = vector.load %arg1[%c0, %c0_0] : memref<224x1024xbf16, #tpu.memory_space<vmem>>, vector<224x1024xbf16>
    %c0_1 = arith.constant 0 : index
    %c0_2 = arith.constant 0 : index
    %1 = vector.load %arg2[%c0_1, %c0_2] : memref<1024x128xbf16, #tpu.memory_space<vmem>>, vector<1024x128xbf16>
    %cst = arith.constant dense<0.000000e+00> : vector<224x128xf32>
    %2 = tpu.matmul %0, %1, %cst {dimension_numbers = #tpu.dot_dimension_numbers<[1], [0], [0], [1], [0, 0, 1, 1], [], []>} : vector<224x1024xbf16>, vector<1024x128xbf16>, vector<224x128xf32> -> vector<224x128xf32>
    %c0_3 = arith.constant 0 : index
    %c0_4 = arith.constant 0 : index
    %3 = vector.load %arg3[%c0_3, %c0_4] : memref<1x128xf32, #tpu.memory_space<vmem>>, vector<1x128xf32>
    %4 = vector.broadcast %3 : vector<1x128xf32> to vector<224x128xf32>
    %5 = arith.addf %2, %4 : vector<224x128xf32>
    %cst_5 = arith.constant 0.000000e+00 : f32
    %6 = vector.broadcast %cst_5 : f32 to vector<224x128xf32>
    %7 = arith.cmpf ogt, %5, %6 : vector<224x128xf32>
    %cst_6 = arith.constant 0.000000e+00 : f32
    %8 = vector.broadcast %cst_6 : f32 to vector<224x128xf32>
    %9 = arith.minimumf %5, %8 : vector<224x128xf32>
    %10 = math.exp %9 : vector<224x128xf32>
    %cst_7 = arith.constant 1.000000e+00 : f32
    %11 = vector.broadcast %cst_7 : f32 to vector<224x128xf32>
    %12 = arith.subf %10, %11 : vector<224x128xf32>
    %13 = arith.select %7, %5, %12 : vector<224x128xi1>, vector<224x128xf32>
    %14 = arith.truncf %13 : vector<224x128xf32> to vector<224x128xbf16>
    %c0_8 = arith.constant 0 : index
    %c0_9 = arith.constant 0 : index
    %15 = vector.load %arg4[%c0_8, %c0_9] : memref<224x128xbf16, #tpu.memory_space<vmem>>, vector<224x128xbf16>
    tpu.vector_store %arg4[%c0_8, %c0_9], %14 {strides = array<i32>} : memref<224x128xbf16, #tpu.memory_space<vmem>>, vector<224x128xbf16>,
    return
  }
  func.func @transform_0(%arg0: i32) -> (i32, i32) {
    %c0_i32 = arith.constant 0 : i32
    %c0_i32_0 = arith.constant 0 : i32
    return %arg0, %c0_i32 : i32, i32
  }
  func.func @transform_1(%arg0: i32) -> (i32, i32) {
    %c0_i32 = arith.constant 0 : i32
    %c0_i32_0 = arith.constant 0 : i32
    %c0_i32_1 = arith.constant 0 : i32
    return %c0_i32, %c0_i32_0 : i32, i32
  }
  func.func @transform_2(%arg0: i32) -> (i32, i32) {
    %c0_i32 = arith.constant 0 : i32
    %c0_i32_0 = arith.constant 0 : i32
    %c0_i32_1 = arith.constant 0 : i32
    return %c0_i32, %c0_i32_0 : i32, i32
  }
  func.func @transform_3(%arg0: i32) -> (i32, i32) {
    %c0_i32 = arith.constant 0 : i32
    %c0_i32_0 = arith.constant 0 : i32
    return %arg0, %c0_i32 : i32, i32
  }
}

module attributes {stable_mosaic.version = 11 : i64} {
  func.func @_conv_gemm_kernel(%arg0: i32, %arg1: memref<128x512xbf16, #tpu.memory_space<vmem>>, %arg2: memref<512x128xbf16, #tpu.memory_space<vmem>>, %arg3: memref<1x128xf32, #tpu.memory_space<vmem>>, %arg4: memref<128x128xbf16, #tpu.memory_space<vmem>>) attributes {dimension_semantics = [#tpu.dimension_semantics<parallel>], iteration_bounds = array<i64: 1>, scalar_prefetch = 0 : i64, scratch_operands = 0 : i64, tpu.core_type = #tpu.core_type<tc>, window_params = [{transform_indices = @transform_0, window_bounds = array<i64: 128, 512>}, {pipeline_mode = #tpu.pipeline_mode<synchronous>, transform_indices = @transform_1, window_bounds = array<i64: 512, 128>}, {pipeline_mode = #tpu.pipeline_mode<synchronous>, transform_indices = @transform_2, window_bounds = array<i64: 1, 128>}, {transform_indices = @transform_3, window_bounds = array<i64: 128, 128>}]} {
    %c0 = arith.constant 0 : index
    %c0_0 = arith.constant 0 : index
    %0 = vector.load %arg1[%c0, %c0_0] : memref<128x512xbf16, #tpu.memory_space<vmem>>, vector<128x512xbf16>
    %c0_1 = arith.constant 0 : index
    %c0_2 = arith.constant 0 : index
    %1 = vector.load %arg2[%c0_1, %c0_2] : memref<512x128xbf16, #tpu.memory_space<vmem>>, vector<512x128xbf16>
    %cst = arith.constant dense<0.000000e+00> : vector<128x128xf32>
    %2 = tpu.matmul %0, %1, %cst {dimension_numbers = #tpu.dot_dimension_numbers<[1], [0], [0], [1], [0, 0, 1, 1], [], []>} : vector<128x512xbf16>, vector<512x128xbf16>, vector<128x128xf32> -> vector<128x128xf32>
    %c0_3 = arith.constant 0 : index
    %c0_4 = arith.constant 0 : index
    %3 = vector.load %arg3[%c0_3, %c0_4] : memref<1x128xf32, #tpu.memory_space<vmem>>, vector<1x128xf32>
    %4 = vector.broadcast %3 : vector<1x128xf32> to vector<128x128xf32>
    %5 = arith.addf %2, %4 : vector<128x128xf32>
    %cst_5 = arith.constant 0.000000e+00 : f32
    %6 = vector.broadcast %cst_5 : f32 to vector<128x128xf32>
    %7 = arith.cmpf ogt, %5, %6 : vector<128x128xf32>
    %cst_6 = arith.constant 0.000000e+00 : f32
    %8 = vector.broadcast %cst_6 : f32 to vector<128x128xf32>
    %9 = arith.minimumf %5, %8 : vector<128x128xf32>
    %10 = math.exp %9 : vector<128x128xf32>
    %cst_7 = arith.constant 1.000000e+00 : f32
    %11 = vector.broadcast %cst_7 : f32 to vector<128x128xf32>
    %12 = arith.subf %10, %11 : vector<128x128xf32>
    %13 = arith.select %7, %5, %12 : vector<128x128xi1>, vector<128x128xf32>
    %14 = arith.truncf %13 : vector<128x128xf32> to vector<128x128xbf16>
    %c0_8 = arith.constant 0 : index
    %c0_9 = arith.constant 0 : index
    %15 = vector.load %arg4[%c0_8, %c0_9] : memref<128x128xbf16, #tpu.memory_space<vmem>>, vector<128x128xbf16>
    tpu.vector_store %arg4[%c0_8, %c0_9], %14 {strides = array<i32>} : memref<128x128xbf16, #tpu.memory_space<vmem>>, vector<128x128xbf16>,
    return
  }
  func.func @transform_0(%arg0: i32) -> (i32, i32) {
    %c0_i32 = arith.constant 0 : i32
    %c0_i32_0 = arith.constant 0 : i32
    return %arg0, %c0_i32 : i32, i32
  }
  func.func @transform_1(%arg0: i32) -> (i32, i32) {
    %c0_i32 = arith.constant 0 : i32
    %c0_i32_0 = arith.constant 0 : i32
    %c0_i32_1 = arith.constant 0 : i32
    return %c0_i32, %c0_i32_0 : i32, i32
  }
  func.func @transform_2(%arg0: i32) -> (i32, i32) {
    %c0_i32 = arith.constant 0 : i32
    %c0_i32_0 = arith.constant 0 : i32
    %c0_i32_1 = arith.constant 0 : i32
    return %c0_i32, %c0_i32_0 : i32, i32
  }
  func.func @transform_3(%arg0: i32) -> (i32, i32) {
    %c0_i32 = arith.constant 0 : i32
    %c0_i32_0 = arith.constant 0 : i32
    return %arg0, %c0_i32 : i32, i32
  }
}

module attributes {stable_mosaic.version = 11 : i64} {
  func.func @_conv_gemm_kernel(%arg0: i32, %arg1: memref<48x640xbf16, #tpu.memory_space<vmem>>, %arg2: memref<640x128xbf16, #tpu.memory_space<vmem>>, %arg3: memref<1x128xf32, #tpu.memory_space<vmem>>, %arg4: memref<48x128xbf16, #tpu.memory_space<vmem>>) attributes {dimension_semantics = [#tpu.dimension_semantics<parallel>], iteration_bounds = array<i64: 1>, scalar_prefetch = 0 : i64, scratch_operands = 0 : i64, tpu.core_type = #tpu.core_type<tc>, window_params = [{transform_indices = @transform_0, window_bounds = array<i64: 48, 640>}, {pipeline_mode = #tpu.pipeline_mode<synchronous>, transform_indices = @transform_1, window_bounds = array<i64: 640, 128>}, {pipeline_mode = #tpu.pipeline_mode<synchronous>, transform_indices = @transform_2, window_bounds = array<i64: 1, 128>}, {transform_indices = @transform_3, window_bounds = array<i64: 48, 128>}]} {
    %c0 = arith.constant 0 : index
    %c0_0 = arith.constant 0 : index
    %0 = vector.load %arg1[%c0, %c0_0] : memref<48x640xbf16, #tpu.memory_space<vmem>>, vector<48x640xbf16>
    %c0_1 = arith.constant 0 : index
    %c0_2 = arith.constant 0 : index
    %1 = vector.load %arg2[%c0_1, %c0_2] : memref<640x128xbf16, #tpu.memory_space<vmem>>, vector<640x128xbf16>
    %cst = arith.constant dense<0.000000e+00> : vector<48x128xf32>
    %2 = tpu.matmul %0, %1, %cst {dimension_numbers = #tpu.dot_dimension_numbers<[1], [0], [0], [1], [0, 0, 1, 1], [], []>} : vector<48x640xbf16>, vector<640x128xbf16>, vector<48x128xf32> -> vector<48x128xf32>
    %c0_3 = arith.constant 0 : index
    %c0_4 = arith.constant 0 : index
    %3 = vector.load %arg3[%c0_3, %c0_4] : memref<1x128xf32, #tpu.memory_space<vmem>>, vector<1x128xf32>
    %4 = vector.broadcast %3 : vector<1x128xf32> to vector<48x128xf32>
    %5 = arith.addf %2, %4 : vector<48x128xf32>
    %6 = arith.truncf %5 : vector<48x128xf32> to vector<48x128xbf16>
    %c0_5 = arith.constant 0 : index
    %c0_6 = arith.constant 0 : index
    %7 = vector.load %arg4[%c0_5, %c0_6] : memref<48x128xbf16, #tpu.memory_space<vmem>>, vector<48x128xbf16>
    tpu.vector_store %arg4[%c0_5, %c0_6], %6 {strides = array<i32>} : memref<48x128xbf16, #tpu.memory_space<vmem>>, vector<48x128xbf16>,
    return
  }
  func.func @transform_0(%arg0: i32) -> (i32, i32) {
    %c0_i32 = arith.constant 0 : i32
    %c0_i32_0 = arith.constant 0 : i32
    return %arg0, %c0_i32 : i32, i32
  }
  func.func @transform_1(%arg0: i32) -> (i32, i32) {
    %c0_i32 = arith.constant 0 : i32
    %c0_i32_0 = arith.constant 0 : i32
    %c0_i32_1 = arith.constant 0 : i32
    return %c0_i32, %c0_i32_0 : i32, i32
  }
  func.func @transform_2(%arg0: i32) -> (i32, i32) {
    %c0_i32 = arith.constant 0 : i32
    %c0_i32_0 = arith.constant 0 : i32
    %c0_i32_1 = arith.constant 0 : i32
    return %c0_i32, %c0_i32_0 : i32, i32
  }
  func.func @transform_3(%arg0: i32) -> (i32, i32) {
    %c0_i32 = arith.constant 0 : i32
    %c0_i32_0 = arith.constant 0 : i32
    return %arg0, %c0_i32 : i32, i32
  }
}

module attributes {stable_mosaic.version = 11 : i64} {
  func.func @_fc_fused_kernel(%arg0: memref<16x1152xbf16, #tpu.memory_space<vmem>>, %arg1: memref<1152x128xbf16, #tpu.memory_space<vmem>>, %arg2: memref<1x128xf32, #tpu.memory_space<vmem>>, %arg3: memref<128x128xbf16, #tpu.memory_space<vmem>>, %arg4: memref<1x128xf32, #tpu.memory_space<vmem>>, %arg5: memref<128x128xbf16, #tpu.memory_space<vmem>>, %arg6: memref<1x128xf32, #tpu.memory_space<vmem>>, %arg7: memref<128x128xbf16, #tpu.memory_space<vmem>>, %arg8: memref<1x128xf32, #tpu.memory_space<vmem>>, %arg9: memref<16x128xf32, #tpu.memory_space<vmem>>) attributes {dimension_semantics = [], scalar_prefetch = 0 : i64, scratch_operands = 0 : i64, tpu.core_type = #tpu.core_type<tc>} {
    %c0 = arith.constant 0 : index
    %c0_0 = arith.constant 0 : index
    %0 = vector.load %arg0[%c0, %c0_0] : memref<16x1152xbf16, #tpu.memory_space<vmem>>, vector<16x1152xbf16>
    %c0_1 = arith.constant 0 : index
    %c0_2 = arith.constant 0 : index
    %1 = vector.load %arg1[%c0_1, %c0_2] : memref<1152x128xbf16, #tpu.memory_space<vmem>>, vector<1152x128xbf16>
    %cst = arith.constant dense<0.000000e+00> : vector<16x128xf32>
    %2 = tpu.matmul %0, %1, %cst {dimension_numbers = #tpu.dot_dimension_numbers<[1], [0], [0], [1], [0, 0, 1, 1], [], []>} : vector<16x1152xbf16>, vector<1152x128xbf16>, vector<16x128xf32> -> vector<16x128xf32>
    %c0_3 = arith.constant 0 : index
    %c0_4 = arith.constant 0 : index
    %3 = vector.load %arg2[%c0_3, %c0_4] : memref<1x128xf32, #tpu.memory_space<vmem>>, vector<1x128xf32>
    %4 = vector.broadcast %3 : vector<1x128xf32> to vector<16x128xf32>
    %5 = arith.addf %2, %4 : vector<16x128xf32>
    %cst_5 = arith.constant 0.000000e+00 : f32
    %6 = vector.broadcast %cst_5 : f32 to vector<16x128xf32>
    %7 = arith.cmpf ogt, %5, %6 : vector<16x128xf32>
    %cst_6 = arith.constant 0.000000e+00 : f32
    %8 = vector.broadcast %cst_6 : f32 to vector<16x128xf32>
    %9 = arith.minimumf %5, %8 : vector<16x128xf32>
    %10 = math.exp %9 : vector<16x128xf32>
    %cst_7 = arith.constant 1.000000e+00 : f32
    %11 = vector.broadcast %cst_7 : f32 to vector<16x128xf32>
    %12 = arith.subf %10, %11 : vector<16x128xf32>
    %13 = arith.select %7, %5, %12 : vector<16x128xi1>, vector<16x128xf32>
    %14 = arith.truncf %13 : vector<16x128xf32> to vector<16x128xbf16>
    %c0_8 = arith.constant 0 : index
    %c0_9 = arith.constant 0 : index
    %15 = vector.load %arg3[%c0_8, %c0_9] : memref<128x128xbf16, #tpu.memory_space<vmem>>, vector<128x128xbf16>
    %cst_10 = arith.constant dense<0.000000e+00> : vector<16x128xf32>
    %16 = tpu.matmul %14, %15, %cst_10 {dimension_numbers = #tpu.dot_dimension_numbers<[1], [0], [0], [1], [0, 0, 1, 1], [], []>} : vector<16x128xbf16>, vector<128x128xbf16>, vector<16x128xf32> -> vector<16x128xf32>
    %c0_11 = arith.constant 0 : index
    %c0_12 = arith.constant 0 : index
    %17 = vector.load %arg4[%c0_11, %c0_12] : memref<1x128xf32, #tpu.memory_space<vmem>>, vector<1x128xf32>
    %18 = vector.broadcast %17 : vector<1x128xf32> to vector<16x128xf32>
    %19 = arith.addf %16, %18 : vector<16x128xf32>
    %cst_13 = arith.constant 0.000000e+00 : f32
    %20 = vector.broadcast %cst_13 : f32 to vector<16x128xf32>
    %21 = arith.cmpf ogt, %19, %20 : vector<16x128xf32>
    %cst_14 = arith.constant 0.000000e+00 : f32
    %22 = vector.broadcast %cst_14 : f32 to vector<16x128xf32>
    %23 = arith.minimumf %19, %22 : vector<16x128xf32>
    %24 = math.exp %23 : vector<16x128xf32>
    %cst_15 = arith.constant 1.000000e+00 : f32
    %25 = vector.broadcast %cst_15 : f32 to vector<16x128xf32>
    %26 = arith.subf %24, %25 : vector<16x128xf32>
    %27 = arith.select %21, %19, %26 : vector<16x128xi1>, vector<16x128xf32>
    %28 = arith.truncf %27 : vector<16x128xf32> to vector<16x128xbf16>
    %c0_16 = arith.constant 0 : index
    %c0_17 = arith.constant 0 : index
    %29 = vector.load %arg5[%c0_16, %c0_17] : memref<128x128xbf16, #tpu.memory_space<vmem>>, vector<128x128xbf16>
    %cst_18 = arith.constant dense<0.000000e+00> : vector<16x128xf32>
    %30 = tpu.matmul %28, %29, %cst_18 {dimension_numbers = #tpu.dot_dimension_numbers<[1], [0], [0], [1], [0, 0, 1, 1], [], []>} : vector<16x128xbf16>, vector<128x128xbf16>, vector<16x128xf32> -> vector<16x128xf32>
    %c0_19 = arith.constant 0 : index
    %c0_20 = arith.constant 0 : index
    %31 = vector.load %arg6[%c0_19, %c0_20] : memref<1x128xf32, #tpu.memory_space<vmem>>, vector<1x128xf32>
    %32 = vector.broadcast %31 : vector<1x128xf32> to vector<16x128xf32>
    %33 = arith.addf %30, %32 : vector<16x128xf32>
    %cst_21 = arith.constant 0.000000e+00 : f32
    %34 = vector.broadcast %cst_21 : f32 to vector<16x128xf32>
    %35 = arith.cmpf ogt, %33, %34 : vector<16x128xf32>
    %cst_22 = arith.constant 0.000000e+00 : f32
    %36 = vector.broadcast %cst_22 : f32 to vector<16x128xf32>
    %37 = arith.minimumf %33, %36 : vector<16x128xf32>
    %38 = math.exp %37 : vector<16x128xf32>
    %cst_23 = arith.constant 1.000000e+00 : f32
    %39 = vector.broadcast %cst_23 : f32 to vector<16x128xf32>
    %40 = arith.subf %38, %39 : vector<16x128xf32>
    %41 = arith.select %35, %33, %40 : vector<16x128xi1>, vector<16x128xf32>
    %42 = arith.truncf %41 : vector<16x128xf32> to vector<16x128xbf16>
    %c0_24 = arith.constant 0 : index
    %c0_25 = arith.constant 0 : index
    %43 = vector.load %arg7[%c0_24, %c0_25] : memref<128x128xbf16, #tpu.memory_space<vmem>>, vector<128x128xbf16>
    %cst_26 = arith.constant dense<0.000000e+00> : vector<16x128xf32>
    %44 = tpu.matmul %42, %43, %cst_26 {dimension_numbers = #tpu.dot_dimension_numbers<[1], [0], [0], [1], [0, 0, 1, 1], [], []>} : vector<16x128xbf16>, vector<128x128xbf16>, vector<16x128xf32> -> vector<16x128xf32>
    %c0_27 = arith.constant 0 : index
    %c0_28 = arith.constant 0 : index
    %45 = vector.load %arg8[%c0_27, %c0_28] : memref<1x128xf32, #tpu.memory_space<vmem>>, vector<1x128xf32>
    %46 = vector.broadcast %45 : vector<1x128xf32> to vector<16x128xf32>
    %47 = arith.addf %44, %46 : vector<16x128xf32>
    %c0_29 = arith.constant 0 : index
    %c0_30 = arith.constant 0 : index
    %48 = vector.load %arg9[%c0_29, %c0_30] : memref<16x128xf32, #tpu.memory_space<vmem>>, vector<16x128xf32>
    tpu.vector_store %arg9[%c0_29, %c0_30], %47 {strides = array<i32>} : memref<16x128xf32, #tpu.memory_space<vmem>>, vector<16x128xf32>,
    return
  }
}

</mosaic_0001>

<llo_original>
// kernel: end2end_forward.6
$region0: #{end2end_forward.6}
  #allocation0 [shape = 'u32[]', space=smem, size = 0x4, offset = 0x4, fixed_abs, tag = 'smem constant byte address 0x4 - core index']
  #allocation1 [shape = 'u32[144,128]{1,0:T(1,128)}', space=vmem, size = 0x12000, scoped, tag = 'internal scratch']
  %s0 = inlined_call_operand.vmem [shape: bf16[6144,128], index: 0, kind: input, shape index: {}]
  %s1 = inlined_call_operand.vmem [shape: bf16[128,128], index: 1, kind: input, shape index: {}]
  %s2 = inlined_call_operand.vmem [shape: f32[1,128], index: 2, kind: input, shape index: {}]
  %s3 = inlined_call_operand.vmem [shape: bf16[6144,128], index: 3, kind: output, shape index: {}]
  %s4 = sld [smem:[#allocation0]]
  $region45: #{end2end_forward.6} parent=0
    _
  %s6 = ssub.s32 1, %s4
  %s7 = scalar_select 0, %s6, %s4
  loop: start=0, step=1, limit=8
  $region2: #{end2end_forward.6} parent=0 // loop_pre_header
    _
  $region3: #{end2end_forward.6} parent=0 // loop_header
    %s9 = sphi 0, %s13
    %p10 = scmp.ge.s32.totalorder %s9, 8
    %s19 = sphi 0, %s21
    %s22 = sphi 0, %s19
    %s23 = sphi 0, %s22
    %s39 = sphi 0, %s23
    %s43 = sphi 0, %s43
    %s45 = sphi 0, %s43
    %s46 = sphi 0, %s45
    %s60 = sphi 0, %s46
    %s64 = sphi 0, %s64
    %s66 = sphi 0, %s64
    %s67 = sphi 0, %s66
    %s81 = sphi 0, %s67
    %s87 = sphi 0, %s89
    %s90 = sphi 0, %s87
    %s91 = sphi 0, %s90
    %s107 = sphi 0, %s91
  $region4: #{end2end_forward.6} parent=0 // loop_header_branch
    %12 = sbr.rel (%p10) target = $region8
  $region5: #{end2end_forward.6} parent=0 // loop_body
    %s14 = ssub.s32 %s9, 1
    %s15 = ssub.s32 %s9, 2
    %s16 = sadd.s32 %s9, 1
    %s17 = ssub.s32 %s9, %s16
    %p18 = scmp.eq.s32.totalorder %s17, 0
    %s20 = sadd.s32 %s19, 1
    %s21 = scalar_select %p18, %s19, %s20
    %p24 = pneg %p18
    %p25 = scmp.eq.s32.totalorder %s9, 5
    %p26 = por %p24, %p25
    %p27 = scmp.ne.s32.totalorder %s19, %s22
    %p28 = scmp.eq.s32.totalorder %s9, 0
    %p29 = por %p27, %p28
    %p30 = scmp.ne.s32.totalorder %s19, %s22
    %p31 = scmp.eq.s32.totalorder %s14, 5
    %p32 = por %p30, %p31
    %p33 = scmp.ne.s32.totalorder %s22, %s23
    %p34 = scmp.eq.s32.totalorder %s14, 0
    %p35 = por %p33, %p34
    %p36 = scmp.ne.s32.totalorder %s22, %s23
    %p37 = scmp.eq.s32.totalorder %s15, 5
    %p38 = por %p36, %p37
    %p40 = scmp.ne.s32.totalorder %s23, %s39
    %p41 = scmp.eq.s32.totalorder %s15, 0
    %p42 = por %p40, %p41
    %s44 = sadd.s32 %s43, 1
    %p47 = scmp.eq.s32.totalorder %s9, 5
    %p48 = scmp.ne.s32.totalorder %s43, %s45
    %p49 = scmp.eq.s32.totalorder %s9, 0
    %p50 = por %p48, %p49
    %p51 = scmp.ne.s32.totalorder %s43, %s45
    %p52 = scmp.eq.s32.totalorder %s14, 5
    %p53 = por %p51, %p52
    %p54 = scmp.ne.s32.totalorder %s45, %s46
    %p55 = scmp.eq.s32.totalorder %s14, 0
    %p56 = por %p54, %p55
    %p57 = scmp.ne.s32.totalorder %s45, %s46
    %p58 = scmp.eq.s32.totalorder %s15, 5
    %p59 = por %p57, %p58
    %p61 = scmp.ne.s32.totalorder %s46, %s60
    %p62 = scmp.eq.s32.totalorder %s15, 0
    %p63 = por %p61, %p62
    %s65 = sadd.s32 %s64, 1
    %p68 = scmp.eq.s32.totalorder %s9, 5
    %p69 = scmp.ne.s32.totalorder %s64, %s66
    %p70 = scmp.eq.s32.totalorder %s9, 0
    %p71 = por %p69, %p70
    %p72 = scmp.ne.s32.totalorder %s64, %s66
    %p73 = scmp.eq.s32.totalorder %s14, 5
    %p74 = por %p72, %p73
    %p75 = scmp.ne.s32.totalorder %s66, %s67
    %p76 = scmp.eq.s32.totalorder %s14, 0
    %p77 = por %p75, %p76
    %p78 = scmp.ne.s32.totalorder %s66, %s67
    %p79 = scmp.eq.s32.totalorder %s15, 5
    %p80 = por %p78, %p79
    %p82 = scmp.ne.s32.totalorder %s67, %s81
    %p83 = scmp.eq.s32.totalorder %s15, 0
    %p84 = por %p82, %p83
    %s85 = ssub.s32 %s9, %s16
    %p86 = scmp.eq.s32.totalorder %s85, 0
    %s88 = sadd.s32 %s87, 1
    %s89 = scalar_select %p86, %s87, %s88
    %p92 = pneg %p86
    %p93 = scmp.eq.s32.totalorder %s9, 5
    %p94 = por %p92, %p93
    %p95 = scmp.ne.s32.totalorder %s87, %s90
    %p96 = scmp.eq.s32.totalorder %s9, 0
    %p97 = por %p95, %p96
    %p98 = scmp.ne.s32.totalorder %s87, %s90
    %p99 = scmp.eq.s32.totalorder %s14, 5
    %p100 = por %p98, %p99
    %p101 = scmp.ne.s32.totalorder %s90, %s91
    %p102 = scmp.eq.s32.totalorder %s14, 0
    %p103 = por %p101, %p102
    %p104 = scmp.ne.s32.totalorder %s90, %s91
    %p105 = scmp.eq.s32.totalorder %s15, 5
    %p106 = por %p104, %p105
    %p108 = scmp.ne.s32.totalorder %s91, %s107
    %p109 = scmp.eq.s32.totalorder %s15, 0
    %p110 = por %p108, %p109
    %p111 = scmp.le.s32.totalorder 1, %s9
    %p112 = scmp.lt.s32.totalorder %s9, 7
    %p113 = pnand %p111, %p112
    %p114 = pneg %p113
    // Predicated region
    $region9: #{end2end_forward.6} parent=5 // pred_check
      _
    $region10: #{end2end_forward.6} parent=5 // pred_check_branch
      %116 = sbr.rel (%p113) target = $region12
    $region11: #{end2end_forward.6} parent=5 // pred_region
      %s117 = ssub.s32 %s9, 1
      // Predicated region
      $region13: #{end2end_forward.6} parent=11 // pred_check
        %p118 = pneg %p56
      $region14: #{end2end_forward.6} parent=11 // pred_check_branch
        %120 = sbr.rel (%p118) target = $region16
      $region15: #{end2end_forward.6} parent=11 // pred_region
        _
      $region16: #{end2end_forward.6} parent=11 // pred_fallthru
        _
      // Predicated region
      $region17: #{end2end_forward.6} parent=11 // pred_check
        %p121 = pneg %p77
      $region18: #{end2end_forward.6} parent=11 // pred_check_branch
        %123 = sbr.rel (%p121) target = $region20
      $region19: #{end2end_forward.6} parent=11 // pred_region
        _
      $region20: #{end2end_forward.6} parent=11 // pred_fallthru
        _
    $region12: #{end2end_forward.6} parent=5 // pred_fallthru
      _
    %p124 = scmp.lt.s32.totalorder %s9, 6
    // Predicated region
    $region21: #{end2end_forward.6} parent=5 // pred_check
      %p125 = pneg %p124
    $region22: #{end2end_forward.6} parent=5 // pred_check_branch
      %127 = sbr.rel (%p125) target = $region24
    $region23: #{end2end_forward.6} parent=5 // pred_region
      // Predicated region
      $region25: #{end2end_forward.6} parent=23 // pred_check
        %p128 = pneg %p29
      $region26: #{end2end_forward.6} parent=23 // pred_check_branch
        %130 = sbr.rel (%p128) target = $region28
      $region27: #{end2end_forward.6} parent=23 // pred_region
        %s131 = smul.u32 128, %s9
        %p132 = scmp.lt.s32.totalorder %s131, 767
        %s133 = scalar_select %p132, %s131, 767
        %s134 = smul.addr %s133, 4
        %s135 = scalar_lea.vmem %s0, %s134
        %s136 = smul.u32 128, %s9
      $region28: #{end2end_forward.6} parent=23 // pred_fallthru
        _
    $region24: #{end2end_forward.6} parent=5 // pred_fallthru
      _
    %p137 = scmp.le.s32.totalorder 1, %s9
    %p138 = scmp.lt.s32.totalorder %s9, 7
    %p139 = pnand %p137, %p138
    %p140 = pneg %p139
    // Predicated region
    $region29: #{end2end_forward.6} parent=5 // pred_check
      _
    $region30: #{end2end_forward.6} parent=5 // pred_check_branch
      %142 = sbr.rel (%p139) target = $region32
    $region31: #{end2end_forward.6} parent=5 // pred_region
      %s143 = ssub.s32 %s9, 1
      %s144 = smul.u32 128, %s14
      %p145 = scmp.lt.s32.totalorder %s144, 767
      %s146 = scalar_select %p145, %s144, 767
      %s147 = smul.addr %s146, 4
      %s148 = scalar_lea.vmem %s0, %s147
      %p149 = pneg %p35
      %p150 = pneg %p32
      %p151 = pneg %p56
      %p152 = pneg %p53
      %p153 = pneg %p77
      %p154 = pneg %p74
      %p155 = pneg %p103
      %p156 = pneg %p100
      %s157 = smul.u32 128, %s14
      %p158 = scmp.lt.s32.totalorder %s157, 767
      %s159 = scalar_select %p158, %s157, 767
      %s160 = smul.addr %s159, 4
      %s161 = scalar_lea.vmem %s3, %s160
      %s162 = smul.u32 128, %s14
      %p163 = scmp.lt.s32.totalorder %s162, 767
      %s164 = scalar_select %p163, %s162, 767
      %s165 = smul.addr %s164, 4
      %s166 = scalar_lea.vmem %s0, %s165
      %s167 = smul.u32 128, %s14
      %s168 = smul.u32 128, %s14
      %p169 = scmp.lt.s32.totalorder %s168, 767
      %s170 = scalar_select %p169, %s168, 767
      %s171 = smul.addr %s170, 4
      %s172 = scalar_lea.vmem %s3, %s171
      %s173 = smul.u32 128, %s14
      %v175 = vld [vmem:[%s166] sm:$0xf]
      %v176 = vld [vmem:[%s166 + $0x4] sm:$0xf]
      %v177 = vld [vmem:[%s166 + $0x8] sm:$0xf]
      %v178 = vld [vmem:[%s166 + $0xc] sm:$0xf]
      %v179 = vld [vmem:[%s166 + $0x10] sm:$0xf]
      %v180 = vld [vmem:[%s166 + $0x14] sm:$0xf]
      %v181 = vld [vmem:[%s166 + $0x18] sm:$0xf]
      %v182 = vld [vmem:[%s166 + $0x1c] sm:$0xf]
      %v183 = vld [vmem:[%s166 + $0x20] sm:$0xf]
      %v184 = vld [vmem:[%s166 + $0x24] sm:$0xf]
      %v185 = vld [vmem:[%s166 + $0x28] sm:$0xf]
      %v186 = vld [vmem:[%s166 + $0x2c] sm:$0xf]
      %v187 = vld [vmem:[%s166 + $0x30] sm:$0xf]
      %v188 = vld [vmem:[%s166 + $0x34] sm:$0xf]
      %v189 = vld [vmem:[%s166 + $0x38] sm:$0xf]
      %v190 = vld [vmem:[%s166 + $0x3c] sm:$0xf]
      %v191 = vld [vmem:[%s166 + $0x40] sm:$0xf]
      %v192 = vld [vmem:[%s166 + $0x44] sm:$0xf]
      %v193 = vld [vmem:[%s166 + $0x48] sm:$0xf]
      %v194 = vld [vmem:[%s166 + $0x4c] sm:$0xf]
      %v195 = vld [vmem:[%s166 + $0x50] sm:$0xf]
      %v196 = vld [vmem:[%s166 + $0x54] sm:$0xf]
      %v197 = vld [vmem:[%s166 + $0x58] sm:$0xf]
      %v198 = vld [vmem:[%s166 + $0x5c] sm:$0xf]
      %v199 = vld [vmem:[%s166 + $0x60] sm:$0xf]
      %v200 = vld [vmem:[%s166 + $0x64] sm:$0xf]
      %v201 = vld [vmem:[%s166 + $0x68] sm:$0xf]
      %v202 = vld [vmem:[%s166 + $0x6c] sm:$0xf]
      %v203 = vld [vmem:[%s166 + $0x70] sm:$0xf]
      %v204 = vld [vmem:[%s166 + $0x74] sm:$0xf]
      %v205 = vld [vmem:[%s166 + $0x78] sm:$0xf]
      %v206 = vld [vmem:[%s166 + $0x7c] sm:$0xf]
      %v207 = vld [vmem:[%s166 + $0x80] sm:$0xf]
      %v208 = vld [vmem:[%s166 + $0x84] sm:$0xf]
      %v209 = vld [vmem:[%s166 + $0x88] sm:$0xf]
      %v210 = vld [vmem:[%s166 + $0x8c] sm:$0xf]
      %v211 = vld [vmem:[%s166 + $0x90] sm:$0xf]
      %v212 = vld [vmem:[%s166 + $0x94] sm:$0xf]
      %v213 = vld [vmem:[%s166 + $0x98] sm:$0xf]
      %v214 = vld [vmem:[%s166 + $0x9c] sm:$0xf]
      %v215 = vld [vmem:[%s166 + $0xa0] sm:$0xf]
      %v216 = vld [vmem:[%s166 + $0xa4] sm:$0xf]
      %v217 = vld [vmem:[%s166 + $0xa8] sm:$0xf]
      %v218 = vld [vmem:[%s166 + $0xac] sm:$0xf]
      %v219 = vld [vmem:[%s166 + $0xb0] sm:$0xf]
      %v220 = vld [vmem:[%s166 + $0xb4] sm:$0xf]
      %v221 = vld [vmem:[%s166 + $0xb8] sm:$0xf]
      %v222 = vld [vmem:[%s166 + $0xbc] sm:$0xf]
      %v223 = vld [vmem:[%s166 + $0xc0] sm:$0xf]
      %v224 = vld [vmem:[%s166 + $0xc4] sm:$0xf]
      %v225 = vld [vmem:[%s166 + $0xc8] sm:$0xf]
      %v226 = vld [vmem:[%s166 + $0xcc] sm:$0xf]
      %v227 = vld [vmem:[%s166 + $0xd0] sm:$0xf]
      %v228 = vld [vmem:[%s166 + $0xd4] sm:$0xf]
      %v229 = vld [vmem:[%s166 + $0xd8] sm:$0xf]
      %v230 = vld [vmem:[%s166 + $0xdc] sm:$0xf]
      %v231 = vld [vmem:[%s166 + $0xe0] sm:$0xf]
      %v232 = vld [vmem:[%s166 + $0xe4] sm:$0xf]
      %v233 = vld [vmem:[%s166 + $0xe8] sm:$0xf]
      %v234 = vld [vmem:[%s166 + $0xec] sm:$0xf]
      %v235 = vld [vmem:[%s166 + $0xf0] sm:$0xf]
      %v236 = vld [vmem:[%s166 + $0xf4] sm:$0xf]
      %v237 = vld [vmem:[%s166 + $0xf8] sm:$0xf]
      %v238 = vld [vmem:[%s166 + $0xfc] sm:$0xf]
      %v239 = vld [vmem:[%s166 + $0x100] sm:$0xf]
      %v240 = vld [vmem:[%s166 + $0x104] sm:$0xf]
      %v241 = vld [vmem:[%s166 + $0x108] sm:$0xf]
      %v242 = vld [vmem:[%s166 + $0x10c] sm:$0xf]
      %v243 = vld [vmem:[%s166 + $0x110] sm:$0xf]
      %v244 = vld [vmem:[%s166 + $0x114] sm:$0xf]
      %v245 = vld [vmem:[%s166 + $0x118] sm:$0xf]
      %v246 = vld [vmem:[%s166 + $0x11c] sm:$0xf]
      %v247 = vld [vmem:[%s166 + $0x120] sm:$0xf]
      %v248 = vld [vmem:[%s166 + $0x124] sm:$0xf]
      %v249 = vld [vmem:[%s166 + $0x128] sm:$0xf]
      %v250 = vld [vmem:[%s166 + $0x12c] sm:$0xf]
      %v251 = vld [vmem:[%s166 + $0x130] sm:$0xf]
      %v252 = vld [vmem:[%s166 + $0x134] sm:$0xf]
      %v253 = vld [vmem:[%s166 + $0x138] sm:$0xf]
      %v254 = vld [vmem:[%s166 + $0x13c] sm:$0xf]
      %v255 = vld [vmem:[%s166 + $0x140] sm:$0xf]
      %v256 = vld [vmem:[%s166 + $0x144] sm:$0xf]
      %v257 = vld [vmem:[%s166 + $0x148] sm:$0xf]
      %v258 = vld [vmem:[%s166 + $0x14c] sm:$0xf]
      %v259 = vld [vmem:[%s166 + $0x150] sm:$0xf]
      %v260 = vld [vmem:[%s166 + $0x154] sm:$0xf]
      %v261 = vld [vmem:[%s166 + $0x158] sm:$0xf]
      %v262 = vld [vmem:[%s166 + $0x15c] sm:$0xf]
      %v263 = vld [vmem:[%s166 + $0x160] sm:$0xf]
      %v264 = vld [vmem:[%s166 + $0x164] sm:$0xf]
      %v265 = vld [vmem:[%s166 + $0x168] sm:$0xf]
      %v266 = vld [vmem:[%s166 + $0x16c] sm:$0xf]
      %v267 = vld [vmem:[%s166 + $0x170] sm:$0xf]
      %v268 = vld [vmem:[%s166 + $0x174] sm:$0xf]
      %v269 = vld [vmem:[%s166 + $0x178] sm:$0xf]
      %v270 = vld [vmem:[%s166 + $0x17c] sm:$0xf]
      %v271 = vld [vmem:[%s166 + $0x180] sm:$0xf]
      %v272 = vld [vmem:[%s166 + $0x184] sm:$0xf]
      %v273 = vld [vmem:[%s166 + $0x188] sm:$0xf]
      %v274 = vld [vmem:[%s166 + $0x18c] sm:$0xf]
      %v275 = vld [vmem:[%s166 + $0x190] sm:$0xf]
      %v276 = vld [vmem:[%s166 + $0x194] sm:$0xf]
      %v277 = vld [vmem:[%s166 + $0x198] sm:$0xf]
      %v278 = vld [vmem:[%s166 + $0x19c] sm:$0xf]
      %v279 = vld [vmem:[%s166 + $0x1a0] sm:$0xf]
      %v280 = vld [vmem:[%s166 + $0x1a4] sm:$0xf]
      %v281 = vld [vmem:[%s166 + $0x1a8] sm:$0xf]
      %v282 = vld [vmem:[%s166 + $0x1ac] sm:$0xf]
      %v283 = vld [vmem:[%s166 + $0x1b0] sm:$0xf]
      %v284 = vld [vmem:[%s166 + $0x1b4] sm:$0xf]
      %v285 = vld [vmem:[%s166 + $0x1b8] sm:$0xf]
      %v286 = vld [vmem:[%s166 + $0x1bc] sm:$0xf]
      %v287 = vld [vmem:[%s166 + $0x1c0] sm:$0xf]
      %v288 = vld [vmem:[%s166 + $0x1c4] sm:$0xf]
      %v289 = vld [vmem:[%s166 + $0x1c8] sm:$0xf]
      %v290 = vld [vmem:[%s166 + $0x1cc] sm:$0xf]
      %v291 = vld [vmem:[%s166 + $0x1d0] sm:$0xf]
      %v292 = vld [vmem:[%s166 + $0x1d4] sm:$0xf]
      %v293 = vld [vmem:[%s166 + $0x1d8] sm:$0xf]
      %v294 = vld [vmem:[%s166 + $0x1dc] sm:$0xf]
      %v295 = vld [vmem:[%s166 + $0x1e0] sm:$0xf]
      %v296 = vld [vmem:[%s166 + $0x1e4] sm:$0xf]
      %v297 = vld [vmem:[%s166 + $0x1e8] sm:$0xf]
      %v298 = vld [vmem:[%s166 + $0x1ec] sm:$0xf]
      %v299 = vld [vmem:[%s166 + $0x1f0] sm:$0xf]
      %v300 = vld [vmem:[%s166 + $0x1f4] sm:$0xf]
      %v301 = vld [vmem:[%s166 + $0x1f8] sm:$0xf]
      %v302 = vld [vmem:[%s166 + $0x1fc] sm:$0xf]
      %v303 = vld [vmem:[%s1] sm:$0xf]
      %v304 = vld [vmem:[%s1 + $0x4] sm:$0xf]
      %v305 = vld [vmem:[%s1 + $0x8] sm:$0xf]
      %v306 = vld [vmem:[%s1 + $0xc] sm:$0xf]
      %v307 = vld [vmem:[%s1 + $0x10] sm:$0xf]
      %v308 = vld [vmem:[%s1 + $0x14] sm:$0xf]
      %v309 = vld [vmem:[%s1 + $0x18] sm:$0xf]
      %v310 = vld [vmem:[%s1 + $0x1c] sm:$0xf]
      %v311 = vld [vmem:[%s1 + $0x20] sm:$0xf]
      %v312 = vld [vmem:[%s1 + $0x24] sm:$0xf]
      %v313 = vld [vmem:[%s1 + $0x28] sm:$0xf]
      %v314 = vld [vmem:[%s1 + $0x2c] sm:$0xf]
      %v315 = vld [vmem:[%s1 + $0x30] sm:$0xf]
      %v316 = vld [vmem:[%s1 + $0x34] sm:$0xf]
      %v317 = vld [vmem:[%s1 + $0x38] sm:$0xf]
      %v318 = vld [vmem:[%s1 + $0x3c] sm:$0xf]
      %v319 = vld [vmem:[%s2] sm:$0x1]
      %v321 = vlaneseq
      %v322 = vshrl.u32 %v321, 7
      %v323 = vsub.s32 0, %v322
      %v324 = vrot.slane %v319, %v323
      %v454 = vunpack.c.l.b16 %v175
      %v455 = vunpack.c.l.b16 %v176
      %v456 = vunpack.c.l.b16 %v177
      %v457 = vunpack.c.l.b16 %v178
      %v458 = vunpack.c.l.b16 %v179
      %v459 = vunpack.c.l.b16 %v180
      %v460 = vunpack.c.l.b16 %v181
      %v461 = vunpack.c.l.b16 %v182
      %v462 = vunpack.c.l.b16 %v183
      %v463 = vunpack.c.l.b16 %v184
      %v464 = vunpack.c.l.b16 %v185
      %v465 = vunpack.c.l.b16 %v186
      %v466 = vunpack.c.l.b16 %v187
      %v467 = vunpack.c.l.b16 %v188
      %v468 = vunpack.c.l.b16 %v189
      %v469 = vunpack.c.l.b16 %v190
      %v470 = vunpack.c.l.b16 %v191
      %v471 = vunpack.c.l.b16 %v192
      %v472 = vunpack.c.l.b16 %v193
      %v473 = vunpack.c.l.b16 %v194
      %v474 = vunpack.c.l.b16 %v195
      %v475 = vunpack.c.l.b16 %v196
      %v476 = vunpack.c.l.b16 %v197
      %v477 = vunpack.c.l.b16 %v198
      %v478 = vunpack.c.l.b16 %v199
      %v479 = vunpack.c.l.b16 %v200
      %v480 = vunpack.c.l.b16 %v201
      %v481 = vunpack.c.l.b16 %v202
      %v482 = vunpack.c.l.b16 %v203
      %v483 = vunpack.c.l.b16 %v204
      %v484 = vunpack.c.l.b16 %v205
      %v485 = vunpack.c.l.b16 %v206
      %v486 = vunpack.c.l.b16 %v207
      %v487 = vunpack.c.l.b16 %v208
      %v488 = vunpack.c.l.b16 %v209
      %v489 = vunpack.c.l.b16 %v210
      %v490 = vunpack.c.l.b16 %v211
      %v491 = vunpack.c.l.b16 %v212
      %v492 = vunpack.c.l.b16 %v213
      %v493 = vunpack.c.l.b16 %v214
      %v494 = vunpack.c.l.b16 %v215
      %v495 = vunpack.c.l.b16 %v216
      %v496 = vunpack.c.l.b16 %v217
      %v497 = vunpack.c.l.b16 %v218
      %v498 = vunpack.c.l.b16 %v219
      %v499 = vunpack.c.l.b16 %v220
      %v500 = vunpack.c.l.b16 %v221
      %v501 = vunpack.c.l.b16 %v222
      %v502 = vunpack.c.l.b16 %v223
      %v503 = vunpack.c.l.b16 %v224
      %v504 = vunpack.c.l.b16 %v225
      %v505 = vunpack.c.l.b16 %v226
      %v506 = vunpack.c.l.b16 %v227
      %v507 = vunpack.c.l.b16 %v228
      %v508 = vunpack.c.l.b16 %v229
      %v509 = vunpack.c.l.b16 %v230
      %v510 = vunpack.c.l.b16 %v231
      %v511 = vunpack.c.l.b16 %v232
      %v512 = vunpack.c.l.b16 %v233
      %v513 = vunpack.c.l.b16 %v234
      %v514 = vunpack.c.l.b16 %v235
      %v515 = vunpack.c.l.b16 %v236
      %v516 = vunpack.c.l.b16 %v237
      %v517 = vunpack.c.l.b16 %v238
      %v518 = vunpack.c.l.b16 %v239
      %v519 = vunpack.c.l.b16 %v240
      %v520 = vunpack.c.l.b16 %v241
      %v521 = vunpack.c.l.b16 %v242
      %v522 = vunpack.c.l.b16 %v243
      %v523 = vunpack.c.l.b16 %v244
      %v524 = vunpack.c.l.b16 %v245
      %v525 = vunpack.c.l.b16 %v246
      %v526 = vunpack.c.l.b16 %v247
      %v527 = vunpack.c.l.b16 %v248
      %v528 = vunpack.c.l.b16 %v249
      %v529 = vunpack.c.l.b16 %v250
      %v530 = vunpack.c.l.b16 %v251
      %v531 = vunpack.c.l.b16 %v252
      %v532 = vunpack.c.l.b16 %v253
      %v533 = vunpack.c.l.b16 %v254
      %v534 = vunpack.c.l.b16 %v255
      %v535 = vunpack.c.l.b16 %v256
      %v536 = vunpack.c.l.b16 %v257
      %v537 = vunpack.c.l.b16 %v258
      %v538 = vunpack.c.l.b16 %v259
      %v539 = vunpack.c.l.b16 %v260
      %v540 = vunpack.c.l.b16 %v261
      %v541 = vunpack.c.l.b16 %v262
      %v542 = vunpack.c.l.b16 %v263
      %v543 = vunpack.c.l.b16 %v264
      %v544 = vunpack.c.l.b16 %v265
      %v545 = vunpack.c.l.b16 %v266
      %v546 = vunpack.c.l.b16 %v267
      %v547 = vunpack.c.l.b16 %v268
      %v548 = vunpack.c.l.b16 %v269
      %v549 = vunpack.c.l.b16 %v270
      %v550 = vunpack.c.l.b16 %v271
      %v551 = vunpack.c.l.b16 %v272
      %v552 = vunpack.c.l.b16 %v273
      %v553 = vunpack.c.l.b16 %v274
      %v554 = vunpack.c.l.b16 %v275
      %v555 = vunpack.c.l.b16 %v276
      %v556 = vunpack.c.l.b16 %v277
      %v557 = vunpack.c.l.b16 %v278
      %v558 = vunpack.c.l.b16 %v279
      %v559 = vunpack.c.l.b16 %v280
      %v560 = vunpack.c.l.b16 %v281
      %v561 = vunpack.c.l.b16 %v282
      %v562 = vunpack.c.l.b16 %v283
      %v563 = vunpack.c.l.b16 %v284
      %v564 = vunpack.c.l.b16 %v285
      %v565 = vunpack.c.l.b16 %v286
      %v566 = vunpack.c.l.b16 %v287
      %v567 = vunpack.c.l.b16 %v288
      %v568 = vunpack.c.l.b16 %v289
      %v569 = vunpack.c.l.b16 %v290
      %v570 = vunpack.c.l.b16 %v291
      %v571 = vunpack.c.l.b16 %v292
      %v572 = vunpack.c.l.b16 %v293
      %v573 = vunpack.c.l.b16 %v294
      %v574 = vunpack.c.l.b16 %v295
      %v575 = vunpack.c.l.b16 %v296
      %v576 = vunpack.c.l.b16 %v297
      %v577 = vunpack.c.l.b16 %v298
      %v578 = vunpack.c.l.b16 %v299
      %v579 = vunpack.c.l.b16 %v300
      %v580 = vunpack.c.l.b16 %v301
      %v581 = vunpack.c.l.b16 %v302
      %v582 = vpack.c.b16 %v455, %v454
      %v583 = vpack.c.b16 %v457, %v456
      %v584 = vpack.c.b16 %v459, %v458
      %v585 = vpack.c.b16 %v461, %v460
      %v586 = vpack.c.b16 %v463, %v462
      %v587 = vpack.c.b16 %v465, %v464
      %v588 = vpack.c.b16 %v467, %v466
      %v589 = vpack.c.b16 %v469, %v468
      %v590 = vpack.c.b16 %v471, %v470
      %v591 = vpack.c.b16 %v473, %v472
      %v592 = vpack.c.b16 %v475, %v474
      %v593 = vpack.c.b16 %v477, %v476
      %v594 = vpack.c.b16 %v479, %v478
      %v595 = vpack.c.b16 %v481, %v480
      %v596 = vpack.c.b16 %v483, %v482
      %v597 = vpack.c.b16 %v485, %v484
      %v598 = vpack.c.b16 %v487, %v486
      %v599 = vpack.c.b16 %v489, %v488
      %v600 = vpack.c.b16 %v491, %v490
      %v601 = vpack.c.b16 %v493, %v492
      %v602 = vpack.c.b16 %v495, %v494
      %v603 = vpack.c.b16 %v497, %v496
      %v604 = vpack.c.b16 %v499, %v498
      %v605 = vpack.c.b16 %v501, %v500
      %v606 = vpack.c.b16 %v503, %v502
      %v607 = vpack.c.b16 %v505, %v504
      %v608 = vpack.c.b16 %v507, %v506
      %v609 = vpack.c.b16 %v509, %v508
      %v610 = vpack.c.b16 %v511, %v510
      %v611 = vpack.c.b16 %v513, %v512
      %v612 = vpack.c.b16 %v515, %v514
      %v613 = vpack.c.b16 %v517, %v516
      %v614 = vpack.c.b16 %v519, %v518
      %v615 = vpack.c.b16 %v521, %v520
      %v616 = vpack.c.b16 %v523, %v522
      %v617 = vpack.c.b16 %v525, %v524
      %v618 = vpack.c.b16 %v527, %v526
      %v619 = vpack.c.b16 %v529, %v528
      %v620 = vpack.c.b16 %v531, %v530
      %v621 = vpack.c.b16 %v533, %v532
      %v622 = vpack.c.b16 %v535, %v534
      %v623 = vpack.c.b16 %v537, %v536
      %v624 = vpack.c.b16 %v539, %v538
      %v625 = vpack.c.b16 %v541, %v540
      %v626 = vpack.c.b16 %v543, %v542
      %v627 = vpack.c.b16 %v545, %v544
      %v628 = vpack.c.b16 %v547, %v546
      %v629 = vpack.c.b16 %v549, %v548
      %v630 = vpack.c.b16 %v551, %v550
      %v631 = vpack.c.b16 %v553, %v552
      %v632 = vpack.c.b16 %v555, %v554
      %v633 = vpack.c.b16 %v557, %v556
      %v634 = vpack.c.b16 %v559, %v558
      %v635 = vpack.c.b16 %v561, %v560
      %v636 = vpack.c.b16 %v563, %v562
      %v637 = vpack.c.b16 %v565, %v564
      %v638 = vpack.c.b16 %v567, %v566
      %v639 = vpack.c.b16 %v569, %v568
      %v640 = vpack.c.b16 %v571, %v570
      %v641 = vpack.c.b16 %v573, %v572
      %v642 = vpack.c.b16 %v575, %v574
      %v643 = vpack.c.b16 %v577, %v576
      %v644 = vpack.c.b16 %v579, %v578
      %v645 = vpack.c.b16 %v581, %v580
      %v726 = vunpack.c.l.b16 %v303
      %v727 = vunpack.c.l.b16 %v304
      %v728 = vunpack.c.l.b16 %v305
      %v729 = vunpack.c.l.b16 %v306
      %v730 = vunpack.c.l.b16 %v307
      %v731 = vunpack.c.l.b16 %v308
      %v732 = vunpack.c.l.b16 %v309
      %v733 = vunpack.c.l.b16 %v310
      %v734 = vunpack.c.l.b16 %v311
      %v735 = vunpack.c.l.b16 %v312
      %v736 = vunpack.c.l.b16 %v313
      %v737 = vunpack.c.l.b16 %v314
      %v738 = vunpack.c.l.b16 %v315
      %v739 = vunpack.c.l.b16 %v316
      %v740 = vunpack.c.l.b16 %v317
      %v741 = vunpack.c.l.b16 %v318
      %v742 = vpack.c.b16 %v727, %v726
      %v743 = vpack.c.b16 %v729, %v728
      %v744 = vpack.c.b16 %v731, %v730
      %v745 = vpack.c.b16 %v733, %v732
      %v746 = vpack.c.b16 %v735, %v734
      %v747 = vpack.c.b16 %v737, %v736
      %v748 = vpack.c.b16 %v739, %v738
      %v749 = vpack.c.b16 %v741, %v740
      %758 = vmatprep.subr.bf16.mxu0 0
      %759 = vmatpush1.bf16.msra.mxu0 %v742
      %760 = vmatprep.subr.bf16.mxu0 0
      %761 = vmatpush1.bf16.msra.mxu0 %v743
      %762 = vmatprep.subr.bf16.mxu0 0
      %763 = vmatpush1.bf16.msra.mxu0 %v744
      %764 = vmatprep.subr.bf16.mxu0 0
      %765 = vmatpush1.bf16.msra.mxu0 %v745
      %766 = vmatprep.subr.bf16.mxu0 0
      %767 = vmatpush1.bf16.msra.mxu0 %v746
      %768 = vmatprep.subr.bf16.mxu0 0
      %769 = vmatpush1.bf16.msra.mxu0 %v747
      %770 = vmatprep.subr.bf16.mxu0 0
      %771 = vmatpush1.bf16.msra.mxu0 %v748
      %772 = vmatprep.subr.bf16.mxu0 0
      %773 = vmatpush1.bf16.msra.mxu0 %v749
      %774 = vmatprep.subr.bf16.mxu0 0
      %775 = vmatpush1.bf16.msra.mxu0 0
      %776 = vmatprep.subr.bf16.mxu0 0
      %777 = vmatpush1.bf16.msra.mxu0 0
      %778 = vmatprep.subr.bf16.mxu0 0
      %779 = vmatpush1.bf16.msra.mxu0 0
      %780 = vmatprep.subr.bf16.mxu0 0
      %781 = vmatpush1.bf16.msra.mxu0 0
      %782 = vmatprep.subr.bf16.mxu0 0
      %783 = vmatpush1.bf16.msra.mxu0 0
      %784 = vmatprep.subr.bf16.mxu0 0
      %785 = vmatpush1.bf16.msra.mxu0 0
      %786 = vmatprep.subr.bf16.mxu0 0
      %787 = vmatpush1.bf16.msra.mxu0 0
      %788 = vmatprep.subr.bf16.mxu0 0
      %789 = vmatpush1.bf16.msra.mxu0 0
      %790 = vmatprep.mubr.bf16.mxu0 0
      %791 = vmatmul.mubr.bf16.gmra.mrb[0].mxu0 %v582
      %v792 = vpop.f32.mrb[0].mxu0
      %v793 = vadd.f32 %v324, %v792
      %v794 = vpop.f32.mrb[0].mxu0
      %v795 = vpop.f32.mrb[0].mxu0
      %v796 = vadd.f32 %v324, %v795
      %v797 = vpop.f32.mrb[0].mxu0
      %798 = vmatprep.mubr.bf16.mxu0 0
      %799 = vmatmul.mubr.bf16.gmra.mrb[0].mxu0 %v583
      %v800 = vpop.f32.mrb[0].mxu0
      %v801 = vadd.f32 %v324, %v800
      %v802 = vpop.f32.mrb[0].mxu0
      %v803 = vpop.f32.mrb[0].mxu0
      %v804 = vadd.f32 %v324, %v803
      %v805 = vpop.f32.mrb[0].mxu0
      %806 = vmatprep.mubr.bf16.mxu0 0
      %807 = vmatmul.mubr.bf16.gmra.mrb[0].mxu0 %v584
      %v808 = vpop.f32.mrb[0].mxu0
      %v809 = vadd.f32 %v324, %v808
      %v810 = vpop.f32.mrb[0].mxu0
      %v811 = vpop.f32.mrb[0].mxu0
      %v812 = vadd.f32 %v324, %v811
      %v813 = vpop.f32.mrb[0].mxu0
      %814 = vmatprep.mubr.bf16.mxu0 0
      %815 = vmatmul.mubr.bf16.gmra.mrb[0].mxu0 %v585
      %v816 = vpop.f32.mrb[0].mxu0
      %v817 = vadd.f32 %v324, %v816
      %v818 = vpop.f32.mrb[0].mxu0
      %v819 = vpop.f32.mrb[0].mxu0
      %v820 = vadd.f32 %v324, %v819
      %v821 = vpop.f32.mrb[0].mxu0
      %822 = vmatprep.mubr.bf16.mxu0 0
      %823 = vmatmul.mubr.bf16.gmra.mrb[0].mxu0 %v586
      %v824 = vpop.f32.mrb[0].mxu0
      %v825 = vadd.f32 %v324, %v824
      %v826 = vpop.f32.mrb[0].mxu0
      %v827 = vpop.f32.mrb[0].mxu0
      %v828 = vadd.f32 %v324, %v827
      %v829 = vpop.f32.mrb[0].mxu0
      %830 = vmatprep.mubr.bf16.mxu0 0
      %831 = vmatmul.mubr.bf16.gmra.mrb[0].mxu0 %v587
      %v832 = vpop.f32.mrb[0].mxu0
      %v833 = vadd.f32 %v324, %v832
      %v834 = vpop.f32.mrb[0].mxu0
      %v835 = vpop.f32.mrb[0].mxu0
      %v836 = vadd.f32 %v324, %v835
      %v837 = vpop.f32.mrb[0].mxu0
      %838 = vmatprep.mubr.bf16.mxu0 0
      %839 = vmatmul.mubr.bf16.gmra.mrb[0].mxu0 %v588
      %v840 = vpop.f32.mrb[0].mxu0
      %v841 = vadd.f32 %v324, %v840
      %v842 = vpop.f32.mrb[0].mxu0
      %v843 = vpop.f32.mrb[0].mxu0
      %v844 = vadd.f32 %v324, %v843
      %v845 = vpop.f32.mrb[0].mxu0
      %846 = vmatprep.mubr.bf16.mxu0 0
      %847 = vmatmul.mubr.bf16.gmra.mrb[0].mxu0 %v589
      %v848 = vpop.f32.mrb[0].mxu0
      %v849 = vadd.f32 %v324, %v848
      %v850 = vpop.f32.mrb[0].mxu0
      %v851 = vpop.f32.mrb[0].mxu0
      %v852 = vadd.f32 %v324, %v851
      %v853 = vpop.f32.mrb[0].mxu0
      %854 = vmatprep.mubr.bf16.mxu0 0
      %855 = vmatmul.mubr.bf16.gmra.mrb[0].mxu0 %v590
      %v856 = vpop.f32.mrb[0].mxu0
      %v857 = vadd.f32 %v324, %v856
      %v858 = vpop.f32.mrb[0].mxu0
      %v859 = vpop.f32.mrb[0].mxu0
      %v860 = vadd.f32 %v324, %v859
      %v861 = vpop.f32.mrb[0].mxu0
      %862 = vmatprep.mubr.bf16.mxu0 0
      %863 = vmatmul.mubr.bf16.gmra.mrb[0].mxu0 %v591
      %v864 = vpop.f32.mrb[0].mxu0
      %v865 = vadd.f32 %v324, %v864
      %v866 = vpop.f32.mrb[0].mxu0
      %v867 = vpop.f32.mrb[0].mxu0
      %v868 = vadd.f32 %v324, %v867
      %v869 = vpop.f32.mrb[0].mxu0
      %870 = vmatprep.mubr.bf16.mxu0 0
      %871 = vmatmul.mubr.bf16.gmra.mrb[0].mxu0 %v592
      %v872 = vpop.f32.mrb[0].mxu0
      %v873 = vadd.f32 %v324, %v872
      %v874 = vpop.f32.mrb[0].mxu0
      %v875 = vpop.f32.mrb[0].mxu0
      %v876 = vadd.f32 %v324, %v875
      %v877 = vpop.f32.mrb[0].mxu0
      %878 = vmatprep.mubr.bf16.mxu0 0
      %879 = vmatmul.mubr.bf16.gmra.mrb[0].mxu0 %v593
      %v880 = vpop.f32.mrb[0].mxu0
      %v881 = vadd.f32 %v324, %v880
      %v882 = vpop.f32.mrb[0].mxu0
      %v883 = vpop.f32.mrb[0].mxu0
      %v884 = vadd.f32 %v324, %v883
      %v885 = vpop.f32.mrb[0].mxu0
      %886 = vmatprep.mubr.bf16.mxu0 0
      %887 = vmatmul.mubr.bf16.gmra.mrb[0].mxu0 %v594
      %v888 = vpop.f32.mrb[0].mxu0
      %v889 = vadd.f32 %v324, %v888
      %v890 = vpop.f32.mrb[0].mxu0
      %v891 = vpop.f32.mrb[0].mxu0
      %v892 = vadd.f32 %v324, %v891
      %v893 = vpop.f32.mrb[0].mxu0
      %894 = vmatprep.mubr.bf16.mxu0 0
      %895 = vmatmul.mubr.bf16.gmra.mrb[0].mxu0 %v595
      %v896 = vpop.f32.mrb[0].mxu0
      %v897 = vadd.f32 %v324, %v896
      %v898 = vpop.f32.mrb[0].mxu0
      %v899 = vpop.f32.mrb[0].mxu0
      %v900 = vadd.f32 %v324, %v899
      %v901 = vpop.f32.mrb[0].mxu0
      %902 = vmatprep.mubr.bf16.mxu0 0
      %903 = vmatmul.mubr.bf16.gmra.mrb[0].mxu0 %v596
      %v904 = vpop.f32.mrb[0].mxu0
      %v905 = vadd.f32 %v324, %v904
      %v906 = vpop.f32.mrb[0].mxu0
      %v907 = vpop.f32.mrb[0].mxu0
      %v908 = vadd.f32 %v324, %v907
      %v909 = vpop.f32.mrb[0].mxu0
      %910 = vmatprep.mubr.bf16.mxu0 0
      %911 = vmatmul.mubr.bf16.gmra.mrb[0].mxu0 %v597
      %v912 = vpop.f32.mrb[0].mxu0
      %v913 = vadd.f32 %v324, %v912
      %v914 = vpop.f32.mrb[0].mxu0
      %v915 = vpop.f32.mrb[0].mxu0
      %v916 = vadd.f32 %v324, %v915
      %v917 = vpop.f32.mrb[0].mxu0
      %918 = vmatprep.mubr.bf16.mxu0 0
      %919 = vmatmul.mubr.bf16.gmra.mrb[0].mxu0 %v598
      %v920 = vpop.f32.mrb[0].mxu0
      %v921 = vadd.f32 %v324, %v920
      %v922 = vpop.f32.mrb[0].mxu0
      %v923 = vpop.f32.mrb[0].mxu0
      %v924 = vadd.f32 %v324, %v923
      %v925 = vpop.f32.mrb[0].mxu0
      %926 = vmatprep.mubr.bf16.mxu0 0
      %927 = vmatmul.mubr.bf16.gmra.mrb[0].mxu0 %v599
      %v928 = vpop.f32.mrb[0].mxu0
      %v929 = vadd.f32 %v324, %v928
      %v930 = vpop.f32.mrb[0].mxu0
      %v931 = vpop.f32.mrb[0].mxu0
      %v932 = vadd.f32 %v324, %v931
      %v933 = vpop.f32.mrb[0].mxu0
      %934 = vmatprep.mubr.bf16.mxu0 0
      %935 = vmatmul.mubr.bf16.gmra.mrb[0].mxu0 %v600
      %v936 = vpop.f32.mrb[0].mxu0
      %v937 = vadd.f32 %v324, %v936
      %v938 = vpop.f32.mrb[0].mxu0
      %v939 = vpop.f32.mrb[0].mxu0
      %v940 = vadd.f32 %v324, %v939
      %v941 = vpop.f32.mrb[0].mxu0
      %942 = vmatprep.mubr.bf16.mxu0 0
      %943 = vmatmul.mubr.bf16.gmra.mrb[0].mxu0 %v601
      %v944 = vpop.f32.mrb[0].mxu0
      %v945 = vadd.f32 %v324, %v944
      %v946 = vpop.f32.mrb[0].mxu0
      %v947 = vpop.f32.mrb[0].mxu0
      %v948 = vadd.f32 %v324, %v947
      %v949 = vpop.f32.mrb[0].mxu0
      %950 = vmatprep.mubr.bf16.mxu0 0
      %951 = vmatmul.mubr.bf16.gmra.mrb[0].mxu0 %v602
      %v952 = vpop.f32.mrb[0].mxu0
      %v953 = vadd.f32 %v324, %v952
      %v954 = vpop.f32.mrb[0].mxu0
      %v955 = vpop.f32.mrb[0].mxu0
      %v956 = vadd.f32 %v324, %v955
      %v957 = vpop.f32.mrb[0].mxu0
      %958 = vmatprep.mubr.bf16.mxu0 0
      %959 = vmatmul.mubr.bf16.gmra.mrb[0].mxu0 %v603
      %v960 = vpop.f32.mrb[0].mxu0
      %v961 = vadd.f32 %v324, %v960
      %v962 = vpop.f32.mrb[0].mxu0
      %v963 = vpop.f32.mrb[0].mxu0
      %v964 = vadd.f32 %v324, %v963
      %v965 = vpop.f32.mrb[0].mxu0
      %966 = vmatprep.mubr.bf16.mxu0 0
      %967 = vmatmul.mubr.bf16.gmra.mrb[0].mxu0 %v604
      %v968 = vpop.f32.mrb[0].mxu0
      %v969 = vadd.f32 %v324, %v968
      %v970 = vpop.f32.mrb[0].mxu0
      %v971 = vpop.f32.mrb[0].mxu0
      %v972 = vadd.f32 %v324, %v971
      %v973 = vpop.f32.mrb[0].mxu0
      %974 = vmatprep.mubr.bf16.mxu0 0
      %975 = vmatmul.mubr.bf16.gmra.mrb[0].mxu0 %v605
      %v976 = vpop.f32.mrb[0].mxu0
      %v977 = vadd.f32 %v324, %v976
      %v978 = vpop.f32.mrb[0].mxu0
      %v979 = vpop.f32.mrb[0].mxu0
      %v980 = vadd.f32 %v324, %v979
      %v981 = vpop.f32.mrb[0].mxu0
      %982 = vmatprep.mubr.bf16.mxu0 0
      %983 = vmatmul.mubr.bf16.gmra.mrb[0].mxu0 %v606
      %v984 = vpop.f32.mrb[0].mxu0
      %v985 = vadd.f32 %v324, %v984
      %v986 = vpop.f32.mrb[0].mxu0
      %v987 = vpop.f32.mrb[0].mxu0
      %v988 = vadd.f32 %v324, %v987
      %v989 = vpop.f32.mrb[0].mxu0
      %990 = vmatprep.mubr.bf16.mxu0 0
      %991 = vmatmul.mubr.bf16.gmra.mrb[0].mxu0 %v607
      %v992 = vpop.f32.mrb[0].mxu0
      %v993 = vadd.f32 %v324, %v992
      %v994 = vpop.f32.mrb[0].mxu0
      %v995 = vpop.f32.mrb[0].mxu0
      %v996 = vadd.f32 %v324, %v995
      %v997 = vpop.f32.mrb[0].mxu0
      %998 = vmatprep.mubr.bf16.mxu0 0
      %999 = vmatmul.mubr.bf16.gmra.mrb[0].mxu0 %v608
      %v1000 = vpop.f32.mrb[0].mxu0
      %v1001 = vadd.f32 %v324, %v1000
      %v1002 = vpop.f32.mrb[0].mxu0
      %v1003 = vpop.f32.mrb[0].mxu0
      %v1004 = vadd.f32 %v324, %v1003
      %v1005 = vpop.f32.mrb[0].mxu0
      %1006 = vmatprep.mubr.bf16.mxu0 0
      %1007 = vmatmul.mubr.bf16.gmra.mrb[0].mxu0 %v609
      %v1008 = vpop.f32.mrb[0].mxu0
      %v1009 = vadd.f32 %v324, %v1008
      %v1010 = vpop.f32.mrb[0].mxu0
      %v1011 = vpop.f32.mrb[0].mxu0
      %v1012 = vadd.f32 %v324, %v1011
      %v1013 = vpop.f32.mrb[0].mxu0
      %1014 = vmatprep.mubr.bf16.mxu0 0
      %1015 = vmatmul.mubr.bf16.gmra.mrb[0].mxu0 %v610
      %v1016 = vpop.f32.mrb[0].mxu0
      %v1017 = vadd.f32 %v324, %v1016
      %v1018 = vpop.f32.mrb[0].mxu0
      %v1019 = vpop.f32.mrb[0].mxu0
      %v1020 = vadd.f32 %v324, %v1019
      %v1021 = vpop.f32.mrb[0].mxu0
      %1022 = vmatprep.mubr.bf16.mxu0 0
      %1023 = vmatmul.mubr.bf16.gmra.mrb[0].mxu0 %v611
      %v1024 = vpop.f32.mrb[0].mxu0
      %v1025 = vadd.f32 %v324, %v1024
      %v1026 = vpop.f32.mrb[0].mxu0
      %v1027 = vpop.f32.mrb[0].mxu0
      %v1028 = vadd.f32 %v324, %v1027
      %v1029 = vpop.f32.mrb[0].mxu0
      %1030 = vmatprep.mubr.bf16.mxu0 0
      %1031 = vmatmul.mubr.bf16.gmra.mrb[0].mxu0 %v612
      %v1032 = vpop.f32.mrb[0].mxu0
      %v1033 = vadd.f32 %v324, %v1032
      %v1034 = vpop.f32.mrb[0].mxu0
      %v1035 = vpop.f32.mrb[0].mxu0
      %v1036 = vadd.f32 %v324, %v1035
      %v1037 = vpop.f32.mrb[0].mxu0
      %1038 = vmatprep.mubr.bf16.mxu0 0
      %1039 = vmatmul.mubr.bf16.gmra.mrb[0].mxu0 %v613
      %v1040 = vpop.f32.mrb[0].mxu0
      %v1041 = vadd.f32 %v324, %v1040
      %v1042 = vpop.f32.mrb[0].mxu0
      %v1043 = vpop.f32.mrb[0].mxu0
      %v1044 = vadd.f32 %v324, %v1043
      %v1045 = vpop.f32.mrb[0].mxu0
      %1046 = vmatprep.mubr.bf16.mxu0 0
      %1047 = vmatmul.mubr.bf16.gmra.mrb[0].mxu0 %v614
      %v1048 = vpop.f32.mrb[0].mxu0
      %v1049 = vadd.f32 %v324, %v1048
      %v1050 = vpop.f32.mrb[0].mxu0
      %v1051 = vpop.f32.mrb[0].mxu0
      %v1052 = vadd.f32 %v324, %v1051
      %v1053 = vpop.f32.mrb[0].mxu0
      %1054 = vmatprep.mubr.bf16.mxu0 0
      %1055 = vmatmul.mubr.bf16.gmra.mrb[0].mxu0 %v615
      %v1056 = vpop.f32.mrb[0].mxu0
      %v1057 = vadd.f32 %v324, %v1056
      %v1058 = vpop.f32.mrb[0].mxu0
      %v1059 = vpop.f32.mrb[0].mxu0
      %v1060 = vadd.f32 %v324, %v1059
      %v1061 = vpop.f32.mrb[0].mxu0
      %1062 = vmatprep.mubr.bf16.mxu0 0
      %1063 = vmatmul.mubr.bf16.gmra.mrb[0].mxu0 %v616
      %v1064 = vpop.f32.mrb[0].mxu0
      %v1065 = vadd.f32 %v324, %v1064
      %v1066 = vpop.f32.mrb[0].mxu0
      %v1067 = vpop.f32.mrb[0].mxu0
      %v1068 = vadd.f32 %v324, %v1067
      %v1069 = vpop.f32.mrb[0].mxu0
      %1070 = vmatprep.mubr.bf16.mxu0 0
      %1071 = vmatmul.mubr.bf16.gmra.mrb[0].mxu0 %v617
      %v1072 = vpop.f32.mrb[0].mxu0
      %v1073 = vadd.f32 %v324, %v1072
      %v1074 = vpop.f32.mrb[0].mxu0
      %v1075 = vpop.f32.mrb[0].mxu0
      %v1076 = vadd.f32 %v324, %v1075
      %v1077 = vpop.f32.mrb[0].mxu0
      %1078 = vmatprep.mubr.bf16.mxu0 0
      %1079 = vmatmul.mubr.bf16.gmra.mrb[0].mxu0 %v618
      %v1080 = vpop.f32.mrb[0].mxu0
      %v1081 = vadd.f32 %v324, %v1080
      %v1082 = vpop.f32.mrb[0].mxu0
      %v1083 = vpop.f32.mrb[0].mxu0
      %v1084 = vadd.f32 %v324, %v1083
      %v1085 = vpop.f32.mrb[0].mxu0
      %1086 = vmatprep.mubr.bf16.mxu0 0
      %1087 = vmatmul.mubr.bf16.gmra.mrb[0].mxu0 %v619
      %v1088 = vpop.f32.mrb[0].mxu0
      %v1089 = vadd.f32 %v324, %v1088
      %v1090 = vpop.f32.mrb[0].mxu0
      %v1091 = vpop.f32.mrb[0].mxu0
      %v1092 = vadd.f32 %v324, %v1091
      %v1093 = vpop.f32.mrb[0].mxu0
      %1094 = vmatprep.mubr.bf16.mxu0 0
      %1095 = vmatmul.mubr.bf16.gmra.mrb[0].mxu0 %v620
      %v1096 = vpop.f32.mrb[0].mxu0
      %v1097 = vadd.f32 %v324, %v1096
      %v1098 = vpop.f32.mrb[0].mxu0
      %v1099 = vpop.f32.mrb[0].mxu0
      %v1100 = vadd.f32 %v324, %v1099
      %v1101 = vpop.f32.mrb[0].mxu0
      %1102 = vmatprep.mubr.bf16.mxu0 0
      %1103 = vmatmul.mubr.bf16.gmra.mrb[0].mxu0 %v621
      %v1104 = vpop.f32.mrb[0].mxu0
      %v1105 = vadd.f32 %v324, %v1104
      %v1106 = vpop.f32.mrb[0].mxu0
      %v1107 = vpop.f32.mrb[0].mxu0
      %v1108 = vadd.f32 %v324, %v1107
      %v1109 = vpop.f32.mrb[0].mxu0
      %1110 = vmatprep.mubr.bf16.mxu0 0
      %1111 = vmatmul.mubr.bf16.gmra.mrb[0].mxu0 %v622
      %v1112 = vpop.f32.mrb[0].mxu0
      %v1113 = vadd.f32 %v324, %v1112
      %v1114 = vpop.f32.mrb[0].mxu0
      %v1115 = vpop.f32.mrb[0].mxu0
      %v1116 = vadd.f32 %v324, %v1115
      %v1117 = vpop.f32.mrb[0].mxu0
      %1118 = vmatprep.mubr.bf16.mxu0 0
      %1119 = vmatmul.mubr.bf16.gmra.mrb[0].mxu0 %v623
      %v1120 = vpop.f32.mrb[0].mxu0
      %v1121 = vadd.f32 %v324, %v1120
      %v1122 = vpop.f32.mrb[0].mxu0
      %v1123 = vpop.f32.mrb[0].mxu0
      %v1124 = vadd.f32 %v324, %v1123
      %v1125 = vpop.f32.mrb[0].mxu0
      %1126 = vmatprep.mubr.bf16.mxu0 0
      %1127 = vmatmul.mubr.bf16.gmra.mrb[0].mxu0 %v624
      %v1128 = vpop.f32.mrb[0].mxu0
      %v1129 = vadd.f32 %v324, %v1128
      %v1130 = vpop.f32.mrb[0].mxu0
      %v1131 = vpop.f32.mrb[0].mxu0
      %v1132 = vadd.f32 %v324, %v1131
      %v1133 = vpop.f32.mrb[0].mxu0
      %1134 = vmatprep.mubr.bf16.mxu0 0
      %1135 = vmatmul.mubr.bf16.gmra.mrb[0].mxu0 %v625
      %v1136 = vpop.f32.mrb[0].mxu0
      %v1137 = vadd.f32 %v324, %v1136
      %v1138 = vpop.f32.mrb[0].mxu0
      %v1139 = vpop.f32.mrb[0].mxu0
      %v1140 = vadd.f32 %v324, %v1139
      %v1141 = vpop.f32.mrb[0].mxu0
      %1142 = vmatprep.mubr.bf16.mxu0 0
      %1143 = vmatmul.mubr.bf16.gmra.mrb[0].mxu0 %v626
      %v1144 = vpop.f32.mrb[0].mxu0
      %v1145 = vadd.f32 %v324, %v1144
      %v1146 = vpop.f32.mrb[0].mxu0
      %v1147 = vpop.f32.mrb[0].mxu0
      %v1148 = vadd.f32 %v324, %v1147
      %v1149 = vpop.f32.mrb[0].mxu0
      %1150 = vmatprep.mubr.bf16.mxu0 0
      %1151 = vmatmul.mubr.bf16.gmra.mrb[0].mxu0 %v627
      %v1152 = vpop.f32.mrb[0].mxu0
      %v1153 = vadd.f32 %v324, %v1152
      %v1154 = vpop.f32.mrb[0].mxu0
      %v1155 = vpop.f32.mrb[0].mxu0
      %v1156 = vadd.f32 %v324, %v1155
      %v1157 = vpop.f32.mrb[0].mxu0
      %1158 = vmatprep.mubr.bf16.mxu0 0
      %1159 = vmatmul.mubr.bf16.gmra.mrb[0].mxu0 %v628
      %v1160 = vpop.f32.mrb[0].mxu0
      %v1161 = vadd.f32 %v324, %v1160
      %v1162 = vpop.f32.mrb[0].mxu0
      %v1163 = vpop.f32.mrb[0].mxu0
      %v1164 = vadd.f32 %v324, %v1163
      %v1165 = vpop.f32.mrb[0].mxu0
      %1166 = vmatprep.mubr.bf16.mxu0 0
      %1167 = vmatmul.mubr.bf16.gmra.mrb[0].mxu0 %v629
      %v1168 = vpop.f32.mrb[0].mxu0
      %v1169 = vadd.f32 %v324, %v1168
      %v1170 = vpop.f32.mrb[0].mxu0
      %v1171 = vpop.f32.mrb[0].mxu0
      %v1172 = vadd.f32 %v324, %v1171
      %v1173 = vpop.f32.mrb[0].mxu0
      %1174 = vmatprep.mubr.bf16.mxu0 0
      %1175 = vmatmul.mubr.bf16.gmra.mrb[0].mxu0 %v630
      %v1176 = vpop.f32.mrb[0].mxu0
      %v1177 = vadd.f32 %v324, %v1176
      %v1178 = vpop.f32.mrb[0].mxu0
      %v1179 = vpop.f32.mrb[0].mxu0
      %v1180 = vadd.f32 %v324, %v1179
      %v1181 = vpop.f32.mrb[0].mxu0
      %1182 = vmatprep.mubr.bf16.mxu0 0
      %1183 = vmatmul.mubr.bf16.gmra.mrb[0].mxu0 %v631
      %v1184 = vpop.f32.mrb[0].mxu0
      %v1185 = vadd.f32 %v324, %v1184
      %v1186 = vpop.f32.mrb[0].mxu0
      %v1187 = vpop.f32.mrb[0].mxu0
      %v1188 = vadd.f32 %v324, %v1187
      %v1189 = vpop.f32.mrb[0].mxu0
      %1190 = vmatprep.mubr.bf16.mxu0 0
      %1191 = vmatmul.mubr.bf16.gmra.mrb[0].mxu0 %v632
      %v1192 = vpop.f32.mrb[0].mxu0
      %v1193 = vadd.f32 %v324, %v1192
      %v1194 = vpop.f32.mrb[0].mxu0
      %v1195 = vpop.f32.mrb[0].mxu0
      %v1196 = vadd.f32 %v324, %v1195
      %v1197 = vpop.f32.mrb[0].mxu0
      %1198 = vmatprep.mubr.bf16.mxu0 0
      %1199 = vmatmul.mubr.bf16.gmra.mrb[0].mxu0 %v633
      %v1200 = vpop.f32.mrb[0].mxu0
      %v1201 = vadd.f32 %v324, %v1200
      %v1202 = vpop.f32.mrb[0].mxu0
      %v1203 = vpop.f32.mrb[0].mxu0
      %v1204 = vadd.f32 %v324, %v1203
      %v1205 = vpop.f32.mrb[0].mxu0
      %1206 = vmatprep.mubr.bf16.mxu0 0
      %1207 = vmatmul.mubr.bf16.gmra.mrb[0].mxu0 %v634
      %v1208 = vpop.f32.mrb[0].mxu0
      %v1209 = vadd.f32 %v324, %v1208
      %v1210 = vpop.f32.mrb[0].mxu0
      %v1211 = vpop.f32.mrb[0].mxu0
      %v1212 = vadd.f32 %v324, %v1211
      %v1213 = vpop.f32.mrb[0].mxu0
      %1214 = vmatprep.mubr.bf16.mxu0 0
      %1215 = vmatmul.mubr.bf16.gmra.mrb[0].mxu0 %v635
      %v1216 = vpop.f32.mrb[0].mxu0
      %v1217 = vadd.f32 %v324, %v1216
      %v1218 = vpop.f32.mrb[0].mxu0
      %v1219 = vpop.f32.mrb[0].mxu0
      %v1220 = vadd.f32 %v324, %v1219
      %v1221 = vpop.f32.mrb[0].mxu0
      %1222 = vmatprep.mubr.bf16.mxu0 0
      %1223 = vmatmul.mubr.bf16.gmra.mrb[0].mxu0 %v636
      %v1224 = vpop.f32.mrb[0].mxu0
      %v1225 = vadd.f32 %v324, %v1224
      %v1226 = vpop.f32.mrb[0].mxu0
      %v1227 = vpop.f32.mrb[0].mxu0
      %v1228 = vadd.f32 %v324, %v1227
      %v1229 = vpop.f32.mrb[0].mxu0
      %1230 = vmatprep.mubr.bf16.mxu0 0
      %1231 = vmatmul.mubr.bf16.gmra.mrb[0].mxu0 %v637
      %v1232 = vpop.f32.mrb[0].mxu0
      %v1233 = vadd.f32 %v324, %v1232
      %v1234 = vpop.f32.mrb[0].mxu0
      %v1235 = vpop.f32.mrb[0].mxu0
      %v1236 = vadd.f32 %v324, %v1235
      %v1237 = vpop.f32.mrb[0].mxu0
      %1238 = vmatprep.mubr.bf16.mxu0 0
      %1239 = vmatmul.mubr.bf16.gmra.mrb[0].mxu0 %v638
      %v1240 = vpop.f32.mrb[0].mxu0
      %v1241 = vadd.f32 %v324, %v1240
      %v1242 = vpop.f32.mrb[0].mxu0
      %v1243 = vpop.f32.mrb[0].mxu0
      %v1244 = vadd.f32 %v324, %v1243
      %v1245 = vpop.f32.mrb[0].mxu0
      %1246 = vmatprep.mubr.bf16.mxu0 0
      %1247 = vmatmul.mubr.bf16.gmra.mrb[0].mxu0 %v639
      %v1248 = vpop.f32.mrb[0].mxu0
      %v1249 = vadd.f32 %v324, %v1248
      %v1250 = vpop.f32.mrb[0].mxu0
      %v1251 = vpop.f32.mrb[0].mxu0
      %v1252 = vadd.f32 %v324, %v1251
      %v1253 = vpop.f32.mrb[0].mxu0
      %1254 = vmatprep.mubr.bf16.mxu0 0
      %1255 = vmatmul.mubr.bf16.gmra.mrb[0].mxu0 %v640
      %v1256 = vpop.f32.mrb[0].mxu0
      %v1257 = vadd.f32 %v324, %v1256
      %v1258 = vpop.f32.mrb[0].mxu0
      %v1259 = vpop.f32.mrb[0].mxu0
      %v1260 = vadd.f32 %v324, %v1259
      %v1261 = vpop.f32.mrb[0].mxu0
      %1262 = vmatprep.mubr.bf16.mxu0 0
      %1263 = vmatmul.mubr.bf16.gmra.mrb[0].mxu0 %v641
      %v1264 = vpop.f32.mrb[0].mxu0
      %v1265 = vadd.f32 %v324, %v1264
      %v1266 = vpop.f32.mrb[0].mxu0
      %v1267 = vpop.f32.mrb[0].mxu0
      %v1268 = vadd.f32 %v324, %v1267
      %v1269 = vpop.f32.mrb[0].mxu0
      %1270 = vmatprep.mubr.bf16.mxu0 0
      %1271 = vmatmul.mubr.bf16.gmra.mrb[0].mxu0 %v642
      %v1272 = vpop.f32.mrb[0].mxu0
      %v1273 = vadd.f32 %v324, %v1272
      %v1274 = vpop.f32.mrb[0].mxu0
      %v1275 = vpop.f32.mrb[0].mxu0
      %v1276 = vadd.f32 %v324, %v1275
      %v1277 = vpop.f32.mrb[0].mxu0
      %1278 = vmatprep.mubr.bf16.mxu0 0
      %1279 = vmatmul.mubr.bf16.gmra.mrb[0].mxu0 %v643
      %v1280 = vpop.f32.mrb[0].mxu0
      %v1281 = vadd.f32 %v324, %v1280
      %v1282 = vpop.f32.mrb[0].mxu0
      %v1283 = vpop.f32.mrb[0].mxu0
      %v1284 = vadd.f32 %v324, %v1283
      %v1285 = vpop.f32.mrb[0].mxu0
      %1286 = vmatprep.mubr.bf16.mxu0 0
      %1287 = vmatmul.mubr.bf16.gmra.mrb[0].mxu0 %v644
      %v1288 = vpop.f32.mrb[0].mxu0
      %v1289 = vadd.f32 %v324, %v1288
      %v1290 = vpop.f32.mrb[0].mxu0
      %v1291 = vpop.f32.mrb[0].mxu0
      %v1292 = vadd.f32 %v324, %v1291
      %v1293 = vpop.f32.mrb[0].mxu0
      %1294 = vmatprep.mubr.bf16.mxu0 0
      %1295 = vmatmul.mubr.bf16.gmra.mrb[0].mxu0 %v645
      %v1296 = vpop.f32.mrb[0].mxu0
      %v1297 = vadd.f32 %v324, %v1296
      %v1298 = vpop.f32.mrb[0].mxu0
      %v1299 = vpop.f32.mrb[0].mxu0
      %v1300 = vadd.f32 %v324, %v1299
      %v1301 = vpop.f32.mrb[0].mxu0
      %1302 = vdwg.mxu0
      %vm1303 = vcmp.gt.f32.partialorder %v793, 0.0
      %vm1304 = vcmp.gt.f32.partialorder %v796, 0.0
      %vm1305 = vcmp.gt.f32.partialorder %v801, 0.0
      %vm1306 = vcmp.gt.f32.partialorder %v804, 0.0
      %vm1307 = vcmp.gt.f32.partialorder %v809, 0.0
      %vm1308 = vcmp.gt.f32.partialorder %v812, 0.0
      %vm1309 = vcmp.gt.f32.partialorder %v817, 0.0
      %vm1310 = vcmp.gt.f32.partialorder %v820, 0.0
      %vm1311 = vcmp.gt.f32.partialorder %v825, 0.0
      %vm1312 = vcmp.gt.f32.partialorder %v828, 0.0
      %vm1313 = vcmp.gt.f32.partialorder %v833, 0.0
      %vm1314 = vcmp.gt.f32.partialorder %v836, 0.0
      %vm1315 = vcmp.gt.f32.partialorder %v841, 0.0
      %vm1316 = vcmp.gt.f32.partialorder %v844, 0.0
      %vm1317 = vcmp.gt.f32.partialorder %v849, 0.0
      %vm1318 = vcmp.gt.f32.partialorder %v852, 0.0
      %vm1319 = vcmp.gt.f32.partialorder %v857, 0.0
      %vm1320 = vcmp.gt.f32.partialorder %v860, 0.0
      %vm1321 = vcmp.gt.f32.partialorder %v865, 0.0
      %vm1322 = vcmp.gt.f32.partialorder %v868, 0.0
      %vm1323 = vcmp.gt.f32.partialorder %v873, 0.0
      %vm1324 = vcmp.gt.f32.partialorder %v876, 0.0
      %vm1325 = vcmp.gt.f32.partialorder %v881, 0.0
      %vm1326 = vcmp.gt.f32.partialorder %v884, 0.0
      %vm1327 = vcmp.gt.f32.partialorder %v889, 0.0
      %vm1328 = vcmp.gt.f32.partialorder %v892, 0.0
      %vm1329 = vcmp.gt.f32.partialorder %v897, 0.0
      %vm1330 = vcmp.gt.f32.partialorder %v900, 0.0
      %vm1331 = vcmp.gt.f32.partialorder %v905, 0.0
      %vm1332 = vcmp.gt.f32.partialorder %v908, 0.0
      %vm1333 = vcmp.gt.f32.partialorder %v913, 0.0
      %vm1334 = vcmp.gt.f32.partialorder %v916, 0.0
      %vm1335 = vcmp.gt.f32.partialorder %v921, 0.0
      %vm1336 = vcmp.gt.f32.partialorder %v924, 0.0
      %vm1337 = vcmp.gt.f32.partialorder %v929, 0.0
      %vm1338 = vcmp.gt.f32.partialorder %v932, 0.0
      %vm1339 = vcmp.gt.f32.partialorder %v937, 0.0
      %vm1340 = vcmp.gt.f32.partialorder %v940, 0.0
      %vm1341 = vcmp.gt.f32.partialorder %v945, 0.0
      %vm1342 = vcmp.gt.f32.partialorder %v948, 0.0
      %vm1343 = vcmp.gt.f32.partialorder %v953, 0.0
      %vm1344 = vcmp.gt.f32.partialorder %v956, 0.0
      %vm1345 = vcmp.gt.f32.partialorder %v961, 0.0
      %vm1346 = vcmp.gt.f32.partialorder %v964, 0.0
      %vm1347 = vcmp.gt.f32.partialorder %v969, 0.0
      %vm1348 = vcmp.gt.f32.partialorder %v972, 0.0
      %vm1349 = vcmp.gt.f32.partialorder %v977, 0.0
      %vm1350 = vcmp.gt.f32.partialorder %v980, 0.0
      %vm1351 = vcmp.gt.f32.partialorder %v985, 0.0
      %vm1352 = vcmp.gt.f32.partialorder %v988, 0.0
      %vm1353 = vcmp.gt.f32.partialorder %v993, 0.0
      %vm1354 = vcmp.gt.f32.partialorder %v996, 0.0
      %vm1355 = vcmp.gt.f32.partialorder %v1001, 0.0
      %vm1356 = vcmp.gt.f32.partialorder %v1004, 0.0
      %vm1357 = vcmp.gt.f32.partialorder %v1009, 0.0
      %vm1358 = vcmp.gt.f32.partialorder %v1012, 0.0
      %vm1359 = vcmp.gt.f32.partialorder %v1017, 0.0
      %vm1360 = vcmp.gt.f32.partialorder %v1020, 0.0
      %vm1361 = vcmp.gt.f32.partialorder %v1025, 0.0
      %vm1362 = vcmp.gt.f32.partialorder %v1028, 0.0
      %vm1363 = vcmp.gt.f32.partialorder %v1033, 0.0
      %vm1364 = vcmp.gt.f32.partialorder %v1036, 0.0
      %vm1365 = vcmp.gt.f32.partialorder %v1041, 0.0
      %vm1366 = vcmp.gt.f32.partialorder %v1044, 0.0
      %vm1367 = vcmp.gt.f32.partialorder %v1049, 0.0
      %vm1368 = vcmp.gt.f32.partialorder %v1052, 0.0
      %vm1369 = vcmp.gt.f32.partialorder %v1057, 0.0
      %vm1370 = vcmp.gt.f32.partialorder %v1060, 0.0
      %vm1371 = vcmp.gt.f32.partialorder %v1065, 0.0
      %vm1372 = vcmp.gt.f32.partialorder %v1068, 0.0
      %vm1373 = vcmp.gt.f32.partialorder %v1073, 0.0
      %vm1374 = vcmp.gt.f32.partialorder %v1076, 0.0
      %vm1375 = vcmp.gt.f32.partialorder %v1081, 0.0
      %vm1376 = vcmp.gt.f32.partialorder %v1084, 0.0
      %vm1377 = vcmp.gt.f32.partialorder %v1089, 0.0
      %vm1378 = vcmp.gt.f32.partialorder %v1092, 0.0
      %vm1379 = vcmp.gt.f32.partialorder %v1097, 0.0
      %vm1380 = vcmp.gt.f32.partialorder %v1100, 0.0
      %vm1381 = vcmp.gt.f32.partialorder %v1105, 0.0
      %vm1382 = vcmp.gt.f32.partialorder %v1108, 0.0
      %vm1383 = vcmp.gt.f32.partialorder %v1113, 0.0
      %vm1384 = vcmp.gt.f32.partialorder %v1116, 0.0
      %vm1385 = vcmp.gt.f32.partialorder %v1121, 0.0
      %vm1386 = vcmp.gt.f32.partialorder %v1124, 0.0
      %vm1387 = vcmp.gt.f32.partialorder %v1129, 0.0
      %vm1388 = vcmp.gt.f32.partialorder %v1132, 0.0
      %vm1389 = vcmp.gt.f32.partialorder %v1137, 0.0
      %vm1390 = vcmp.gt.f32.partialorder %v1140, 0.0
      %vm1391 = vcmp.gt.f32.partialorder %v1145, 0.0
      %vm1392 = vcmp.gt.f32.partialorder %v1148, 0.0
      %vm1393 = vcmp.gt.f32.partialorder %v1153, 0.0
      %vm1394 = vcmp.gt.f32.partialorder %v1156, 0.0
      %vm1395 = vcmp.gt.f32.partialorder %v1161, 0.0
      %vm1396 = vcmp.gt.f32.partialorder %v1164, 0.0
      %vm1397 = vcmp.gt.f32.partialorder %v1169, 0.0
      %vm1398 = vcmp.gt.f32.partialorder %v1172, 0.0
      %vm1399 = vcmp.gt.f32.partialorder %v1177, 0.0
      %vm1400 = vcmp.gt.f32.partialorder %v1180, 0.0
      %vm1401 = vcmp.gt.f32.partialorder %v1185, 0.0
      %vm1402 = vcmp.gt.f32.partialorder %v1188, 0.0
      %vm1403 = vcmp.gt.f32.partialorder %v1193, 0.0
      %vm1404 = vcmp.gt.f32.partialorder %v1196, 0.0
      %vm1405 = vcmp.gt.f32.partialorder %v1201, 0.0
      %vm1406 = vcmp.gt.f32.partialorder %v1204, 0.0
      %vm1407 = vcmp.gt.f32.partialorder %v1209, 0.0
      %vm1408 = vcmp.gt.f32.partialorder %v1212, 0.0
      %vm1409 = vcmp.gt.f32.partialorder %v1217, 0.0
      %vm1410 = vcmp.gt.f32.partialorder %v1220, 0.0
      %vm1411 = vcmp.gt.f32.partialorder %v1225, 0.0
      %vm1412 = vcmp.gt.f32.partialorder %v1228, 0.0
      %vm1413 = vcmp.gt.f32.partialorder %v1233, 0.0
      %vm1414 = vcmp.gt.f32.partialorder %v1236, 0.0
      %vm1415 = vcmp.gt.f32.partialorder %v1241, 0.0
      %vm1416 = vcmp.gt.f32.partialorder %v1244, 0.0
      %vm1417 = vcmp.gt.f32.partialorder %v1249, 0.0
      %vm1418 = vcmp.gt.f32.partialorder %v1252, 0.0
      %vm1419 = vcmp.gt.f32.partialorder %v1257, 0.0
      %vm1420 = vcmp.gt.f32.partialorder %v1260, 0.0
      %vm1421 = vcmp.gt.f32.partialorder %v1265, 0.0
      %vm1422 = vcmp.gt.f32.partialorder %v1268, 0.0
      %vm1423 = vcmp.gt.f32.partialorder %v1273, 0.0
      %vm1424 = vcmp.gt.f32.partialorder %v1276, 0.0
      %vm1425 = vcmp.gt.f32.partialorder %v1281, 0.0
      %vm1426 = vcmp.gt.f32.partialorder %v1284, 0.0
      %vm1427 = vcmp.gt.f32.partialorder %v1289, 0.0
      %vm1428 = vcmp.gt.f32.partialorder %v1292, 0.0
      %vm1429 = vcmp.gt.f32.partialorder %v1297, 0.0
      %vm1430 = vcmp.gt.f32.partialorder %v1300, 0.0
      %v1431 = vmin.f32 %v793, 0.0
      %v1432 = vmin.f32 %v796, 0.0
      %v1433 = vmin.f32 %v801, 0.0
      %v1434 = vmin.f32 %v804, 0.0
      %v1435 = vmin.f32 %v809, 0.0
      %v1436 = vmin.f32 %v812, 0.0
      %v1437 = vmin.f32 %v817, 0.0
      %v1438 = vmin.f32 %v820, 0.0
      %v1439 = vmin.f32 %v825, 0.0
      %v1440 = vmin.f32 %v828, 0.0
      %v1441 = vmin.f32 %v833, 0.0
      %v1442 = vmin.f32 %v836, 0.0
      %v1443 = vmin.f32 %v841, 0.0
      %v1444 = vmin.f32 %v844, 0.0
      %v1445 = vmin.f32 %v849, 0.0
      %v1446 = vmin.f32 %v852, 0.0
      %v1447 = vmin.f32 %v857, 0.0
      %v1448 = vmin.f32 %v860, 0.0
      %v1449 = vmin.f32 %v865, 0.0
      %v1450 = vmin.f32 %v868, 0.0
      %v1451 = vmin.f32 %v873, 0.0
      %v1452 = vmin.f32 %v876, 0.0
      %v1453 = vmin.f32 %v881, 0.0
      %v1454 = vmin.f32 %v884, 0.0
      %v1455 = vmin.f32 %v889, 0.0
      %v1456 = vmin.f32 %v892, 0.0
      %v1457 = vmin.f32 %v897, 0.0
      %v1458 = vmin.f32 %v900, 0.0
      %v1459 = vmin.f32 %v905, 0.0
      %v1460 = vmin.f32 %v908, 0.0
      %v1461 = vmin.f32 %v913, 0.0
      %v1462 = vmin.f32 %v916, 0.0
      %v1463 = vmin.f32 %v921, 0.0
      %v1464 = vmin.f32 %v924, 0.0
      %v1465 = vmin.f32 %v929, 0.0
      %v1466 = vmin.f32 %v932, 0.0
      %v1467 = vmin.f32 %v937, 0.0
      %v1468 = vmin.f32 %v940, 0.0
      %v1469 = vmin.f32 %v945, 0.0
      %v1470 = vmin.f32 %v948, 0.0
      %v1471 = vmin.f32 %v953, 0.0
      %v1472 = vmin.f32 %v956, 0.0
      %v1473 = vmin.f32 %v961, 0.0
      %v1474 = vmin.f32 %v964, 0.0
      %v1475 = vmin.f32 %v969, 0.0
      %v1476 = vmin.f32 %v972, 0.0
      %v1477 = vmin.f32 %v977, 0.0
      %v1478 = vmin.f32 %v980, 0.0
      %v1479 = vmin.f32 %v985, 0.0
      %v1480 = vmin.f32 %v988, 0.0
      %v1481 = vmin.f32 %v993, 0.0
      %v1482 = vmin.f32 %v996, 0.0
      %v1483 = vmin.f32 %v1001, 0.0
      %v1484 = vmin.f32 %v1004, 0.0
      %v1485 = vmin.f32 %v1009, 0.0
      %v1486 = vmin.f32 %v1012, 0.0
      %v1487 = vmin.f32 %v1017, 0.0
      %v1488 = vmin.f32 %v1020, 0.0
      %v1489 = vmin.f32 %v1025, 0.0
      %v1490 = vmin.f32 %v1028, 0.0
      %v1491 = vmin.f32 %v1033, 0.0
      %v1492 = vmin.f32 %v1036, 0.0
      %v1493 = vmin.f32 %v1041, 0.0
      %v1494 = vmin.f32 %v1044, 0.0
      %v1495 = vmin.f32 %v1049, 0.0
      %v1496 = vmin.f32 %v1052, 0.0
      %v1497 = vmin.f32 %v1057, 0.0
      %v1498 = vmin.f32 %v1060, 0.0
      %v1499 = vmin.f32 %v1065, 0.0
      %v1500 = vmin.f32 %v1068, 0.0
      %v1501 = vmin.f32 %v1073, 0.0
      %v1502 = vmin.f32 %v1076, 0.0
      %v1503 = vmin.f32 %v1081, 0.0
      %v1504 = vmin.f32 %v1084, 0.0
      %v1505 = vmin.f32 %v1089, 0.0
      %v1506 = vmin.f32 %v1092, 0.0
      %v1507 = vmin.f32 %v1097, 0.0
      %v1508 = vmin.f32 %v1100, 0.0
      %v1509 = vmin.f32 %v1105, 0.0
      %v1510 = vmin.f32 %v1108, 0.0
      %v1511 = vmin.f32 %v1113, 0.0
      %v1512 = vmin.f32 %v1116, 0.0
      %v1513 = vmin.f32 %v1121, 0.0
      %v1514 = vmin.f32 %v1124, 0.0
      %v1515 = vmin.f32 %v1129, 0.0
      %v1516 = vmin.f32 %v1132, 0.0
      %v1517 = vmin.f32 %v1137, 0.0
      %v1518 = vmin.f32 %v1140, 0.0
      %v1519 = vmin.f32 %v1145, 0.0
      %v1520 = vmin.f32 %v1148, 0.0
      %v1521 = vmin.f32 %v1153, 0.0
      %v1522 = vmin.f32 %v1156, 0.0
      %v1523 = vmin.f32 %v1161, 0.0
      %v1524 = vmin.f32 %v1164, 0.0
      %v1525 = vmin.f32 %v1169, 0.0
      %v1526 = vmin.f32 %v1172, 0.0
      %v1527 = vmin.f32 %v1177, 0.0
      %v1528 = vmin.f32 %v1180, 0.0
      %v1529 = vmin.f32 %v1185, 0.0
      %v1530 = vmin.f32 %v1188, 0.0
      %v1531 = vmin.f32 %v1193, 0.0
      %v1532 = vmin.f32 %v1196, 0.0
      %v1533 = vmin.f32 %v1201, 0.0
      %v1534 = vmin.f32 %v1204, 0.0
      %v1535 = vmin.f32 %v1209, 0.0
      %v1536 = vmin.f32 %v1212, 0.0
      %v1537 = vmin.f32 %v1217, 0.0
      %v1538 = vmin.f32 %v1220, 0.0
      %v1539 = vmin.f32 %v1225, 0.0
      %v1540 = vmin.f32 %v1228, 0.0
      %v1541 = vmin.f32 %v1233, 0.0
      %v1542 = vmin.f32 %v1236, 0.0
      %v1543 = vmin.f32 %v1241, 0.0
      %v1544 = vmin.f32 %v1244, 0.0
      %v1545 = vmin.f32 %v1249, 0.0
      %v1546 = vmin.f32 %v1252, 0.0
      %v1547 = vmin.f32 %v1257, 0.0
      %v1548 = vmin.f32 %v1260, 0.0
      %v1549 = vmin.f32 %v1265, 0.0
      %v1550 = vmin.f32 %v1268, 0.0
      %v1551 = vmin.f32 %v1273, 0.0
      %v1552 = vmin.f32 %v1276, 0.0
      %v1553 = vmin.f32 %v1281, 0.0
      %v1554 = vmin.f32 %v1284, 0.0
      %v1555 = vmin.f32 %v1289, 0.0
      %v1556 = vmin.f32 %v1292, 0.0
      %v1557 = vmin.f32 %v1297, 0.0
      %v1558 = vmin.f32 %v1300, 0.0
      %v1559 = vmul.f32 %v1431, 1.442695
      %v1560 = vpow.pop %v1559
      %v1561 = vmul.f32 %v1432, 1.442695
      %v1562 = vpow.pop %v1561
      %v1563 = vmul.f32 %v1433, 1.442695
      %v1564 = vpow.pop %v1563
      %v1565 = vmul.f32 %v1434, 1.442695
      %v1566 = vpow.pop %v1565
      %v1567 = vmul.f32 %v1435, 1.442695
      %v1568 = vpow.pop %v1567
      %v1569 = vmul.f32 %v1436, 1.442695
      %v1570 = vpow.pop %v1569
      %v1571 = vmul.f32 %v1437, 1.442695
      %v1572 = vpow.pop %v1571
      %v1573 = vmul.f32 %v1438, 1.442695
      %v1574 = vpow.pop %v1573
      %v1575 = vmul.f32 %v1439, 1.442695
      %v1576 = vpow.pop %v1575
      %v1577 = vmul.f32 %v1440, 1.442695
      %v1578 = vpow.pop %v1577
      %v1579 = vmul.f32 %v1441, 1.442695
      %v1580 = vpow.pop %v1579
      %v1581 = vmul.f32 %v1442, 1.442695
      %v1582 = vpow.pop %v1581
      %v1583 = vmul.f32 %v1443, 1.442695
      %v1584 = vpow.pop %v1583
      %v1585 = vmul.f32 %v1444, 1.442695
      %v1586 = vpow.pop %v1585
      %v1587 = vmul.f32 %v1445, 1.442695
      %v1588 = vpow.pop %v1587
      %v1589 = vmul.f32 %v1446, 1.442695
      %v1590 = vpow.pop %v1589
      %v1591 = vmul.f32 %v1447, 1.442695
      %v1592 = vpow.pop %v1591
      %v1593 = vmul.f32 %v1448, 1.442695
      %v1594 = vpow.pop %v1593
      %v1595 = vmul.f32 %v1449, 1.442695
      %v1596 = vpow.pop %v1595
      %v1597 = vmul.f32 %v1450, 1.442695
      %v1598 = vpow.pop %v1597
      %v1599 = vmul.f32 %v1451, 1.442695
      %v1600 = vpow.pop %v1599
      %v1601 = vmul.f32 %v1452, 1.442695
      %v1602 = vpow.pop %v1601
      %v1603 = vmul.f32 %v1453, 1.442695
      %v1604 = vpow.pop %v1603
      %v1605 = vmul.f32 %v1454, 1.442695
      %v1606 = vpow.pop %v1605
      %v1607 = vmul.f32 %v1455, 1.442695
      %v1608 = vpow.pop %v1607
      %v1609 = vmul.f32 %v1456, 1.442695
      %v1610 = vpow.pop %v1609
      %v1611 = vmul.f32 %v1457, 1.442695
      %v1612 = vpow.pop %v1611
      %v1613 = vmul.f32 %v1458, 1.442695
      %v1614 = vpow.pop %v1613
      %v1615 = vmul.f32 %v1459, 1.442695
      %v1616 = vpow.pop %v1615
      %v1617 = vmul.f32 %v1460, 1.442695
      %v1618 = vpow.pop %v1617
      %v1619 = vmul.f32 %v1461, 1.442695
      %v1620 = vpow.pop %v1619
      %v1621 = vmul.f32 %v1462, 1.442695
      %v1622 = vpow.pop %v1621
      %v1623 = vmul.f32 %v1463, 1.442695
      %v1624 = vpow.pop %v1623
      %v1625 = vmul.f32 %v1464, 1.442695
      %v1626 = vpow.pop %v1625
      %v1627 = vmul.f32 %v1465, 1.442695
      %v1628 = vpow.pop %v1627
      %v1629 = vmul.f32 %v1466, 1.442695
      %v1630 = vpow.pop %v1629
      %v1631 = vmul.f32 %v1467, 1.442695
      %v1632 = vpow.pop %v1631
      %v1633 = vmul.f32 %v1468, 1.442695
      %v1634 = vpow.pop %v1633
      %v1635 = vmul.f32 %v1469, 1.442695
      %v1636 = vpow.pop %v1635
      %v1637 = vmul.f32 %v1470, 1.442695
      %v1638 = vpow.pop %v1637
      %v1639 = vmul.f32 %v1471, 1.442695
      %v1640 = vpow.pop %v1639
      %v1641 = vmul.f32 %v1472, 1.442695
      %v1642 = vpow.pop %v1641
      %v1643 = vmul.f32 %v1473, 1.442695
      %v1644 = vpow.pop %v1643
      %v1645 = vmul.f32 %v1474, 1.442695
      %v1646 = vpow.pop %v1645
      %v1647 = vmul.f32 %v1475, 1.442695
      %v1648 = vpow.pop %v1647
      %v1649 = vmul.f32 %v1476, 1.442695
      %v1650 = vpow.pop %v1649
      %v1651 = vmul.f32 %v1477, 1.442695
      %v1652 = vpow.pop %v1651
      %v1653 = vmul.f32 %v1478, 1.442695
      %v1654 = vpow.pop %v1653
      %v1655 = vmul.f32 %v1479, 1.442695
      %v1656 = vpow.pop %v1655
      %v1657 = vmul.f32 %v1480, 1.442695
      %v1658 = vpow.pop %v1657
      %v1659 = vmul.f32 %v1481, 1.442695
      %v1660 = vpow.pop %v1659
      %v1661 = vmul.f32 %v1482, 1.442695
      %v1662 = vpow.pop %v1661
      %v1663 = vmul.f32 %v1483, 1.442695
      %v1664 = vpow.pop %v1663
      %v1665 = vmul.f32 %v1484, 1.442695
      %v1666 = vpow.pop %v1665
      %v1667 = vmul.f32 %v1485, 1.442695
      %v1668 = vpow.pop %v1667
      %v1669 = vmul.f32 %v1486, 1.442695
      %v1670 = vpow.pop %v1669
      %v1671 = vmul.f32 %v1487, 1.442695
      %v1672 = vpow.pop %v1671
      %v1673 = vmul.f32 %v1488, 1.442695
      %v1674 = vpow.pop %v1673
      %v1675 = vmul.f32 %v1489, 1.442695
      %v1676 = vpow.pop %v1675
      %v1677 = vmul.f32 %v1490, 1.442695
      %v1678 = vpow.pop %v1677
      %v1679 = vmul.f32 %v1491, 1.442695
      %v1680 = vpow.pop %v1679
      %v1681 = vmul.f32 %v1492, 1.442695
      %v1682 = vpow.pop %v1681
      %v1683 = vmul.f32 %v1493, 1.442695
      %v1684 = vpow.pop %v1683
      %v1685 = vmul.f32 %v1494, 1.442695
      %v1686 = vpow.pop %v1685
      %v1687 = vmul.f32 %v1495, 1.442695
      %v1688 = vpow.pop %v1687
      %v1689 = vmul.f32 %v1496, 1.442695
      %v1690 = vpow.pop %v1689
      %v1691 = vmul.f32 %v1497, 1.442695
      %v1692 = vpow.pop %v1691
      %v1693 = vmul.f32 %v1498, 1.442695
      %v1694 = vpow.pop %v1693
      %v1695 = vmul.f32 %v1499, 1.442695
      %v1696 = vpow.pop %v1695
      %v1697 = vmul.f32 %v1500, 1.442695
      %v1698 = vpow.pop %v1697
      %v1699 = vmul.f32 %v1501, 1.442695
      %v1700 = vpow.pop %v1699
      %v1701 = vmul.f32 %v1502, 1.442695
      %v1702 = vpow.pop %v1701
      %v1703 = vmul.f32 %v1503, 1.442695
      %v1704 = vpow.pop %v1703
      %v1705 = vmul.f32 %v1504, 1.442695
      %v1706 = vpow.pop %v1705
      %v1707 = vmul.f32 %v1505, 1.442695
      %v1708 = vpow.pop %v1707
      %v1709 = vmul.f32 %v1506, 1.442695
      %v1710 = vpow.pop %v1709
      %v1711 = vmul.f32 %v1507, 1.442695
      %v1712 = vpow.pop %v1711
      %v1713 = vmul.f32 %v1508, 1.442695
      %v1714 = vpow.pop %v1713
      %v1715 = vmul.f32 %v1509, 1.442695
      %v1716 = vpow.pop %v1715
      %v1717 = vmul.f32 %v1510, 1.442695
      %v1718 = vpow.pop %v1717
      %v1719 = vmul.f32 %v1511, 1.442695
      %v1720 = vpow.pop %v1719
      %v1721 = vmul.f32 %v1512, 1.442695
      %v1722 = vpow.pop %v1721
      %v1723 = vmul.f32 %v1513, 1.442695
      %v1724 = vpow.pop %v1723
      %v1725 = vmul.f32 %v1514, 1.442695
      %v1726 = vpow.pop %v1725
      %v1727 = vmul.f32 %v1515, 1.442695
      %v1728 = vpow.pop %v1727
      %v1729 = vmul.f32 %v1516, 1.442695
      %v1730 = vpow.pop %v1729
      %v1731 = vmul.f32 %v1517, 1.442695
      %v1732 = vpow.pop %v1731
      %v1733 = vmul.f32 %v1518, 1.442695
      %v1734 = vpow.pop %v1733
      %v1735 = vmul.f32 %v1519, 1.442695
      %v1736 = vpow.pop %v1735
      %v1737 = vmul.f32 %v1520, 1.442695
      %v1738 = vpow.pop %v1737
      %v1739 = vmul.f32 %v1521, 1.442695
      %v1740 = vpow.pop %v1739
      %v1741 = vmul.f32 %v1522, 1.442695
      %v1742 = vpow.pop %v1741
      %v1743 = vmul.f32 %v1523, 1.442695
      %v1744 = vpow.pop %v1743
      %v1745 = vmul.f32 %v1524, 1.442695
      %v1746 = vpow.pop %v1745
      %v1747 = vmul.f32 %v1525, 1.442695
      %v1748 = vpow.pop %v1747
      %v1749 = vmul.f32 %v1526, 1.442695
      %v1750 = vpow.pop %v1749
      %v1751 = vmul.f32 %v1527, 1.442695
      %v1752 = vpow.pop %v1751
      %v1753 = vmul.f32 %v1528, 1.442695
      %v1754 = vpow.pop %v1753
      %v1755 = vmul.f32 %v1529, 1.442695
      %v1756 = vpow.pop %v1755
      %v1757 = vmul.f32 %v1530, 1.442695
      %v1758 = vpow.pop %v1757
      %v1759 = vmul.f32 %v1531, 1.442695
      %v1760 = vpow.pop %v1759
      %v1761 = vmul.f32 %v1532, 1.442695
      %v1762 = vpow.pop %v1761
      %v1763 = vmul.f32 %v1533, 1.442695
      %v1764 = vpow.pop %v1763
      %v1765 = vmul.f32 %v1534, 1.442695
      %v1766 = vpow.pop %v1765
      %v1767 = vmul.f32 %v1535, 1.442695
      %v1768 = vpow.pop %v1767
      %v1769 = vmul.f32 %v1536, 1.442695
      %v1770 = vpow.pop %v1769
      %v1771 = vmul.f32 %v1537, 1.442695
      %v1772 = vpow.pop %v1771
      %v1773 = vmul.f32 %v1538, 1.442695
      %v1774 = vpow.pop %v1773
      %v1775 = vmul.f32 %v1539, 1.442695
      %v1776 = vpow.pop %v1775
      %v1777 = vmul.f32 %v1540, 1.442695
      %v1778 = vpow.pop %v1777
      %v1779 = vmul.f32 %v1541, 1.442695
      %v1780 = vpow.pop %v1779
      %v1781 = vmul.f32 %v1542, 1.442695
      %v1782 = vpow.pop %v1781
      %v1783 = vmul.f32 %v1543, 1.442695
      %v1784 = vpow.pop %v1783
      %v1785 = vmul.f32 %v1544, 1.442695
      %v1786 = vpow.pop %v1785
      %v1787 = vmul.f32 %v1545, 1.442695
      %v1788 = vpow.pop %v1787
      %v1789 = vmul.f32 %v1546, 1.442695
      %v1790 = vpow.pop %v1789
      %v1791 = vmul.f32 %v1547, 1.442695
      %v1792 = vpow.pop %v1791
      %v1793 = vmul.f32 %v1548, 1.442695
      %v1794 = vpow.pop %v1793
      %v1795 = vmul.f32 %v1549, 1.442695
      %v1796 = vpow.pop %v1795
      %v1797 = vmul.f32 %v1550, 1.442695
      %v1798 = vpow.pop %v1797
      %v1799 = vmul.f32 %v1551, 1.442695
      %v1800 = vpow.pop %v1799
      %v1801 = vmul.f32 %v1552, 1.442695
      %v1802 = vpow.pop %v1801
      %v1803 = vmul.f32 %v1553, 1.442695
      %v1804 = vpow.pop %v1803
      %v1805 = vmul.f32 %v1554, 1.442695
      %v1806 = vpow.pop %v1805
      %v1807 = vmul.f32 %v1555, 1.442695
      %v1808 = vpow.pop %v1807
      %v1809 = vmul.f32 %v1556, 1.442695
      %v1810 = vpow.pop %v1809
      %v1811 = vmul.f32 %v1557, 1.442695
      %v1812 = vpow.pop %v1811
      %v1813 = vmul.f32 %v1558, 1.442695
      %v1814 = vpow.pop %v1813
      %v1815 = vsub.f32 %v1560, 1.0
      %v1816 = vsub.f32 %v1562, 1.0
      %v1817 = vsub.f32 %v1564, 1.0
      %v1818 = vsub.f32 %v1566, 1.0
      %v1819 = vsub.f32 %v1568, 1.0
      %v1820 = vsub.f32 %v1570, 1.0
      %v1821 = vsub.f32 %v1572, 1.0
      %v1822 = vsub.f32 %v1574, 1.0
      %v1823 = vsub.f32 %v1576, 1.0
      %v1824 = vsub.f32 %v1578, 1.0
      %v1825 = vsub.f32 %v1580, 1.0
      %v1826 = vsub.f32 %v1582, 1.0
      %v1827 = vsub.f32 %v1584, 1.0
      %v1828 = vsub.f32 %v1586, 1.0
      %v1829 = vsub.f32 %v1588, 1.0
      %v1830 = vsub.f32 %v1590, 1.0
      %v1831 = vsub.f32 %v1592, 1.0
      %v1832 = vsub.f32 %v1594, 1.0
      %v1833 = vsub.f32 %v1596, 1.0
      %v1834 = vsub.f32 %v1598, 1.0
      %v1835 = vsub.f32 %v1600, 1.0
      %v1836 = vsub.f32 %v1602, 1.0
      %v1837 = vsub.f32 %v1604, 1.0
      %v1838 = vsub.f32 %v1606, 1.0
      %v1839 = vsub.f32 %v1608, 1.0
      %v1840 = vsub.f32 %v1610, 1.0
      %v1841 = vsub.f32 %v1612, 1.0
      %v1842 = vsub.f32 %v1614, 1.0
      %v1843 = vsub.f32 %v1616, 1.0
      %v1844 = vsub.f32 %v1618, 1.0
      %v1845 = vsub.f32 %v1620, 1.0
      %v1846 = vsub.f32 %v1622, 1.0
      %v1847 = vsub.f32 %v1624, 1.0
      %v1848 = vsub.f32 %v1626, 1.0
      %v1849 = vsub.f32 %v1628, 1.0
      %v1850 = vsub.f32 %v1630, 1.0
      %v1851 = vsub.f32 %v1632, 1.0
      %v1852 = vsub.f32 %v1634, 1.0
      %v1853 = vsub.f32 %v1636, 1.0
      %v1854 = vsub.f32 %v1638, 1.0
      %v1855 = vsub.f32 %v1640, 1.0
      %v1856 = vsub.f32 %v1642, 1.0
      %v1857 = vsub.f32 %v1644, 1.0
      %v1858 = vsub.f32 %v1646, 1.0
      %v1859 = vsub.f32 %v1648, 1.0
      %v1860 = vsub.f32 %v1650, 1.0
      %v1861 = vsub.f32 %v1652, 1.0
      %v1862 = vsub.f32 %v1654, 1.0
      %v1863 = vsub.f32 %v1656, 1.0
      %v1864 = vsub.f32 %v1658, 1.0
      %v1865 = vsub.f32 %v1660, 1.0
      %v1866 = vsub.f32 %v1662, 1.0
      %v1867 = vsub.f32 %v1664, 1.0
      %v1868 = vsub.f32 %v1666, 1.0
      %v1869 = vsub.f32 %v1668, 1.0
      %v1870 = vsub.f32 %v1670, 1.0
      %v1871 = vsub.f32 %v1672, 1.0
      %v1872 = vsub.f32 %v1674, 1.0
      %v1873 = vsub.f32 %v1676, 1.0
      %v1874 = vsub.f32 %v1678, 1.0
      %v1875 = vsub.f32 %v1680, 1.0
      %v1876 = vsub.f32 %v1682, 1.0
      %v1877 = vsub.f32 %v1684, 1.0
      %v1878 = vsub.f32 %v1686, 1.0
      %v1879 = vsub.f32 %v1688, 1.0
      %v1880 = vsub.f32 %v1690, 1.0
      %v1881 = vsub.f32 %v1692, 1.0
      %v1882 = vsub.f32 %v1694, 1.0
      %v1883 = vsub.f32 %v1696, 1.0
      %v1884 = vsub.f32 %v1698, 1.0
      %v1885 = vsub.f32 %v1700, 1.0
      %v1886 = vsub.f32 %v1702, 1.0
      %v1887 = vsub.f32 %v1704, 1.0
      %v1888 = vsub.f32 %v1706, 1.0
      %v1889 = vsub.f32 %v1708, 1.0
      %v1890 = vsub.f32 %v1710, 1.0
      %v1891 = vsub.f32 %v1712, 1.0
      %v1892 = vsub.f32 %v1714, 1.0
      %v1893 = vsub.f32 %v1716, 1.0
      %v1894 = vsub.f32 %v1718, 1.0
      %v1895 = vsub.f32 %v1720, 1.0
      %v1896 = vsub.f32 %v1722, 1.0
      %v1897 = vsub.f32 %v1724, 1.0
      %v1898 = vsub.f32 %v1726, 1.0
      %v1899 = vsub.f32 %v1728, 1.0
      %v1900 = vsub.f32 %v1730, 1.0
      %v1901 = vsub.f32 %v1732, 1.0
      %v1902 = vsub.f32 %v1734, 1.0
      %v1903 = vsub.f32 %v1736, 1.0
      %v1904 = vsub.f32 %v1738, 1.0
      %v1905 = vsub.f32 %v1740, 1.0
      %v1906 = vsub.f32 %v1742, 1.0
      %v1907 = vsub.f32 %v1744, 1.0
      %v1908 = vsub.f32 %v1746, 1.0
      %v1909 = vsub.f32 %v1748, 1.0
      %v1910 = vsub.f32 %v1750, 1.0
      %v1911 = vsub.f32 %v1752, 1.0
      %v1912 = vsub.f32 %v1754, 1.0
      %v1913 = vsub.f32 %v1756, 1.0
      %v1914 = vsub.f32 %v1758, 1.0
      %v1915 = vsub.f32 %v1760, 1.0
      %v1916 = vsub.f32 %v1762, 1.0
      %v1917 = vsub.f32 %v1764, 1.0
      %v1918 = vsub.f32 %v1766, 1.0
      %v1919 = vsub.f32 %v1768, 1.0
      %v1920 = vsub.f32 %v1770, 1.0
      %v1921 = vsub.f32 %v1772, 1.0
      %v1922 = vsub.f32 %v1774, 1.0
      %v1923 = vsub.f32 %v1776, 1.0
      %v1924 = vsub.f32 %v1778, 1.0
      %v1925 = vsub.f32 %v1780, 1.0
      %v1926 = vsub.f32 %v1782, 1.0
      %v1927 = vsub.f32 %v1784, 1.0
      %v1928 = vsub.f32 %v1786, 1.0
      %v1929 = vsub.f32 %v1788, 1.0
      %v1930 = vsub.f32 %v1790, 1.0
      %v1931 = vsub.f32 %v1792, 1.0
      %v1932 = vsub.f32 %v1794, 1.0
      %v1933 = vsub.f32 %v1796, 1.0
      %v1934 = vsub.f32 %v1798, 1.0
      %v1935 = vsub.f32 %v1800, 1.0
      %v1936 = vsub.f32 %v1802, 1.0
      %v1937 = vsub.f32 %v1804, 1.0
      %v1938 = vsub.f32 %v1806, 1.0
      %v1939 = vsub.f32 %v1808, 1.0
      %v1940 = vsub.f32 %v1810, 1.0
      %v1941 = vsub.f32 %v1812, 1.0
      %v1942 = vsub.f32 %v1814, 1.0
      %v1943 = vsel %vm1303, %v793, %v1815
      %v1944 = vsel %vm1304, %v796, %v1816
      %v1945 = vsel %vm1305, %v801, %v1817
      %v1946 = vsel %vm1306, %v804, %v1818
      %v1947 = vsel %vm1307, %v809, %v1819
      %v1948 = vsel %vm1308, %v812, %v1820
      %v1949 = vsel %vm1309, %v817, %v1821
      %v1950 = vsel %vm1310, %v820, %v1822
      %v1951 = vsel %vm1311, %v825, %v1823
      %v1952 = vsel %vm1312, %v828, %v1824
      %v1953 = vsel %vm1313, %v833, %v1825
      %v1954 = vsel %vm1314, %v836, %v1826
      %v1955 = vsel %vm1315, %v841, %v1827
      %v1956 = vsel %vm1316, %v844, %v1828
      %v1957 = vsel %vm1317, %v849, %v1829
      %v1958 = vsel %vm1318, %v852, %v1830
      %v1959 = vsel %vm1319, %v857, %v1831
      %v1960 = vsel %vm1320, %v860, %v1832
      %v1961 = vsel %vm1321, %v865, %v1833
      %v1962 = vsel %vm1322, %v868, %v1834
      %v1963 = vsel %vm1323, %v873, %v1835
      %v1964 = vsel %vm1324, %v876, %v1836
      %v1965 = vsel %vm1325, %v881, %v1837
      %v1966 = vsel %vm1326, %v884, %v1838
      %v1967 = vsel %vm1327, %v889, %v1839
      %v1968 = vsel %vm1328, %v892, %v1840
      %v1969 = vsel %vm1329, %v897, %v1841
      %v1970 = vsel %vm1330, %v900, %v1842
      %v1971 = vsel %vm1331, %v905, %v1843
      %v1972 = vsel %vm1332, %v908, %v1844
      %v1973 = vsel %vm1333, %v913, %v1845
      %v1974 = vsel %vm1334, %v916, %v1846
      %v1975 = vsel %vm1335, %v921, %v1847
      %v1976 = vsel %vm1336, %v924, %v1848
      %v1977 = vsel %vm1337, %v929, %v1849
      %v1978 = vsel %vm1338, %v932, %v1850
      %v1979 = vsel %vm1339, %v937, %v1851
      %v1980 = vsel %vm1340, %v940, %v1852
      %v1981 = vsel %vm1341, %v945, %v1853
      %v1982 = vsel %vm1342, %v948, %v1854
      %v1983 = vsel %vm1343, %v953, %v1855
      %v1984 = vsel %vm1344, %v956, %v1856
      %v1985 = vsel %vm1345, %v961, %v1857
      %v1986 = vsel %vm1346, %v964, %v1858
      %v1987 = vsel %vm1347, %v969, %v1859
      %v1988 = vsel %vm1348, %v972, %v1860
      %v1989 = vsel %vm1349, %v977, %v1861
      %v1990 = vsel %vm1350, %v980, %v1862
      %v1991 = vsel %vm1351, %v985, %v1863
      %v1992 = vsel %vm1352, %v988, %v1864
      %v1993 = vsel %vm1353, %v993, %v1865
      %v1994 = vsel %vm1354, %v996, %v1866
      %v1995 = vsel %vm1355, %v1001, %v1867
      %v1996 = vsel %vm1356, %v1004, %v1868
      %v1997 = vsel %vm1357, %v1009, %v1869
      %v1998 = vsel %vm1358, %v1012, %v1870
      %v1999 = vsel %vm1359, %v1017, %v1871
      %v2000 = vsel %vm1360, %v1020, %v1872
      %v2001 = vsel %vm1361, %v1025, %v1873
      %v2002 = vsel %vm1362, %v1028, %v1874
      %v2003 = vsel %vm1363, %v1033, %v1875
      %v2004 = vsel %vm1364, %v1036, %v1876
      %v2005 = vsel %vm1365, %v1041, %v1877
      %v2006 = vsel %vm1366, %v1044, %v1878
      %v2007 = vsel %vm1367, %v1049, %v1879
      %v2008 = vsel %vm1368, %v1052, %v1880
      %v2009 = vsel %vm1369, %v1057, %v1881
      %v2010 = vsel %vm1370, %v1060, %v1882
      %v2011 = vsel %vm1371, %v1065, %v1883
      %v2012 = vsel %vm1372, %v1068, %v1884
      %v2013 = vsel %vm1373, %v1073, %v1885
      %v2014 = vsel %vm1374, %v1076, %v1886
      %v2015 = vsel %vm1375, %v1081, %v1887
      %v2016 = vsel %vm1376, %v1084, %v1888
      %v2017 = vsel %vm1377, %v1089, %v1889
      %v2018 = vsel %vm1378, %v1092, %v1890
      %v2019 = vsel %vm1379, %v1097, %v1891
      %v2020 = vsel %vm1380, %v1100, %v1892
      %v2021 = vsel %vm1381, %v1105, %v1893
      %v2022 = vsel %vm1382, %v1108, %v1894
      %v2023 = vsel %vm1383, %v1113, %v1895
      %v2024 = vsel %vm1384, %v1116, %v1896
      %v2025 = vsel %vm1385, %v1121, %v1897
      %v2026 = vsel %vm1386, %v1124, %v1898
      %v2027 = vsel %vm1387, %v1129, %v1899
      %v2028 = vsel %vm1388, %v1132, %v1900
      %v2029 = vsel %vm1389, %v1137, %v1901
      %v2030 = vsel %vm1390, %v1140, %v1902
      %v2031 = vsel %vm1391, %v1145, %v1903
      %v2032 = vsel %vm1392, %v1148, %v1904
      %v2033 = vsel %vm1393, %v1153, %v1905
      %v2034 = vsel %vm1394, %v1156, %v1906
      %v2035 = vsel %vm1395, %v1161, %v1907
      %v2036 = vsel %vm1396, %v1164, %v1908
      %v2037 = vsel %vm1397, %v1169, %v1909
      %v2038 = vsel %vm1398, %v1172, %v1910
      %v2039 = vsel %vm1399, %v1177, %v1911
      %v2040 = vsel %vm1400, %v1180, %v1912
      %v2041 = vsel %vm1401, %v1185, %v1913
      %v2042 = vsel %vm1402, %v1188, %v1914
      %v2043 = vsel %vm1403, %v1193, %v1915
      %v2044 = vsel %vm1404, %v1196, %v1916
      %v2045 = vsel %vm1405, %v1201, %v1917
      %v2046 = vsel %vm1406, %v1204, %v1918
      %v2047 = vsel %vm1407, %v1209, %v1919
      %v2048 = vsel %vm1408, %v1212, %v1920
      %v2049 = vsel %vm1409, %v1217, %v1921
      %v2050 = vsel %vm1410, %v1220, %v1922
      %v2051 = vsel %vm1411, %v1225, %v1923
      %v2052 = vsel %vm1412, %v1228, %v1924
      %v2053 = vsel %vm1413, %v1233, %v1925
      %v2054 = vsel %vm1414, %v1236, %v1926
      %v2055 = vsel %vm1415, %v1241, %v1927
      %v2056 = vsel %vm1416, %v1244, %v1928
      %v2057 = vsel %vm1417, %v1249, %v1929
      %v2058 = vsel %vm1418, %v1252, %v1930
      %v2059 = vsel %vm1419, %v1257, %v1931
      %v2060 = vsel %vm1420, %v1260, %v1932
      %v2061 = vsel %vm1421, %v1265, %v1933
      %v2062 = vsel %vm1422, %v1268, %v1934
      %v2063 = vsel %vm1423, %v1273, %v1935
      %v2064 = vsel %vm1424, %v1276, %v1936
      %v2065 = vsel %vm1425, %v1281, %v1937
      %v2066 = vsel %vm1426, %v1284, %v1938
      %v2067 = vsel %vm1427, %v1289, %v1939
      %v2068 = vsel %vm1428, %v1292, %v1940
      %v2069 = vsel %vm1429, %v1297, %v1941
      %v2070 = vsel %vm1430, %v1300, %v1942
      %v2071 = vpack.c.bf16 %v1944, %v1943
      %v2072 = vpack.c.bf16 %v1946, %v1945
      %v2073 = vpack.c.bf16 %v1948, %v1947
      %v2074 = vpack.c.bf16 %v1950, %v1949
      %v2075 = vpack.c.bf16 %v1952, %v1951
      %v2076 = vpack.c.bf16 %v1954, %v1953
      %v2077 = vpack.c.bf16 %v1956, %v1955
      %v2078 = vpack.c.bf16 %v1958, %v1957
      %v2079 = vpack.c.bf16 %v1960, %v1959
      %v2080 = vpack.c.bf16 %v1962, %v1961
      %v2081 = vpack.c.bf16 %v1964, %v1963
      %v2082 = vpack.c.bf16 %v1966, %v1965
      %v2083 = vpack.c.bf16 %v1968, %v1967
      %v2084 = vpack.c.bf16 %v1970, %v1969
      %v2085 = vpack.c.bf16 %v1972, %v1971
      %v2086 = vpack.c.bf16 %v1974, %v1973
      %v2087 = vpack.c.bf16 %v1976, %v1975
      %v2088 = vpack.c.bf16 %v1978, %v1977
      %v2089 = vpack.c.bf16 %v1980, %v1979
      %v2090 = vpack.c.bf16 %v1982, %v1981
      %v2091 = vpack.c.bf16 %v1984, %v1983
      %v2092 = vpack.c.bf16 %v1986, %v1985
      %v2093 = vpack.c.bf16 %v1988, %v1987
      %v2094 = vpack.c.bf16 %v1990, %v1989
      %v2095 = vpack.c.bf16 %v1992, %v1991
      %v2096 = vpack.c.bf16 %v1994, %v1993
      %v2097 = vpack.c.bf16 %v1996, %v1995
      %v2098 = vpack.c.bf16 %v1998, %v1997
      %v2099 = vpack.c.bf16 %v2000, %v1999
      %v2100 = vpack.c.bf16 %v2002, %v2001
      %v2101 = vpack.c.bf16 %v2004, %v2003
      %v2102 = vpack.c.bf16 %v2006, %v2005
      %v2103 = vpack.c.bf16 %v2008, %v2007
      %v2104 = vpack.c.bf16 %v2010, %v2009
      %v2105 = vpack.c.bf16 %v2012, %v2011
      %v2106 = vpack.c.bf16 %v2014, %v2013
      %v2107 = vpack.c.bf16 %v2016, %v2015
      %v2108 = vpack.c.bf16 %v2018, %v2017
      %v2109 = vpack.c.bf16 %v2020, %v2019
      %v2110 = vpack.c.bf16 %v2022, %v2021
      %v2111 = vpack.c.bf16 %v2024, %v2023
      %v2112 = vpack.c.bf16 %v2026, %v2025
      %v2113 = vpack.c.bf16 %v2028, %v2027
      %v2114 = vpack.c.bf16 %v2030, %v2029
      %v2115 = vpack.c.bf16 %v2032, %v2031
      %v2116 = vpack.c.bf16 %v2034, %v2033
      %v2117 = vpack.c.bf16 %v2036, %v2035
      %v2118 = vpack.c.bf16 %v2038, %v2037
      %v2119 = vpack.c.bf16 %v2040, %v2039
      %v2120 = vpack.c.bf16 %v2042, %v2041
      %v2121 = vpack.c.bf16 %v2044, %v2043
      %v2122 = vpack.c.bf16 %v2046, %v2045
      %v2123 = vpack.c.bf16 %v2048, %v2047
      %v2124 = vpack.c.bf16 %v2050, %v2049
      %v2125 = vpack.c.bf16 %v2052, %v2051
      %v2126 = vpack.c.bf16 %v2054, %v2053
      %v2127 = vpack.c.bf16 %v2056, %v2055
      %v2128 = vpack.c.bf16 %v2058, %v2057
      %v2129 = vpack.c.bf16 %v2060, %v2059
      %v2130 = vpack.c.bf16 %v2062, %v2061
      %v2131 = vpack.c.bf16 %v2064, %v2063
      %v2132 = vpack.c.bf16 %v2066, %v2065
      %v2133 = vpack.c.bf16 %v2068, %v2067
      %v2134 = vpack.c.bf16 %v2070, %v2069
      %v2199 = vunpack.c.l.b16 %v2071
      %v2200 = vunpack.c.h.b16 %v2071
      %v2201 = vunpack.c.l.b16 %v2072
      %v2202 = vunpack.c.h.b16 %v2072
      %v2203 = vunpack.c.l.b16 %v2073
      %v2204 = vunpack.c.h.b16 %v2073
      %v2205 = vunpack.c.l.b16 %v2074
      %v2206 = vunpack.c.h.b16 %v2074
      %v2207 = vunpack.c.l.b16 %v2075
      %v2208 = vunpack.c.h.b16 %v2075
      %v2209 = vunpack.c.l.b16 %v2076
      %v2210 = vunpack.c.h.b16 %v2076
      %v2211 = vunpack.c.l.b16 %v2077
      %v2212 = vunpack.c.h.b16 %v2077
      %v2213 = vunpack.c.l.b16 %v2078
      %v2214 = vunpack.c.h.b16 %v2078
      %v2215 = vunpack.c.l.b16 %v2079
      %v2216 = vunpack.c.h.b16 %v2079
      %v2217 = vunpack.c.l.b16 %v2080
      %v2218 = vunpack.c.h.b16 %v2080
      %v2219 = vunpack.c.l.b16 %v2081
      %v2220 = vunpack.c.h.b16 %v2081
      %v2221 = vunpack.c.l.b16 %v2082
      %v2222 = vunpack.c.h.b16 %v2082
      %v2223 = vunpack.c.l.b16 %v2083
      %v2224 = vunpack.c.h.b16 %v2083
      %v2225 = vunpack.c.l.b16 %v2084
      %v2226 = vunpack.c.h.b16 %v2084
      %v2227 = vunpack.c.l.b16 %v2085
      %v2228 = vunpack.c.h.b16 %v2085
      %v2229 = vunpack.c.l.b16 %v2086
      %v2230 = vunpack.c.h.b16 %v2086
      %v2231 = vunpack.c.l.b16 %v2087
      %v2232 = vunpack.c.h.b16 %v2087
      %v2233 = vunpack.c.l.b16 %v2088
      %v2234 = vunpack.c.h.b16 %v2088
      %v2235 = vunpack.c.l.b16 %v2089
      %v2236 = vunpack.c.h.b16 %v2089
      %v2237 = vunpack.c.l.b16 %v2090
      %v2238 = vunpack.c.h.b16 %v2090
      %v2239 = vunpack.c.l.b16 %v2091
      %v2240 = vunpack.c.h.b16 %v2091
      %v2241 = vunpack.c.l.b16 %v2092
      %v2242 = vunpack.c.h.b16 %v2092
      %v2243 = vunpack.c.l.b16 %v2093
      %v2244 = vunpack.c.h.b16 %v2093
      %v2245 = vunpack.c.l.b16 %v2094
      %v2246 = vunpack.c.h.b16 %v2094
      %v2247 = vunpack.c.l.b16 %v2095
      %v2248 = vunpack.c.h.b16 %v2095
      %v2249 = vunpack.c.l.b16 %v2096
      %v2250 = vunpack.c.h.b16 %v2096
      %v2251 = vunpack.c.l.b16 %v2097
      %v2252 = vunpack.c.h.b16 %v2097
      %v2253 = vunpack.c.l.b16 %v2098
      %v2254 = vunpack.c.h.b16 %v2098
      %v2255 = vunpack.c.l.b16 %v2099
      %v2256 = vunpack.c.h.b16 %v2099
      %v2257 = vunpack.c.l.b16 %v2100
      %v2258 = vunpack.c.h.b16 %v2100
      %v2259 = vunpack.c.l.b16 %v2101
      %v2260 = vunpack.c.h.b16 %v2101
      %v2261 = vunpack.c.l.b16 %v2102
      %v2262 = vunpack.c.h.b16 %v2102
      %v2263 = vunpack.c.l.b16 %v2103
      %v2264 = vunpack.c.h.b16 %v2103
      %v2265 = vunpack.c.l.b16 %v2104
      %v2266 = vunpack.c.h.b16 %v2104
      %v2267 = vunpack.c.l.b16 %v2105
      %v2268 = vunpack.c.h.b16 %v2105
      %v2269 = vunpack.c.l.b16 %v2106
      %v2270 = vunpack.c.h.b16 %v2106
      %v2271 = vunpack.c.l.b16 %v2107
      %v2272 = vunpack.c.h.b16 %v2107
      %v2273 = vunpack.c.l.b16 %v2108
      %v2274 = vunpack.c.h.b16 %v2108
      %v2275 = vunpack.c.l.b16 %v2109
      %v2276 = vunpack.c.h.b16 %v2109
      %v2277 = vunpack.c.l.b16 %v2110
      %v2278 = vunpack.c.h.b16 %v2110
      %v2279 = vunpack.c.l.b16 %v2111
      %v2280 = vunpack.c.h.b16 %v2111
      %v2281 = vunpack.c.l.b16 %v2112
      %v2282 = vunpack.c.h.b16 %v2112
      %v2283 = vunpack.c.l.b16 %v2113
      %v2284 = vunpack.c.h.b16 %v2113
      %v2285 = vunpack.c.l.b16 %v2114
      %v2286 = vunpack.c.h.b16 %v2114
      %v2287 = vunpack.c.l.b16 %v2115
      %v2288 = vunpack.c.h.b16 %v2115
      %v2289 = vunpack.c.l.b16 %v2116
      %v2290 = vunpack.c.h.b16 %v2116
      %v2291 = vunpack.c.l.b16 %v2117
      %v2292 = vunpack.c.h.b16 %v2117
      %v2293 = vunpack.c.l.b16 %v2118
      %v2294 = vunpack.c.h.b16 %v2118
      %v2295 = vunpack.c.l.b16 %v2119
      %v2296 = vunpack.c.h.b16 %v2119
      %v2297 = vunpack.c.l.b16 %v2120
      %v2298 = vunpack.c.h.b16 %v2120
      %v2299 = vunpack.c.l.b16 %v2121
      %v2300 = vunpack.c.h.b16 %v2121
      %v2301 = vunpack.c.l.b16 %v2122
      %v2302 = vunpack.c.h.b16 %v2122
      %v2303 = vunpack.c.l.b16 %v2123
      %v2304 = vunpack.c.h.b16 %v2123
      %v2305 = vunpack.c.l.b16 %v2124
      %v2306 = vunpack.c.h.b16 %v2124
      %v2307 = vunpack.c.l.b16 %v2125
      %v2308 = vunpack.c.h.b16 %v2125
      %v2309 = vunpack.c.l.b16 %v2126
      %v2310 = vunpack.c.h.b16 %v2126
      %v2311 = vunpack.c.l.b16 %v2127
      %v2312 = vunpack.c.h.b16 %v2127
      %v2313 = vunpack.c.l.b16 %v2128
      %v2314 = vunpack.c.h.b16 %v2128
      %v2315 = vunpack.c.l.b16 %v2129
      %v2316 = vunpack.c.h.b16 %v2129
      %v2317 = vunpack.c.l.b16 %v2130
      %v2318 = vunpack.c.h.b16 %v2130
      %v2319 = vunpack.c.l.b16 %v2131
      %v2320 = vunpack.c.h.b16 %v2131
      %v2321 = vunpack.c.l.b16 %v2132
      %v2322 = vunpack.c.h.b16 %v2132
      %v2323 = vunpack.c.l.b16 %v2133
      %v2324 = vunpack.c.h.b16 %v2133
      %v2325 = vunpack.c.l.b16 %v2134
      %v2326 = vunpack.c.h.b16 %v2134
      %v2327 = vpack.c.b16 %v2199, %v2199
      %v2328 = vpack.c.b16 %v2200, %v2200
      %v2329 = vpack.c.b16 %v2201, %v2201
      %v2330 = vpack.c.b16 %v2202, %v2202
      %v2331 = vpack.c.b16 %v2203, %v2203
      %v2332 = vpack.c.b16 %v2204, %v2204
      %v2333 = vpack.c.b16 %v2205, %v2205
      %v2334 = vpack.c.b16 %v2206, %v2206
      %v2335 = vpack.c.b16 %v2207, %v2207
      %v2336 = vpack.c.b16 %v2208, %v2208
      %v2337 = vpack.c.b16 %v2209, %v2209
      %v2338 = vpack.c.b16 %v2210, %v2210
      %v2339 = vpack.c.b16 %v2211, %v2211
      %v2340 = vpack.c.b16 %v2212, %v2212
      %v2341 = vpack.c.b16 %v2213, %v2213
      %v2342 = vpack.c.b16 %v2214, %v2214
      %v2343 = vpack.c.b16 %v2215, %v2215
      %v2344 = vpack.c.b16 %v2216, %v2216
      %v2345 = vpack.c.b16 %v2217, %v2217
      %v2346 = vpack.c.b16 %v2218, %v2218
      %v2347 = vpack.c.b16 %v2219, %v2219
      %v2348 = vpack.c.b16 %v2220, %v2220
      %v2349 = vpack.c.b16 %v2221, %v2221
      %v2350 = vpack.c.b16 %v2222, %v2222
      %v2351 = vpack.c.b16 %v2223, %v2223
      %v2352 = vpack.c.b16 %v2224, %v2224
      %v2353 = vpack.c.b16 %v2225, %v2225
      %v2354 = vpack.c.b16 %v2226, %v2226
      %v2355 = vpack.c.b16 %v2227, %v2227
      %v2356 = vpack.c.b16 %v2228, %v2228
      %v2357 = vpack.c.b16 %v2229, %v2229
      %v2358 = vpack.c.b16 %v2230, %v2230
      %v2359 = vpack.c.b16 %v2231, %v2231
      %v2360 = vpack.c.b16 %v2232, %v2232
      %v2361 = vpack.c.b16 %v2233, %v2233
      %v2362 = vpack.c.b16 %v2234, %v2234
      %v2363 = vpack.c.b16 %v2235, %v2235
      %v2364 = vpack.c.b16 %v2236, %v2236
      %v2365 = vpack.c.b16 %v2237, %v2237
      %v2366 = vpack.c.b16 %v2238, %v2238
      %v2367 = vpack.c.b16 %v2239, %v2239
      %v2368 = vpack.c.b16 %v2240, %v2240
      %v2369 = vpack.c.b16 %v2241, %v2241
      %v2370 = vpack.c.b16 %v2242, %v2242
      %v2371 = vpack.c.b16 %v2243, %v2243
      %v2372 = vpack.c.b16 %v2244, %v2244
      %v2373 = vpack.c.b16 %v2245, %v2245
      %v2374 = vpack.c.b16 %v2246, %v2246
      %v2375 = vpack.c.b16 %v2247, %v2247
      %v2376 = vpack.c.b16 %v2248, %v2248
      %v2377 = vpack.c.b16 %v2249, %v2249
      %v2378 = vpack.c.b16 %v2250, %v2250
      %v2379 = vpack.c.b16 %v2251, %v2251
      %v2380 = vpack.c.b16 %v2252, %v2252
      %v2381 = vpack.c.b16 %v2253, %v2253
      %v2382 = vpack.c.b16 %v2254, %v2254
      %v2383 = vpack.c.b16 %v2255, %v2255
      %v2384 = vpack.c.b16 %v2256, %v2256
      %v2385 = vpack.c.b16 %v2257, %v2257
      %v2386 = vpack.c.b16 %v2258, %v2258
      %v2387 = vpack.c.b16 %v2259, %v2259
      %v2388 = vpack.c.b16 %v2260, %v2260
      %v2389 = vpack.c.b16 %v2261, %v2261
      %v2390 = vpack.c.b16 %v2262, %v2262
      %v2391 = vpack.c.b16 %v2263, %v2263
      %v2392 = vpack.c.b16 %v2264, %v2264
      %v2393 = vpack.c.b16 %v2265, %v2265
      %v2394 = vpack.c.b16 %v2266, %v2266
      %v2395 = vpack.c.b16 %v2267, %v2267
      %v2396 = vpack.c.b16 %v2268, %v2268
      %v2397 = vpack.c.b16 %v2269, %v2269
      %v2398 = vpack.c.b16 %v2270, %v2270
      %v2399 = vpack.c.b16 %v2271, %v2271
      %v2400 = vpack.c.b16 %v2272, %v2272
      %v2401 = vpack.c.b16 %v2273, %v2273
      %v2402 = vpack.c.b16 %v2274, %v2274
      %v2403 = vpack.c.b16 %v2275, %v2275
      %v2404 = vpack.c.b16 %v2276, %v2276
      %v2405 = vpack.c.b16 %v2277, %v2277
      %v2406 = vpack.c.b16 %v2278, %v2278
      %v2407 = vpack.c.b16 %v2279, %v2279
      %v2408 = vpack.c.b16 %v2280, %v2280
      %v2409 = vpack.c.b16 %v2281, %v2281
      %v2410 = vpack.c.b16 %v2282, %v2282
      %v2411 = vpack.c.b16 %v2283, %v2283
      %v2412 = vpack.c.b16 %v2284, %v2284
      %v2413 = vpack.c.b16 %v2285, %v2285
      %v2414 = vpack.c.b16 %v2286, %v2286
      %v2415 = vpack.c.b16 %v2287, %v2287
      %v2416 = vpack.c.b16 %v2288, %v2288
      %v2417 = vpack.c.b16 %v2289, %v2289
      %v2418 = vpack.c.b16 %v2290, %v2290
      %v2419 = vpack.c.b16 %v2291, %v2291
      %v2420 = vpack.c.b16 %v2292, %v2292
      %v2421 = vpack.c.b16 %v2293, %v2293
      %v2422 = vpack.c.b16 %v2294, %v2294
      %v2423 = vpack.c.b16 %v2295, %v2295
      %v2424 = vpack.c.b16 %v2296, %v2296
      %v2425 = vpack.c.b16 %v2297, %v2297
      %v2426 = vpack.c.b16 %v2298, %v2298
      %v2427 = vpack.c.b16 %v2299, %v2299
      %v2428 = vpack.c.b16 %v2300, %v2300
      %v2429 = vpack.c.b16 %v2301, %v2301
      %v2430 = vpack.c.b16 %v2302, %v2302
      %v2431 = vpack.c.b16 %v2303, %v2303
      %v2432 = vpack.c.b16 %v2304, %v2304
      %v2433 = vpack.c.b16 %v2305, %v2305
      %v2434 = vpack.c.b16 %v2306, %v2306
      %v2435 = vpack.c.b16 %v2307, %v2307
      %v2436 = vpack.c.b16 %v2308, %v2308
      %v2437 = vpack.c.b16 %v2309, %v2309
      %v2438 = vpack.c.b16 %v2310, %v2310
      %v2439 = vpack.c.b16 %v2311, %v2311
      %v2440 = vpack.c.b16 %v2312, %v2312
      %v2441 = vpack.c.b16 %v2313, %v2313
      %v2442 = vpack.c.b16 %v2314, %v2314
      %v2443 = vpack.c.b16 %v2315, %v2315
      %v2444 = vpack.c.b16 %v2316, %v2316
      %v2445 = vpack.c.b16 %v2317, %v2317
      %v2446 = vpack.c.b16 %v2318, %v2318
      %v2447 = vpack.c.b16 %v2319, %v2319
      %v2448 = vpack.c.b16 %v2320, %v2320
      %v2449 = vpack.c.b16 %v2321, %v2321
      %v2450 = vpack.c.b16 %v2322, %v2322
      %v2451 = vpack.c.b16 %v2323, %v2323
      %v2452 = vpack.c.b16 %v2324, %v2324
      %v2453 = vpack.c.b16 %v2325, %v2325
      %v2454 = vpack.c.b16 %v2326, %v2326
      %2583 = vst [vmem:[%s172] sm:$0xf] %v2327
      %2584 = vst [vmem:[%s172 + $0x4] sm:$0xf] %v2328
      %2585 = vst [vmem:[%s172 + $0x8] sm:$0xf] %v2329
      %2586 = vst [vmem:[%s172 + $0xc] sm:$0xf] %v2330
      %2587 = vst [vmem:[%s172 + $0x10] sm:$0xf] %v2331
      %2588 = vst [vmem:[%s172 + $0x14] sm:$0xf] %v2332
      %2589 = vst [vmem:[%s172 + $0x18] sm:$0xf] %v2333
      %2590 = vst [vmem:[%s172 + $0x1c] sm:$0xf] %v2334
      %2591 = vst [vmem:[%s172 + $0x20] sm:$0xf] %v2335
      %2592 = vst [vmem:[%s172 + $0x24] sm:$0xf] %v2336
      %2593 = vst [vmem:[%s172 + $0x28] sm:$0xf] %v2337
      %2594 = vst [vmem:[%s172 + $0x2c] sm:$0xf] %v2338
      %2595 = vst [vmem:[%s172 + $0x30] sm:$0xf] %v2339
      %2596 = vst [vmem:[%s172 + $0x34] sm:$0xf] %v2340
      %2597 = vst [vmem:[%s172 + $0x38] sm:$0xf] %v2341
      %2598 = vst [vmem:[%s172 + $0x3c] sm:$0xf] %v2342
      %2599 = vst [vmem:[%s172 + $0x40] sm:$0xf] %v2343
      %2600 = vst [vmem:[%s172 + $0x44] sm:$0xf] %v2344
      %2601 = vst [vmem:[%s172 + $0x48] sm:$0xf] %v2345
      %2602 = vst [vmem:[%s172 + $0x4c] sm:$0xf] %v2346
      %2603 = vst [vmem:[%s172 + $0x50] sm:$0xf] %v2347
      %2604 = vst [vmem:[%s172 + $0x54] sm:$0xf] %v2348
      %2605 = vst [vmem:[%s172 + $0x58] sm:$0xf] %v2349
      %2606 = vst [vmem:[%s172 + $0x5c] sm:$0xf] %v2350
      %2607 = vst [vmem:[%s172 + $0x60] sm:$0xf] %v2351
      %2608 = vst [vmem:[%s172 + $0x64] sm:$0xf] %v2352
      %2609 = vst [vmem:[%s172 + $0x68] sm:$0xf] %v2353
      %2610 = vst [vmem:[%s172 + $0x6c] sm:$0xf] %v2354
      %2611 = vst [vmem:[%s172 + $0x70] sm:$0xf] %v2355
      %2612 = vst [vmem:[%s172 + $0x74] sm:$0xf] %v2356
      %2613 = vst [vmem:[%s172 + $0x78] sm:$0xf] %v2357
      %2614 = vst [vmem:[%s172 + $0x7c] sm:$0xf] %v2358
      %2615 = vst [vmem:[%s172 + $0x80] sm:$0xf] %v2359
      %2616 = vst [vmem:[%s172 + $0x84] sm:$0xf] %v2360
      %2617 = vst [vmem:[%s172 + $0x88] sm:$0xf] %v2361
      %2618 = vst [vmem:[%s172 + $0x8c] sm:$0xf] %v2362
      %2619 = vst [vmem:[%s172 + $0x90] sm:$0xf] %v2363
      %2620 = vst [vmem:[%s172 + $0x94] sm:$0xf] %v2364
      %2621 = vst [vmem:[%s172 + $0x98] sm:$0xf] %v2365
      %2622 = vst [vmem:[%s172 + $0x9c] sm:$0xf] %v2366
      %2623 = vst [vmem:[%s172 + $0xa0] sm:$0xf] %v2367
      %2624 = vst [vmem:[%s172 + $0xa4] sm:$0xf] %v2368
      %2625 = vst [vmem:[%s172 + $0xa8] sm:$0xf] %v2369
      %2626 = vst [vmem:[%s172 + $0xac] sm:$0xf] %v2370
      %2627 = vst [vmem:[%s172 + $0xb0] sm:$0xf] %v2371
      %2628 = vst [vmem:[%s172 + $0xb4] sm:$0xf] %v2372
      %2629 = vst [vmem:[%s172 + $0xb8] sm:$0xf] %v2373
      %2630 = vst [vmem:[%s172 + $0xbc] sm:$0xf] %v2374
      %2631 = vst [vmem:[%s172 + $0xc0] sm:$0xf] %v2375
      %2632 = vst [vmem:[%s172 + $0xc4] sm:$0xf] %v2376
      %2633 = vst [vmem:[%s172 + $0xc8] sm:$0xf] %v2377
      %2634 = vst [vmem:[%s172 + $0xcc] sm:$0xf] %v2378
      %2635 = vst [vmem:[%s172 + $0xd0] sm:$0xf] %v2379
      %2636 = vst [vmem:[%s172 + $0xd4] sm:$0xf] %v2380
      %2637 = vst [vmem:[%s172 + $0xd8] sm:$0xf] %v2381
      %2638 = vst [vmem:[%s172 + $0xdc] sm:$0xf] %v2382
      %2639 = vst [vmem:[%s172 + $0xe0] sm:$0xf] %v2383
      %2640 = vst [vmem:[%s172 + $0xe4] sm:$0xf] %v2384
      %2641 = vst [vmem:[%s172 + $0xe8] sm:$0xf] %v2385
      %2642 = vst [vmem:[%s172 + $0xec] sm:$0xf] %v2386
      %2643 = vst [vmem:[%s172 + $0xf0] sm:$0xf] %v2387
      %2644 = vst [vmem:[%s172 + $0xf4] sm:$0xf] %v2388
      %2645 = vst [vmem:[%s172 + $0xf8] sm:$0xf] %v2389
      %2646 = vst [vmem:[%s172 + $0xfc] sm:$0xf] %v2390
      %2647 = vst [vmem:[%s172 + $0x100] sm:$0xf] %v2391
      %2648 = vst [vmem:[%s172 + $0x104] sm:$0xf] %v2392
      %2649 = vst [vmem:[%s172 + $0x108] sm:$0xf] %v2393
      %2650 = vst [vmem:[%s172 + $0x10c] sm:$0xf] %v2394
      %2651 = vst [vmem:[%s172 + $0x110] sm:$0xf] %v2395
      %2652 = vst [vmem:[%s172 + $0x114] sm:$0xf] %v2396
      %2653 = vst [vmem:[%s172 + $0x118] sm:$0xf] %v2397
      %2654 = vst [vmem:[%s172 + $0x11c] sm:$0xf] %v2398
      %2655 = vst [vmem:[%s172 + $0x120] sm:$0xf] %v2399
      %2656 = vst [vmem:[%s172 + $0x124] sm:$0xf] %v2400
      %2657 = vst [vmem:[%s172 + $0x128] sm:$0xf] %v2401
      %2658 = vst [vmem:[%s172 + $0x12c] sm:$0xf] %v2402
      %2659 = vst [vmem:[%s172 + $0x130] sm:$0xf] %v2403
      %2660 = vst [vmem:[%s172 + $0x134] sm:$0xf] %v2404
      %2661 = vst [vmem:[%s172 + $0x138] sm:$0xf] %v2405
      %2662 = vst [vmem:[%s172 + $0x13c] sm:$0xf] %v2406
      %2663 = vst [vmem:[%s172 + $0x140] sm:$0xf] %v2407
      %2664 = vst [vmem:[%s172 + $0x144] sm:$0xf] %v2408
      %2665 = vst [vmem:[%s172 + $0x148] sm:$0xf] %v2409
      %2666 = vst [vmem:[%s172 + $0x14c] sm:$0xf] %v2410
      %2667 = vst [vmem:[%s172 + $0x150] sm:$0xf] %v2411
      %2668 = vst [vmem:[%s172 + $0x154] sm:$0xf] %v2412
      %2669 = vst [vmem:[%s172 + $0x158] sm:$0xf] %v2413
      %2670 = vst [vmem:[%s172 + $0x15c] sm:$0xf] %v2414
      %2671 = vst [vmem:[%s172 + $0x160] sm:$0xf] %v2415
      %2672 = vst [vmem:[%s172 + $0x164] sm:$0xf] %v2416
      %2673 = vst [vmem:[%s172 + $0x168] sm:$0xf] %v2417
      %2674 = vst [vmem:[%s172 + $0x16c] sm:$0xf] %v2418
      %2675 = vst [vmem:[%s172 + $0x170] sm:$0xf] %v2419
      %2676 = vst [vmem:[%s172 + $0x174] sm:$0xf] %v2420
      %2677 = vst [vmem:[%s172 + $0x178] sm:$0xf] %v2421
      %2678 = vst [vmem:[%s172 + $0x17c] sm:$0xf] %v2422
      %2679 = vst [vmem:[%s172 + $0x180] sm:$0xf] %v2423
      %2680 = vst [vmem:[%s172 + $0x184] sm:$0xf] %v2424
      %2681 = vst [vmem:[%s172 + $0x188] sm:$0xf] %v2425
      %2682 = vst [vmem:[%s172 + $0x18c] sm:$0xf] %v2426
      %2683 = vst [vmem:[%s172 + $0x190] sm:$0xf] %v2427
      %2684 = vst [vmem:[%s172 + $0x194] sm:$0xf] %v2428
      %2685 = vst [vmem:[%s172 + $0x198] sm:$0xf] %v2429
      %2686 = vst [vmem:[%s172 + $0x19c] sm:$0xf] %v2430
      %2687 = vst [vmem:[%s172 + $0x1a0] sm:$0xf] %v2431
      %2688 = vst [vmem:[%s172 + $0x1a4] sm:$0xf] %v2432
      %2689 = vst [vmem:[%s172 + $0x1a8] sm:$0xf] %v2433
      %2690 = vst [vmem:[%s172 + $0x1ac] sm:$0xf] %v2434
      %2691 = vst [vmem:[%s172 + $0x1b0] sm:$0xf] %v2435
      %2692 = vst [vmem:[%s172 + $0x1b4] sm:$0xf] %v2436
      %2693 = vst [vmem:[%s172 + $0x1b8] sm:$0xf] %v2437
      %2694 = vst [vmem:[%s172 + $0x1bc] sm:$0xf] %v2438
      %2695 = vst [vmem:[%s172 + $0x1c0] sm:$0xf] %v2439
      %2696 = vst [vmem:[%s172 + $0x1c4] sm:$0xf] %v2440
      %2697 = vst [vmem:[%s172 + $0x1c8] sm:$0xf] %v2441
      %2698 = vst [vmem:[%s172 + $0x1cc] sm:$0xf] %v2442
      %2699 = vst [vmem:[%s172 + $0x1d0] sm:$0xf] %v2443
      %2700 = vst [vmem:[%s172 + $0x1d4] sm:$0xf] %v2444
      %2701 = vst [vmem:[%s172 + $0x1d8] sm:$0xf] %v2445
      %2702 = vst [vmem:[%s172 + $0x1dc] sm:$0xf] %v2446
      %2703 = vst [vmem:[%s172 + $0x1e0] sm:$0xf] %v2447
      %2704 = vst [vmem:[%s172 + $0x1e4] sm:$0xf] %v2448
      %2705 = vst [vmem:[%s172 + $0x1e8] sm:$0xf] %v2449
      %2706 = vst [vmem:[%s172 + $0x1ec] sm:$0xf] %v2450
      %2707 = vst [vmem:[%s172 + $0x1f0] sm:$0xf] %v2451
      %2708 = vst [vmem:[%s172 + $0x1f4] sm:$0xf] %v2452
      %2709 = vst [vmem:[%s172 + $0x1f8] sm:$0xf] %v2453
      %2710 = vst [vmem:[%s172 + $0x1fc] sm:$0xf] %v2454
      %s2711 = smul.u32 128, %s14
      %p2712 = scmp.lt.s32.totalorder %s2711, 767
      %s2713 = scalar_select %p2712, %s2711, 767
      %s2714 = smul.addr %s2713, 4
      %s2715 = scalar_lea.vmem %s3, %s2714
      // Predicated region
      $region33: #{end2end_forward.6} parent=31 // pred_check
        %p2716 = pneg %p100
      $region34: #{end2end_forward.6} parent=31 // pred_check_branch
        %2718 = sbr.rel (%p2716) target = $region36
      $region35: #{end2end_forward.6} parent=31 // pred_region
        %s2719 = smul.u32 128, %s14
      $region36: #{end2end_forward.6} parent=31 // pred_fallthru
        _
    $region32: #{end2end_forward.6} parent=5 // pred_fallthru
      _
    %p2720 = scmp.le.s32.totalorder 2, %s9
    // Predicated region
    $region37: #{end2end_forward.6} parent=5 // pred_check
      %p2721 = pneg %p2720
    $region38: #{end2end_forward.6} parent=5 // pred_check_branch
      %2723 = sbr.rel (%p2721) target = $region40
    $region39: #{end2end_forward.6} parent=5 // pred_region
      %s2724 = ssub.s32 %s9, 2
      // Predicated region
      $region41: #{end2end_forward.6} parent=39 // pred_check
        %p2725 = pneg %p106
      $region42: #{end2end_forward.6} parent=39 // pred_check_branch
        %2727 = sbr.rel (%p2725) target = $region44
      $region43: #{end2end_forward.6} parent=39 // pred_region
        %s2728 = smul.u32 128, %s15
        %p2729 = scmp.lt.s32.totalorder %s2728, 767
        %s2730 = scalar_select %p2729, %s2728, 767
        %s2731 = smul.addr %s2730, 4
        %s2732 = scalar_lea.vmem %s3, %s2731
      $region44: #{end2end_forward.6} parent=39 // pred_fallthru
        _
    $region40: #{end2end_forward.6} parent=5 // pred_fallthru
      _
  $region6: #{end2end_forward.6} parent=0 // loop_footer
    %s13 = sadd.s32 1, %s9
  $region7: #{end2end_forward.6} parent=0 // loop_footer_branch
    %8 = sbr.rel target = $region3
  $region8: #{end2end_forward.6} parent=0 // loop_exit
    _

// kernel: end2end_forward.7
$region0: #{end2end_forward.7}
  #allocation0 [shape = 'u32[]', space=smem, size = 0x4, offset = 0x4, fixed_abs, tag = 'smem constant byte address 0x4 - core index']
  #allocation1 [shape = 'u32[144,128]{1,0:T(1,128)}', space=vmem, size = 0x12000, scoped, tag = 'internal scratch']
  %s0 = inlined_call_operand.vmem [shape: bf16[2048,640], index: 0, kind: input, shape index: {}]
  %s1 = inlined_call_operand.vmem [shape: bf16[640,128], index: 1, kind: input, shape index: {}]
  %s2 = inlined_call_operand.vmem [shape: f32[1,128], index: 2, kind: input, shape index: {}]
  %s3 = inlined_call_operand.vmem [shape: bf16[2048,128], index: 3, kind: output, shape index: {}]
  %s4 = sld [smem:[#allocation0]]
  $region45: #{end2end_forward.7} parent=0
    _
  %s6 = ssub.s32 1, %s4
  %s7 = scalar_select 0, %s6, %s4
  loop: start=0, step=1, limit=4
  $region2: #{end2end_forward.7} parent=0 // loop_pre_header
    _
  $region3: #{end2end_forward.7} parent=0 // loop_header
    %s9 = sphi 0, %s13
    %p10 = scmp.ge.s32.totalorder %s9, 4
    %s19 = sphi 0, %s21
    %s22 = sphi 0, %s19
    %s23 = sphi 0, %s22
    %s39 = sphi 0, %s23
    %s43 = sphi 0, %s43
    %s45 = sphi 0, %s43
    %s46 = sphi 0, %s45
    %s60 = sphi 0, %s46
    %s64 = sphi 0, %s64
    %s66 = sphi 0, %s64
    %s67 = sphi 0, %s66
    %s81 = sphi 0, %s67
    %s87 = sphi 0, %s89
    %s90 = sphi 0, %s87
    %s91 = sphi 0, %s90
    %s107 = sphi 0, %s91
  $region4: #{end2end_forward.7} parent=0 // loop_header_branch
    %12 = sbr.rel (%p10) target = $region8
  $region5: #{end2end_forward.7} parent=0 // loop_body
    %s14 = ssub.s32 %s9, 1
    %s15 = ssub.s32 %s9, 2
    %s16 = sadd.s32 %s9, 1
    %s17 = ssub.s32 %s9, %s16
    %p18 = scmp.eq.s32.totalorder %s17, 0
    %s20 = sadd.s32 %s19, 1
    %s21 = scalar_select %p18, %s19, %s20
    %p24 = pneg %p18
    %p25 = scmp.eq.s32.totalorder %s9, 1
    %p26 = por %p24, %p25
    %p27 = scmp.ne.s32.totalorder %s19, %s22
    %p28 = scmp.eq.s32.totalorder %s9, 0
    %p29 = por %p27, %p28
    %p30 = scmp.ne.s32.totalorder %s19, %s22
    %p31 = scmp.eq.s32.totalorder %s14, 1
    %p32 = por %p30, %p31
    %p33 = scmp.ne.s32.totalorder %s22, %s23
    %p34 = scmp.eq.s32.totalorder %s14, 0
    %p35 = por %p33, %p34
    %p36 = scmp.ne.s32.totalorder %s22, %s23
    %p37 = scmp.eq.s32.totalorder %s15, 1
    %p38 = por %p36, %p37
    %p40 = scmp.ne.s32.totalorder %s23, %s39
    %p41 = scmp.eq.s32.totalorder %s15, 0
    %p42 = por %p40, %p41
    %s44 = sadd.s32 %s43, 1
    %p47 = scmp.eq.s32.totalorder %s9, 1
    %p48 = scmp.ne.s32.totalorder %s43, %s45
    %p49 = scmp.eq.s32.totalorder %s9, 0
    %p50 = por %p48, %p49
    %p51 = scmp.ne.s32.totalorder %s43, %s45
    %p52 = scmp.eq.s32.totalorder %s14, 1
    %p53 = por %p51, %p52
    %p54 = scmp.ne.s32.totalorder %s45, %s46
    %p55 = scmp.eq.s32.totalorder %s14, 0
    %p56 = por %p54, %p55
    %p57 = scmp.ne.s32.totalorder %s45, %s46
    %p58 = scmp.eq.s32.totalorder %s15, 1
    %p59 = por %p57, %p58
    %p61 = scmp.ne.s32.totalorder %s46, %s60
    %p62 = scmp.eq.s32.totalorder %s15, 0
    %p63 = por %p61, %p62
    %s65 = sadd.s32 %s64, 1
    %p68 = scmp.eq.s32.totalorder %s9, 1
    %p69 = scmp.ne.s32.totalorder %s64, %s66
    %p70 = scmp.eq.s32.totalorder %s9, 0
    %p71 = por %p69, %p70
    %p72 = scmp.ne.s32.totalorder %s64, %s66
    %p73 = scmp.eq.s32.totalorder %s14, 1
    %p74 = por %p72, %p73
    %p75 = scmp.ne.s32.totalorder %s66, %s67
    %p76 = scmp.eq.s32.totalorder %s14, 0
    %p77 = por %p75, %p76
    %p78 = scmp.ne.s32.totalorder %s66, %s67
    %p79 = scmp.eq.s32.totalorder %s15, 1
    %p80 = por %p78, %p79
    %p82 = scmp.ne.s32.totalorder %s67, %s81
    %p83 = scmp.eq.s32.totalorder %s15, 0
    %p84 = por %p82, %p83
    %s85 = ssub.s32 %s9, %s16
    %p86 = scmp.eq.s32.totalorder %s85, 0
    %s88 = sadd.s32 %s87, 1
    %s89 = scalar_select %p86, %s87, %s88
    %p92 = pneg %p86
    %p93 = scmp.eq.s32.totalorder %s9, 1
    %p94 = por %p92, %p93
    %p95 = scmp.ne.s32.totalorder %s87, %s90
    %p96 = scmp.eq.s32.totalorder %s9, 0
    %p97 = por %p95, %p96
    %p98 = scmp.ne.s32.totalorder %s87, %s90
    %p99 = scmp.eq.s32.totalorder %s14, 1
    %p100 = por %p98, %p99
    %p101 = scmp.ne.s32.totalorder %s90, %s91
    %p102 = scmp.eq.s32.totalorder %s14, 0
    %p103 = por %p101, %p102
    %p104 = scmp.ne.s32.totalorder %s90, %s91
    %p105 = scmp.eq.s32.totalorder %s15, 1
    %p106 = por %p104, %p105
    %p108 = scmp.ne.s32.totalorder %s91, %s107
    %p109 = scmp.eq.s32.totalorder %s15, 0
    %p110 = por %p108, %p109
    %p111 = scmp.le.s32.totalorder 1, %s9
    %p112 = scmp.lt.s32.totalorder %s9, 3
    %p113 = pnand %p111, %p112
    %p114 = pneg %p113
    // Predicated region
    $region9: #{end2end_forward.7} parent=5 // pred_check
      _
    $region10: #{end2end_forward.7} parent=5 // pred_check_branch
      %116 = sbr.rel (%p113) target = $region12
    $region11: #{end2end_forward.7} parent=5 // pred_region
      %s117 = ssub.s32 %s9, 1
      // Predicated region
      $region13: #{end2end_forward.7} parent=11 // pred_check
        %p118 = pneg %p56
      $region14: #{end2end_forward.7} parent=11 // pred_check_branch
        %120 = sbr.rel (%p118) target = $region16
      $region15: #{end2end_forward.7} parent=11 // pred_region
        _
      $region16: #{end2end_forward.7} parent=11 // pred_fallthru
        _
      // Predicated region
      $region17: #{end2end_forward.7} parent=11 // pred_check
        %p121 = pneg %p77
      $region18: #{end2end_forward.7} parent=11 // pred_check_branch
        %123 = sbr.rel (%p121) target = $region20
      $region19: #{end2end_forward.7} parent=11 // pred_region
        _
      $region20: #{end2end_forward.7} parent=11 // pred_fallthru
        _
    $region12: #{end2end_forward.7} parent=5 // pred_fallthru
      _
    %p124 = scmp.lt.s32.totalorder %s9, 2
    // Predicated region
    $region21: #{end2end_forward.7} parent=5 // pred_check
      %p125 = pneg %p124
    $region22: #{end2end_forward.7} parent=5 // pred_check_branch
      %127 = sbr.rel (%p125) target = $region24
    $region23: #{end2end_forward.7} parent=5 // pred_region
      // Predicated region
      $region25: #{end2end_forward.7} parent=23 // pred_check
        %p128 = pneg %p29
      $region26: #{end2end_forward.7} parent=23 // pred_check_branch
        %130 = sbr.rel (%p128) target = $region28
      $region27: #{end2end_forward.7} parent=23 // pred_region
        %s131 = smul.u32 128, %s9
        %p132 = scmp.lt.s32.totalorder %s131, 255
        %s133 = scalar_select %p132, %s131, 255
        %s134 = smul.addr %s133, 5
        %s135 = smul.addr %s134, 4
        %s136 = scalar_lea.vmem %s0, %s135
        %s137 = smul.u32 128, %s9
      $region28: #{end2end_forward.7} parent=23 // pred_fallthru
        _
    $region24: #{end2end_forward.7} parent=5 // pred_fallthru
      _
    %p138 = scmp.le.s32.totalorder 1, %s9
    %p139 = scmp.lt.s32.totalorder %s9, 3
    %p140 = pnand %p138, %p139
    %p141 = pneg %p140
    // Predicated region
    $region29: #{end2end_forward.7} parent=5 // pred_check
      _
    $region30: #{end2end_forward.7} parent=5 // pred_check_branch
      %143 = sbr.rel (%p140) target = $region32
    $region31: #{end2end_forward.7} parent=5 // pred_region
      %s144 = ssub.s32 %s9, 1
      %s145 = smul.u32 128, %s14
      %p146 = scmp.lt.s32.totalorder %s145, 255
      %s147 = scalar_select %p146, %s145, 255
      %s148 = smul.addr %s147, 5
      %s149 = smul.addr %s148, 4
      %s150 = scalar_lea.vmem %s0, %s149
      %p151 = pneg %p35
      %p152 = pneg %p32
      %p153 = pneg %p56
      %p154 = pneg %p53
      %p155 = pneg %p77
      %p156 = pneg %p74
      %p157 = pneg %p103
      %p158 = pneg %p100
      %s159 = smul.u32 128, %s14
      %p160 = scmp.lt.s32.totalorder %s159, 255
      %s161 = scalar_select %p160, %s159, 255
      %s162 = smul.addr %s161, 4
      %s163 = scalar_lea.vmem %s3, %s162
      %s164 = smul.u32 128, %s14
      %p165 = scmp.lt.s32.totalorder %s164, 255
      %s166 = scalar_select %p165, %s164, 255
      %s167 = smul.addr %s166, 5
      %s168 = smul.addr %s167, 4
      %s169 = scalar_lea.vmem %s0, %s168
      %s170 = smul.u32 128, %s14
      %s171 = smul.u32 128, %s14
      %p172 = scmp.lt.s32.totalorder %s171, 255
      %s173 = scalar_select %p172, %s171, 255
      %s174 = smul.addr %s173, 4
      %s175 = scalar_lea.vmem %s3, %s174
      %s176 = smul.u32 128, %s14
      %v178 = vld [vmem:[%s169] sm:$0xff]
      %v179 = vld [vmem:[%s169 + $0x8] sm:$0xff]
      %v180 = vld [vmem:[%s169 + $0x10] sm:$0xf]
      %v181 = vld [vmem:[%s169 + $0x14] sm:$0xff]
      %v182 = vld [vmem:[%s169 + $0x1c] sm:$0xff]
      %v183 = vld [vmem:[%s169 + $0x24] sm:$0xf]
      %v184 = vld [vmem:[%s169 + $0x28] sm:$0xff]
      %v185 = vld [vmem:[%s169 + $0x30] sm:$0xff]
      %v186 = vld [vmem:[%s169 + $0x38] sm:$0xf]
      %v187 = vld [vmem:[%s169 + $0x3c] sm:$0xff]
      %v188 = vld [vmem:[%s169 + $0x44] sm:$0xff]
      %v189 = vld [vmem:[%s169 + $0x4c] sm:$0xf]
      %v190 = vld [vmem:[%s169 + $0x50] sm:$0xff]
      %v191 = vld [vmem:[%s169 + $0x58] sm:$0xff]
      %v192 = vld [vmem:[%s169 + $0x60] sm:$0xf]
      %v193 = vld [vmem:[%s169 + $0x64] sm:$0xff]
      %v194 = vld [vmem:[%s169 + $0x6c] sm:$0xff]
      %v195 = vld [vmem:[%s169 + $0x74] sm:$0xf]
      %v196 = vld [vmem:[%s169 + $0x78] sm:$0xff]
      %v197 = vld [vmem:[%s169 + $0x80] sm:$0xff]
      %v198 = vld [vmem:[%s169 + $0x88] sm:$0xf]
      %v199 = vld [vmem:[%s169 + $0x8c] sm:$0xff]
      %v200 = vld [vmem:[%s169 + $0x94] sm:$0xff]
      %v201 = vld [vmem:[%s169 + $0x9c] sm:$0xf]
      %v202 = vld [vmem:[%s169 + $0xa0] sm:$0xff]
      %v203 = vld [vmem:[%s169 + $0xa8] sm:$0xff]
      %v204 = vld [vmem:[%s169 + $0xb0] sm:$0xf]
      %v205 = vld [vmem:[%s169 + $0xb4] sm:$0xff]
      %v206 = vld [vmem:[%s169 + $0xbc] sm:$0xff]
      %v207 = vld [vmem:[%s169 + $0xc4] sm:$0xf]
      %v208 = vld [vmem:[%s169 + $0xc8] sm:$0xff]
      %v209 = vld [vmem:[%s169 + $0xd0] sm:$0xff]
      %v210 = vld [vmem:[%s169 + $0xd8] sm:$0xf]
      %v211 = vld [vmem:[%s169 + $0xdc] sm:$0xff]
      %v212 = vld [vmem:[%s169 + $0xe4] sm:$0xff]
      %v213 = vld [vmem:[%s169 + $0xec] sm:$0xf]
      %v214 = vld [vmem:[%s169 + $0xf0] sm:$0xff]
      %v215 = vld [vmem:[%s169 + $0xf8] sm:$0xff]
      %v216 = vld [vmem:[%s169 + $0x100] sm:$0xf]
      %v217 = vld [vmem:[%s169 + $0x104] sm:$0xff]
      %v218 = vld [vmem:[%s169 + $0x10c] sm:$0xff]
      %v219 = vld [vmem:[%s169 + $0x114] sm:$0xf]
      %v220 = vld [vmem:[%s169 + $0x118] sm:$0xff]
      %v221 = vld [vmem:[%s169 + $0x120] sm:$0xff]
      %v222 = vld [vmem:[%s169 + $0x128] sm:$0xf]
      %v223 = vld [vmem:[%s169 + $0x12c] sm:$0xff]
      %v224 = vld [vmem:[%s169 + $0x134] sm:$0xff]
      %v225 = vld [vmem:[%s169 + $0x13c] sm:$0xf]
      %v226 = vld [vmem:[%s169 + $0x140] sm:$0xff]
      %v227 = vld [vmem:[%s169 + $0x148] sm:$0xff]
      %v228 = vld [vmem:[%s169 + $0x150] sm:$0xf]
      %v229 = vld [vmem:[%s169 + $0x154] sm:$0xff]
      %v230 = vld [vmem:[%s169 + $0x15c] sm:$0xff]
      %v231 = vld [vmem:[%s169 + $0x164] sm:$0xf]
      %v232 = vld [vmem:[%s169 + $0x168] sm:$0xff]
      %v233 = vld [vmem:[%s169 + $0x170] sm:$0xff]
      %v234 = vld [vmem:[%s169 + $0x178] sm:$0xf]
      %v235 = vld [vmem:[%s169 + $0x17c] sm:$0xff]
      %v236 = vld [vmem:[%s169 + $0x184] sm:$0xff]
      %v237 = vld [vmem:[%s169 + $0x18c] sm:$0xf]
      %v238 = vld [vmem:[%s169 + $0x190] sm:$0xff]
      %v239 = vld [vmem:[%s169 + $0x198] sm:$0xff]
      %v240 = vld [vmem:[%s169 + $0x1a0] sm:$0xf]
      %v241 = vld [vmem:[%s169 + $0x1a4] sm:$0xff]
      %v242 = vld [vmem:[%s169 + $0x1ac] sm:$0xff]
      %v243 = vld [vmem:[%s169 + $0x1b4] sm:$0xf]
      %v244 = vld [vmem:[%s169 + $0x1b8] sm:$0xff]
      %v245 = vld [vmem:[%s169 + $0x1c0] sm:$0xff]
      %v246 = vld [vmem:[%s169 + $0x1c8] sm:$0xf]
      %v247 = vld [vmem:[%s169 + $0x1cc] sm:$0xff]
      %v248 = vld [vmem:[%s169 + $0x1d4] sm:$0xff]
      %v249 = vld [vmem:[%s169 + $0x1dc] sm:$0xf]
      %v250 = vld [vmem:[%s169 + $0x1e0] sm:$0xff]
      %v251 = vld [vmem:[%s169 + $0x1e8] sm:$0xff]
      %v252 = vld [vmem:[%s169 + $0x1f0] sm:$0xf]
      %v253 = vld [vmem:[%s169 + $0x1f4] sm:$0xff]
      %v254 = vld [vmem:[%s169 + $0x1fc] sm:$0xff]
      %v255 = vld [vmem:[%s169 + $0x204] sm:$0xf]
      %v256 = vld [vmem:[%s169 + $0x208] sm:$0xff]
      %v257 = vld [vmem:[%s169 + $0x210] sm:$0xff]
      %v258 = vld [vmem:[%s169 + $0x218] sm:$0xf]
      %v259 = vld [vmem:[%s169 + $0x21c] sm:$0xff]
      %v260 = vld [vmem:[%s169 + $0x224] sm:$0xff]
      %v261 = vld [vmem:[%s169 + $0x22c] sm:$0xf]
      %v262 = vld [vmem:[%s169 + $0x230] sm:$0xff]
      %v263 = vld [vmem:[%s169 + $0x238] sm:$0xff]
      %v264 = vld [vmem:[%s169 + $0x240] sm:$0xf]
      %v265 = vld [vmem:[%s169 + $0x244] sm:$0xff]
      %v266 = vld [vmem:[%s169 + $0x24c] sm:$0xff]
      %v267 = vld [vmem:[%s169 + $0x254] sm:$0xf]
      %v268 = vld [vmem:[%s169 + $0x258] sm:$0xff]
      %v269 = vld [vmem:[%s169 + $0x260] sm:$0xff]
      %v270 = vld [vmem:[%s169 + $0x268] sm:$0xf]
      %v271 = vld [vmem:[%s169 + $0x26c] sm:$0xff]
      %v272 = vld [vmem:[%s169 + $0x274] sm:$0xff]
      %v273 = vld [vmem:[%s169 + $0x27c] sm:$0xf]
      %v274 = vld [vmem:[%s169 + $0x280] sm:$0xff]
      %v275 = vld [vmem:[%s169 + $0x288] sm:$0xff]
      %v276 = vld [vmem:[%s169 + $0x290] sm:$0xf]
      %v277 = vld [vmem:[%s169 + $0x294] sm:$0xff]
      %v278 = vld [vmem:[%s169 + $0x29c] sm:$0xff]
      %v279 = vld [vmem:[%s169 + $0x2a4] sm:$0xf]
      %v280 = vld [vmem:[%s169 + $0x2a8] sm:$0xff]
      %v281 = vld [vmem:[%s169 + $0x2b0] sm:$0xff]
      %v282 = vld [vmem:[%s169 + $0x2b8] sm:$0xf]
      %v283 = vld [vmem:[%s169 + $0x2bc] sm:$0xff]
      %v284 = vld [vmem:[%s169 + $0x2c4] sm:$0xff]
      %v285 = vld [vmem:[%s169 + $0x2cc] sm:$0xf]
      %v286 = vld [vmem:[%s169 + $0x2d0] sm:$0xff]
      %v287 = vld [vmem:[%s169 + $0x2d8] sm:$0xff]
      %v288 = vld [vmem:[%s169 + $0x2e0] sm:$0xf]
      %v289 = vld [vmem:[%s169 + $0x2e4] sm:$0xff]
      %v290 = vld [vmem:[%s169 + $0x2ec] sm:$0xff]
      %v291 = vld [vmem:[%s169 + $0x2f4] sm:$0xf]
      %v292 = vld [vmem:[%s169 + $0x2f8] sm:$0xff]
      %v293 = vld [vmem:[%s169 + $0x300] sm:$0xff]
      %v294 = vld [vmem:[%s169 + $0x308] sm:$0xf]
      %v295 = vld [vmem:[%s169 + $0x30c] sm:$0xff]
      %v296 = vld [vmem:[%s169 + $0x314] sm:$0xff]
      %v297 = vld [vmem:[%s169 + $0x31c] sm:$0xf]
      %v298 = vld [vmem:[%s169 + $0x320] sm:$0xff]
      %v299 = vld [vmem:[%s169 + $0x328] sm:$0xff]
      %v300 = vld [vmem:[%s169 + $0x330] sm:$0xf]
      %v301 = vld [vmem:[%s169 + $0x334] sm:$0xff]
      %v302 = vld [vmem:[%s169 + $0x33c] sm:$0xff]
      %v303 = vld [vmem:[%s169 + $0x344] sm:$0xf]
      %v304 = vld [vmem:[%s169 + $0x348] sm:$0xff]
      %v305 = vld [vmem:[%s169 + $0x350] sm:$0xff]
      %v306 = vld [vmem:[%s169 + $0x358] sm:$0xf]
      %v307 = vld [vmem:[%s169 + $0x35c] sm:$0xff]
      %v308 = vld [vmem:[%s169 + $0x364] sm:$0xff]
      %v309 = vld [vmem:[%s169 + $0x36c] sm:$0xf]
      %v310 = vld [vmem:[%s169 + $0x370] sm:$0xff]
      %v311 = vld [vmem:[%s169 + $0x378] sm:$0xff]
      %v312 = vld [vmem:[%s169 + $0x380] sm:$0xf]
      %v313 = vld [vmem:[%s169 + $0x384] sm:$0xff]
      %v314 = vld [vmem:[%s169 + $0x38c] sm:$0xff]
      %v315 = vld [vmem:[%s169 + $0x394] sm:$0xf]
      %v316 = vld [vmem:[%s169 + $0x398] sm:$0xff]
      %v317 = vld [vmem:[%s169 + $0x3a0] sm:$0xff]
      %v318 = vld [vmem:[%s169 + $0x3a8] sm:$0xf]
      %v319 = vld [vmem:[%s169 + $0x3ac] sm:$0xff]
      %v320 = vld [vmem:[%s169 + $0x3b4] sm:$0xff]
      %v321 = vld [vmem:[%s169 + $0x3bc] sm:$0xf]
      %v322 = vld [vmem:[%s169 + $0x3c0] sm:$0xff]
      %v323 = vld [vmem:[%s169 + $0x3c8] sm:$0xff]
      %v324 = vld [vmem:[%s169 + $0x3d0] sm:$0xf]
      %v325 = vld [vmem:[%s169 + $0x3d4] sm:$0xff]
      %v326 = vld [vmem:[%s169 + $0x3dc] sm:$0xff]
      %v327 = vld [vmem:[%s169 + $0x3e4] sm:$0xf]
      %v328 = vld [vmem:[%s169 + $0x3e8] sm:$0xff]
      %v329 = vld [vmem:[%s169 + $0x3f0] sm:$0xff]
      %v330 = vld [vmem:[%s169 + $0x3f8] sm:$0xf]
      %v331 = vld [vmem:[%s169 + $0x3fc] sm:$0xff]
      %v332 = vld [vmem:[%s169 + $0x404] sm:$0xff]
      %v333 = vld [vmem:[%s169 + $0x40c] sm:$0xf]
      %v334 = vld [vmem:[%s169 + $0x410] sm:$0xff]
      %v335 = vld [vmem:[%s169 + $0x418] sm:$0xff]
      %v336 = vld [vmem:[%s169 + $0x420] sm:$0xf]
      %v337 = vld [vmem:[%s169 + $0x424] sm:$0xff]
      %v338 = vld [vmem:[%s169 + $0x42c] sm:$0xff]
      %v339 = vld [vmem:[%s169 + $0x434] sm:$0xf]
      %v340 = vld [vmem:[%s169 + $0x438] sm:$0xff]
      %v341 = vld [vmem:[%s169 + $0x440] sm:$0xff]
      %v342 = vld [vmem:[%s169 + $0x448] sm:$0xf]
      %v343 = vld [vmem:[%s169 + $0x44c] sm:$0xff]
      %v344 = vld [vmem:[%s169 + $0x454] sm:$0xff]
      %v345 = vld [vmem:[%s169 + $0x45c] sm:$0xf]
      %v346 = vld [vmem:[%s169 + $0x460] sm:$0xff]
      %v347 = vld [vmem:[%s169 + $0x468] sm:$0xff]
      %v348 = vld [vmem:[%s169 + $0x470] sm:$0xf]
      %v349 = vld [vmem:[%s169 + $0x474] sm:$0xff]
      %v350 = vld [vmem:[%s169 + $0x47c] sm:$0xff]
      %v351 = vld [vmem:[%s169 + $0x484] sm:$0xf]
      %v352 = vld [vmem:[%s169 + $0x488] sm:$0xff]
      %v353 = vld [vmem:[%s169 + $0x490] sm:$0xff]
      %v354 = vld [vmem:[%s169 + $0x498] sm:$0xf]
      %v355 = vld [vmem:[%s169 + $0x49c] sm:$0xff]
      %v356 = vld [vmem:[%s169 + $0x4a4] sm:$0xff]
      %v357 = vld [vmem:[%s169 + $0x4ac] sm:$0xf]
      %v358 = vld [vmem:[%s169 + $0x4b0] sm:$0xff]
      %v359 = vld [vmem:[%s169 + $0x4b8] sm:$0xff]
      %v360 = vld [vmem:[%s169 + $0x4c0] sm:$0xf]
      %v361 = vld [vmem:[%s169 + $0x4c4] sm:$0xff]
      %v362 = vld [vmem:[%s169 + $0x4cc] sm:$0xff]
      %v363 = vld [vmem:[%s169 + $0x4d4] sm:$0xf]
      %v364 = vld [vmem:[%s169 + $0x4d8] sm:$0xff]
      %v365 = vld [vmem:[%s169 + $0x4e0] sm:$0xff]
      %v366 = vld [vmem:[%s169 + $0x4e8] sm:$0xf]
      %v367 = vld [vmem:[%s169 + $0x4ec] sm:$0xff]
      %v368 = vld [vmem:[%s169 + $0x4f4] sm:$0xff]
      %v369 = vld [vmem:[%s169 + $0x4fc] sm:$0xf]
      %v370 = vld [vmem:[%s169 + $0x500] sm:$0xff]
      %v371 = vld [vmem:[%s169 + $0x508] sm:$0xff]
      %v372 = vld [vmem:[%s169 + $0x510] sm:$0xf]
      %v373 = vld [vmem:[%s169 + $0x514] sm:$0xff]
      %v374 = vld [vmem:[%s169 + $0x51c] sm:$0xff]
      %v375 = vld [vmem:[%s169 + $0x524] sm:$0xf]
      %v376 = vld [vmem:[%s169 + $0x528] sm:$0xff]
      %v377 = vld [vmem:[%s169 + $0x530] sm:$0xff]
      %v378 = vld [vmem:[%s169 + $0x538] sm:$0xf]
      %v379 = vld [vmem:[%s169 + $0x53c] sm:$0xff]
      %v380 = vld [vmem:[%s169 + $0x544] sm:$0xff]
      %v381 = vld [vmem:[%s169 + $0x54c] sm:$0xf]
      %v382 = vld [vmem:[%s169 + $0x550] sm:$0xff]
      %v383 = vld [vmem:[%s169 + $0x558] sm:$0xff]
      %v384 = vld [vmem:[%s169 + $0x560] sm:$0xf]
      %v385 = vld [vmem:[%s169 + $0x564] sm:$0xff]
      %v386 = vld [vmem:[%s169 + $0x56c] sm:$0xff]
      %v387 = vld [vmem:[%s169 + $0x574] sm:$0xf]
      %v388 = vld [vmem:[%s169 + $0x578] sm:$0xff]
      %v389 = vld [vmem:[%s169 + $0x580] sm:$0xff]
      %v390 = vld [vmem:[%s169 + $0x588] sm:$0xf]
      %v391 = vld [vmem:[%s169 + $0x58c] sm:$0xff]
      %v392 = vld [vmem:[%s169 + $0x594] sm:$0xff]
      %v393 = vld [vmem:[%s169 + $0x59c] sm:$0xf]
      %v394 = vld [vmem:[%s169 + $0x5a0] sm:$0xff]
      %v395 = vld [vmem:[%s169 + $0x5a8] sm:$0xff]
      %v396 = vld [vmem:[%s169 + $0x5b0] sm:$0xf]
      %v397 = vld [vmem:[%s169 + $0x5b4] sm:$0xff]
      %v398 = vld [vmem:[%s169 + $0x5bc] sm:$0xff]
      %v399 = vld [vmem:[%s169 + $0x5c4] sm:$0xf]
      %v400 = vld [vmem:[%s169 + $0x5c8] sm:$0xff]
      %v401 = vld [vmem:[%s169 + $0x5d0] sm:$0xff]
      %v402 = vld [vmem:[%s169 + $0x5d8] sm:$0xf]
      %v403 = vld [vmem:[%s169 + $0x5dc] sm:$0xff]
      %v404 = vld [vmem:[%s169 + $0x5e4] sm:$0xff]
      %v405 = vld [vmem:[%s169 + $0x5ec] sm:$0xf]
      %v406 = vld [vmem:[%s169 + $0x5f0] sm:$0xff]
      %v407 = vld [vmem:[%s169 + $0x5f8] sm:$0xff]
      %v408 = vld [vmem:[%s169 + $0x600] sm:$0xf]
      %v409 = vld [vmem:[%s169 + $0x604] sm:$0xff]
      %v410 = vld [vmem:[%s169 + $0x60c] sm:$0xff]
      %v411 = vld [vmem:[%s169 + $0x614] sm:$0xf]
      %v412 = vld [vmem:[%s169 + $0x618] sm:$0xff]
      %v413 = vld [vmem:[%s169 + $0x620] sm:$0xff]
      %v414 = vld [vmem:[%s169 + $0x628] sm:$0xf]
      %v415 = vld [vmem:[%s169 + $0x62c] sm:$0xff]
      %v416 = vld [vmem:[%s169 + $0x634] sm:$0xff]
      %v417 = vld [vmem:[%s169 + $0x63c] sm:$0xf]
      %v418 = vld [vmem:[%s169 + $0x640] sm:$0xff]
      %v419 = vld [vmem:[%s169 + $0x648] sm:$0xff]
      %v420 = vld [vmem:[%s169 + $0x650] sm:$0xf]
      %v421 = vld [vmem:[%s169 + $0x654] sm:$0xff]
      %v422 = vld [vmem:[%s169 + $0x65c] sm:$0xff]
      %v423 = vld [vmem:[%s169 + $0x664] sm:$0xf]
      %v424 = vld [vmem:[%s169 + $0x668] sm:$0xff]
      %v425 = vld [vmem:[%s169 + $0x670] sm:$0xff]
      %v426 = vld [vmem:[%s169 + $0x678] sm:$0xf]
      %v427 = vld [vmem:[%s169 + $0x67c] sm:$0xff]
      %v428 = vld [vmem:[%s169 + $0x684] sm:$0xff]
      %v429 = vld [vmem:[%s169 + $0x68c] sm:$0xf]
      %v430 = vld [vmem:[%s169 + $0x690] sm:$0xff]
      %v431 = vld [vmem:[%s169 + $0x698] sm:$0xff]
      %v432 = vld [vmem:[%s169 + $0x6a0] sm:$0xf]
      %v433 = vld [vmem:[%s169 + $0x6a4] sm:$0xff]
      %v434 = vld [vmem:[%s169 + $0x6ac] sm:$0xff]
      %v435 = vld [vmem:[%s169 + $0x6b4] sm:$0xf]
      %v436 = vld [vmem:[%s169 + $0x6b8] sm:$0xff]
      %v437 = vld [vmem:[%s169 + $0x6c0] sm:$0xff]
      %v438 = vld [vmem:[%s169 + $0x6c8] sm:$0xf]
      %v439 = vld [vmem:[%s169 + $0x6cc] sm:$0xff]
      %v440 = vld [vmem:[%s169 + $0x6d4] sm:$0xff]
      %v441 = vld [vmem:[%s169 + $0x6dc] sm:$0xf]
      %v442 = vld [vmem:[%s169 + $0x6e0] sm:$0xff]
      %v443 = vld [vmem:[%s169 + $0x6e8] sm:$0xff]
      %v444 = vld [vmem:[%s169 + $0x6f0] sm:$0xf]
      %v445 = vld [vmem:[%s169 + $0x6f4] sm:$0xff]
      %v446 = vld [vmem:[%s169 + $0x6fc] sm:$0xff]
      %v447 = vld [vmem:[%s169 + $0x704] sm:$0xf]
      %v448 = vld [vmem:[%s169 + $0x708] sm:$0xff]
      %v449 = vld [vmem:[%s169 + $0x710] sm:$0xff]
      %v450 = vld [vmem:[%s169 + $0x718] sm:$0xf]
      %v451 = vld [vmem:[%s169 + $0x71c] sm:$0xff]
      %v452 = vld [vmem:[%s169 + $0x724] sm:$0xff]
      %v453 = vld [vmem:[%s169 + $0x72c] sm:$0xf]
      %v454 = vld [vmem:[%s169 + $0x730] sm:$0xff]
      %v455 = vld [vmem:[%s169 + $0x738] sm:$0xff]
      %v456 = vld [vmem:[%s169 + $0x740] sm:$0xf]
      %v457 = vld [vmem:[%s169 + $0x744] sm:$0xff]
      %v458 = vld [vmem:[%s169 + $0x74c] sm:$0xff]
      %v459 = vld [vmem:[%s169 + $0x754] sm:$0xf]
      %v460 = vld [vmem:[%s169 + $0x758] sm:$0xff]
      %v461 = vld [vmem:[%s169 + $0x760] sm:$0xff]
      %v462 = vld [vmem:[%s169 + $0x768] sm:$0xf]
      %v463 = vld [vmem:[%s169 + $0x76c] sm:$0xff]
      %v464 = vld [vmem:[%s169 + $0x774] sm:$0xff]
      %v465 = vld [vmem:[%s169 + $0x77c] sm:$0xf]
      %v466 = vld [vmem:[%s169 + $0x780] sm:$0xff]
      %v467 = vld [vmem:[%s169 + $0x788] sm:$0xff]
      %v468 = vld [vmem:[%s169 + $0x790] sm:$0xf]
      %v469 = vld [vmem:[%s169 + $0x794] sm:$0xff]
      %v470 = vld [vmem:[%s169 + $0x79c] sm:$0xff]
      %v471 = vld [vmem:[%s169 + $0x7a4] sm:$0xf]
      %v472 = vld [vmem:[%s169 + $0x7a8] sm:$0xff]
      %v473 = vld [vmem:[%s169 + $0x7b0] sm:$0xff]
      %v474 = vld [vmem:[%s169 + $0x7b8] sm:$0xf]
      %v475 = vld [vmem:[%s169 + $0x7bc] sm:$0xff]
      %v476 = vld [vmem:[%s169 + $0x7c4] sm:$0xff]
      %v477 = vld [vmem:[%s169 + $0x7cc] sm:$0xf]
      %v478 = vld [vmem:[%s169 + $0x7d0] sm:$0xff]
      %v479 = vld [vmem:[%s169 + $0x7d8] sm:$0xff]
      %v480 = vld [vmem:[%s169 + $0x7e0] sm:$0xf]
      %v481 = vld [vmem:[%s169 + $0x7e4] sm:$0xff]
      %v482 = vld [vmem:[%s169 + $0x7ec] sm:$0xff]
      %v483 = vld [vmem:[%s169 + $0x7f4] sm:$0xf]
      %v484 = vld [vmem:[%s169 + $0x7f8] sm:$0xff]
      %v485 = vld [vmem:[%s169 + $0x800] sm:$0xff]
      %v486 = vld [vmem:[%s169 + $0x808] sm:$0xf]
      %v487 = vld [vmem:[%s169 + $0x80c] sm:$0xff]
      %v488 = vld [vmem:[%s169 + $0x814] sm:$0xff]
      %v489 = vld [vmem:[%s169 + $0x81c] sm:$0xf]
      %v490 = vld [vmem:[%s169 + $0x820] sm:$0xff]
      %v491 = vld [vmem:[%s169 + $0x828] sm:$0xff]
      %v492 = vld [vmem:[%s169 + $0x830] sm:$0xf]
      %v493 = vld [vmem:[%s169 + $0x834] sm:$0xff]
      %v494 = vld [vmem:[%s169 + $0x83c] sm:$0xff]
      %v495 = vld [vmem:[%s169 + $0x844] sm:$0xf]
      %v496 = vld [vmem:[%s169 + $0x848] sm:$0xff]
      %v497 = vld [vmem:[%s169 + $0x850] sm:$0xff]
      %v498 = vld [vmem:[%s169 + $0x858] sm:$0xf]
      %v499 = vld [vmem:[%s169 + $0x85c] sm:$0xff]
      %v500 = vld [vmem:[%s169 + $0x864] sm:$0xff]
      %v501 = vld [vmem:[%s169 + $0x86c] sm:$0xf]
      %v502 = vld [vmem:[%s169 + $0x870] sm:$0xff]
      %v503 = vld [vmem:[%s169 + $0x878] sm:$0xff]
      %v504 = vld [vmem:[%s169 + $0x880] sm:$0xf]
      %v505 = vld [vmem:[%s169 + $0x884] sm:$0xff]
      %v506 = vld [vmem:[%s169 + $0x88c] sm:$0xff]
      %v507 = vld [vmem:[%s169 + $0x894] sm:$0xf]
      %v508 = vld [vmem:[%s169 + $0x898] sm:$0xff]
      %v509 = vld [vmem:[%s169 + $0x8a0] sm:$0xff]
      %v510 = vld [vmem:[%s169 + $0x8a8] sm:$0xf]
      %v511 = vld [vmem:[%s169 + $0x8ac] sm:$0xff]
      %v512 = vld [vmem:[%s169 + $0x8b4] sm:$0xff]
      %v513 = vld [vmem:[%s169 + $0x8bc] sm:$0xf]
      %v514 = vld [vmem:[%s169 + $0x8c0] sm:$0xff]
      %v515 = vld [vmem:[%s169 + $0x8c8] sm:$0xff]
      %v516 = vld [vmem:[%s169 + $0x8d0] sm:$0xf]
      %v517 = vld [vmem:[%s169 + $0x8d4] sm:$0xff]
      %v518 = vld [vmem:[%s169 + $0x8dc] sm:$0xff]
      %v519 = vld [vmem:[%s169 + $0x8e4] sm:$0xf]
      %v520 = vld [vmem:[%s169 + $0x8e8] sm:$0xff]
      %v521 = vld [vmem:[%s169 + $0x8f0] sm:$0xff]
      %v522 = vld [vmem:[%s169 + $0x8f8] sm:$0xf]
      %v523 = vld [vmem:[%s169 + $0x8fc] sm:$0xff]
      %v524 = vld [vmem:[%s169 + $0x904] sm:$0xff]
      %v525 = vld [vmem:[%s169 + $0x90c] sm:$0xf]
      %v526 = vld [vmem:[%s169 + $0x910] sm:$0xff]
      %v527 = vld [vmem:[%s169 + $0x918] sm:$0xff]
      %v528 = vld [vmem:[%s169 + $0x920] sm:$0xf]
      %v529 = vld [vmem:[%s169 + $0x924] sm:$0xff]
      %v530 = vld [vmem:[%s169 + $0x92c] sm:$0xff]
      %v531 = vld [vmem:[%s169 + $0x934] sm:$0xf]
      %v532 = vld [vmem:[%s169 + $0x938] sm:$0xff]
      %v533 = vld [vmem:[%s169 + $0x940] sm:$0xff]
      %v534 = vld [vmem:[%s169 + $0x948] sm:$0xf]
      %v535 = vld [vmem:[%s169 + $0x94c] sm:$0xff]
      %v536 = vld [vmem:[%s169 + $0x954] sm:$0xff]
      %v537 = vld [vmem:[%s169 + $0x95c] sm:$0xf]
      %v538 = vld [vmem:[%s169 + $0x960] sm:$0xff]
      %v539 = vld [vmem:[%s169 + $0x968] sm:$0xff]
      %v540 = vld [vmem:[%s169 + $0x970] sm:$0xf]
      %v541 = vld [vmem:[%s169 + $0x974] sm:$0xff]
      %v542 = vld [vmem:[%s169 + $0x97c] sm:$0xff]
      %v543 = vld [vmem:[%s169 + $0x984] sm:$0xf]
      %v544 = vld [vmem:[%s169 + $0x988] sm:$0xff]
      %v545 = vld [vmem:[%s169 + $0x990] sm:$0xff]
      %v546 = vld [vmem:[%s169 + $0x998] sm:$0xf]
      %v547 = vld [vmem:[%s169 + $0x99c] sm:$0xff]
      %v548 = vld [vmem:[%s169 + $0x9a4] sm:$0xff]
      %v549 = vld [vmem:[%s169 + $0x9ac] sm:$0xf]
      %v550 = vld [vmem:[%s169 + $0x9b0] sm:$0xff]
      %v551 = vld [vmem:[%s169 + $0x9b8] sm:$0xff]
      %v552 = vld [vmem:[%s169 + $0x9c0] sm:$0xf]
      %v553 = vld [vmem:[%s169 + $0x9c4] sm:$0xff]
      %v554 = vld [vmem:[%s169 + $0x9cc] sm:$0xff]
      %v555 = vld [vmem:[%s169 + $0x9d4] sm:$0xf]
      %v556 = vld [vmem:[%s169 + $0x9d8] sm:$0xff]
      %v557 = vld [vmem:[%s169 + $0x9e0] sm:$0xff]
      %v558 = vld [vmem:[%s169 + $0x9e8] sm:$0xf]
      %v559 = vld [vmem:[%s169 + $0x9ec] sm:$0xff]
      %v560 = vld [vmem:[%s169 + $0x9f4] sm:$0xff]
      %v561 = vld [vmem:[%s169 + $0x9fc] sm:$0xf]
      %v562 = vld [vmem:[%s1] sm:$0xf]
      %v563 = vld [vmem:[%s1 + $0x4] sm:$0xf]
      %v564 = vld [vmem:[%s1 + $0x8] sm:$0xf]
      %v565 = vld [vmem:[%s1 + $0xc] sm:$0xf]
      %v566 = vld [vmem:[%s1 + $0x10] sm:$0xf]
      %v567 = vld [vmem:[%s1 + $0x14] sm:$0xf]
      %v568 = vld [vmem:[%s1 + $0x18] sm:$0xf]
      %v569 = vld [vmem:[%s1 + $0x1c] sm:$0xf]
      %v570 = vld [vmem:[%s1 + $0x20] sm:$0xf]
      %v571 = vld [vmem:[%s1 + $0x24] sm:$0xf]
      %v572 = vld [vmem:[%s1 + $0x28] sm:$0xf]
      %v573 = vld [vmem:[%s1 + $0x2c] sm:$0xf]
      %v574 = vld [vmem:[%s1 + $0x30] sm:$0xf]
      %v575 = vld [vmem:[%s1 + $0x34] sm:$0xf]
      %v576 = vld [vmem:[%s1 + $0x38] sm:$0xf]
      %v577 = vld [vmem:[%s1 + $0x3c] sm:$0xf]
      %v578 = vld [vmem:[%s1 + $0x40] sm:$0xf]
      %v579 = vld [vmem:[%s1 + $0x44] sm:$0xf]
      %v580 = vld [vmem:[%s1 + $0x48] sm:$0xf]
      %v581 = vld [vmem:[%s1 + $0x4c] sm:$0xf]
      %v582 = vld [vmem:[%s1 + $0x50] sm:$0xf]
      %v583 = vld [vmem:[%s1 + $0x54] sm:$0xf]
      %v584 = vld [vmem:[%s1 + $0x58] sm:$0xf]
      %v585 = vld [vmem:[%s1 + $0x5c] sm:$0xf]
      %v586 = vld [vmem:[%s1 + $0x60] sm:$0xf]
      %v587 = vld [vmem:[%s1 + $0x64] sm:$0xf]
      %v588 = vld [vmem:[%s1 + $0x68] sm:$0xf]
      %v589 = vld [vmem:[%s1 + $0x6c] sm:$0xf]
      %v590 = vld [vmem:[%s1 + $0x70] sm:$0xf]
      %v591 = vld [vmem:[%s1 + $0x74] sm:$0xf]
      %v592 = vld [vmem:[%s1 + $0x78] sm:$0xf]
      %v593 = vld [vmem:[%s1 + $0x7c] sm:$0xf]
      %v594 = vld [vmem:[%s1 + $0x80] sm:$0xf]
      %v595 = vld [vmem:[%s1 + $0x84] sm:$0xf]
      %v596 = vld [vmem:[%s1 + $0x88] sm:$0xf]
      %v597 = vld [vmem:[%s1 + $0x8c] sm:$0xf]
      %v598 = vld [vmem:[%s1 + $0x90] sm:$0xf]
      %v599 = vld [vmem:[%s1 + $0x94] sm:$0xf]
      %v600 = vld [vmem:[%s1 + $0x98] sm:$0xf]
      %v601 = vld [vmem:[%s1 + $0x9c] sm:$0xf]
      %v602 = vld [vmem:[%s1 + $0xa0] sm:$0xf]
      %v603 = vld [vmem:[%s1 + $0xa4] sm:$0xf]
      %v604 = vld [vmem:[%s1 + $0xa8] sm:$0xf]
      %v605 = vld [vmem:[%s1 + $0xac] sm:$0xf]
      %v606 = vld [vmem:[%s1 + $0xb0] sm:$0xf]
      %v607 = vld [vmem:[%s1 + $0xb4] sm:$0xf]
      %v608 = vld [vmem:[%s1 + $0xb8] sm:$0xf]
      %v609 = vld [vmem:[%s1 + $0xbc] sm:$0xf]
      %v610 = vld [vmem:[%s1 + $0xc0] sm:$0xf]
      %v611 = vld [vmem:[%s1 + $0xc4] sm:$0xf]
      %v612 = vld [vmem:[%s1 + $0xc8] sm:$0xf]
      %v613 = vld [vmem:[%s1 + $0xcc] sm:$0xf]
      %v614 = vld [vmem:[%s1 + $0xd0] sm:$0xf]
      %v615 = vld [vmem:[%s1 + $0xd4] sm:$0xf]
      %v616 = vld [vmem:[%s1 + $0xd8] sm:$0xf]
      %v617 = vld [vmem:[%s1 + $0xdc] sm:$0xf]
      %v618 = vld [vmem:[%s1 + $0xe0] sm:$0xf]
      %v619 = vld [vmem:[%s1 + $0xe4] sm:$0xf]
      %v620 = vld [vmem:[%s1 + $0xe8] sm:$0xf]
      %v621 = vld [vmem:[%s1 + $0xec] sm:$0xf]
      %v622 = vld [vmem:[%s1 + $0xf0] sm:$0xf]
      %v623 = vld [vmem:[%s1 + $0xf4] sm:$0xf]
      %v624 = vld [vmem:[%s1 + $0xf8] sm:$0xf]
      %v625 = vld [vmem:[%s1 + $0xfc] sm:$0xf]
      %v626 = vld [vmem:[%s1 + $0x100] sm:$0xf]
      %v627 = vld [vmem:[%s1 + $0x104] sm:$0xf]
      %v628 = vld [vmem:[%s1 + $0x108] sm:$0xf]
      %v629 = vld [vmem:[%s1 + $0x10c] sm:$0xf]
      %v630 = vld [vmem:[%s1 + $0x110] sm:$0xf]
      %v631 = vld [vmem:[%s1 + $0x114] sm:$0xf]
      %v632 = vld [vmem:[%s1 + $0x118] sm:$0xf]
      %v633 = vld [vmem:[%s1 + $0x11c] sm:$0xf]
      %v634 = vld [vmem:[%s1 + $0x120] sm:$0xf]
      %v635 = vld [vmem:[%s1 + $0x124] sm:$0xf]
      %v636 = vld [vmem:[%s1 + $0x128] sm:$0xf]
      %v637 = vld [vmem:[%s1 + $0x12c] sm:$0xf]
      %v638 = vld [vmem:[%s1 + $0x130] sm:$0xf]
      %v639 = vld [vmem:[%s1 + $0x134] sm:$0xf]
      %v640 = vld [vmem:[%s1 + $0x138] sm:$0xf]
      %v641 = vld [vmem:[%s1 + $0x13c] sm:$0xf]
      %v642 = vld [vmem:[%s2] sm:$0x1]
      %v644 = vlaneseq
      %v645 = vshrl.u32 %v644, 7
      %v646 = vsub.s32 0, %v645
      %v647 = vrot.slane %v642, %v646
      %v1033 = vunpack.c.l.b16 %v178
      %v1034 = vunpack.c.h.b16 %v178
      %v1035 = vunpack.c.l.b16 %v179
      %v1036 = vunpack.c.h.b16 %v179
      %v1037 = vunpack.c.l.b16 %v180
      %v1038 = vunpack.c.l.b16 %v181
      %v1039 = vunpack.c.h.b16 %v181
      %v1040 = vunpack.c.l.b16 %v182
      %v1041 = vunpack.c.h.b16 %v182
      %v1042 = vunpack.c.l.b16 %v183
      %v1043 = vunpack.c.l.b16 %v184
      %v1044 = vunpack.c.h.b16 %v184
      %v1045 = vunpack.c.l.b16 %v185
      %v1046 = vunpack.c.h.b16 %v185
      %v1047 = vunpack.c.l.b16 %v186
      %v1048 = vunpack.c.l.b16 %v187
      %v1049 = vunpack.c.h.b16 %v187
      %v1050 = vunpack.c.l.b16 %v188
      %v1051 = vunpack.c.h.b16 %v188
      %v1052 = vunpack.c.l.b16 %v189
      %v1053 = vunpack.c.l.b16 %v190
      %v1054 = vunpack.c.h.b16 %v190
      %v1055 = vunpack.c.l.b16 %v191
      %v1056 = vunpack.c.h.b16 %v191
      %v1057 = vunpack.c.l.b16 %v192
      %v1058 = vunpack.c.l.b16 %v193
      %v1059 = vunpack.c.h.b16 %v193
      %v1060 = vunpack.c.l.b16 %v194
      %v1061 = vunpack.c.h.b16 %v194
      %v1062 = vunpack.c.l.b16 %v195
      %v1063 = vunpack.c.l.b16 %v196
      %v1064 = vunpack.c.h.b16 %v196
      %v1065 = vunpack.c.l.b16 %v197
      %v1066 = vunpack.c.h.b16 %v197
      %v1067 = vunpack.c.l.b16 %v198
      %v1068 = vunpack.c.l.b16 %v199
      %v1069 = vunpack.c.h.b16 %v199
      %v1070 = vunpack.c.l.b16 %v200
      %v1071 = vunpack.c.h.b16 %v200
      %v1072 = vunpack.c.l.b16 %v201
      %v1073 = vunpack.c.l.b16 %v202
      %v1074 = vunpack.c.h.b16 %v202
      %v1075 = vunpack.c.l.b16 %v203
      %v1076 = vunpack.c.h.b16 %v203
      %v1077 = vunpack.c.l.b16 %v204
      %v1078 = vunpack.c.l.b16 %v205
      %v1079 = vunpack.c.h.b16 %v205
      %v1080 = vunpack.c.l.b16 %v206
      %v1081 = vunpack.c.h.b16 %v206
      %v1082 = vunpack.c.l.b16 %v207
      %v1083 = vunpack.c.l.b16 %v208
      %v1084 = vunpack.c.h.b16 %v208
      %v1085 = vunpack.c.l.b16 %v209
      %v1086 = vunpack.c.h.b16 %v209
      %v1087 = vunpack.c.l.b16 %v210
      %v1088 = vunpack.c.l.b16 %v211
      %v1089 = vunpack.c.h.b16 %v211
      %v1090 = vunpack.c.l.b16 %v212
      %v1091 = vunpack.c.h.b16 %v212
      %v1092 = vunpack.c.l.b16 %v213
      %v1093 = vunpack.c.l.b16 %v214
      %v1094 = vunpack.c.h.b16 %v214
      %v1095 = vunpack.c.l.b16 %v215
      %v1096 = vunpack.c.h.b16 %v215
      %v1097 = vunpack.c.l.b16 %v216
      %v1098 = vunpack.c.l.b16 %v217
      %v1099 = vunpack.c.h.b16 %v217
      %v1100 = vunpack.c.l.b16 %v218
      %v1101 = vunpack.c.h.b16 %v218
      %v1102 = vunpack.c.l.b16 %v219
      %v1103 = vunpack.c.l.b16 %v220
      %v1104 = vunpack.c.h.b16 %v220
      %v1105 = vunpack.c.l.b16 %v221
      %v1106 = vunpack.c.h.b16 %v221
      %v1107 = vunpack.c.l.b16 %v222
      %v1108 = vunpack.c.l.b16 %v223
      %v1109 = vunpack.c.h.b16 %v223
      %v1110 = vunpack.c.l.b16 %v224
      %v1111 = vunpack.c.h.b16 %v224
      %v1112 = vunpack.c.l.b16 %v225
      %v1113 = vunpack.c.l.b16 %v226
      %v1114 = vunpack.c.h.b16 %v226
      %v1115 = vunpack.c.l.b16 %v227
      %v1116 = vunpack.c.h.b16 %v227
      %v1117 = vunpack.c.l.b16 %v228
      %v1118 = vunpack.c.l.b16 %v229
      %v1119 = vunpack.c.h.b16 %v229
      %v1120 = vunpack.c.l.b16 %v230
      %v1121 = vunpack.c.h.b16 %v230
      %v1122 = vunpack.c.l.b16 %v231
      %v1123 = vunpack.c.l.b16 %v232
      %v1124 = vunpack.c.h.b16 %v232
      %v1125 = vunpack.c.l.b16 %v233
      %v1126 = vunpack.c.h.b16 %v233
      %v1127 = vunpack.c.l.b16 %v234
      %v1128 = vunpack.c.l.b16 %v235
      %v1129 = vunpack.c.h.b16 %v235
      %v1130 = vunpack.c.l.b16 %v236
      %v1131 = vunpack.c.h.b16 %v236
      %v1132 = vunpack.c.l.b16 %v237
      %v1133 = vunpack.c.l.b16 %v238
      %v1134 = vunpack.c.h.b16 %v238
      %v1135 = vunpack.c.l.b16 %v239
      %v1136 = vunpack.c.h.b16 %v239
      %v1137 = vunpack.c.l.b16 %v240
      %v1138 = vunpack.c.l.b16 %v241
      %v1139 = vunpack.c.h.b16 %v241
      %v1140 = vunpack.c.l.b16 %v242
      %v1141 = vunpack.c.h.b16 %v242
      %v1142 = vunpack.c.l.b16 %v243
      %v1143 = vunpack.c.l.b16 %v244
      %v1144 = vunpack.c.h.b16 %v244
      %v1145 = vunpack.c.l.b16 %v245
      %v1146 = vunpack.c.h.b16 %v245
      %v1147 = vunpack.c.l.b16 %v246
      %v1148 = vunpack.c.l.b16 %v247
      %v1149 = vunpack.c.h.b16 %v247
      %v1150 = vunpack.c.l.b16 %v248
      %v1151 = vunpack.c.h.b16 %v248
      %v1152 = vunpack.c.l.b16 %v249
      %v1153 = vunpack.c.l.b16 %v250
      %v1154 = vunpack.c.h.b16 %v250
      %v1155 = vunpack.c.l.b16 %v251
      %v1156 = vunpack.c.h.b16 %v251
      %v1157 = vunpack.c.l.b16 %v252
      %v1158 = vunpack.c.l.b16 %v253
      %v1159 = vunpack.c.h.b16 %v253
      %v1160 = vunpack.c.l.b16 %v254
      %v1161 = vunpack.c.h.b16 %v254
      %v1162 = vunpack.c.l.b16 %v255
      %v1163 = vunpack.c.l.b16 %v256
      %v1164 = vunpack.c.h.b16 %v256
      %v1165 = vunpack.c.l.b16 %v257
      %v1166 = vunpack.c.h.b16 %v257
      %v1167 = vunpack.c.l.b16 %v258
      %v1168 = vunpack.c.l.b16 %v259
      %v1169 = vunpack.c.h.b16 %v259
      %v1170 = vunpack.c.l.b16 %v260
      %v1171 = vunpack.c.h.b16 %v260
      %v1172 = vunpack.c.l.b16 %v261
      %v1173 = vunpack.c.l.b16 %v262
      %v1174 = vunpack.c.h.b16 %v262
      %v1175 = vunpack.c.l.b16 %v263
      %v1176 = vunpack.c.h.b16 %v263
      %v1177 = vunpack.c.l.b16 %v264
      %v1178 = vunpack.c.l.b16 %v265
      %v1179 = vunpack.c.h.b16 %v265
      %v1180 = vunpack.c.l.b16 %v266
      %v1181 = vunpack.c.h.b16 %v266
      %v1182 = vunpack.c.l.b16 %v267
      %v1183 = vunpack.c.l.b16 %v268
      %v1184 = vunpack.c.h.b16 %v268
      %v1185 = vunpack.c.l.b16 %v269
      %v1186 = vunpack.c.h.b16 %v269
      %v1187 = vunpack.c.l.b16 %v270
      %v1188 = vunpack.c.l.b16 %v271
      %v1189 = vunpack.c.h.b16 %v271
      %v1190 = vunpack.c.l.b16 %v272
      %v1191 = vunpack.c.h.b16 %v272
      %v1192 = vunpack.c.l.b16 %v273
      %v1193 = vunpack.c.l.b16 %v274
      %v1194 = vunpack.c.h.b16 %v274
      %v1195 = vunpack.c.l.b16 %v275
      %v1196 = vunpack.c.h.b16 %v275
      %v1197 = vunpack.c.l.b16 %v276
      %v1198 = vunpack.c.l.b16 %v277
      %v1199 = vunpack.c.h.b16 %v277
      %v1200 = vunpack.c.l.b16 %v278
      %v1201 = vunpack.c.h.b16 %v278
      %v1202 = vunpack.c.l.b16 %v279
      %v1203 = vunpack.c.l.b16 %v280
      %v1204 = vunpack.c.h.b16 %v280
      %v1205 = vunpack.c.l.b16 %v281
      %v1206 = vunpack.c.h.b16 %v281
      %v1207 = vunpack.c.l.b16 %v282
      %v1208 = vunpack.c.l.b16 %v283
      %v1209 = vunpack.c.h.b16 %v283
      %v1210 = vunpack.c.l.b16 %v284
      %v1211 = vunpack.c.h.b16 %v284
      %v1212 = vunpack.c.l.b16 %v285
      %v1213 = vunpack.c.l.b16 %v286
      %v1214 = vunpack.c.h.b16 %v286
      %v1215 = vunpack.c.l.b16 %v287
      %v1216 = vunpack.c.h.b16 %v287
      %v1217 = vunpack.c.l.b16 %v288
      %v1218 = vunpack.c.l.b16 %v289
      %v1219 = vunpack.c.h.b16 %v289
      %v1220 = vunpack.c.l.b16 %v290
      %v1221 = vunpack.c.h.b16 %v290
      %v1222 = vunpack.c.l.b16 %v291
      %v1223 = vunpack.c.l.b16 %v292
      %v1224 = vunpack.c.h.b16 %v292
      %v1225 = vunpack.c.l.b16 %v293
      %v1226 = vunpack.c.h.b16 %v293
      %v1227 = vunpack.c.l.b16 %v294
      %v1228 = vunpack.c.l.b16 %v295
      %v1229 = vunpack.c.h.b16 %v295
      %v1230 = vunpack.c.l.b16 %v296
      %v1231 = vunpack.c.h.b16 %v296
      %v1232 = vunpack.c.l.b16 %v297
      %v1233 = vunpack.c.l.b16 %v298
      %v1234 = vunpack.c.h.b16 %v298
      %v1235 = vunpack.c.l.b16 %v299
      %v1236 = vunpack.c.h.b16 %v299
      %v1237 = vunpack.c.l.b16 %v300
      %v1238 = vunpack.c.l.b16 %v301
      %v1239 = vunpack.c.h.b16 %v301
      %v1240 = vunpack.c.l.b16 %v302
      %v1241 = vunpack.c.h.b16 %v302
      %v1242 = vunpack.c.l.b16 %v303
      %v1243 = vunpack.c.l.b16 %v304
      %v1244 = vunpack.c.h.b16 %v304
      %v1245 = vunpack.c.l.b16 %v305
      %v1246 = vunpack.c.h.b16 %v305
      %v1247 = vunpack.c.l.b16 %v306
      %v1248 = vunpack.c.l.b16 %v307
      %v1249 = vunpack.c.h.b16 %v307
      %v1250 = vunpack.c.l.b16 %v308
      %v1251 = vunpack.c.h.b16 %v308
      %v1252 = vunpack.c.l.b16 %v309
      %v1253 = vunpack.c.l.b16 %v310
      %v1254 = vunpack.c.h.b16 %v310
      %v1255 = vunpack.c.l.b16 %v311
      %v1256 = vunpack.c.h.b16 %v311
      %v1257 = vunpack.c.l.b16 %v312
      %v1258 = vunpack.c.l.b16 %v313
      %v1259 = vunpack.c.h.b16 %v313
      %v1260 = vunpack.c.l.b16 %v314
      %v1261 = vunpack.c.h.b16 %v314
      %v1262 = vunpack.c.l.b16 %v315
      %v1263 = vunpack.c.l.b16 %v316
      %v1264 = vunpack.c.h.b16 %v316
      %v1265 = vunpack.c.l.b16 %v317
      %v1266 = vunpack.c.h.b16 %v317
      %v1267 = vunpack.c.l.b16 %v318
      %v1268 = vunpack.c.l.b16 %v319
      %v1269 = vunpack.c.h.b16 %v319
      %v1270 = vunpack.c.l.b16 %v320
      %v1271 = vunpack.c.h.b16 %v320
      %v1272 = vunpack.c.l.b16 %v321
      %v1273 = vunpack.c.l.b16 %v322
      %v1274 = vunpack.c.h.b16 %v322
      %v1275 = vunpack.c.l.b16 %v323
      %v1276 = vunpack.c.h.b16 %v323
      %v1277 = vunpack.c.l.b16 %v324
      %v1278 = vunpack.c.l.b16 %v325
      %v1279 = vunpack.c.h.b16 %v325
      %v1280 = vunpack.c.l.b16 %v326
      %v1281 = vunpack.c.h.b16 %v326
      %v1282 = vunpack.c.l.b16 %v327
      %v1283 = vunpack.c.l.b16 %v328
      %v1284 = vunpack.c.h.b16 %v328
      %v1285 = vunpack.c.l.b16 %v329
      %v1286 = vunpack.c.h.b16 %v329
      %v1287 = vunpack.c.l.b16 %v330
      %v1288 = vunpack.c.l.b16 %v331
      %v1289 = vunpack.c.h.b16 %v331
      %v1290 = vunpack.c.l.b16 %v332
      %v1291 = vunpack.c.h.b16 %v332
      %v1292 = vunpack.c.l.b16 %v333
      %v1293 = vunpack.c.l.b16 %v334
      %v1294 = vunpack.c.h.b16 %v334
      %v1295 = vunpack.c.l.b16 %v335
      %v1296 = vunpack.c.h.b16 %v335
      %v1297 = vunpack.c.l.b16 %v336
      %v1298 = vunpack.c.l.b16 %v337
      %v1299 = vunpack.c.h.b16 %v337
      %v1300 = vunpack.c.l.b16 %v338
      %v1301 = vunpack.c.h.b16 %v338
      %v1302 = vunpack.c.l.b16 %v339
      %v1303 = vunpack.c.l.b16 %v340
      %v1304 = vunpack.c.h.b16 %v340
      %v1305 = vunpack.c.l.b16 %v341
      %v1306 = vunpack.c.h.b16 %v341
      %v1307 = vunpack.c.l.b16 %v342
      %v1308 = vunpack.c.l.b16 %v343
      %v1309 = vunpack.c.h.b16 %v343
      %v1310 = vunpack.c.l.b16 %v344
      %v1311 = vunpack.c.h.b16 %v344
      %v1312 = vunpack.c.l.b16 %v345
      %v1313 = vunpack.c.l.b16 %v346
      %v1314 = vunpack.c.h.b16 %v346
      %v1315 = vunpack.c.l.b16 %v347
      %v1316 = vunpack.c.h.b16 %v347
      %v1317 = vunpack.c.l.b16 %v348
      %v1318 = vunpack.c.l.b16 %v349
      %v1319 = vunpack.c.h.b16 %v349
      %v1320 = vunpack.c.l.b16 %v350
      %v1321 = vunpack.c.h.b16 %v350
      %v1322 = vunpack.c.l.b16 %v351
      %v1323 = vunpack.c.l.b16 %v352
      %v1324 = vunpack.c.h.b16 %v352
      %v1325 = vunpack.c.l.b16 %v353
      %v1326 = vunpack.c.h.b16 %v353
      %v1327 = vunpack.c.l.b16 %v354
      %v1328 = vunpack.c.l.b16 %v355
      %v1329 = vunpack.c.h.b16 %v355
      %v1330 = vunpack.c.l.b16 %v356
      %v1331 = vunpack.c.h.b16 %v356
      %v1332 = vunpack.c.l.b16 %v357
      %v1333 = vunpack.c.l.b16 %v358
      %v1334 = vunpack.c.h.b16 %v358
      %v1335 = vunpack.c.l.b16 %v359
      %v1336 = vunpack.c.h.b16 %v359
      %v1337 = vunpack.c.l.b16 %v360
      %v1338 = vunpack.c.l.b16 %v361
      %v1339 = vunpack.c.h.b16 %v361
      %v1340 = vunpack.c.l.b16 %v362
      %v1341 = vunpack.c.h.b16 %v362
      %v1342 = vunpack.c.l.b16 %v363
      %v1343 = vunpack.c.l.b16 %v364
      %v1344 = vunpack.c.h.b16 %v364
      %v1345 = vunpack.c.l.b16 %v365
      %v1346 = vunpack.c.h.b16 %v365
      %v1347 = vunpack.c.l.b16 %v366
      %v1348 = vunpack.c.l.b16 %v367
      %v1349 = vunpack.c.h.b16 %v367
      %v1350 = vunpack.c.l.b16 %v368
      %v1351 = vunpack.c.h.b16 %v368
      %v1352 = vunpack.c.l.b16 %v369
      %v1353 = vunpack.c.l.b16 %v370
      %v1354 = vunpack.c.h.b16 %v370
      %v1355 = vunpack.c.l.b16 %v371
      %v1356 = vunpack.c.h.b16 %v371
      %v1357 = vunpack.c.l.b16 %v372
      %v1358 = vunpack.c.l.b16 %v373
      %v1359 = vunpack.c.h.b16 %v373
      %v1360 = vunpack.c.l.b16 %v374
      %v1361 = vunpack.c.h.b16 %v374
      %v1362 = vunpack.c.l.b16 %v375
      %v1363 = vunpack.c.l.b16 %v376
      %v1364 = vunpack.c.h.b16 %v376
      %v1365 = vunpack.c.l.b16 %v377
      %v1366 = vunpack.c.h.b16 %v377
      %v1367 = vunpack.c.l.b16 %v378
      %v1368 = vunpack.c.l.b16 %v379
      %v1369 = vunpack.c.h.b16 %v379
      %v1370 = vunpack.c.l.b16 %v380
      %v1371 = vunpack.c.h.b16 %v380
      %v1372 = vunpack.c.l.b16 %v381
      %v1373 = vunpack.c.l.b16 %v382
      %v1374 = vunpack.c.h.b16 %v382
      %v1375 = vunpack.c.l.b16 %v383
      %v1376 = vunpack.c.h.b16 %v383
      %v1377 = vunpack.c.l.b16 %v384
      %v1378 = vunpack.c.l.b16 %v385
      %v1379 = vunpack.c.h.b16 %v385
      %v1380 = vunpack.c.l.b16 %v386
      %v1381 = vunpack.c.h.b16 %v386
      %v1382 = vunpack.c.l.b16 %v387
      %v1383 = vunpack.c.l.b16 %v388
      %v1384 = vunpack.c.h.b16 %v388
      %v1385 = vunpack.c.l.b16 %v389
      %v1386 = vunpack.c.h.b16 %v389
      %v1387 = vunpack.c.l.b16 %v390
      %v1388 = vunpack.c.l.b16 %v391
      %v1389 = vunpack.c.h.b16 %v391
      %v1390 = vunpack.c.l.b16 %v392
      %v1391 = vunpack.c.h.b16 %v392
      %v1392 = vunpack.c.l.b16 %v393
      %v1393 = vunpack.c.l.b16 %v394
      %v1394 = vunpack.c.h.b16 %v394
      %v1395 = vunpack.c.l.b16 %v395
      %v1396 = vunpack.c.h.b16 %v395
      %v1397 = vunpack.c.l.b16 %v396
      %v1398 = vunpack.c.l.b16 %v397
      %v1399 = vunpack.c.h.b16 %v397
      %v1400 = vunpack.c.l.b16 %v398
      %v1401 = vunpack.c.h.b16 %v398
      %v1402 = vunpack.c.l.b16 %v399
      %v1403 = vunpack.c.l.b16 %v400
      %v1404 = vunpack.c.h.b16 %v400
      %v1405 = vunpack.c.l.b16 %v401
      %v1406 = vunpack.c.h.b16 %v401
      %v1407 = vunpack.c.l.b16 %v402
      %v1408 = vunpack.c.l.b16 %v403
      %v1409 = vunpack.c.h.b16 %v403
      %v1410 = vunpack.c.l.b16 %v404
      %v1411 = vunpack.c.h.b16 %v404
      %v1412 = vunpack.c.l.b16 %v405
      %v1413 = vunpack.c.l.b16 %v406
      %v1414 = vunpack.c.h.b16 %v406
      %v1415 = vunpack.c.l.b16 %v407
      %v1416 = vunpack.c.h.b16 %v407
      %v1417 = vunpack.c.l.b16 %v408
      %v1418 = vunpack.c.l.b16 %v409
      %v1419 = vunpack.c.h.b16 %v409
      %v1420 = vunpack.c.l.b16 %v410
      %v1421 = vunpack.c.h.b16 %v410
      %v1422 = vunpack.c.l.b16 %v411
      %v1423 = vunpack.c.l.b16 %v412
      %v1424 = vunpack.c.h.b16 %v412
      %v1425 = vunpack.c.l.b16 %v413
      %v1426 = vunpack.c.h.b16 %v413
      %v1427 = vunpack.c.l.b16 %v414
      %v1428 = vunpack.c.l.b16 %v415
      %v1429 = vunpack.c.h.b16 %v415
      %v1430 = vunpack.c.l.b16 %v416
      %v1431 = vunpack.c.h.b16 %v416
      %v1432 = vunpack.c.l.b16 %v417
      %v1433 = vunpack.c.l.b16 %v418
      %v1434 = vunpack.c.h.b16 %v418
      %v1435 = vunpack.c.l.b16 %v419
      %v1436 = vunpack.c.h.b16 %v419
      %v1437 = vunpack.c.l.b16 %v420
      %v1438 = vunpack.c.l.b16 %v421
      %v1439 = vunpack.c.h.b16 %v421
      %v1440 = vunpack.c.l.b16 %v422
      %v1441 = vunpack.c.h.b16 %v422
      %v1442 = vunpack.c.l.b16 %v423
      %v1443 = vunpack.c.l.b16 %v424
      %v1444 = vunpack.c.h.b16 %v424
      %v1445 = vunpack.c.l.b16 %v425
      %v1446 = vunpack.c.h.b16 %v425
      %v1447 = vunpack.c.l.b16 %v426
      %v1448 = vunpack.c.l.b16 %v427
      %v1449 = vunpack.c.h.b16 %v427
      %v1450 = vunpack.c.l.b16 %v428
      %v1451 = vunpack.c.h.b16 %v428
      %v1452 = vunpack.c.l.b16 %v429
      %v1453 = vunpack.c.l.b16 %v430
      %v1454 = vunpack.c.h.b16 %v430
      %v1455 = vunpack.c.l.b16 %v431
      %v1456 = vunpack.c.h.b16 %v431
      %v1457 = vunpack.c.l.b16 %v432
      %v1458 = vunpack.c.l.b16 %v433
      %v1459 = vunpack.c.h.b16 %v433
      %v1460 = vunpack.c.l.b16 %v434
      %v1461 = vunpack.c.h.b16 %v434
      %v1462 = vunpack.c.l.b16 %v435
      %v1463 = vunpack.c.l.b16 %v436
      %v1464 = vunpack.c.h.b16 %v436
      %v1465 = vunpack.c.l.b16 %v437
      %v1466 = vunpack.c.h.b16 %v437
      %v1467 = vunpack.c.l.b16 %v438
      %v1468 = vunpack.c.l.b16 %v439
      %v1469 = vunpack.c.h.b16 %v439
      %v1470 = vunpack.c.l.b16 %v440
      %v1471 = vunpack.c.h.b16 %v440
      %v1472 = vunpack.c.l.b16 %v441
      %v1473 = vunpack.c.l.b16 %v442
      %v1474 = vunpack.c.h.b16 %v442
      %v1475 = vunpack.c.l.b16 %v443
      %v1476 = vunpack.c.h.b16 %v443
      %v1477 = vunpack.c.l.b16 %v444
      %v1478 = vunpack.c.l.b16 %v445
      %v1479 = vunpack.c.h.b16 %v445
      %v1480 = vunpack.c.l.b16 %v446
      %v1481 = vunpack.c.h.b16 %v446
      %v1482 = vunpack.c.l.b16 %v447
      %v1483 = vunpack.c.l.b16 %v448
      %v1484 = vunpack.c.h.b16 %v448
      %v1485 = vunpack.c.l.b16 %v449
      %v1486 = vunpack.c.h.b16 %v449
      %v1487 = vunpack.c.l.b16 %v450
      %v1488 = vunpack.c.l.b16 %v451
      %v1489 = vunpack.c.h.b16 %v451
      %v1490 = vunpack.c.l.b16 %v452
      %v1491 = vunpack.c.h.b16 %v452
      %v1492 = vunpack.c.l.b16 %v453
      %v1493 = vunpack.c.l.b16 %v454
      %v1494 = vunpack.c.h.b16 %v454
      %v1495 = vunpack.c.l.b16 %v455
      %v1496 = vunpack.c.h.b16 %v455
      %v1497 = vunpack.c.l.b16 %v456
      %v1498 = vunpack.c.l.b16 %v457
      %v1499 = vunpack.c.h.b16 %v457
      %v1500 = vunpack.c.l.b16 %v458
      %v1501 = vunpack.c.h.b16 %v458
      %v1502 = vunpack.c.l.b16 %v459
      %v1503 = vunpack.c.l.b16 %v460
      %v1504 = vunpack.c.h.b16 %v460
      %v1505 = vunpack.c.l.b16 %v461
      %v1506 = vunpack.c.h.b16 %v461
      %v1507 = vunpack.c.l.b16 %v462
      %v1508 = vunpack.c.l.b16 %v463
      %v1509 = vunpack.c.h.b16 %v463
      %v1510 = vunpack.c.l.b16 %v464
      %v1511 = vunpack.c.h.b16 %v464
      %v1512 = vunpack.c.l.b16 %v465
      %v1513 = vunpack.c.l.b16 %v466
      %v1514 = vunpack.c.h.b16 %v466
      %v1515 = vunpack.c.l.b16 %v467
      %v1516 = vunpack.c.h.b16 %v467
      %v1517 = vunpack.c.l.b16 %v468
      %v1518 = vunpack.c.l.b16 %v469
      %v1519 = vunpack.c.h.b16 %v469
      %v1520 = vunpack.c.l.b16 %v470
      %v1521 = vunpack.c.h.b16 %v470
      %v1522 = vunpack.c.l.b16 %v471
      %v1523 = vunpack.c.l.b16 %v472
      %v1524 = vunpack.c.h.b16 %v472
      %v1525 = vunpack.c.l.b16 %v473
      %v1526 = vunpack.c.h.b16 %v473
      %v1527 = vunpack.c.l.b16 %v474
      %v1528 = vunpack.c.l.b16 %v475
      %v1529 = vunpack.c.h.b16 %v475
      %v1530 = vunpack.c.l.b16 %v476
      %v1531 = vunpack.c.h.b16 %v476
      %v1532 = vunpack.c.l.b16 %v477
      %v1533 = vunpack.c.l.b16 %v478
      %v1534 = vunpack.c.h.b16 %v478
      %v1535 = vunpack.c.l.b16 %v479
      %v1536 = vunpack.c.h.b16 %v479
      %v1537 = vunpack.c.l.b16 %v480
      %v1538 = vunpack.c.l.b16 %v481
      %v1539 = vunpack.c.h.b16 %v481
      %v1540 = vunpack.c.l.b16 %v482
      %v1541 = vunpack.c.h.b16 %v482
      %v1542 = vunpack.c.l.b16 %v483
      %v1543 = vunpack.c.l.b16 %v484
      %v1544 = vunpack.c.h.b16 %v484
      %v1545 = vunpack.c.l.b16 %v485
      %v1546 = vunpack.c.h.b16 %v485
      %v1547 = vunpack.c.l.b16 %v486
      %v1548 = vunpack.c.l.b16 %v487
      %v1549 = vunpack.c.h.b16 %v487
      %v1550 = vunpack.c.l.b16 %v488
      %v1551 = vunpack.c.h.b16 %v488
      %v1552 = vunpack.c.l.b16 %v489
      %v1553 = vunpack.c.l.b16 %v490
      %v1554 = vunpack.c.h.b16 %v490
      %v1555 = vunpack.c.l.b16 %v491
      %v1556 = vunpack.c.h.b16 %v491
      %v1557 = vunpack.c.l.b16 %v492
      %v1558 = vunpack.c.l.b16 %v493
      %v1559 = vunpack.c.h.b16 %v493
      %v1560 = vunpack.c.l.b16 %v494
      %v1561 = vunpack.c.h.b16 %v494
      %v1562 = vunpack.c.l.b16 %v495
      %v1563 = vunpack.c.l.b16 %v496
      %v1564 = vunpack.c.h.b16 %v496
      %v1565 = vunpack.c.l.b16 %v497
      %v1566 = vunpack.c.h.b16 %v497
      %v1567 = vunpack.c.l.b16 %v498
      %v1568 = vunpack.c.l.b16 %v499
      %v1569 = vunpack.c.h.b16 %v499
      %v1570 = vunpack.c.l.b16 %v500
      %v1571 = vunpack.c.h.b16 %v500
      %v1572 = vunpack.c.l.b16 %v501
      %v1573 = vunpack.c.l.b16 %v502
      %v1574 = vunpack.c.h.b16 %v502
      %v1575 = vunpack.c.l.b16 %v503
      %v1576 = vunpack.c.h.b16 %v503
      %v1577 = vunpack.c.l.b16 %v504
      %v1578 = vunpack.c.l.b16 %v505
      %v1579 = vunpack.c.h.b16 %v505
      %v1580 = vunpack.c.l.b16 %v506
      %v1581 = vunpack.c.h.b16 %v506
      %v1582 = vunpack.c.l.b16 %v507
      %v1583 = vunpack.c.l.b16 %v508
      %v1584 = vunpack.c.h.b16 %v508
      %v1585 = vunpack.c.l.b16 %v509
      %v1586 = vunpack.c.h.b16 %v509
      %v1587 = vunpack.c.l.b16 %v510
      %v1588 = vunpack.c.l.b16 %v511
      %v1589 = vunpack.c.h.b16 %v511
      %v1590 = vunpack.c.l.b16 %v512
      %v1591 = vunpack.c.h.b16 %v512
      %v1592 = vunpack.c.l.b16 %v513
      %v1593 = vunpack.c.l.b16 %v514
      %v1594 = vunpack.c.h.b16 %v514
      %v1595 = vunpack.c.l.b16 %v515
      %v1596 = vunpack.c.h.b16 %v515
      %v1597 = vunpack.c.l.b16 %v516
      %v1598 = vunpack.c.l.b16 %v517
      %v1599 = vunpack.c.h.b16 %v517
      %v1600 = vunpack.c.l.b16 %v518
      %v1601 = vunpack.c.h.b16 %v518
      %v1602 = vunpack.c.l.b16 %v519
      %v1603 = vunpack.c.l.b16 %v520
      %v1604 = vunpack.c.h.b16 %v520
      %v1605 = vunpack.c.l.b16 %v521
      %v1606 = vunpack.c.h.b16 %v521
      %v1607 = vunpack.c.l.b16 %v522
      %v1608 = vunpack.c.l.b16 %v523
      %v1609 = vunpack.c.h.b16 %v523
      %v1610 = vunpack.c.l.b16 %v524
      %v1611 = vunpack.c.h.b16 %v524
      %v1612 = vunpack.c.l.b16 %v525
      %v1613 = vunpack.c.l.b16 %v526
      %v1614 = vunpack.c.h.b16 %v526
      %v1615 = vunpack.c.l.b16 %v527
      %v1616 = vunpack.c.h.b16 %v527
      %v1617 = vunpack.c.l.b16 %v528
      %v1618 = vunpack.c.l.b16 %v529
      %v1619 = vunpack.c.h.b16 %v529
      %v1620 = vunpack.c.l.b16 %v530
      %v1621 = vunpack.c.h.b16 %v530
      %v1622 = vunpack.c.l.b16 %v531
      %v1623 = vunpack.c.l.b16 %v532
      %v1624 = vunpack.c.h.b16 %v532
      %v1625 = vunpack.c.l.b16 %v533
      %v1626 = vunpack.c.h.b16 %v533
      %v1627 = vunpack.c.l.b16 %v534
      %v1628 = vunpack.c.l.b16 %v535
      %v1629 = vunpack.c.h.b16 %v535
      %v1630 = vunpack.c.l.b16 %v536
      %v1631 = vunpack.c.h.b16 %v536
      %v1632 = vunpack.c.l.b16 %v537
      %v1633 = vunpack.c.l.b16 %v538
      %v1634 = vunpack.c.h.b16 %v538
      %v1635 = vunpack.c.l.b16 %v539
      %v1636 = vunpack.c.h.b16 %v539
      %v1637 = vunpack.c.l.b16 %v540
      %v1638 = vunpack.c.l.b16 %v541
      %v1639 = vunpack.c.h.b16 %v541
      %v1640 = vunpack.c.l.b16 %v542
      %v1641 = vunpack.c.h.b16 %v542
      %v1642 = vunpack.c.l.b16 %v543
      %v1643 = vunpack.c.l.b16 %v544
      %v1644 = vunpack.c.h.b16 %v544
      %v1645 = vunpack.c.l.b16 %v545
      %v1646 = vunpack.c.h.b16 %v545
      %v1647 = vunpack.c.l.b16 %v546
      %v1648 = vunpack.c.l.b16 %v547
      %v1649 = vunpack.c.h.b16 %v547
      %v1650 = vunpack.c.l.b16 %v548
      %v1651 = vunpack.c.h.b16 %v548
      %v1652 = vunpack.c.l.b16 %v549
      %v1653 = vunpack.c.l.b16 %v550
      %v1654 = vunpack.c.h.b16 %v550
      %v1655 = vunpack.c.l.b16 %v551
      %v1656 = vunpack.c.h.b16 %v551
      %v1657 = vunpack.c.l.b16 %v552
      %v1658 = vunpack.c.l.b16 %v553
      %v1659 = vunpack.c.h.b16 %v553
      %v1660 = vunpack.c.l.b16 %v554
      %v1661 = vunpack.c.h.b16 %v554
      %v1662 = vunpack.c.l.b16 %v555
      %v1663 = vunpack.c.l.b16 %v556
      %v1664 = vunpack.c.h.b16 %v556
      %v1665 = vunpack.c.l.b16 %v557
      %v1666 = vunpack.c.h.b16 %v557
      %v1667 = vunpack.c.l.b16 %v558
      %v1668 = vunpack.c.l.b16 %v559
      %v1669 = vunpack.c.h.b16 %v559
      %v1670 = vunpack.c.l.b16 %v560
      %v1671 = vunpack.c.h.b16 %v560
      %v1672 = vunpack.c.l.b16 %v561
      %v1673 = vpack.c.b16 %v1038, %v1033
      %v1674 = vpack.c.b16 %v1039, %v1034
      %v1675 = vpack.c.b16 %v1040, %v1035
      %v1676 = vpack.c.b16 %v1041, %v1036
      %v1677 = vpack.c.b16 %v1042, %v1037
      %v1678 = vpack.c.b16 %v1048, %v1043
      %v1679 = vpack.c.b16 %v1049, %v1044
      %v1680 = vpack.c.b16 %v1050, %v1045
      %v1681 = vpack.c.b16 %v1051, %v1046
      %v1682 = vpack.c.b16 %v1052, %v1047
      %v1683 = vpack.c.b16 %v1058, %v1053
      %v1684 = vpack.c.b16 %v1059, %v1054
      %v1685 = vpack.c.b16 %v1060, %v1055
      %v1686 = vpack.c.b16 %v1061, %v1056
      %v1687 = vpack.c.b16 %v1062, %v1057
      %v1688 = vpack.c.b16 %v1068, %v1063
      %v1689 = vpack.c.b16 %v1069, %v1064
      %v1690 = vpack.c.b16 %v1070, %v1065
      %v1691 = vpack.c.b16 %v1071, %v1066
      %v1692 = vpack.c.b16 %v1072, %v1067
      %v1693 = vpack.c.b16 %v1078, %v1073
      %v1694 = vpack.c.b16 %v1079, %v1074
      %v1695 = vpack.c.b16 %v1080, %v1075
      %v1696 = vpack.c.b16 %v1081, %v1076
      %v1697 = vpack.c.b16 %v1082, %v1077
      %v1698 = vpack.c.b16 %v1088, %v1083
      %v1699 = vpack.c.b16 %v1089, %v1084
      %v1700 = vpack.c.b16 %v1090, %v1085
      %v1701 = vpack.c.b16 %v1091, %v1086
      %v1702 = vpack.c.b16 %v1092, %v1087
      %v1703 = vpack.c.b16 %v1098, %v1093
      %v1704 = vpack.c.b16 %v1099, %v1094
      %v1705 = vpack.c.b16 %v1100, %v1095
      %v1706 = vpack.c.b16 %v1101, %v1096
      %v1707 = vpack.c.b16 %v1102, %v1097
      %v1708 = vpack.c.b16 %v1108, %v1103
      %v1709 = vpack.c.b16 %v1109, %v1104
      %v1710 = vpack.c.b16 %v1110, %v1105
      %v1711 = vpack.c.b16 %v1111, %v1106
      %v1712 = vpack.c.b16 %v1112, %v1107
      %v1713 = vpack.c.b16 %v1118, %v1113
      %v1714 = vpack.c.b16 %v1119, %v1114
      %v1715 = vpack.c.b16 %v1120, %v1115
      %v1716 = vpack.c.b16 %v1121, %v1116
      %v1717 = vpack.c.b16 %v1122, %v1117
      %v1718 = vpack.c.b16 %v1128, %v1123
      %v1719 = vpack.c.b16 %v1129, %v1124
      %v1720 = vpack.c.b16 %v1130, %v1125
      %v1721 = vpack.c.b16 %v1131, %v1126
      %v1722 = vpack.c.b16 %v1132, %v1127
      %v1723 = vpack.c.b16 %v1138, %v1133
      %v1724 = vpack.c.b16 %v1139, %v1134
      %v1725 = vpack.c.b16 %v1140, %v1135
      %v1726 = vpack.c.b16 %v1141, %v1136
      %v1727 = vpack.c.b16 %v1142, %v1137
      %v1728 = vpack.c.b16 %v1148, %v1143
      %v1729 = vpack.c.b16 %v1149, %v1144
      %v1730 = vpack.c.b16 %v1150, %v1145
      %v1731 = vpack.c.b16 %v1151, %v1146
      %v1732 = vpack.c.b16 %v1152, %v1147
      %v1733 = vpack.c.b16 %v1158, %v1153
      %v1734 = vpack.c.b16 %v1159, %v1154
      %v1735 = vpack.c.b16 %v1160, %v1155
      %v1736 = vpack.c.b16 %v1161, %v1156
      %v1737 = vpack.c.b16 %v1162, %v1157
      %v1738 = vpack.c.b16 %v1168, %v1163
      %v1739 = vpack.c.b16 %v1169, %v1164
      %v1740 = vpack.c.b16 %v1170, %v1165
      %v1741 = vpack.c.b16 %v1171, %v1166
      %v1742 = vpack.c.b16 %v1172, %v1167
      %v1743 = vpack.c.b16 %v1178, %v1173
      %v1744 = vpack.c.b16 %v1179, %v1174
      %v1745 = vpack.c.b16 %v1180, %v1175
      %v1746 = vpack.c.b16 %v1181, %v1176
      %v1747 = vpack.c.b16 %v1182, %v1177
      %v1748 = vpack.c.b16 %v1188, %v1183
      %v1749 = vpack.c.b16 %v1189, %v1184
      %v1750 = vpack.c.b16 %v1190, %v1185
      %v1751 = vpack.c.b16 %v1191, %v1186
      %v1752 = vpack.c.b16 %v1192, %v1187
      %v1753 = vpack.c.b16 %v1198, %v1193
      %v1754 = vpack.c.b16 %v1199, %v1194
      %v1755 = vpack.c.b16 %v1200, %v1195
      %v1756 = vpack.c.b16 %v1201, %v1196
      %v1757 = vpack.c.b16 %v1202, %v1197
      %v1758 = vpack.c.b16 %v1208, %v1203
      %v1759 = vpack.c.b16 %v1209, %v1204
      %v1760 = vpack.c.b16 %v1210, %v1205
      %v1761 = vpack.c.b16 %v1211, %v1206
      %v1762 = vpack.c.b16 %v1212, %v1207
      %v1763 = vpack.c.b16 %v1218, %v1213
      %v1764 = vpack.c.b16 %v1219, %v1214
      %v1765 = vpack.c.b16 %v1220, %v1215
      %v1766 = vpack.c.b16 %v1221, %v1216
      %v1767 = vpack.c.b16 %v1222, %v1217
      %v1768 = vpack.c.b16 %v1228, %v1223
      %v1769 = vpack.c.b16 %v1229, %v1224
      %v1770 = vpack.c.b16 %v1230, %v1225
      %v1771 = vpack.c.b16 %v1231, %v1226
      %v1772 = vpack.c.b16 %v1232, %v1227
      %v1773 = vpack.c.b16 %v1238, %v1233
      %v1774 = vpack.c.b16 %v1239, %v1234
      %v1775 = vpack.c.b16 %v1240, %v1235
      %v1776 = vpack.c.b16 %v1241, %v1236
      %v1777 = vpack.c.b16 %v1242, %v1237
      %v1778 = vpack.c.b16 %v1248, %v1243
      %v1779 = vpack.c.b16 %v1249, %v1244
      %v1780 = vpack.c.b16 %v1250, %v1245
      %v1781 = vpack.c.b16 %v1251, %v1246
      %v1782 = vpack.c.b16 %v1252, %v1247
      %v1783 = vpack.c.b16 %v1258, %v1253
      %v1784 = vpack.c.b16 %v1259, %v1254
      %v1785 = vpack.c.b16 %v1260, %v1255
      %v1786 = vpack.c.b16 %v1261, %v1256
      %v1787 = vpack.c.b16 %v1262, %v1257
      %v1788 = vpack.c.b16 %v1268, %v1263
      %v1789 = vpack.c.b16 %v1269, %v1264
      %v1790 = vpack.c.b16 %v1270, %v1265
      %v1791 = vpack.c.b16 %v1271, %v1266
      %v1792 = vpack.c.b16 %v1272, %v1267
      %v1793 = vpack.c.b16 %v1278, %v1273
      %v1794 = vpack.c.b16 %v1279, %v1274
      %v1795 = vpack.c.b16 %v1280, %v1275
      %v1796 = vpack.c.b16 %v1281, %v1276
      %v1797 = vpack.c.b16 %v1282, %v1277
      %v1798 = vpack.c.b16 %v1288, %v1283
      %v1799 = vpack.c.b16 %v1289, %v1284
      %v1800 = vpack.c.b16 %v1290, %v1285
      %v1801 = vpack.c.b16 %v1291, %v1286
      %v1802 = vpack.c.b16 %v1292, %v1287
      %v1803 = vpack.c.b16 %v1298, %v1293
      %v1804 = vpack.c.b16 %v1299, %v1294
      %v1805 = vpack.c.b16 %v1300, %v1295
      %v1806 = vpack.c.b16 %v1301, %v1296
      %v1807 = vpack.c.b16 %v1302, %v1297
      %v1808 = vpack.c.b16 %v1308, %v1303
      %v1809 = vpack.c.b16 %v1309, %v1304
      %v1810 = vpack.c.b16 %v1310, %v1305
      %v1811 = vpack.c.b16 %v1311, %v1306
      %v1812 = vpack.c.b16 %v1312, %v1307
      %v1813 = vpack.c.b16 %v1318, %v1313
      %v1814 = vpack.c.b16 %v1319, %v1314
      %v1815 = vpack.c.b16 %v1320, %v1315
      %v1816 = vpack.c.b16 %v1321, %v1316
      %v1817 = vpack.c.b16 %v1322, %v1317
      %v1818 = vpack.c.b16 %v1328, %v1323
      %v1819 = vpack.c.b16 %v1329, %v1324
      %v1820 = vpack.c.b16 %v1330, %v1325
      %v1821 = vpack.c.b16 %v1331, %v1326
      %v1822 = vpack.c.b16 %v1332, %v1327
      %v1823 = vpack.c.b16 %v1338, %v1333
      %v1824 = vpack.c.b16 %v1339, %v1334
      %v1825 = vpack.c.b16 %v1340, %v1335
      %v1826 = vpack.c.b16 %v1341, %v1336
      %v1827 = vpack.c.b16 %v1342, %v1337
      %v1828 = vpack.c.b16 %v1348, %v1343
      %v1829 = vpack.c.b16 %v1349, %v1344
      %v1830 = vpack.c.b16 %v1350, %v1345
      %v1831 = vpack.c.b16 %v1351, %v1346
      %v1832 = vpack.c.b16 %v1352, %v1347
      %v1833 = vpack.c.b16 %v1358, %v1353
      %v1834 = vpack.c.b16 %v1359, %v1354
      %v1835 = vpack.c.b16 %v1360, %v1355
      %v1836 = vpack.c.b16 %v1361, %v1356
      %v1837 = vpack.c.b16 %v1362, %v1357
      %v1838 = vpack.c.b16 %v1368, %v1363
      %v1839 = vpack.c.b16 %v1369, %v1364
      %v1840 = vpack.c.b16 %v1370, %v1365
      %v1841 = vpack.c.b16 %v1371, %v1366
      %v1842 = vpack.c.b16 %v1372, %v1367
      %v1843 = vpack.c.b16 %v1378, %v1373
      %v1844 = vpack.c.b16 %v1379, %v1374
      %v1845 = vpack.c.b16 %v1380, %v1375
      %v1846 = vpack.c.b16 %v1381, %v1376
      %v1847 = vpack.c.b16 %v1382, %v1377
      %v1848 = vpack.c.b16 %v1388, %v1383
      %v1849 = vpack.c.b16 %v1389, %v1384
      %v1850 = vpack.c.b16 %v1390, %v1385
      %v1851 = vpack.c.b16 %v1391, %v1386
      %v1852 = vpack.c.b16 %v1392, %v1387
      %v1853 = vpack.c.b16 %v1398, %v1393
      %v1854 = vpack.c.b16 %v1399, %v1394
      %v1855 = vpack.c.b16 %v1400, %v1395
      %v1856 = vpack.c.b16 %v1401, %v1396
      %v1857 = vpack.c.b16 %v1402, %v1397
      %v1858 = vpack.c.b16 %v1408, %v1403
      %v1859 = vpack.c.b16 %v1409, %v1404
      %v1860 = vpack.c.b16 %v1410, %v1405
      %v1861 = vpack.c.b16 %v1411, %v1406
      %v1862 = vpack.c.b16 %v1412, %v1407
      %v1863 = vpack.c.b16 %v1418, %v1413
      %v1864 = vpack.c.b16 %v1419, %v1414
      %v1865 = vpack.c.b16 %v1420, %v1415
      %v1866 = vpack.c.b16 %v1421, %v1416
      %v1867 = vpack.c.b16 %v1422, %v1417
      %v1868 = vpack.c.b16 %v1428, %v1423
      %v1869 = vpack.c.b16 %v1429, %v1424
      %v1870 = vpack.c.b16 %v1430, %v1425
      %v1871 = vpack.c.b16 %v1431, %v1426
      %v1872 = vpack.c.b16 %v1432, %v1427
      %v1873 = vpack.c.b16 %v1438, %v1433
      %v1874 = vpack.c.b16 %v1439, %v1434
      %v1875 = vpack.c.b16 %v1440, %v1435
      %v1876 = vpack.c.b16 %v1441, %v1436
      %v1877 = vpack.c.b16 %v1442, %v1437
      %v1878 = vpack.c.b16 %v1448, %v1443
      %v1879 = vpack.c.b16 %v1449, %v1444
      %v1880 = vpack.c.b16 %v1450, %v1445
      %v1881 = vpack.c.b16 %v1451, %v1446
      %v1882 = vpack.c.b16 %v1452, %v1447
      %v1883 = vpack.c.b16 %v1458, %v1453
      %v1884 = vpack.c.b16 %v1459, %v1454
      %v1885 = vpack.c.b16 %v1460, %v1455
      %v1886 = vpack.c.b16 %v1461, %v1456
      %v1887 = vpack.c.b16 %v1462, %v1457
      %v1888 = vpack.c.b16 %v1468, %v1463
      %v1889 = vpack.c.b16 %v1469, %v1464
      %v1890 = vpack.c.b16 %v1470, %v1465
      %v1891 = vpack.c.b16 %v1471, %v1466
      %v1892 = vpack.c.b16 %v1472, %v1467
      %v1893 = vpack.c.b16 %v1478, %v1473
      %v1894 = vpack.c.b16 %v1479, %v1474
      %v1895 = vpack.c.b16 %v1480, %v1475
      %v1896 = vpack.c.b16 %v1481, %v1476
      %v1897 = vpack.c.b16 %v1482, %v1477
      %v1898 = vpack.c.b16 %v1488, %v1483
      %v1899 = vpack.c.b16 %v1489, %v1484
      %v1900 = vpack.c.b16 %v1490, %v1485
      %v1901 = vpack.c.b16 %v1491, %v1486
      %v1902 = vpack.c.b16 %v1492, %v1487
      %v1903 = vpack.c.b16 %v1498, %v1493
      %v1904 = vpack.c.b16 %v1499, %v1494
      %v1905 = vpack.c.b16 %v1500, %v1495
      %v1906 = vpack.c.b16 %v1501, %v1496
      %v1907 = vpack.c.b16 %v1502, %v1497
      %v1908 = vpack.c.b16 %v1508, %v1503
      %v1909 = vpack.c.b16 %v1509, %v1504
      %v1910 = vpack.c.b16 %v1510, %v1505
      %v1911 = vpack.c.b16 %v1511, %v1506
      %v1912 = vpack.c.b16 %v1512, %v1507
      %v1913 = vpack.c.b16 %v1518, %v1513
      %v1914 = vpack.c.b16 %v1519, %v1514
      %v1915 = vpack.c.b16 %v1520, %v1515
      %v1916 = vpack.c.b16 %v1521, %v1516
      %v1917 = vpack.c.b16 %v1522, %v1517
      %v1918 = vpack.c.b16 %v1528, %v1523
      %v1919 = vpack.c.b16 %v1529, %v1524
      %v1920 = vpack.c.b16 %v1530, %v1525
      %v1921 = vpack.c.b16 %v1531, %v1526
      %v1922 = vpack.c.b16 %v1532, %v1527
      %v1923 = vpack.c.b16 %v1538, %v1533
      %v1924 = vpack.c.b16 %v1539, %v1534
      %v1925 = vpack.c.b16 %v1540, %v1535
      %v1926 = vpack.c.b16 %v1541, %v1536
      %v1927 = vpack.c.b16 %v1542, %v1537
      %v1928 = vpack.c.b16 %v1548, %v1543
      %v1929 = vpack.c.b16 %v1549, %v1544
      %v1930 = vpack.c.b16 %v1550, %v1545
      %v1931 = vpack.c.b16 %v1551, %v1546
      %v1932 = vpack.c.b16 %v1552, %v1547
      %v1933 = vpack.c.b16 %v1558, %v1553
      %v1934 = vpack.c.b16 %v1559, %v1554
      %v1935 = vpack.c.b16 %v1560, %v1555
      %v1936 = vpack.c.b16 %v1561, %v1556
      %v1937 = vpack.c.b16 %v1562, %v1557
      %v1938 = vpack.c.b16 %v1568, %v1563
      %v1939 = vpack.c.b16 %v1569, %v1564
      %v1940 = vpack.c.b16 %v1570, %v1565
      %v1941 = vpack.c.b16 %v1571, %v1566
      %v1942 = vpack.c.b16 %v1572, %v1567
      %v1943 = vpack.c.b16 %v1578, %v1573
      %v1944 = vpack.c.b16 %v1579, %v1574
      %v1945 = vpack.c.b16 %v1580, %v1575
      %v1946 = vpack.c.b16 %v1581, %v1576
      %v1947 = vpack.c.b16 %v1582, %v1577
      %v1948 = vpack.c.b16 %v1588, %v1583
      %v1949 = vpack.c.b16 %v1589, %v1584
      %v1950 = vpack.c.b16 %v1590, %v1585
      %v1951 = vpack.c.b16 %v1591, %v1586
      %v1952 = vpack.c.b16 %v1592, %v1587
      %v1953 = vpack.c.b16 %v1598, %v1593
      %v1954 = vpack.c.b16 %v1599, %v1594
      %v1955 = vpack.c.b16 %v1600, %v1595
      %v1956 = vpack.c.b16 %v1601, %v1596
      %v1957 = vpack.c.b16 %v1602, %v1597
      %v1958 = vpack.c.b16 %v1608, %v1603
      %v1959 = vpack.c.b16 %v1609, %v1604
      %v1960 = vpack.c.b16 %v1610, %v1605
      %v1961 = vpack.c.b16 %v1611, %v1606
      %v1962 = vpack.c.b16 %v1612, %v1607
      %v1963 = vpack.c.b16 %v1618, %v1613
      %v1964 = vpack.c.b16 %v1619, %v1614
      %v1965 = vpack.c.b16 %v1620, %v1615
      %v1966 = vpack.c.b16 %v1621, %v1616
      %v1967 = vpack.c.b16 %v1622, %v1617
      %v1968 = vpack.c.b16 %v1628, %v1623
      %v1969 = vpack.c.b16 %v1629, %v1624
      %v1970 = vpack.c.b16 %v1630, %v1625
      %v1971 = vpack.c.b16 %v1631, %v1626
      %v1972 = vpack.c.b16 %v1632, %v1627
      %v1973 = vpack.c.b16 %v1638, %v1633
      %v1974 = vpack.c.b16 %v1639, %v1634
      %v1975 = vpack.c.b16 %v1640, %v1635
      %v1976 = vpack.c.b16 %v1641, %v1636
      %v1977 = vpack.c.b16 %v1642, %v1637
      %v1978 = vpack.c.b16 %v1648, %v1643
      %v1979 = vpack.c.b16 %v1649, %v1644
      %v1980 = vpack.c.b16 %v1650, %v1645
      %v1981 = vpack.c.b16 %v1651, %v1646
      %v1982 = vpack.c.b16 %v1652, %v1647
      %v1983 = vpack.c.b16 %v1658, %v1653
      %v1984 = vpack.c.b16 %v1659, %v1654
      %v1985 = vpack.c.b16 %v1660, %v1655
      %v1986 = vpack.c.b16 %v1661, %v1656
      %v1987 = vpack.c.b16 %v1662, %v1657
      %v1988 = vpack.c.b16 %v1668, %v1663
      %v1989 = vpack.c.b16 %v1669, %v1664
      %v1990 = vpack.c.b16 %v1670, %v1665
      %v1991 = vpack.c.b16 %v1671, %v1666
      %v1992 = vpack.c.b16 %v1672, %v1667
      %v2393 = vunpack.c.l.b16 %v562
      %v2394 = vunpack.c.l.b16 %v563
      %v2395 = vunpack.c.l.b16 %v564
      %v2396 = vunpack.c.l.b16 %v565
      %v2397 = vunpack.c.l.b16 %v566
      %v2398 = vunpack.c.l.b16 %v567
      %v2399 = vunpack.c.l.b16 %v568
      %v2400 = vunpack.c.l.b16 %v569
      %v2401 = vunpack.c.l.b16 %v570
      %v2402 = vunpack.c.l.b16 %v571
      %v2403 = vunpack.c.l.b16 %v572
      %v2404 = vunpack.c.l.b16 %v573
      %v2405 = vunpack.c.l.b16 %v574
      %v2406 = vunpack.c.l.b16 %v575
      %v2407 = vunpack.c.l.b16 %v576
      %v2408 = vunpack.c.l.b16 %v577
      %v2409 = vunpack.c.l.b16 %v578
      %v2410 = vunpack.c.l.b16 %v579
      %v2411 = vunpack.c.l.b16 %v580
      %v2412 = vunpack.c.l.b16 %v581
      %v2413 = vunpack.c.l.b16 %v582
      %v2414 = vunpack.c.l.b16 %v583
      %v2415 = vunpack.c.l.b16 %v584
      %v2416 = vunpack.c.l.b16 %v585
      %v2417 = vunpack.c.l.b16 %v586
      %v2418 = vunpack.c.l.b16 %v587
      %v2419 = vunpack.c.l.b16 %v588
      %v2420 = vunpack.c.l.b16 %v589
      %v2421 = vunpack.c.l.b16 %v590
      %v2422 = vunpack.c.l.b16 %v591
      %v2423 = vunpack.c.l.b16 %v592
      %v2424 = vunpack.c.l.b16 %v593
      %v2425 = vunpack.c.l.b16 %v594
      %v2426 = vunpack.c.l.b16 %v595
      %v2427 = vunpack.c.l.b16 %v596
      %v2428 = vunpack.c.l.b16 %v597
      %v2429 = vunpack.c.l.b16 %v598
      %v2430 = vunpack.c.l.b16 %v599
      %v2431 = vunpack.c.l.b16 %v600
      %v2432 = vunpack.c.l.b16 %v601
      %v2433 = vunpack.c.l.b16 %v602
      %v2434 = vunpack.c.l.b16 %v603
      %v2435 = vunpack.c.l.b16 %v604
      %v2436 = vunpack.c.l.b16 %v605
      %v2437 = vunpack.c.l.b16 %v606
      %v2438 = vunpack.c.l.b16 %v607
      %v2439 = vunpack.c.l.b16 %v608
      %v2440 = vunpack.c.l.b16 %v609
      %v2441 = vunpack.c.l.b16 %v610
      %v2442 = vunpack.c.l.b16 %v611
      %v2443 = vunpack.c.l.b16 %v612
      %v2444 = vunpack.c.l.b16 %v613
      %v2445 = vunpack.c.l.b16 %v614
      %v2446 = vunpack.c.l.b16 %v615
      %v2447 = vunpack.c.l.b16 %v616
      %v2448 = vunpack.c.l.b16 %v617
      %v2449 = vunpack.c.l.b16 %v618
      %v2450 = vunpack.c.l.b16 %v619
      %v2451 = vunpack.c.l.b16 %v620
      %v2452 = vunpack.c.l.b16 %v621
      %v2453 = vunpack.c.l.b16 %v622
      %v2454 = vunpack.c.l.b16 %v623
      %v2455 = vunpack.c.l.b16 %v624
      %v2456 = vunpack.c.l.b16 %v625
      %v2457 = vunpack.c.l.b16 %v626
      %v2458 = vunpack.c.l.b16 %v627
      %v2459 = vunpack.c.l.b16 %v628
      %v2460 = vunpack.c.l.b16 %v629
      %v2461 = vunpack.c.l.b16 %v630
      %v2462 = vunpack.c.l.b16 %v631
      %v2463 = vunpack.c.l.b16 %v632
      %v2464 = vunpack.c.l.b16 %v633
      %v2465 = vunpack.c.l.b16 %v634
      %v2466 = vunpack.c.l.b16 %v635
      %v2467 = vunpack.c.l.b16 %v636
      %v2468 = vunpack.c.l.b16 %v637
      %v2469 = vunpack.c.l.b16 %v638
      %v2470 = vunpack.c.l.b16 %v639
      %v2471 = vunpack.c.l.b16 %v640
      %v2472 = vunpack.c.l.b16 %v641
      %v2473 = vpack.c.b16 %v2394, %v2393
      %v2474 = vpack.c.b16 %v2396, %v2395
      %v2475 = vpack.c.b16 %v2398, %v2397
      %v2476 = vpack.c.b16 %v2400, %v2399
      %v2477 = vpack.c.b16 %v2402, %v2401
      %v2478 = vpack.c.b16 %v2404, %v2403
      %v2479 = vpack.c.b16 %v2406, %v2405
      %v2480 = vpack.c.b16 %v2408, %v2407
      %v2481 = vpack.c.b16 %v2410, %v2409
      %v2482 = vpack.c.b16 %v2412, %v2411
      %v2483 = vpack.c.b16 %v2414, %v2413
      %v2484 = vpack.c.b16 %v2416, %v2415
      %v2485 = vpack.c.b16 %v2418, %v2417
      %v2486 = vpack.c.b16 %v2420, %v2419
      %v2487 = vpack.c.b16 %v2422, %v2421
      %v2488 = vpack.c.b16 %v2424, %v2423
      %v2489 = vpack.c.b16 %v2426, %v2425
      %v2490 = vpack.c.b16 %v2428, %v2427
      %v2491 = vpack.c.b16 %v2430, %v2429
      %v2492 = vpack.c.b16 %v2432, %v2431
      %v2493 = vpack.c.b16 %v2434, %v2433
      %v2494 = vpack.c.b16 %v2436, %v2435
      %v2495 = vpack.c.b16 %v2438, %v2437
      %v2496 = vpack.c.b16 %v2440, %v2439
      %v2497 = vpack.c.b16 %v2442, %v2441
      %v2498 = vpack.c.b16 %v2444, %v2443
      %v2499 = vpack.c.b16 %v2446, %v2445
      %v2500 = vpack.c.b16 %v2448, %v2447
      %v2501 = vpack.c.b16 %v2450, %v2449
      %v2502 = vpack.c.b16 %v2452, %v2451
      %v2503 = vpack.c.b16 %v2454, %v2453
      %v2504 = vpack.c.b16 %v2456, %v2455
      %v2505 = vpack.c.b16 %v2458, %v2457
      %v2506 = vpack.c.b16 %v2460, %v2459
      %v2507 = vpack.c.b16 %v2462, %v2461
      %v2508 = vpack.c.b16 %v2464, %v2463
      %v2509 = vpack.c.b16 %v2466, %v2465
      %v2510 = vpack.c.b16 %v2468, %v2467
      %v2511 = vpack.c.b16 %v2470, %v2469
      %v2512 = vpack.c.b16 %v2472, %v2471
      %2553 = vmatprep.subr.bf16.mxu0 0
      %2554 = vmatpush1.bf16.msra.mxu0 %v2473
      %2555 = vmatprep.subr.bf16.mxu0 0
      %2556 = vmatpush1.bf16.msra.mxu0 %v2474
      %2557 = vmatprep.subr.bf16.mxu0 0
      %2558 = vmatpush1.bf16.msra.mxu0 %v2475
      %2559 = vmatprep.subr.bf16.mxu0 0
      %2560 = vmatpush1.bf16.msra.mxu0 %v2476
      %2561 = vmatprep.subr.bf16.mxu0 0
      %2562 = vmatpush1.bf16.msra.mxu0 %v2477
      %2563 = vmatprep.subr.bf16.mxu0 0
      %2564 = vmatpush1.bf16.msra.mxu0 %v2478
      %2565 = vmatprep.subr.bf16.mxu0 0
      %2566 = vmatpush1.bf16.msra.mxu0 %v2479
      %2567 = vmatprep.subr.bf16.mxu0 0
      %2568 = vmatpush1.bf16.msra.mxu0 %v2480
      %2569 = vmatprep.subr.bf16.mxu0 0
      %2570 = vmatpush1.bf16.msra.mxu0 %v2481
      %2571 = vmatprep.subr.bf16.mxu0 0
      %2572 = vmatpush1.bf16.msra.mxu0 %v2482
      %2573 = vmatprep.subr.bf16.mxu0 0
      %2574 = vmatpush1.bf16.msra.mxu0 %v2483
      %2575 = vmatprep.subr.bf16.mxu0 0
      %2576 = vmatpush1.bf16.msra.mxu0 %v2484
      %2577 = vmatprep.subr.bf16.mxu0 0
      %2578 = vmatpush1.bf16.msra.mxu0 %v2485
      %2579 = vmatprep.subr.bf16.mxu0 0
      %2580 = vmatpush1.bf16.msra.mxu0 %v2486
      %2581 = vmatprep.subr.bf16.mxu0 0
      %2582 = vmatpush1.bf16.msra.mxu0 %v2487
      %2583 = vmatprep.subr.bf16.mxu0 0
      %2584 = vmatpush1.bf16.msra.mxu0 %v2488
      %2585 = vmatprep.mubr.bf16.mxu0 %v1674
      %2586 = vmatmul.mubr.bf16.gmra.mrb[0].mxu0 %v1673
      %v2587 = vpop.f32.mrb[0].mxu0
      %v2588 = vadd.f32 %v647, %v2587
      %v2589 = vpop.f32.mrb[0].mxu0
      %v2590 = vpop.f32.mrb[0].mxu0
      %v2591 = vadd.f32 %v647, %v2590
      %v2592 = vpop.f32.mrb[0].mxu0
      %2593 = vmatprep.mubr.bf16.mxu0 %v1679
      %2594 = vmatmul.mubr.bf16.gmra.mrb[0].mxu0 %v1678
      %v2595 = vpop.f32.mrb[0].mxu0
      %v2596 = vadd.f32 %v647, %v2595
      %v2597 = vpop.f32.mrb[0].mxu0
      %v2598 = vpop.f32.mrb[0].mxu0
      %v2599 = vadd.f32 %v647, %v2598
      %v2600 = vpop.f32.mrb[0].mxu0
      %2601 = vmatprep.mubr.bf16.mxu0 %v1684
      %2602 = vmatmul.mubr.bf16.gmra.mrb[0].mxu0 %v1683
      %v2603 = vpop.f32.mrb[0].mxu0
      %v2604 = vadd.f32 %v647, %v2603
      %v2605 = vpop.f32.mrb[0].mxu0
      %v2606 = vpop.f32.mrb[0].mxu0
      %v2607 = vadd.f32 %v647, %v2606
      %v2608 = vpop.f32.mrb[0].mxu0
      %2609 = vmatprep.mubr.bf16.mxu0 %v1689
      %2610 = vmatmul.mubr.bf16.gmra.mrb[0].mxu0 %v1688
      %v2611 = vpop.f32.mrb[0].mxu0
      %v2612 = vadd.f32 %v647, %v2611
      %v2613 = vpop.f32.mrb[0].mxu0
      %v2614 = vpop.f32.mrb[0].mxu0
      %v2615 = vadd.f32 %v647, %v2614
      %v2616 = vpop.f32.mrb[0].mxu0
      %2617 = vmatprep.mubr.bf16.mxu0 %v1694
      %2618 = vmatmul.mubr.bf16.gmra.mrb[0].mxu0 %v1693
      %v2619 = vpop.f32.mrb[0].mxu0
      %v2620 = vadd.f32 %v647, %v2619
      %v2621 = vpop.f32.mrb[0].mxu0
      %v2622 = vpop.f32.mrb[0].mxu0
      %v2623 = vadd.f32 %v647, %v2622
      %v2624 = vpop.f32.mrb[0].mxu0
      %2625 = vmatprep.mubr.bf16.mxu0 %v1699
      %2626 = vmatmul.mubr.bf16.gmra.mrb[0].mxu0 %v1698
      %v2627 = vpop.f32.mrb[0].mxu0
      %v2628 = vadd.f32 %v647, %v2627
      %v2629 = vpop.f32.mrb[0].mxu0
      %v2630 = vpop.f32.mrb[0].mxu0
      %v2631 = vadd.f32 %v647, %v2630
      %v2632 = vpop.f32.mrb[0].mxu0
      %2633 = vmatprep.mubr.bf16.mxu0 %v1704
      %2634 = vmatmul.mubr.bf16.gmra.mrb[0].mxu0 %v1703
      %v2635 = vpop.f32.mrb[0].mxu0
      %v2636 = vadd.f32 %v647, %v2635
      %v2637 = vpop.f32.mrb[0].mxu0
      %v2638 = vpop.f32.mrb[0].mxu0
      %v2639 = vadd.f32 %v647, %v2638
      %v2640 = vpop.f32.mrb[0].mxu0
      %2641 = vmatprep.mubr.bf16.mxu0 %v1709
      %2642 = vmatmul.mubr.bf16.gmra.mrb[0].mxu0 %v1708
      %v2643 = vpop.f32.mrb[0].mxu0
      %v2644 = vadd.f32 %v647, %v2643
      %v2645 = vpop.f32.mrb[0].mxu0
      %v2646 = vpop.f32.mrb[0].mxu0
      %v2647 = vadd.f32 %v647, %v2646
      %v2648 = vpop.f32.mrb[0].mxu0
      %2649 = vmatprep.mubr.bf16.mxu0 %v1714
      %2650 = vmatmul.mubr.bf16.gmra.mrb[0].mxu0 %v1713
      %v2651 = vpop.f32.mrb[0].mxu0
      %v2652 = vadd.f32 %v647, %v2651
      %v2653 = vpop.f32.mrb[0].mxu0
      %v2654 = vpop.f32.mrb[0].mxu0
      %v2655 = vadd.f32 %v647, %v2654
      %v2656 = vpop.f32.mrb[0].mxu0
      %2657 = vmatprep.mubr.bf16.mxu0 %v1719
      %2658 = vmatmul.mubr.bf16.gmra.mrb[0].mxu0 %v1718
      %v2659 = vpop.f32.mrb[0].mxu0
      %v2660 = vadd.f32 %v647, %v2659
      %v2661 = vpop.f32.mrb[0].mxu0
      %v2662 = vpop.f32.mrb[0].mxu0
      %v2663 = vadd.f32 %v647, %v2662
      %v2664 = vpop.f32.mrb[0].mxu0
      %2665 = vmatprep.mubr.bf16.mxu0 %v1724
      %2666 = vmatmul.mubr.bf16.gmra.mrb[0].mxu0 %v1723
      %v2667 = vpop.f32.mrb[0].mxu0
      %v2668 = vadd.f32 %v647, %v2667
      %v2669 = vpop.f32.mrb[0].mxu0
      %v2670 = vpop.f32.mrb[0].mxu0
      %v2671 = vadd.f32 %v647, %v2670
      %v2672 = vpop.f32.mrb[0].mxu0
      %2673 = vmatprep.mubr.bf16.mxu0 %v1729
      %2674 = vmatmul.mubr.bf16.gmra.mrb[0].mxu0 %v1728
      %v2675 = vpop.f32.mrb[0].mxu0
      %v2676 = vadd.f32 %v647, %v2675
      %v2677 = vpop.f32.mrb[0].mxu0
      %v2678 = vpop.f32.mrb[0].mxu0
      %v2679 = vadd.f32 %v647, %v2678
      %v2680 = vpop.f32.mrb[0].mxu0
      %2681 = vmatprep.mubr.bf16.mxu0 %v1734
      %2682 = vmatmul.mubr.bf16.gmra.mrb[0].mxu0 %v1733
      %v2683 = vpop.f32.mrb[0].mxu0
      %v2684 = vadd.f32 %v647, %v2683
      %v2685 = vpop.f32.mrb[0].mxu0
      %v2686 = vpop.f32.mrb[0].mxu0
      %v2687 = vadd.f32 %v647, %v2686
      %v2688 = vpop.f32.mrb[0].mxu0
      %2689 = vmatprep.mubr.bf16.mxu0 %v1739
      %2690 = vmatmul.mubr.bf16.gmra.mrb[0].mxu0 %v1738
      %v2691 = vpop.f32.mrb[0].mxu0
      %v2692 = vadd.f32 %v647, %v2691
      %v2693 = vpop.f32.mrb[0].mxu0
      %v2694 = vpop.f32.mrb[0].mxu0
      %v2695 = vadd.f32 %v647, %v2694
      %v2696 = vpop.f32.mrb[0].mxu0
      %2697 = vmatprep.mubr.bf16.mxu0 %v1744
      %2698 = vmatmul.mubr.bf16.gmra.mrb[0].mxu0 %v1743
      %v2699 = vpop.f32.mrb[0].mxu0
      %v2700 = vadd.f32 %v647, %v2699
      %v2701 = vpop.f32.mrb[0].mxu0
      %v2702 = vpop.f32.mrb[0].mxu0
      %v2703 = vadd.f32 %v647, %v2702
      %v2704 = vpop.f32.mrb[0].mxu0
      %2705 = vmatprep.mubr.bf16.mxu0 %v1749
      %2706 = vmatmul.mubr.bf16.gmra.mrb[0].mxu0 %v1748
      %v2707 = vpop.f32.mrb[0].mxu0
      %v2708 = vadd.f32 %v647, %v2707
      %v2709 = vpop.f32.mrb[0].mxu0
      %v2710 = vpop.f32.mrb[0].mxu0
      %v2711 = vadd.f32 %v647, %v2710
      %v2712 = vpop.f32.mrb[0].mxu0
      %2713 = vmatprep.mubr.bf16.mxu0 %v1754
      %2714 = vmatmul.mubr.bf16.gmra.mrb[0].mxu0 %v1753
      %v2715 = vpop.f32.mrb[0].mxu0
      %v2716 = vadd.f32 %v647, %v2715
      %v2717 = vpop.f32.mrb[0].mxu0
      %v2718 = vpop.f32.mrb[0].mxu0
      %v2719 = vadd.f32 %v647, %v2718
      %v2720 = vpop.f32.mrb[0].mxu0
      %2721 = vmatprep.mubr.bf16.mxu0 %v1759
      %2722 = vmatmul.mubr.bf16.gmra.mrb[0].mxu0 %v1758
      %v2723 = vpop.f32.mrb[0].mxu0
      %v2724 = vadd.f32 %v647, %v2723
      %v2725 = vpop.f32.mrb[0].mxu0
      %v2726 = vpop.f32.mrb[0].mxu0
      %v2727 = vadd.f32 %v647, %v2726
      %v2728 = vpop.f32.mrb[0].mxu0
      %2729 = vmatprep.mubr.bf16.mxu0 %v1764
      %2730 = vmatmul.mubr.bf16.gmra.mrb[0].mxu0 %v1763
      %v2731 = vpop.f32.mrb[0].mxu0
      %v2732 = vadd.f32 %v647, %v2731
      %v2733 = vpop.f32.mrb[0].mxu0
      %v2734 = vpop.f32.mrb[0].mxu0
      %v2735 = vadd.f32 %v647, %v2734
      %v2736 = vpop.f32.mrb[0].mxu0
      %2737 = vmatprep.mubr.bf16.mxu0 %v1769
      %2738 = vmatmul.mubr.bf16.gmra.mrb[0].mxu0 %v1768
      %v2739 = vpop.f32.mrb[0].mxu0
      %v2740 = vadd.f32 %v647, %v2739
      %v2741 = vpop.f32.mrb[0].mxu0
      %v2742 = vpop.f32.mrb[0].mxu0
      %v2743 = vadd.f32 %v647, %v2742
      %v2744 = vpop.f32.mrb[0].mxu0
      %2745 = vmatprep.mubr.bf16.mxu0 %v1774
      %2746 = vmatmul.mubr.bf16.gmra.mrb[0].mxu0 %v1773
      %v2747 = vpop.f32.mrb[0].mxu0
      %v2748 = vadd.f32 %v647, %v2747
      %v2749 = vpop.f32.mrb[0].mxu0
      %v2750 = vpop.f32.mrb[0].mxu0
      %v2751 = vadd.f32 %v647, %v2750
      %v2752 = vpop.f32.mrb[0].mxu0
      %2753 = vmatprep.mubr.bf16.mxu0 %v1779
      %2754 = vmatmul.mubr.bf16.gmra.mrb[0].mxu0 %v1778
      %v2755 = vpop.f32.mrb[0].mxu0
      %v2756 = vadd.f32 %v647, %v2755
      %v2757 = vpop.f32.mrb[0].mxu0
      %v2758 = vpop.f32.mrb[0].mxu0
      %v2759 = vadd.f32 %v647, %v2758
      %v2760 = vpop.f32.mrb[0].mxu0
      %2761 = vmatprep.mubr.bf16.mxu0 %v1784
      %2762 = vmatmul.mubr.bf16.gmra.mrb[0].mxu0 %v1783
      %v2763 = vpop.f32.mrb[0].mxu0
      %v2764 = vadd.f32 %v647, %v2763
      %v2765 = vpop.f32.mrb[0].mxu0
      %v2766 = vpop.f32.mrb[0].mxu0
      %v2767 = vadd.f32 %v647, %v2766
      %v2768 = vpop.f32.mrb[0].mxu0
      %2769 = vmatprep.mubr.bf16.mxu0 %v1789
      %2770 = vmatmul.mubr.bf16.gmra.mrb[0].mxu0 %v1788
      %v2771 = vpop.f32.mrb[0].mxu0
      %v2772 = vadd.f32 %v647, %v2771
      %v2773 = vpop.f32.mrb[0].mxu0
      %v2774 = vpop.f32.mrb[0].mxu0
      %v2775 = vadd.f32 %v647, %v2774
      %v2776 = vpop.f32.mrb[0].mxu0
      %2777 = vmatprep.mubr.bf16.mxu0 %v1794
      %2778 = vmatmul.mubr.bf16.gmra.mrb[0].mxu0 %v1793
      %v2779 = vpop.f32.mrb[0].mxu0
      %v2780 = vadd.f32 %v647, %v2779
      %v2781 = vpop.f32.mrb[0].mxu0
      %v2782 = vpop.f32.mrb[0].mxu0
      %v2783 = vadd.f32 %v647, %v2782
      %v2784 = vpop.f32.mrb[0].mxu0
      %2785 = vmatprep.mubr.bf16.mxu0 %v1799
      %2786 = vmatmul.mubr.bf16.gmra.mrb[0].mxu0 %v1798
      %v2787 = vpop.f32.mrb[0].mxu0
      %v2788 = vadd.f32 %v647, %v2787
      %v2789 = vpop.f32.mrb[0].mxu0
      %v2790 = vpop.f32.mrb[0].mxu0
      %v2791 = vadd.f32 %v647, %v2790
      %v2792 = vpop.f32.mrb[0].mxu0
      %2793 = vmatprep.mubr.bf16.mxu0 %v1804
      %2794 = vmatmul.mubr.bf16.gmra.mrb[0].mxu0 %v1803
      %v2795 = vpop.f32.mrb[0].mxu0
      %v2796 = vadd.f32 %v647, %v2795
      %v2797 = vpop.f32.mrb[0].mxu0
      %v2798 = vpop.f32.mrb[0].mxu0
      %v2799 = vadd.f32 %v647, %v2798
      %v2800 = vpop.f32.mrb[0].mxu0
      %2801 = vmatprep.mubr.bf16.mxu0 %v1809
      %2802 = vmatmul.mubr.bf16.gmra.mrb[0].mxu0 %v1808
      %v2803 = vpop.f32.mrb[0].mxu0
      %v2804 = vadd.f32 %v647, %v2803
      %v2805 = vpop.f32.mrb[0].mxu0
      %v2806 = vpop.f32.mrb[0].mxu0
      %v2807 = vadd.f32 %v647, %v2806
      %v2808 = vpop.f32.mrb[0].mxu0
      %2809 = vmatprep.mubr.bf16.mxu0 %v1814
      %2810 = vmatmul.mubr.bf16.gmra.mrb[0].mxu0 %v1813
      %v2811 = vpop.f32.mrb[0].mxu0
      %v2812 = vadd.f32 %v647, %v2811
      %v2813 = vpop.f32.mrb[0].mxu0
      %v2814 = vpop.f32.mrb[0].mxu0
      %v2815 = vadd.f32 %v647, %v2814
      %v2816 = vpop.f32.mrb[0].mxu0
      %2817 = vmatprep.mubr.bf16.mxu0 %v1819
      %2818 = vmatmul.mubr.bf16.gmra.mrb[0].mxu0 %v1818
      %v2819 = vpop.f32.mrb[0].mxu0
      %v2820 = vadd.f32 %v647, %v2819
      %v2821 = vpop.f32.mrb[0].mxu0
      %v2822 = vpop.f32.mrb[0].mxu0
      %v2823 = vadd.f32 %v647, %v2822
      %v2824 = vpop.f32.mrb[0].mxu0
      %2825 = vmatprep.mubr.bf16.mxu0 %v1824
      %2826 = vmatmul.mubr.bf16.gmra.mrb[0].mxu0 %v1823
      %v2827 = vpop.f32.mrb[0].mxu0
      %v2828 = vadd.f32 %v647, %v2827
      %v2829 = vpop.f32.mrb[0].mxu0
      %v2830 = vpop.f32.mrb[0].mxu0
      %v2831 = vadd.f32 %v647, %v2830
      %v2832 = vpop.f32.mrb[0].mxu0
      %2833 = vmatprep.mubr.bf16.mxu0 %v1829
      %2834 = vmatmul.mubr.bf16.gmra.mrb[0].mxu0 %v1828
      %v2835 = vpop.f32.mrb[0].mxu0
      %v2836 = vadd.f32 %v647, %v2835
      %v2837 = vpop.f32.mrb[0].mxu0
      %v2838 = vpop.f32.mrb[0].mxu0
      %v2839 = vadd.f32 %v647, %v2838
      %v2840 = vpop.f32.mrb[0].mxu0
      %2841 = vmatprep.mubr.bf16.mxu0 %v1834
      %2842 = vmatmul.mubr.bf16.gmra.mrb[0].mxu0 %v1833
      %v2843 = vpop.f32.mrb[0].mxu0
      %v2844 = vadd.f32 %v647, %v2843
      %v2845 = vpop.f32.mrb[0].mxu0
      %v2846 = vpop.f32.mrb[0].mxu0
      %v2847 = vadd.f32 %v647, %v2846
      %v2848 = vpop.f32.mrb[0].mxu0
      %2849 = vmatprep.mubr.bf16.mxu0 %v1839
      %2850 = vmatmul.mubr.bf16.gmra.mrb[0].mxu0 %v1838
      %v2851 = vpop.f32.mrb[0].mxu0
      %v2852 = vadd.f32 %v647, %v2851
      %v2853 = vpop.f32.mrb[0].mxu0
      %v2854 = vpop.f32.mrb[0].mxu0
      %v2855 = vadd.f32 %v647, %v2854
      %v2856 = vpop.f32.mrb[0].mxu0
      %2857 = vmatprep.mubr.bf16.mxu0 %v1844
      %2858 = vmatmul.mubr.bf16.gmra.mrb[0].mxu0 %v1843
      %v2859 = vpop.f32.mrb[0].mxu0
      %v2860 = vadd.f32 %v647, %v2859
      %v2861 = vpop.f32.mrb[0].mxu0
      %v2862 = vpop.f32.mrb[0].mxu0
      %v2863 = vadd.f32 %v647, %v2862
      %v2864 = vpop.f32.mrb[0].mxu0
      %2865 = vmatprep.mubr.bf16.mxu0 %v1849
      %2866 = vmatmul.mubr.bf16.gmra.mrb[0].mxu0 %v1848
      %v2867 = vpop.f32.mrb[0].mxu0
      %v2868 = vadd.f32 %v647, %v2867
      %v2869 = vpop.f32.mrb[0].mxu0
      %v2870 = vpop.f32.mrb[0].mxu0
      %v2871 = vadd.f32 %v647, %v2870
      %v2872 = vpop.f32.mrb[0].mxu0
      %2873 = vmatprep.mubr.bf16.mxu0 %v1854
      %2874 = vmatmul.mubr.bf16.gmra.mrb[0].mxu0 %v1853
      %v2875 = vpop.f32.mrb[0].mxu0
      %v2876 = vadd.f32 %v647, %v2875
      %v2877 = vpop.f32.mrb[0].mxu0
      %v2878 = vpop.f32.mrb[0].mxu0
      %v2879 = vadd.f32 %v647, %v2878
      %v2880 = vpop.f32.mrb[0].mxu0
      %2881 = vmatprep.mubr.bf16.mxu0 %v1859
      %2882 = vmatmul.mubr.bf16.gmra.mrb[0].mxu0 %v1858
      %v2883 = vpop.f32.mrb[0].mxu0
      %v2884 = vadd.f32 %v647, %v2883
      %v2885 = vpop.f32.mrb[0].mxu0
      %v2886 = vpop.f32.mrb[0].mxu0
      %v2887 = vadd.f32 %v647, %v2886
      %v2888 = vpop.f32.mrb[0].mxu0
      %2889 = vmatprep.mubr.bf16.mxu0 %v1864
      %2890 = vmatmul.mubr.bf16.gmra.mrb[0].mxu0 %v1863
      %v2891 = vpop.f32.mrb[0].mxu0
      %v2892 = vadd.f32 %v647, %v2891
      %v2893 = vpop.f32.mrb[0].mxu0
      %v2894 = vpop.f32.mrb[0].mxu0
      %v2895 = vadd.f32 %v647, %v2894
      %v2896 = vpop.f32.mrb[0].mxu0
      %2897 = vmatprep.mubr.bf16.mxu0 %v1869
      %2898 = vmatmul.mubr.bf16.gmra.mrb[0].mxu0 %v1868
      %v2899 = vpop.f32.mrb[0].mxu0
      %v2900 = vadd.f32 %v647, %v2899
      %v2901 = vpop.f32.mrb[0].mxu0
      %v2902 = vpop.f32.mrb[0].mxu0
      %v2903 = vadd.f32 %v647, %v2902
      %v2904 = vpop.f32.mrb[0].mxu0
      %2905 = vmatprep.mubr.bf16.mxu0 %v1874
      %2906 = vmatmul.mubr.bf16.gmra.mrb[0].mxu0 %v1873
      %v2907 = vpop.f32.mrb[0].mxu0
      %v2908 = vadd.f32 %v647, %v2907
      %v2909 = vpop.f32.mrb[0].mxu0
      %v2910 = vpop.f32.mrb[0].mxu0
      %v2911 = vadd.f32 %v647, %v2910
      %v2912 = vpop.f32.mrb[0].mxu0
      %2913 = vmatprep.mubr.bf16.mxu0 %v1879
      %2914 = vmatmul.mubr.bf16.gmra.mrb[0].mxu0 %v1878
      %v2915 = vpop.f32.mrb[0].mxu0
      %v2916 = vadd.f32 %v647, %v2915
      %v2917 = vpop.f32.mrb[0].mxu0
      %v2918 = vpop.f32.mrb[0].mxu0
      %v2919 = vadd.f32 %v647, %v2918
      %v2920 = vpop.f32.mrb[0].mxu0
      %2921 = vmatprep.mubr.bf16.mxu0 %v1884
      %2922 = vmatmul.mubr.bf16.gmra.mrb[0].mxu0 %v1883
      %v2923 = vpop.f32.mrb[0].mxu0
      %v2924 = vadd.f32 %v647, %v2923
      %v2925 = vpop.f32.mrb[0].mxu0
      %v2926 = vpop.f32.mrb[0].mxu0
      %v2927 = vadd.f32 %v647, %v2926
      %v2928 = vpop.f32.mrb[0].mxu0
      %2929 = vmatprep.mubr.bf16.mxu0 %v1889
      %2930 = vmatmul.mubr.bf16.gmra.mrb[0].mxu0 %v1888
      %v2931 = vpop.f32.mrb[0].mxu0
      %v2932 = vadd.f32 %v647, %v2931
      %v2933 = vpop.f32.mrb[0].mxu0
      %v2934 = vpop.f32.mrb[0].mxu0
      %v2935 = vadd.f32 %v647, %v2934
      %v2936 = vpop.f32.mrb[0].mxu0
      %2937 = vmatprep.mubr.bf16.mxu0 %v1894
      %2938 = vmatmul.mubr.bf16.gmra.mrb[0].mxu0 %v1893
      %v2939 = vpop.f32.mrb[0].mxu0
      %v2940 = vadd.f32 %v647, %v2939
      %v2941 = vpop.f32.mrb[0].mxu0
      %v2942 = vpop.f32.mrb[0].mxu0
      %v2943 = vadd.f32 %v647, %v2942
      %v2944 = vpop.f32.mrb[0].mxu0
      %2945 = vmatprep.mubr.bf16.mxu0 %v1899
      %2946 = vmatmul.mubr.bf16.gmra.mrb[0].mxu0 %v1898
      %v2947 = vpop.f32.mrb[0].mxu0
      %v2948 = vadd.f32 %v647, %v2947
      %v2949 = vpop.f32.mrb[0].mxu0
      %v2950 = vpop.f32.mrb[0].mxu0
      %v2951 = vadd.f32 %v647, %v2950
      %v2952 = vpop.f32.mrb[0].mxu0
      %2953 = vmatprep.mubr.bf16.mxu0 %v1904
      %2954 = vmatmul.mubr.bf16.gmra.mrb[0].mxu0 %v1903
      %v2955 = vpop.f32.mrb[0].mxu0
      %v2956 = vadd.f32 %v647, %v2955
      %v2957 = vpop.f32.mrb[0].mxu0
      %v2958 = vpop.f32.mrb[0].mxu0
      %v2959 = vadd.f32 %v647, %v2958
      %v2960 = vpop.f32.mrb[0].mxu0
      %2961 = vmatprep.mubr.bf16.mxu0 %v1909
      %2962 = vmatmul.mubr.bf16.gmra.mrb[0].mxu0 %v1908
      %v2963 = vpop.f32.mrb[0].mxu0
      %v2964 = vadd.f32 %v647, %v2963
      %v2965 = vpop.f32.mrb[0].mxu0
      %v2966 = vpop.f32.mrb[0].mxu0
      %v2967 = vadd.f32 %v647, %v2966
      %v2968 = vpop.f32.mrb[0].mxu0
      %2969 = vmatprep.mubr.bf16.mxu0 %v1914
      %2970 = vmatmul.mubr.bf16.gmra.mrb[0].mxu0 %v1913
      %v2971 = vpop.f32.mrb[0].mxu0
      %v2972 = vadd.f32 %v647, %v2971
      %v2973 = vpop.f32.mrb[0].mxu0
      %v2974 = vpop.f32.mrb[0].mxu0
      %v2975 = vadd.f32 %v647, %v2974
      %v2976 = vpop.f32.mrb[0].mxu0
      %2977 = vmatprep.mubr.bf16.mxu0 %v1919
      %2978 = vmatmul.mubr.bf16.gmra.mrb[0].mxu0 %v1918
      %v2979 = vpop.f32.mrb[0].mxu0
      %v2980 = vadd.f32 %v647, %v2979
      %v2981 = vpop.f32.mrb[0].mxu0
      %v2982 = vpop.f32.mrb[0].mxu0
      %v2983 = vadd.f32 %v647, %v2982
      %v2984 = vpop.f32.mrb[0].mxu0
      %2985 = vmatprep.mubr.bf16.mxu0 %v1924
      %2986 = vmatmul.mubr.bf16.gmra.mrb[0].mxu0 %v1923
      %v2987 = vpop.f32.mrb[0].mxu0
      %v2988 = vadd.f32 %v647, %v2987
      %v2989 = vpop.f32.mrb[0].mxu0
      %v2990 = vpop.f32.mrb[0].mxu0
      %v2991 = vadd.f32 %v647, %v2990
      %v2992 = vpop.f32.mrb[0].mxu0
      %2993 = vmatprep.mubr.bf16.mxu0 %v1929
      %2994 = vmatmul.mubr.bf16.gmra.mrb[0].mxu0 %v1928
      %v2995 = vpop.f32.mrb[0].mxu0
      %v2996 = vadd.f32 %v647, %v2995
      %v2997 = vpop.f32.mrb[0].mxu0
      %v2998 = vpop.f32.mrb[0].mxu0
      %v2999 = vadd.f32 %v647, %v2998
      %v3000 = vpop.f32.mrb[0].mxu0
      %3001 = vmatprep.mubr.bf16.mxu0 %v1934
      %3002 = vmatmul.mubr.bf16.gmra.mrb[0].mxu0 %v1933
      %v3003 = vpop.f32.mrb[0].mxu0
      %v3004 = vadd.f32 %v647, %v3003
      %v3005 = vpop.f32.mrb[0].mxu0
      %v3006 = vpop.f32.mrb[0].mxu0
      %v3007 = vadd.f32 %v647, %v3006
      %v3008 = vpop.f32.mrb[0].mxu0
      %3009 = vmatprep.mubr.bf16.mxu0 %v1939
      %3010 = vmatmul.mubr.bf16.gmra.mrb[0].mxu0 %v1938
      %v3011 = vpop.f32.mrb[0].mxu0
      %v3012 = vadd.f32 %v647, %v3011
      %v3013 = vpop.f32.mrb[0].mxu0
      %v3014 = vpop.f32.mrb[0].mxu0
      %v3015 = vadd.f32 %v647, %v3014
      %v3016 = vpop.f32.mrb[0].mxu0
      %3017 = vmatprep.mubr.bf16.mxu0 %v1944
      %3018 = vmatmul.mubr.bf16.gmra.mrb[0].mxu0 %v1943
      %v3019 = vpop.f32.mrb[0].mxu0
      %v3020 = vadd.f32 %v647, %v3019
      %v3021 = vpop.f32.mrb[0].mxu0
      %v3022 = vpop.f32.mrb[0].mxu0
      %v3023 = vadd.f32 %v647, %v3022
      %v3024 = vpop.f32.mrb[0].mxu0
      %3025 = vmatprep.mubr.bf16.mxu0 %v1949
      %3026 = vmatmul.mubr.bf16.gmra.mrb[0].mxu0 %v1948
      %v3027 = vpop.f32.mrb[0].mxu0
      %v3028 = vadd.f32 %v647, %v3027
      %v3029 = vpop.f32.mrb[0].mxu0
      %v3030 = vpop.f32.mrb[0].mxu0
      %v3031 = vadd.f32 %v647, %v3030
      %v3032 = vpop.f32.mrb[0].mxu0
      %3033 = vmatprep.mubr.bf16.mxu0 %v1954
      %3034 = vmatmul.mubr.bf16.gmra.mrb[0].mxu0 %v1953
      %v3035 = vpop.f32.mrb[0].mxu0
      %v3036 = vadd.f32 %v647, %v3035
      %v3037 = vpop.f32.mrb[0].mxu0
      %v3038 = vpop.f32.mrb[0].mxu0
      %v3039 = vadd.f32 %v647, %v3038
      %v3040 = vpop.f32.mrb[0].mxu0
      %3041 = vmatprep.mubr.bf16.mxu0 %v1959
      %3042 = vmatmul.mubr.bf16.gmra.mrb[0].mxu0 %v1958
      %v3043 = vpop.f32.mrb[0].mxu0
      %v3044 = vadd.f32 %v647, %v3043
      %v3045 = vpop.f32.mrb[0].mxu0
      %v3046 = vpop.f32.mrb[0].mxu0
      %v3047 = vadd.f32 %v647, %v3046
      %v3048 = vpop.f32.mrb[0].mxu0
      %3049 = vmatprep.mubr.bf16.mxu0 %v1964
      %3050 = vmatmul.mubr.bf16.gmra.mrb[0].mxu0 %v1963
      %v3051 = vpop.f32.mrb[0].mxu0
      %v3052 = vadd.f32 %v647, %v3051
      %v3053 = vpop.f32.mrb[0].mxu0
      %v3054 = vpop.f32.mrb[0].mxu0
      %v3055 = vadd.f32 %v647, %v3054
      %v3056 = vpop.f32.mrb[0].mxu0
      %3057 = vmatprep.mubr.bf16.mxu0 %v1969
      %3058 = vmatmul.mubr.bf16.gmra.mrb[0].mxu0 %v1968
      %v3059 = vpop.f32.mrb[0].mxu0
      %v3060 = vadd.f32 %v647, %v3059
      %v3061 = vpop.f32.mrb[0].mxu0
      %v3062 = vpop.f32.mrb[0].mxu0
      %v3063 = vadd.f32 %v647, %v3062
      %v3064 = vpop.f32.mrb[0].mxu0
      %3065 = vmatprep.mubr.bf16.mxu0 %v1974
      %3066 = vmatmul.mubr.bf16.gmra.mrb[0].mxu0 %v1973
      %v3067 = vpop.f32.mrb[0].mxu0
      %v3068 = vadd.f32 %v647, %v3067
      %v3069 = vpop.f32.mrb[0].mxu0
      %v3070 = vpop.f32.mrb[0].mxu0
      %v3071 = vadd.f32 %v647, %v3070
      %v3072 = vpop.f32.mrb[0].mxu0
      %3073 = vmatprep.mubr.bf16.mxu0 %v1979
      %3074 = vmatmul.mubr.bf16.gmra.mrb[0].mxu0 %v1978
      %v3075 = vpop.f32.mrb[0].mxu0
      %v3076 = vadd.f32 %v647, %v3075
      %v3077 = vpop.f32.mrb[0].mxu0
      %v3078 = vpop.f32.mrb[0].mxu0
      %v3079 = vadd.f32 %v647, %v3078
      %v3080 = vpop.f32.mrb[0].mxu0
      %3081 = vmatprep.mubr.bf16.mxu0 %v1984
      %3082 = vmatmul.mubr.bf16.gmra.mrb[0].mxu0 %v1983
      %v3083 = vpop.f32.mrb[0].mxu0
      %v3084 = vadd.f32 %v647, %v3083
      %v3085 = vpop.f32.mrb[0].mxu0
      %v3086 = vpop.f32.mrb[0].mxu0
      %v3087 = vadd.f32 %v647, %v3086
      %v3088 = vpop.f32.mrb[0].mxu0
      %3089 = vmatprep.mubr.bf16.mxu0 %v1989
      %3090 = vmatmul.mubr.bf16.gmra.mrb[0].mxu0 %v1988
      %v3091 = vpop.f32.mrb[0].mxu0
      %v3092 = vadd.f32 %v647, %v3091
      %v3093 = vpop.f32.mrb[0].mxu0
      %v3094 = vpop.f32.mrb[0].mxu0
      %v3095 = vadd.f32 %v647, %v3094
      %v3096 = vpop.f32.mrb[0].mxu0
      %3097 = vdwg.mxu0
      %3098 = vmatprep.subr.bf16.mxu0 0
      %3099 = vmatpush1.bf16.msra.mxu0 %v2489
      %3100 = vmatprep.subr.bf16.mxu0 0
      %3101 = vmatpush1.bf16.msra.mxu0 %v2490
      %3102 = vmatprep.subr.bf16.mxu0 0
      %3103 = vmatpush1.bf16.msra.mxu0 %v2491
      %3104 = vmatprep.subr.bf16.mxu0 0
      %3105 = vmatpush1.bf16.msra.mxu0 %v2492
      %3106 = vmatprep.subr.bf16.mxu0 0
      %3107 = vmatpush1.bf16.msra.mxu0 %v2493
      %3108 = vmatprep.subr.bf16.mxu0 0
      %3109 = vmatpush1.bf16.msra.mxu0 %v2494
      %3110 = vmatprep.subr.bf16.mxu0 0
      %3111 = vmatpush1.bf16.msra.mxu0 %v2495
      %3112 = vmatprep.subr.bf16.mxu0 0
      %3113 = vmatpush1.bf16.msra.mxu0 %v2496
      %3114 = vmatprep.subr.bf16.mxu0 0
      %3115 = vmatpush1.bf16.msra.mxu0 %v2497
      %3116 = vmatprep.subr.bf16.mxu0 0
      %3117 = vmatpush1.bf16.msra.mxu0 %v2498
      %3118 = vmatprep.subr.bf16.mxu0 0
      %3119 = vmatpush1.bf16.msra.mxu0 %v2499
      %3120 = vmatprep.subr.bf16.mxu0 0
      %3121 = vmatpush1.bf16.msra.mxu0 %v2500
      %3122 = vmatprep.subr.bf16.mxu0 0
      %3123 = vmatpush1.bf16.msra.mxu0 %v2501
      %3124 = vmatprep.subr.bf16.mxu0 0
      %3125 = vmatpush1.bf16.msra.mxu0 %v2502
      %3126 = vmatprep.subr.bf16.mxu0 0
      %3127 = vmatpush1.bf16.msra.mxu0 %v2503
      %3128 = vmatprep.subr.bf16.mxu0 0
      %3129 = vmatpush1.bf16.msra.mxu0 %v2504
      %3130 = vmatprep.mubr.bf16.mxu0 %v1676
      %3131 = vmatmul.mubr.bf16.gmra.mrb[0].mxu0 %v1675
      %v3132 = vpop.f32.mrb[0].mxu0
      %v3133 = vadd.f32 %v2588, %v3132
      %v3134 = vpop.f32.mrb[0].mxu0
      %v3135 = vpop.f32.mrb[0].mxu0
      %v3136 = vadd.f32 %v2591, %v3135
      %v3137 = vpop.f32.mrb[0].mxu0
      %3138 = vmatprep.mubr.bf16.mxu0 %v1681
      %3139 = vmatmul.mubr.bf16.gmra.mrb[0].mxu0 %v1680
      %v3140 = vpop.f32.mrb[0].mxu0
      %v3141 = vadd.f32 %v2596, %v3140
      %v3142 = vpop.f32.mrb[0].mxu0
      %v3143 = vpop.f32.mrb[0].mxu0
      %v3144 = vadd.f32 %v2599, %v3143
      %v3145 = vpop.f32.mrb[0].mxu0
      %3146 = vmatprep.mubr.bf16.mxu0 %v1686
      %3147 = vmatmul.mubr.bf16.gmra.mrb[0].mxu0 %v1685
      %v3148 = vpop.f32.mrb[0].mxu0
      %v3149 = vadd.f32 %v2604, %v3148
      %v3150 = vpop.f32.mrb[0].mxu0
      %v3151 = vpop.f32.mrb[0].mxu0
      %v3152 = vadd.f32 %v2607, %v3151
      %v3153 = vpop.f32.mrb[0].mxu0
      %3154 = vmatprep.mubr.bf16.mxu0 %v1691
      %3155 = vmatmul.mubr.bf16.gmra.mrb[0].mxu0 %v1690
      %v3156 = vpop.f32.mrb[0].mxu0
      %v3157 = vadd.f32 %v2612, %v3156
      %v3158 = vpop.f32.mrb[0].mxu0
      %v3159 = vpop.f32.mrb[0].mxu0
      %v3160 = vadd.f32 %v2615, %v3159
      %v3161 = vpop.f32.mrb[0].mxu0
      %3162 = vmatprep.mubr.bf16.mxu0 %v1696
      %3163 = vmatmul.mubr.bf16.gmra.mrb[0].mxu0 %v1695
      %v3164 = vpop.f32.mrb[0].mxu0
      %v3165 = vadd.f32 %v2620, %v3164
      %v3166 = vpop.f32.mrb[0].mxu0
      %v3167 = vpop.f32.mrb[0].mxu0
      %v3168 = vadd.f32 %v2623, %v3167
      %v3169 = vpop.f32.mrb[0].mxu0
      %3170 = vmatprep.mubr.bf16.mxu0 %v1701
      %3171 = vmatmul.mubr.bf16.gmra.mrb[0].mxu0 %v1700
      %v3172 = vpop.f32.mrb[0].mxu0
      %v3173 = vadd.f32 %v2628, %v3172
      %v3174 = vpop.f32.mrb[0].mxu0
      %v3175 = vpop.f32.mrb[0].mxu0
      %v3176 = vadd.f32 %v2631, %v3175
      %v3177 = vpop.f32.mrb[0].mxu0
      %3178 = vmatprep.mubr.bf16.mxu0 %v1706
      %3179 = vmatmul.mubr.bf16.gmra.mrb[0].mxu0 %v1705
      %v3180 = vpop.f32.mrb[0].mxu0
      %v3181 = vadd.f32 %v2636, %v3180
      %v3182 = vpop.f32.mrb[0].mxu0
      %v3183 = vpop.f32.mrb[0].mxu0
      %v3184 = vadd.f32 %v2639, %v3183
      %v3185 = vpop.f32.mrb[0].mxu0
      %3186 = vmatprep.mubr.bf16.mxu0 %v1711
      %3187 = vmatmul.mubr.bf16.gmra.mrb[0].mxu0 %v1710
      %v3188 = vpop.f32.mrb[0].mxu0
      %v3189 = vadd.f32 %v2644, %v3188
      %v3190 = vpop.f32.mrb[0].mxu0
      %v3191 = vpop.f32.mrb[0].mxu0
      %v3192 = vadd.f32 %v2647, %v3191
      %v3193 = vpop.f32.mrb[0].mxu0
      %3194 = vmatprep.mubr.bf16.mxu0 %v1716
      %3195 = vmatmul.mubr.bf16.gmra.mrb[0].mxu0 %v1715
      %v3196 = vpop.f32.mrb[0].mxu0
      %v3197 = vadd.f32 %v2652, %v3196
      %v3198 = vpop.f32.mrb[0].mxu0
      %v3199 = vpop.f32.mrb[0].mxu0
      %v3200 = vadd.f32 %v2655, %v3199
      %v3201 = vpop.f32.mrb[0].mxu0
      %3202 = vmatprep.mubr.bf16.mxu0 %v1721
      %3203 = vmatmul.mubr.bf16.gmra.mrb[0].mxu0 %v1720
      %v3204 = vpop.f32.mrb[0].mxu0
      %v3205 = vadd.f32 %v2660, %v3204
      %v3206 = vpop.f32.mrb[0].mxu0
      %v3207 = vpop.f32.mrb[0].mxu0
      %v3208 = vadd.f32 %v2663, %v3207
      %v3209 = vpop.f32.mrb[0].mxu0
      %3210 = vmatprep.mubr.bf16.mxu0 %v1726
      %3211 = vmatmul.mubr.bf16.gmra.mrb[0].mxu0 %v1725
      %v3212 = vpop.f32.mrb[0].mxu0
      %v3213 = vadd.f32 %v2668, %v3212
      %v3214 = vpop.f32.mrb[0].mxu0
      %v3215 = vpop.f32.mrb[0].mxu0
      %v3216 = vadd.f32 %v2671, %v3215
      %v3217 = vpop.f32.mrb[0].mxu0
      %3218 = vmatprep.mubr.bf16.mxu0 %v1731
      %3219 = vmatmul.mubr.bf16.gmra.mrb[0].mxu0 %v1730
      %v3220 = vpop.f32.mrb[0].mxu0
      %v3221 = vadd.f32 %v2676, %v3220
      %v3222 = vpop.f32.mrb[0].mxu0
      %v3223 = vpop.f32.mrb[0].mxu0
      %v3224 = vadd.f32 %v2679, %v3223
      %v3225 = vpop.f32.mrb[0].mxu0
      %3226 = vmatprep.mubr.bf16.mxu0 %v1736
      %3227 = vmatmul.mubr.bf16.gmra.mrb[0].mxu0 %v1735
      %v3228 = vpop.f32.mrb[0].mxu0
      %v3229 = vadd.f32 %v2684, %v3228
      %v3230 = vpop.f32.mrb[0].mxu0
      %v3231 = vpop.f32.mrb[0].mxu0
      %v3232 = vadd.f32 %v2687, %v3231
      %v3233 = vpop.f32.mrb[0].mxu0
      %3234 = vmatprep.mubr.bf16.mxu0 %v1741
      %3235 = vmatmul.mubr.bf16.gmra.mrb[0].mxu0 %v1740
      %v3236 = vpop.f32.mrb[0].mxu0
      %v3237 = vadd.f32 %v2692, %v3236
      %v3238 = vpop.f32.mrb[0].mxu0
      %v3239 = vpop.f32.mrb[0].mxu0
      %v3240 = vadd.f32 %v2695, %v3239
      %v3241 = vpop.f32.mrb[0].mxu0
      %3242 = vmatprep.mubr.bf16.mxu0 %v1746
      %3243 = vmatmul.mubr.bf16.gmra.mrb[0].mxu0 %v1745
      %v3244 = vpop.f32.mrb[0].mxu0
      %v3245 = vadd.f32 %v2700, %v3244
      %v3246 = vpop.f32.mrb[0].mxu0
      %v3247 = vpop.f32.mrb[0].mxu0
      %v3248 = vadd.f32 %v2703, %v3247
      %v3249 = vpop.f32.mrb[0].mxu0
      %3250 = vmatprep.mubr.bf16.mxu0 %v1751
      %3251 = vmatmul.mubr.bf16.gmra.mrb[0].mxu0 %v1750
      %v3252 = vpop.f32.mrb[0].mxu0
      %v3253 = vadd.f32 %v2708, %v3252
      %v3254 = vpop.f32.mrb[0].mxu0
      %v3255 = vpop.f32.mrb[0].mxu0
      %v3256 = vadd.f32 %v2711, %v3255
      %v3257 = vpop.f32.mrb[0].mxu0
      %3258 = vmatprep.mubr.bf16.mxu0 %v1756
      %3259 = vmatmul.mubr.bf16.gmra.mrb[0].mxu0 %v1755
      %v3260 = vpop.f32.mrb[0].mxu0
      %v3261 = vadd.f32 %v2716, %v3260
      %v3262 = vpop.f32.mrb[0].mxu0
      %v3263 = vpop.f32.mrb[0].mxu0
      %v3264 = vadd.f32 %v2719, %v3263
      %v3265 = vpop.f32.mrb[0].mxu0
      %3266 = vmatprep.mubr.bf16.mxu0 %v1761
      %3267 = vmatmul.mubr.bf16.gmra.mrb[0].mxu0 %v1760
      %v3268 = vpop.f32.mrb[0].mxu0
      %v3269 = vadd.f32 %v2724, %v3268
      %v3270 = vpop.f32.mrb[0].mxu0
      %v3271 = vpop.f32.mrb[0].mxu0
      %v3272 = vadd.f32 %v2727, %v3271
      %v3273 = vpop.f32.mrb[0].mxu0
      %3274 = vmatprep.mubr.bf16.mxu0 %v1766
      %3275 = vmatmul.mubr.bf16.gmra.mrb[0].mxu0 %v1765
      %v3276 = vpop.f32.mrb[0].mxu0
      %v3277 = vadd.f32 %v2732, %v3276
      %v3278 = vpop.f32.mrb[0].mxu0
      %v3279 = vpop.f32.mrb[0].mxu0
      %v3280 = vadd.f32 %v2735, %v3279
      %v3281 = vpop.f32.mrb[0].mxu0
      %3282 = vmatprep.mubr.bf16.mxu0 %v1771
      %3283 = vmatmul.mubr.bf16.gmra.mrb[0].mxu0 %v1770
      %v3284 = vpop.f32.mrb[0].mxu0
      %v3285 = vadd.f32 %v2740, %v3284
      %v3286 = vpop.f32.mrb[0].mxu0
      %v3287 = vpop.f32.mrb[0].mxu0
      %v3288 = vadd.f32 %v2743, %v3287
      %v3289 = vpop.f32.mrb[0].mxu0
      %3290 = vmatprep.mubr.bf16.mxu0 %v1776
      %3291 = vmatmul.mubr.bf16.gmra.mrb[0].mxu0 %v1775
      %v3292 = vpop.f32.mrb[0].mxu0
      %v3293 = vadd.f32 %v2748, %v3292
      %v3294 = vpop.f32.mrb[0].mxu0
      %v3295 = vpop.f32.mrb[0].mxu0
      %v3296 = vadd.f32 %v2751, %v3295
      %v3297 = vpop.f32.mrb[0].mxu0
      %3298 = vmatprep.mubr.bf16.mxu0 %v1781
      %3299 = vmatmul.mubr.bf16.gmra.mrb[0].mxu0 %v1780
      %v3300 = vpop.f32.mrb[0].mxu0
      %v3301 = vadd.f32 %v2756, %v3300
      %v3302 = vpop.f32.mrb[0].mxu0
      %v3303 = vpop.f32.mrb[0].mxu0
      %v3304 = vadd.f32 %v2759, %v3303
      %v3305 = vpop.f32.mrb[0].mxu0
      %3306 = vmatprep.mubr.bf16.mxu0 %v1786
      %3307 = vmatmul.mubr.bf16.gmra.mrb[0].mxu0 %v1785
      %v3308 = vpop.f32.mrb[0].mxu0
      %v3309 = vadd.f32 %v2764, %v3308
      %v3310 = vpop.f32.mrb[0].mxu0
      %v3311 = vpop.f32.mrb[0].mxu0
      %v3312 = vadd.f32 %v2767, %v3311
      %v3313 = vpop.f32.mrb[0].mxu0
      %3314 = vmatprep.mubr.bf16.mxu0 %v1791
      %3315 = vmatmul.mubr.bf16.gmra.mrb[0].mxu0 %v1790
      %v3316 = vpop.f32.mrb[0].mxu0
      %v3317 = vadd.f32 %v2772, %v3316
      %v3318 = vpop.f32.mrb[0].mxu0
      %v3319 = vpop.f32.mrb[0].mxu0
      %v3320 = vadd.f32 %v2775, %v3319
      %v3321 = vpop.f32.mrb[0].mxu0
      %3322 = vmatprep.mubr.bf16.mxu0 %v1796
      %3323 = vmatmul.mubr.bf16.gmra.mrb[0].mxu0 %v1795
      %v3324 = vpop.f32.mrb[0].mxu0
      %v3325 = vadd.f32 %v2780, %v3324
      %v3326 = vpop.f32.mrb[0].mxu0
      %v3327 = vpop.f32.mrb[0].mxu0
      %v3328 = vadd.f32 %v2783, %v3327
      %v3329 = vpop.f32.mrb[0].mxu0
      %3330 = vmatprep.mubr.bf16.mxu0 %v1801
      %3331 = vmatmul.mubr.bf16.gmra.mrb[0].mxu0 %v1800
      %v3332 = vpop.f32.mrb[0].mxu0
      %v3333 = vadd.f32 %v2788, %v3332
      %v3334 = vpop.f32.mrb[0].mxu0
      %v3335 = vpop.f32.mrb[0].mxu0
      %v3336 = vadd.f32 %v2791, %v3335
      %v3337 = vpop.f32.mrb[0].mxu0
      %3338 = vmatprep.mubr.bf16.mxu0 %v1806
      %3339 = vmatmul.mubr.bf16.gmra.mrb[0].mxu0 %v1805
      %v3340 = vpop.f32.mrb[0].mxu0
      %v3341 = vadd.f32 %v2796, %v3340
      %v3342 = vpop.f32.mrb[0].mxu0
      %v3343 = vpop.f32.mrb[0].mxu0
      %v3344 = vadd.f32 %v2799, %v3343
      %v3345 = vpop.f32.mrb[0].mxu0
      %3346 = vmatprep.mubr.bf16.mxu0 %v1811
      %3347 = vmatmul.mubr.bf16.gmra.mrb[0].mxu0 %v1810
      %v3348 = vpop.f32.mrb[0].mxu0
      %v3349 = vadd.f32 %v2804, %v3348
      %v3350 = vpop.f32.mrb[0].mxu0
      %v3351 = vpop.f32.mrb[0].mxu0
      %v3352 = vadd.f32 %v2807, %v3351
      %v3353 = vpop.f32.mrb[0].mxu0
      %3354 = vmatprep.mubr.bf16.mxu0 %v1816
      %3355 = vmatmul.mubr.bf16.gmra.mrb[0].mxu0 %v1815
      %v3356 = vpop.f32.mrb[0].mxu0
      %v3357 = vadd.f32 %v2812, %v3356
      %v3358 = vpop.f32.mrb[0].mxu0
      %v3359 = vpop.f32.mrb[0].mxu0
      %v3360 = vadd.f32 %v2815, %v3359
      %v3361 = vpop.f32.mrb[0].mxu0
      %3362 = vmatprep.mubr.bf16.mxu0 %v1821
      %3363 = vmatmul.mubr.bf16.gmra.mrb[0].mxu0 %v1820
      %v3364 = vpop.f32.mrb[0].mxu0
      %v3365 = vadd.f32 %v2820, %v3364
      %v3366 = vpop.f32.mrb[0].mxu0
      %v3367 = vpop.f32.mrb[0].mxu0
      %v3368 = vadd.f32 %v2823, %v3367
      %v3369 = vpop.f32.mrb[0].mxu0
      %3370 = vmatprep.mubr.bf16.mxu0 %v1826
      %3371 = vmatmul.mubr.bf16.gmra.mrb[0].mxu0 %v1825
      %v3372 = vpop.f32.mrb[0].mxu0
      %v3373 = vadd.f32 %v2828, %v3372
      %v3374 = vpop.f32.mrb[0].mxu0
      %v3375 = vpop.f32.mrb[0].mxu0
      %v3376 = vadd.f32 %v2831, %v3375
      %v3377 = vpop.f32.mrb[0].mxu0
      %3378 = vmatprep.mubr.bf16.mxu0 %v1831
      %3379 = vmatmul.mubr.bf16.gmra.mrb[0].mxu0 %v1830
      %v3380 = vpop.f32.mrb[0].mxu0
      %v3381 = vadd.f32 %v2836, %v3380
      %v3382 = vpop.f32.mrb[0].mxu0
      %v3383 = vpop.f32.mrb[0].mxu0
      %v3384 = vadd.f32 %v2839, %v3383
      %v3385 = vpop.f32.mrb[0].mxu0
      %3386 = vmatprep.mubr.bf16.mxu0 %v1836
      %3387 = vmatmul.mubr.bf16.gmra.mrb[0].mxu0 %v1835
      %v3388 = vpop.f32.mrb[0].mxu0
      %v3389 = vadd.f32 %v2844, %v3388
      %v3390 = vpop.f32.mrb[0].mxu0
      %v3391 = vpop.f32.mrb[0].mxu0
      %v3392 = vadd.f32 %v2847, %v3391
      %v3393 = vpop.f32.mrb[0].mxu0
      %3394 = vmatprep.mubr.bf16.mxu0 %v1841
      %3395 = vmatmul.mubr.bf16.gmra.mrb[0].mxu0 %v1840
      %v3396 = vpop.f32.mrb[0].mxu0
      %v3397 = vadd.f32 %v2852, %v3396
      %v3398 = vpop.f32.mrb[0].mxu0
      %v3399 = vpop.f32.mrb[0].mxu0
      %v3400 = vadd.f32 %v2855, %v3399
      %v3401 = vpop.f32.mrb[0].mxu0
      %3402 = vmatprep.mubr.bf16.mxu0 %v1846
      %3403 = vmatmul.mubr.bf16.gmra.mrb[0].mxu0 %v1845
      %v3404 = vpop.f32.mrb[0].mxu0
      %v3405 = vadd.f32 %v2860, %v3404
      %v3406 = vpop.f32.mrb[0].mxu0
      %v3407 = vpop.f32.mrb[0].mxu0
      %v3408 = vadd.f32 %v2863, %v3407
      %v3409 = vpop.f32.mrb[0].mxu0
      %3410 = vmatprep.mubr.bf16.mxu0 %v1851
      %3411 = vmatmul.mubr.bf16.gmra.mrb[0].mxu0 %v1850
      %v3412 = vpop.f32.mrb[0].mxu0
      %v3413 = vadd.f32 %v2868, %v3412
      %v3414 = vpop.f32.mrb[0].mxu0
      %v3415 = vpop.f32.mrb[0].mxu0
      %v3416 = vadd.f32 %v2871, %v3415
      %v3417 = vpop.f32.mrb[0].mxu0
      %3418 = vmatprep.mubr.bf16.mxu0 %v1856
      %3419 = vmatmul.mubr.bf16.gmra.mrb[0].mxu0 %v1855
      %v3420 = vpop.f32.mrb[0].mxu0
      %v3421 = vadd.f32 %v2876, %v3420
      %v3422 = vpop.f32.mrb[0].mxu0
      %v3423 = vpop.f32.mrb[0].mxu0
      %v3424 = vadd.f32 %v2879, %v3423
      %v3425 = vpop.f32.mrb[0].mxu0
      %3426 = vmatprep.mubr.bf16.mxu0 %v1861
      %3427 = vmatmul.mubr.bf16.gmra.mrb[0].mxu0 %v1860
      %v3428 = vpop.f32.mrb[0].mxu0
      %v3429 = vadd.f32 %v2884, %v3428
      %v3430 = vpop.f32.mrb[0].mxu0
      %v3431 = vpop.f32.mrb[0].mxu0
      %v3432 = vadd.f32 %v2887, %v3431
      %v3433 = vpop.f32.mrb[0].mxu0
      %3434 = vmatprep.mubr.bf16.mxu0 %v1866
      %3435 = vmatmul.mubr.bf16.gmra.mrb[0].mxu0 %v1865
      %v3436 = vpop.f32.mrb[0].mxu0
      %v3437 = vadd.f32 %v2892, %v3436
      %v3438 = vpop.f32.mrb[0].mxu0
      %v3439 = vpop.f32.mrb[0].mxu0
      %v3440 = vadd.f32 %v2895, %v3439
      %v3441 = vpop.f32.mrb[0].mxu0
      %3442 = vmatprep.mubr.bf16.mxu0 %v1871
      %3443 = vmatmul.mubr.bf16.gmra.mrb[0].mxu0 %v1870
      %v3444 = vpop.f32.mrb[0].mxu0
      %v3445 = vadd.f32 %v2900, %v3444
      %v3446 = vpop.f32.mrb[0].mxu0
      %v3447 = vpop.f32.mrb[0].mxu0
      %v3448 = vadd.f32 %v2903, %v3447
      %v3449 = vpop.f32.mrb[0].mxu0
      %3450 = vmatprep.mubr.bf16.mxu0 %v1876
      %3451 = vmatmul.mubr.bf16.gmra.mrb[0].mxu0 %v1875
      %v3452 = vpop.f32.mrb[0].mxu0
      %v3453 = vadd.f32 %v2908, %v3452
      %v3454 = vpop.f32.mrb[0].mxu0
      %v3455 = vpop.f32.mrb[0].mxu0
      %v3456 = vadd.f32 %v2911, %v3455
      %v3457 = vpop.f32.mrb[0].mxu0
      %3458 = vmatprep.mubr.bf16.mxu0 %v1881
      %3459 = vmatmul.mubr.bf16.gmra.mrb[0].mxu0 %v1880
      %v3460 = vpop.f32.mrb[0].mxu0
      %v3461 = vadd.f32 %v2916, %v3460
      %v3462 = vpop.f32.mrb[0].mxu0
      %v3463 = vpop.f32.mrb[0].mxu0
      %v3464 = vadd.f32 %v2919, %v3463
      %v3465 = vpop.f32.mrb[0].mxu0
      %3466 = vmatprep.mubr.bf16.mxu0 %v1886
      %3467 = vmatmul.mubr.bf16.gmra.mrb[0].mxu0 %v1885
      %v3468 = vpop.f32.mrb[0].mxu0
      %v3469 = vadd.f32 %v2924, %v3468
      %v3470 = vpop.f32.mrb[0].mxu0
      %v3471 = vpop.f32.mrb[0].mxu0
      %v3472 = vadd.f32 %v2927, %v3471
      %v3473 = vpop.f32.mrb[0].mxu0
      %3474 = vmatprep.mubr.bf16.mxu0 %v1891
      %3475 = vmatmul.mubr.bf16.gmra.mrb[0].mxu0 %v1890
      %v3476 = vpop.f32.mrb[0].mxu0
      %v3477 = vadd.f32 %v2932, %v3476
      %v3478 = vpop.f32.mrb[0].mxu0
      %v3479 = vpop.f32.mrb[0].mxu0
      %v3480 = vadd.f32 %v2935, %v3479
      %v3481 = vpop.f32.mrb[0].mxu0
      %3482 = vmatprep.mubr.bf16.mxu0 %v1896
      %3483 = vmatmul.mubr.bf16.gmra.mrb[0].mxu0 %v1895
      %v3484 = vpop.f32.mrb[0].mxu0
      %v3485 = vadd.f32 %v2940, %v3484
      %v3486 = vpop.f32.mrb[0].mxu0
      %v3487 = vpop.f32.mrb[0].mxu0
      %v3488 = vadd.f32 %v2943, %v3487
      %v3489 = vpop.f32.mrb[0].mxu0
      %3490 = vmatprep.mubr.bf16.mxu0 %v1901
      %3491 = vmatmul.mubr.bf16.gmra.mrb[0].mxu0 %v1900
      %v3492 = vpop.f32.mrb[0].mxu0
      %v3493 = vadd.f32 %v2948, %v3492
      %v3494 = vpop.f32.mrb[0].mxu0
      %v3495 = vpop.f32.mrb[0].mxu0
      %v3496 = vadd.f32 %v2951, %v3495
      %v3497 = vpop.f32.mrb[0].mxu0
      %3498 = vmatprep.mubr.bf16.mxu0 %v1906
      %3499 = vmatmul.mubr.bf16.gmra.mrb[0].mxu0 %v1905
      %v3500 = vpop.f32.mrb[0].mxu0
      %v3501 = vadd.f32 %v2956, %v3500
      %v3502 = vpop.f32.mrb[0].mxu0
      %v3503 = vpop.f32.mrb[0].mxu0
      %v3504 = vadd.f32 %v2959, %v3503
      %v3505 = vpop.f32.mrb[0].mxu0
      %3506 = vmatprep.mubr.bf16.mxu0 %v1911
      %3507 = vmatmul.mubr.bf16.gmra.mrb[0].mxu0 %v1910
      %v3508 = vpop.f32.mrb[0].mxu0
      %v3509 = vadd.f32 %v2964, %v3508
      %v3510 = vpop.f32.mrb[0].mxu0
      %v3511 = vpop.f32.mrb[0].mxu0
      %v3512 = vadd.f32 %v2967, %v3511
      %v3513 = vpop.f32.mrb[0].mxu0
      %3514 = vmatprep.mubr.bf16.mxu0 %v1916
      %3515 = vmatmul.mubr.bf16.gmra.mrb[0].mxu0 %v1915
      %v3516 = vpop.f32.mrb[0].mxu0
      %v3517 = vadd.f32 %v2972, %v3516
      %v3518 = vpop.f32.mrb[0].mxu0
      %v3519 = vpop.f32.mrb[0].mxu0
      %v3520 = vadd.f32 %v2975, %v3519
      %v3521 = vpop.f32.mrb[0].mxu0
      %3522 = vmatprep.mubr.bf16.mxu0 %v1921
      %3523 = vmatmul.mubr.bf16.gmra.mrb[0].mxu0 %v1920
      %v3524 = vpop.f32.mrb[0].mxu0
      %v3525 = vadd.f32 %v2980, %v3524
      %v3526 = vpop.f32.mrb[0].mxu0
      %v3527 = vpop.f32.mrb[0].mxu0
      %v3528 = vadd.f32 %v2983, %v3527
      %v3529 = vpop.f32.mrb[0].mxu0
      %3530 = vmatprep.mubr.bf16.mxu0 %v1926
      %3531 = vmatmul.mubr.bf16.gmra.mrb[0].mxu0 %v1925
      %v3532 = vpop.f32.mrb[0].mxu0
      %v3533 = vadd.f32 %v2988, %v3532
      %v3534 = vpop.f32.mrb[0].mxu0
      %v3535 = vpop.f32.mrb[0].mxu0
      %v3536 = vadd.f32 %v2991, %v3535
      %v3537 = vpop.f32.mrb[0].mxu0
      %3538 = vmatprep.mubr.bf16.mxu0 %v1931
      %3539 = vmatmul.mubr.bf16.gmra.mrb[0].mxu0 %v1930
      %v3540 = vpop.f32.mrb[0].mxu0
      %v3541 = vadd.f32 %v2996, %v3540
      %v3542 = vpop.f32.mrb[0].mxu0
      %v3543 = vpop.f32.mrb[0].mxu0
      %v3544 = vadd.f32 %v2999, %v3543
      %v3545 = vpop.f32.mrb[0].mxu0
      %3546 = vmatprep.mubr.bf16.mxu0 %v1936
      %3547 = vmatmul.mubr.bf16.gmra.mrb[0].mxu0 %v1935
      %v3548 = vpop.f32.mrb[0].mxu0
      %v3549 = vadd.f32 %v3004, %v3548
      %v3550 = vpop.f32.mrb[0].mxu0
      %v3551 = vpop.f32.mrb[0].mxu0
      %v3552 = vadd.f32 %v3007, %v3551
      %v3553 = vpop.f32.mrb[0].mxu0
      %3554 = vmatprep.mubr.bf16.mxu0 %v1941
      %3555 = vmatmul.mubr.bf16.gmra.mrb[0].mxu0 %v1940
      %v3556 = vpop.f32.mrb[0].mxu0
      %v3557 = vadd.f32 %v3012, %v3556
      %v3558 = vpop.f32.mrb[0].mxu0
      %v3559 = vpop.f32.mrb[0].mxu0
      %v3560 = vadd.f32 %v3015, %v3559
      %v3561 = vpop.f32.mrb[0].mxu0
      %3562 = vmatprep.mubr.bf16.mxu0 %v1946
      %3563 = vmatmul.mubr.bf16.gmra.mrb[0].mxu0 %v1945
      %v3564 = vpop.f32.mrb[0].mxu0
      %v3565 = vadd.f32 %v3020, %v3564
      %v3566 = vpop.f32.mrb[0].mxu0
      %v3567 = vpop.f32.mrb[0].mxu0
      %v3568 = vadd.f32 %v3023, %v3567
      %v3569 = vpop.f32.mrb[0].mxu0
      %3570 = vmatprep.mubr.bf16.mxu0 %v1951
      %3571 = vmatmul.mubr.bf16.gmra.mrb[0].mxu0 %v1950
      %v3572 = vpop.f32.mrb[0].mxu0
      %v3573 = vadd.f32 %v3028, %v3572
      %v3574 = vpop.f32.mrb[0].mxu0
      %v3575 = vpop.f32.mrb[0].mxu0
      %v3576 = vadd.f32 %v3031, %v3575
      %v3577 = vpop.f32.mrb[0].mxu0
      %3578 = vmatprep.mubr.bf16.mxu0 %v1956
      %3579 = vmatmul.mubr.bf16.gmra.mrb[0].mxu0 %v1955
      %v3580 = vpop.f32.mrb[0].mxu0
      %v3581 = vadd.f32 %v3036, %v3580
      %v3582 = vpop.f32.mrb[0].mxu0
      %v3583 = vpop.f32.mrb[0].mxu0
      %v3584 = vadd.f32 %v3039, %v3583
      %v3585 = vpop.f32.mrb[0].mxu0
      %3586 = vmatprep.mubr.bf16.mxu0 %v1961
      %3587 = vmatmul.mubr.bf16.gmra.mrb[0].mxu0 %v1960
      %v3588 = vpop.f32.mrb[0].mxu0
      %v3589 = vadd.f32 %v3044, %v3588
      %v3590 = vpop.f32.mrb[0].mxu0
      %v3591 = vpop.f32.mrb[0].mxu0
      %v3592 = vadd.f32 %v3047, %v3591
      %v3593 = vpop.f32.mrb[0].mxu0
      %3594 = vmatprep.mubr.bf16.mxu0 %v1966
      %3595 = vmatmul.mubr.bf16.gmra.mrb[0].mxu0 %v1965
      %v3596 = vpop.f32.mrb[0].mxu0
      %v3597 = vadd.f32 %v3052, %v3596
      %v3598 = vpop.f32.mrb[0].mxu0
      %v3599 = vpop.f32.mrb[0].mxu0
      %v3600 = vadd.f32 %v3055, %v3599
      %v3601 = vpop.f32.mrb[0].mxu0
      %3602 = vmatprep.mubr.bf16.mxu0 %v1971
      %3603 = vmatmul.mubr.bf16.gmra.mrb[0].mxu0 %v1970
      %v3604 = vpop.f32.mrb[0].mxu0
      %v3605 = vadd.f32 %v3060, %v3604
      %v3606 = vpop.f32.mrb[0].mxu0
      %v3607 = vpop.f32.mrb[0].mxu0
      %v3608 = vadd.f32 %v3063, %v3607
      %v3609 = vpop.f32.mrb[0].mxu0
      %3610 = vmatprep.mubr.bf16.mxu0 %v1976
      %3611 = vmatmul.mubr.bf16.gmra.mrb[0].mxu0 %v1975
      %v3612 = vpop.f32.mrb[0].mxu0
      %v3613 = vadd.f32 %v3068, %v3612
      %v3614 = vpop.f32.mrb[0].mxu0
      %v3615 = vpop.f32.mrb[0].mxu0
      %v3616 = vadd.f32 %v3071, %v3615
      %v3617 = vpop.f32.mrb[0].mxu0
      %3618 = vmatprep.mubr.bf16.mxu0 %v1981
      %3619 = vmatmul.mubr.bf16.gmra.mrb[0].mxu0 %v1980
      %v3620 = vpop.f32.mrb[0].mxu0
      %v3621 = vadd.f32 %v3076, %v3620
      %v3622 = vpop.f32.mrb[0].mxu0
      %v3623 = vpop.f32.mrb[0].mxu0
      %v3624 = vadd.f32 %v3079, %v3623
      %v3625 = vpop.f32.mrb[0].mxu0
      %3626 = vmatprep.mubr.bf16.mxu0 %v1986
      %3627 = vmatmul.mubr.bf16.gmra.mrb[0].mxu0 %v1985
      %v3628 = vpop.f32.mrb[0].mxu0
      %v3629 = vadd.f32 %v3084, %v3628
      %v3630 = vpop.f32.mrb[0].mxu0
      %v3631 = vpop.f32.mrb[0].mxu0
      %v3632 = vadd.f32 %v3087, %v3631
      %v3633 = vpop.f32.mrb[0].mxu0
      %3634 = vmatprep.mubr.bf16.mxu0 %v1991
      %3635 = vmatmul.mubr.bf16.gmra.mrb[0].mxu0 %v1990
      %v3636 = vpop.f32.mrb[0].mxu0
      %v3637 = vadd.f32 %v3092, %v3636
      %v3638 = vpop.f32.mrb[0].mxu0
      %v3639 = vpop.f32.mrb[0].mxu0
      %v3640 = vadd.f32 %v3095, %v3639
      %v3641 = vpop.f32.mrb[0].mxu0
      %3642 = vdwg.mxu0
      %3643 = vmatprep.subr.bf16.mxu0 0
      %3644 = vmatpush1.bf16.msra.mxu0 %v2505
      %3645 = vmatprep.subr.bf16.mxu0 0
      %3646 = vmatpush1.bf16.msra.mxu0 %v2506
      %3647 = vmatprep.subr.bf16.mxu0 0
      %3648 = vmatpush1.bf16.msra.mxu0 %v2507
      %3649 = vmatprep.subr.bf16.mxu0 0
      %3650 = vmatpush1.bf16.msra.mxu0 %v2508
      %3651 = vmatprep.subr.bf16.mxu0 0
      %3652 = vmatpush1.bf16.msra.mxu0 %v2509
      %3653 = vmatprep.subr.bf16.mxu0 0
      %3654 = vmatpush1.bf16.msra.mxu0 %v2510
      %3655 = vmatprep.subr.bf16.mxu0 0
      %3656 = vmatpush1.bf16.msra.mxu0 %v2511
      %3657 = vmatprep.subr.bf16.mxu0 0
      %3658 = vmatpush1.bf16.msra.mxu0 %v2512
      %3659 = vmatprep.subr.bf16.mxu0 0
      %3660 = vmatpush1.bf16.msra.mxu0 0
      %3661 = vmatprep.subr.bf16.mxu0 0
      %3662 = vmatpush1.bf16.msra.mxu0 0
      %3663 = vmatprep.subr.bf16.mxu0 0
      %3664 = vmatpush1.bf16.msra.mxu0 0
      %3665 = vmatprep.subr.bf16.mxu0 0
      %3666 = vmatpush1.bf16.msra.mxu0 0
      %3667 = vmatprep.subr.bf16.mxu0 0
      %3668 = vmatpush1.bf16.msra.mxu0 0
      %3669 = vmatprep.subr.bf16.mxu0 0
      %3670 = vmatpush1.bf16.msra.mxu0 0
      %3671 = vmatprep.subr.bf16.mxu0 0
      %3672 = vmatpush1.bf16.msra.mxu0 0
      %3673 = vmatprep.subr.bf16.mxu0 0
      %3674 = vmatpush1.bf16.msra.mxu0 0
      %3675 = vmatprep.mubr.bf16.mxu0 0
      %3676 = vmatmul.mubr.bf16.gmra.mrb[0].mxu0 %v1677
      %v3677 = vpop.f32.mrb[0].mxu0
      %v3678 = vadd.f32 %v3133, %v3677
      %v3679 = vpop.f32.mrb[0].mxu0
      %v3680 = vpop.f32.mrb[0].mxu0
      %v3681 = vadd.f32 %v3136, %v3680
      %v3682 = vpop.f32.mrb[0].mxu0
      %3683 = vmatprep.mubr.bf16.mxu0 0
      %3684 = vmatmul.mubr.bf16.gmra.mrb[0].mxu0 %v1682
      %v3685 = vpop.f32.mrb[0].mxu0
      %v3686 = vadd.f32 %v3141, %v3685
      %v3687 = vpop.f32.mrb[0].mxu0
      %v3688 = vpop.f32.mrb[0].mxu0
      %v3689 = vadd.f32 %v3144, %v3688
      %v3690 = vpop.f32.mrb[0].mxu0
      %3691 = vmatprep.mubr.bf16.mxu0 0
      %3692 = vmatmul.mubr.bf16.gmra.mrb[0].mxu0 %v1687
      %v3693 = vpop.f32.mrb[0].mxu0
      %v3694 = vadd.f32 %v3149, %v3693
      %v3695 = vpop.f32.mrb[0].mxu0
      %v3696 = vpop.f32.mrb[0].mxu0
      %v3697 = vadd.f32 %v3152, %v3696
      %v3698 = vpop.f32.mrb[0].mxu0
      %3699 = vmatprep.mubr.bf16.mxu0 0
      %3700 = vmatmul.mubr.bf16.gmra.mrb[0].mxu0 %v1692
      %v3701 = vpop.f32.mrb[0].mxu0
      %v3702 = vadd.f32 %v3157, %v3701
      %v3703 = vpop.f32.mrb[0].mxu0
      %v3704 = vpop.f32.mrb[0].mxu0
      %v3705 = vadd.f32 %v3160, %v3704
      %v3706 = vpop.f32.mrb[0].mxu0
      %3707 = vmatprep.mubr.bf16.mxu0 0
      %3708 = vmatmul.mubr.bf16.gmra.mrb[0].mxu0 %v1697
      %v3709 = vpop.f32.mrb[0].mxu0
      %v3710 = vadd.f32 %v3165, %v3709
      %v3711 = vpop.f32.mrb[0].mxu0
      %v3712 = vpop.f32.mrb[0].mxu0
      %v3713 = vadd.f32 %v3168, %v3712
      %v3714 = vpop.f32.mrb[0].mxu0
      %3715 = vmatprep.mubr.bf16.mxu0 0
      %3716 = vmatmul.mubr.bf16.gmra.mrb[0].mxu0 %v1702
      %v3717 = vpop.f32.mrb[0].mxu0
      %v3718 = vadd.f32 %v3173, %v3717
      %v3719 = vpop.f32.mrb[0].mxu0
      %v3720 = vpop.f32.mrb[0].mxu0
      %v3721 = vadd.f32 %v3176, %v3720
      %v3722 = vpop.f32.mrb[0].mxu0
      %3723 = vmatprep.mubr.bf16.mxu0 0
      %3724 = vmatmul.mubr.bf16.gmra.mrb[0].mxu0 %v1707
      %v3725 = vpop.f32.mrb[0].mxu0
      %v3726 = vadd.f32 %v3181, %v3725
      %v3727 = vpop.f32.mrb[0].mxu0
      %v3728 = vpop.f32.mrb[0].mxu0
      %v3729 = vadd.f32 %v3184, %v3728
      %v3730 = vpop.f32.mrb[0].mxu0
      %3731 = vmatprep.mubr.bf16.mxu0 0
      %3732 = vmatmul.mubr.bf16.gmra.mrb[0].mxu0 %v1712
      %v3733 = vpop.f32.mrb[0].mxu0
      %v3734 = vadd.f32 %v3189, %v3733
      %v3735 = vpop.f32.mrb[0].mxu0
      %v3736 = vpop.f32.mrb[0].mxu0
      %v3737 = vadd.f32 %v3192, %v3736
      %v3738 = vpop.f32.mrb[0].mxu0
      %3739 = vmatprep.mubr.bf16.mxu0 0
      %3740 = vmatmul.mubr.bf16.gmra.mrb[0].mxu0 %v1717
      %v3741 = vpop.f32.mrb[0].mxu0
      %v3742 = vadd.f32 %v3197, %v3741
      %v3743 = vpop.f32.mrb[0].mxu0
      %v3744 = vpop.f32.mrb[0].mxu0
      %v3745 = vadd.f32 %v3200, %v3744
      %v3746 = vpop.f32.mrb[0].mxu0
      %3747 = vmatprep.mubr.bf16.mxu0 0
      %3748 = vmatmul.mubr.bf16.gmra.mrb[0].mxu0 %v1722
      %v3749 = vpop.f32.mrb[0].mxu0
      %v3750 = vadd.f32 %v3205, %v3749
      %v3751 = vpop.f32.mrb[0].mxu0
      %v3752 = vpop.f32.mrb[0].mxu0
      %v3753 = vadd.f32 %v3208, %v3752
      %v3754 = vpop.f32.mrb[0].mxu0
      %3755 = vmatprep.mubr.bf16.mxu0 0
      %3756 = vmatmul.mubr.bf16.gmra.mrb[0].mxu0 %v1727
      %v3757 = vpop.f32.mrb[0].mxu0
      %v3758 = vadd.f32 %v3213, %v3757
      %v3759 = vpop.f32.mrb[0].mxu0
      %v3760 = vpop.f32.mrb[0].mxu0
      %v3761 = vadd.f32 %v3216, %v3760
      %v3762 = vpop.f32.mrb[0].mxu0
      %3763 = vmatprep.mubr.bf16.mxu0 0
      %3764 = vmatmul.mubr.bf16.gmra.mrb[0].mxu0 %v1732
      %v3765 = vpop.f32.mrb[0].mxu0
      %v3766 = vadd.f32 %v3221, %v3765
      %v3767 = vpop.f32.mrb[0].mxu0
      %v3768 = vpop.f32.mrb[0].mxu0
      %v3769 = vadd.f32 %v3224, %v3768
      %v3770 = vpop.f32.mrb[0].mxu0
      %3771 = vmatprep.mubr.bf16.mxu0 0
      %3772 = vmatmul.mubr.bf16.gmra.mrb[0].mxu0 %v1737
      %v3773 = vpop.f32.mrb[0].mxu0
      %v3774 = vadd.f32 %v3229, %v3773
      %v3775 = vpop.f32.mrb[0].mxu0
      %v3776 = vpop.f32.mrb[0].mxu0
      %v3777 = vadd.f32 %v3232, %v3776
      %v3778 = vpop.f32.mrb[0].mxu0
      %3779 = vmatprep.mubr.bf16.mxu0 0
      %3780 = vmatmul.mubr.bf16.gmra.mrb[0].mxu0 %v1742
      %v3781 = vpop.f32.mrb[0].mxu0
      %v3782 = vadd.f32 %v3237, %v3781
      %v3783 = vpop.f32.mrb[0].mxu0
      %v3784 = vpop.f32.mrb[0].mxu0
      %v3785 = vadd.f32 %v3240, %v3784
      %v3786 = vpop.f32.mrb[0].mxu0
      %3787 = vmatprep.mubr.bf16.mxu0 0
      %3788 = vmatmul.mubr.bf16.gmra.mrb[0].mxu0 %v1747
      %v3789 = vpop.f32.mrb[0].mxu0
      %v3790 = vadd.f32 %v3245, %v3789
      %v3791 = vpop.f32.mrb[0].mxu0
      %v3792 = vpop.f32.mrb[0].mxu0
      %v3793 = vadd.f32 %v3248, %v3792
      %v3794 = vpop.f32.mrb[0].mxu0
      %3795 = vmatprep.mubr.bf16.mxu0 0
      %3796 = vmatmul.mubr.bf16.gmra.mrb[0].mxu0 %v1752
      %v3797 = vpop.f32.mrb[0].mxu0
      %v3798 = vadd.f32 %v3253, %v3797
      %v3799 = vpop.f32.mrb[0].mxu0
      %v3800 = vpop.f32.mrb[0].mxu0
      %v3801 = vadd.f32 %v3256, %v3800
      %v3802 = vpop.f32.mrb[0].mxu0
      %3803 = vmatprep.mubr.bf16.mxu0 0
      %3804 = vmatmul.mubr.bf16.gmra.mrb[0].mxu0 %v1757
      %v3805 = vpop.f32.mrb[0].mxu0
      %v3806 = vadd.f32 %v3261, %v3805
      %v3807 = vpop.f32.mrb[0].mxu0
      %v3808 = vpop.f32.mrb[0].mxu0
      %v3809 = vadd.f32 %v3264, %v3808
      %v3810 = vpop.f32.mrb[0].mxu0
      %3811 = vmatprep.mubr.bf16.mxu0 0
      %3812 = vmatmul.mubr.bf16.gmra.mrb[0].mxu0 %v1762
      %v3813 = vpop.f32.mrb[0].mxu0
      %v3814 = vadd.f32 %v3269, %v3813
      %v3815 = vpop.f32.mrb[0].mxu0
      %v3816 = vpop.f32.mrb[0].mxu0
      %v3817 = vadd.f32 %v3272, %v3816
      %v3818 = vpop.f32.mrb[0].mxu0
      %3819 = vmatprep.mubr.bf16.mxu0 0
      %3820 = vmatmul.mubr.bf16.gmra.mrb[0].mxu0 %v1767
      %v3821 = vpop.f32.mrb[0].mxu0
      %v3822 = vadd.f32 %v3277, %v3821
      %v3823 = vpop.f32.mrb[0].mxu0
      %v3824 = vpop.f32.mrb[0].mxu0
      %v3825 = vadd.f32 %v3280, %v3824
      %v3826 = vpop.f32.mrb[0].mxu0
      %3827 = vmatprep.mubr.bf16.mxu0 0
      %3828 = vmatmul.mubr.bf16.gmra.mrb[0].mxu0 %v1772
      %v3829 = vpop.f32.mrb[0].mxu0
      %v3830 = vadd.f32 %v3285, %v3829
      %v3831 = vpop.f32.mrb[0].mxu0
      %v3832 = vpop.f32.mrb[0].mxu0
      %v3833 = vadd.f32 %v3288, %v3832
      %v3834 = vpop.f32.mrb[0].mxu0
      %3835 = vmatprep.mubr.bf16.mxu0 0
      %3836 = vmatmul.mubr.bf16.gmra.mrb[0].mxu0 %v1777
      %v3837 = vpop.f32.mrb[0].mxu0
      %v3838 = vadd.f32 %v3293, %v3837
      %v3839 = vpop.f32.mrb[0].mxu0
      %v3840 = vpop.f32.mrb[0].mxu0
      %v3841 = vadd.f32 %v3296, %v3840
      %v3842 = vpop.f32.mrb[0].mxu0
      %3843 = vmatprep.mubr.bf16.mxu0 0
      %3844 = vmatmul.mubr.bf16.gmra.mrb[0].mxu0 %v1782
      %v3845 = vpop.f32.mrb[0].mxu0
      %v3846 = vadd.f32 %v3301, %v3845
      %v3847 = vpop.f32.mrb[0].mxu0
      %v3848 = vpop.f32.mrb[0].mxu0
      %v3849 = vadd.f32 %v3304, %v3848
      %v3850 = vpop.f32.mrb[0].mxu0
      %3851 = vmatprep.mubr.bf16.mxu0 0
      %3852 = vmatmul.mubr.bf16.gmra.mrb[0].mxu0 %v1787
      %v3853 = vpop.f32.mrb[0].mxu0
      %v3854 = vadd.f32 %v3309, %v3853
      %v3855 = vpop.f32.mrb[0].mxu0
      %v3856 = vpop.f32.mrb[0].mxu0
      %v3857 = vadd.f32 %v3312, %v3856
      %v3858 = vpop.f32.mrb[0].mxu0
      %3859 = vmatprep.mubr.bf16.mxu0 0
      %3860 = vmatmul.mubr.bf16.gmra.mrb[0].mxu0 %v1792
      %v3861 = vpop.f32.mrb[0].mxu0
      %v3862 = vadd.f32 %v3317, %v3861
      %v3863 = vpop.f32.mrb[0].mxu0
      %v3864 = vpop.f32.mrb[0].mxu0
      %v3865 = vadd.f32 %v3320, %v3864
      %v3866 = vpop.f32.mrb[0].mxu0
      %3867 = vmatprep.mubr.bf16.mxu0 0
      %3868 = vmatmul.mubr.bf16.gmra.mrb[0].mxu0 %v1797
      %v3869 = vpop.f32.mrb[0].mxu0
      %v3870 = vadd.f32 %v3325, %v3869
      %v3871 = vpop.f32.mrb[0].mxu0
      %v3872 = vpop.f32.mrb[0].mxu0
      %v3873 = vadd.f32 %v3328, %v3872
      %v3874 = vpop.f32.mrb[0].mxu0
      %3875 = vmatprep.mubr.bf16.mxu0 0
      %3876 = vmatmul.mubr.bf16.gmra.mrb[0].mxu0 %v1802
      %v3877 = vpop.f32.mrb[0].mxu0
      %v3878 = vadd.f32 %v3333, %v3877
      %v3879 = vpop.f32.mrb[0].mxu0
      %v3880 = vpop.f32.mrb[0].mxu0
      %v3881 = vadd.f32 %v3336, %v3880
      %v3882 = vpop.f32.mrb[0].mxu0
      %3883 = vmatprep.mubr.bf16.mxu0 0
      %3884 = vmatmul.mubr.bf16.gmra.mrb[0].mxu0 %v1807
      %v3885 = vpop.f32.mrb[0].mxu0
      %v3886 = vadd.f32 %v3341, %v3885
      %v3887 = vpop.f32.mrb[0].mxu0
      %v3888 = vpop.f32.mrb[0].mxu0
      %v3889 = vadd.f32 %v3344, %v3888
      %v3890 = vpop.f32.mrb[0].mxu0
      %3891 = vmatprep.mubr.bf16.mxu0 0
      %3892 = vmatmul.mubr.bf16.gmra.mrb[0].mxu0 %v1812
      %v3893 = vpop.f32.mrb[0].mxu0
      %v3894 = vadd.f32 %v3349, %v3893
      %v3895 = vpop.f32.mrb[0].mxu0
      %v3896 = vpop.f32.mrb[0].mxu0
      %v3897 = vadd.f32 %v3352, %v3896
      %v3898 = vpop.f32.mrb[0].mxu0
      %3899 = vmatprep.mubr.bf16.mxu0 0
      %3900 = vmatmul.mubr.bf16.gmra.mrb[0].mxu0 %v1817
      %v3901 = vpop.f32.mrb[0].mxu0
      %v3902 = vadd.f32 %v3357, %v3901
      %v3903 = vpop.f32.mrb[0].mxu0
      %v3904 = vpop.f32.mrb[0].mxu0
      %v3905 = vadd.f32 %v3360, %v3904
      %v3906 = vpop.f32.mrb[0].mxu0
      %3907 = vmatprep.mubr.bf16.mxu0 0
      %3908 = vmatmul.mubr.bf16.gmra.mrb[0].mxu0 %v1822
      %v3909 = vpop.f32.mrb[0].mxu0
      %v3910 = vadd.f32 %v3365, %v3909
      %v3911 = vpop.f32.mrb[0].mxu0
      %v3912 = vpop.f32.mrb[0].mxu0
      %v3913 = vadd.f32 %v3368, %v3912
      %v3914 = vpop.f32.mrb[0].mxu0
      %3915 = vmatprep.mubr.bf16.mxu0 0
      %3916 = vmatmul.mubr.bf16.gmra.mrb[0].mxu0 %v1827
      %v3917 = vpop.f32.mrb[0].mxu0
      %v3918 = vadd.f32 %v3373, %v3917
      %v3919 = vpop.f32.mrb[0].mxu0
      %v3920 = vpop.f32.mrb[0].mxu0
      %v3921 = vadd.f32 %v3376, %v3920
      %v3922 = vpop.f32.mrb[0].mxu0
      %3923 = vmatprep.mubr.bf16.mxu0 0
      %3924 = vmatmul.mubr.bf16.gmra.mrb[0].mxu0 %v1832
      %v3925 = vpop.f32.mrb[0].mxu0
      %v3926 = vadd.f32 %v3381, %v3925
      %v3927 = vpop.f32.mrb[0].mxu0
      %v3928 = vpop.f32.mrb[0].mxu0
      %v3929 = vadd.f32 %v3384, %v3928
      %v3930 = vpop.f32.mrb[0].mxu0
      %3931 = vmatprep.mubr.bf16.mxu0 0
      %3932 = vmatmul.mubr.bf16.gmra.mrb[0].mxu0 %v1837
      %v3933 = vpop.f32.mrb[0].mxu0
      %v3934 = vadd.f32 %v3389, %v3933
      %v3935 = vpop.f32.mrb[0].mxu0
      %v3936 = vpop.f32.mrb[0].mxu0
      %v3937 = vadd.f32 %v3392, %v3936
      %v3938 = vpop.f32.mrb[0].mxu0
      %3939 = vmatprep.mubr.bf16.mxu0 0
      %3940 = vmatmul.mubr.bf16.gmra.mrb[0].mxu0 %v1842
      %v3941 = vpop.f32.mrb[0].mxu0
      %v3942 = vadd.f32 %v3397, %v3941
      %v3943 = vpop.f32.mrb[0].mxu0
      %v3944 = vpop.f32.mrb[0].mxu0
      %v3945 = vadd.f32 %v3400, %v3944
      %v3946 = vpop.f32.mrb[0].mxu0
      %3947 = vmatprep.mubr.bf16.mxu0 0
      %3948 = vmatmul.mubr.bf16.gmra.mrb[0].mxu0 %v1847
      %v3949 = vpop.f32.mrb[0].mxu0
      %v3950 = vadd.f32 %v3405, %v3949
      %v3951 = vpop.f32.mrb[0].mxu0
      %v3952 = vpop.f32.mrb[0].mxu0
      %v3953 = vadd.f32 %v3408, %v3952
      %v3954 = vpop.f32.mrb[0].mxu0
      %3955 = vmatprep.mubr.bf16.mxu0 0
      %3956 = vmatmul.mubr.bf16.gmra.mrb[0].mxu0 %v1852
      %v3957 = vpop.f32.mrb[0].mxu0
      %v3958 = vadd.f32 %v3413, %v3957
      %v3959 = vpop.f32.mrb[0].mxu0
      %v3960 = vpop.f32.mrb[0].mxu0
      %v3961 = vadd.f32 %v3416, %v3960
      %v3962 = vpop.f32.mrb[0].mxu0
      %3963 = vmatprep.mubr.bf16.mxu0 0
      %3964 = vmatmul.mubr.bf16.gmra.mrb[0].mxu0 %v1857
      %v3965 = vpop.f32.mrb[0].mxu0
      %v3966 = vadd.f32 %v3421, %v3965
      %v3967 = vpop.f32.mrb[0].mxu0
      %v3968 = vpop.f32.mrb[0].mxu0
      %v3969 = vadd.f32 %v3424, %v3968
      %v3970 = vpop.f32.mrb[0].mxu0
      %3971 = vmatprep.mubr.bf16.mxu0 0
      %3972 = vmatmul.mubr.bf16.gmra.mrb[0].mxu0 %v1862
      %v3973 = vpop.f32.mrb[0].mxu0
      %v3974 = vadd.f32 %v3429, %v3973
      %v3975 = vpop.f32.mrb[0].mxu0
      %v3976 = vpop.f32.mrb[0].mxu0
      %v3977 = vadd.f32 %v3432, %v3976
      %v3978 = vpop.f32.mrb[0].mxu0
      %3979 = vmatprep.mubr.bf16.mxu0 0
      %3980 = vmatmul.mubr.bf16.gmra.mrb[0].mxu0 %v1867
      %v3981 = vpop.f32.mrb[0].mxu0
      %v3982 = vadd.f32 %v3437, %v3981
      %v3983 = vpop.f32.mrb[0].mxu0
      %v3984 = vpop.f32.mrb[0].mxu0
      %v3985 = vadd.f32 %v3440, %v3984
      %v3986 = vpop.f32.mrb[0].mxu0
      %3987 = vmatprep.mubr.bf16.mxu0 0
      %3988 = vmatmul.mubr.bf16.gmra.mrb[0].mxu0 %v1872
      %v3989 = vpop.f32.mrb[0].mxu0
      %v3990 = vadd.f32 %v3445, %v3989
      %v3991 = vpop.f32.mrb[0].mxu0
      %v3992 = vpop.f32.mrb[0].mxu0
      %v3993 = vadd.f32 %v3448, %v3992
      %v3994 = vpop.f32.mrb[0].mxu0
      %3995 = vmatprep.mubr.bf16.mxu0 0
      %3996 = vmatmul.mubr.bf16.gmra.mrb[0].mxu0 %v1877
      %v3997 = vpop.f32.mrb[0].mxu0
      %v3998 = vadd.f32 %v3453, %v3997
      %v3999 = vpop.f32.mrb[0].mxu0
      %v4000 = vpop.f32.mrb[0].mxu0
      %v4001 = vadd.f32 %v3456, %v4000
      %v4002 = vpop.f32.mrb[0].mxu0
      %4003 = vmatprep.mubr.bf16.mxu0 0
      %4004 = vmatmul.mubr.bf16.gmra.mrb[0].mxu0 %v1882
      %v4005 = vpop.f32.mrb[0].mxu0
      %v4006 = vadd.f32 %v3461, %v4005
      %v4007 = vpop.f32.mrb[0].mxu0
      %v4008 = vpop.f32.mrb[0].mxu0
      %v4009 = vadd.f32 %v3464, %v4008
      %v4010 = vpop.f32.mrb[0].mxu0
      %4011 = vmatprep.mubr.bf16.mxu0 0
      %4012 = vmatmul.mubr.bf16.gmra.mrb[0].mxu0 %v1887
      %v4013 = vpop.f32.mrb[0].mxu0
      %v4014 = vadd.f32 %v3469, %v4013
      %v4015 = vpop.f32.mrb[0].mxu0
      %v4016 = vpop.f32.mrb[0].mxu0
      %v4017 = vadd.f32 %v3472, %v4016
      %v4018 = vpop.f32.mrb[0].mxu0
      %4019 = vmatprep.mubr.bf16.mxu0 0
      %4020 = vmatmul.mubr.bf16.gmra.mrb[0].mxu0 %v1892
      %v4021 = vpop.f32.mrb[0].mxu0
      %v4022 = vadd.f32 %v3477, %v4021
      %v4023 = vpop.f32.mrb[0].mxu0
      %v4024 = vpop.f32.mrb[0].mxu0
      %v4025 = vadd.f32 %v3480, %v4024
      %v4026 = vpop.f32.mrb[0].mxu0
      %4027 = vmatprep.mubr.bf16.mxu0 0
      %4028 = vmatmul.mubr.bf16.gmra.mrb[0].mxu0 %v1897
      %v4029 = vpop.f32.mrb[0].mxu0
      %v4030 = vadd.f32 %v3485, %v4029
      %v4031 = vpop.f32.mrb[0].mxu0
      %v4032 = vpop.f32.mrb[0].mxu0
      %v4033 = vadd.f32 %v3488, %v4032
      %v4034 = vpop.f32.mrb[0].mxu0
      %4035 = vmatprep.mubr.bf16.mxu0 0
      %4036 = vmatmul.mubr.bf16.gmra.mrb[0].mxu0 %v1902
      %v4037 = vpop.f32.mrb[0].mxu0
      %v4038 = vadd.f32 %v3493, %v4037
      %v4039 = vpop.f32.mrb[0].mxu0
      %v4040 = vpop.f32.mrb[0].mxu0
      %v4041 = vadd.f32 %v3496, %v4040
      %v4042 = vpop.f32.mrb[0].mxu0
      %4043 = vmatprep.mubr.bf16.mxu0 0
      %4044 = vmatmul.mubr.bf16.gmra.mrb[0].mxu0 %v1907
      %v4045 = vpop.f32.mrb[0].mxu0
      %v4046 = vadd.f32 %v3501, %v4045
      %v4047 = vpop.f32.mrb[0].mxu0
      %v4048 = vpop.f32.mrb[0].mxu0
      %v4049 = vadd.f32 %v3504, %v4048
      %v4050 = vpop.f32.mrb[0].mxu0
      %4051 = vmatprep.mubr.bf16.mxu0 0
      %4052 = vmatmul.mubr.bf16.gmra.mrb[0].mxu0 %v1912
      %v4053 = vpop.f32.mrb[0].mxu0
      %v4054 = vadd.f32 %v3509, %v4053
      %v4055 = vpop.f32.mrb[0].mxu0
      %v4056 = vpop.f32.mrb[0].mxu0
      %v4057 = vadd.f32 %v3512, %v4056
      %v4058 = vpop.f32.mrb[0].mxu0
      %4059 = vmatprep.mubr.bf16.mxu0 0
      %4060 = vmatmul.mubr.bf16.gmra.mrb[0].mxu0 %v1917
      %v4061 = vpop.f32.mrb[0].mxu0
      %v4062 = vadd.f32 %v3517, %v4061
      %v4063 = vpop.f32.mrb[0].mxu0
      %v4064 = vpop.f32.mrb[0].mxu0
      %v4065 = vadd.f32 %v3520, %v4064
      %v4066 = vpop.f32.mrb[0].mxu0
      %4067 = vmatprep.mubr.bf16.mxu0 0
      %4068 = vmatmul.mubr.bf16.gmra.mrb[0].mxu0 %v1922
      %v4069 = vpop.f32.mrb[0].mxu0
      %v4070 = vadd.f32 %v3525, %v4069
      %v4071 = vpop.f32.mrb[0].mxu0
      %v4072 = vpop.f32.mrb[0].mxu0
      %v4073 = vadd.f32 %v3528, %v4072
      %v4074 = vpop.f32.mrb[0].mxu0
      %4075 = vmatprep.mubr.bf16.mxu0 0
      %4076 = vmatmul.mubr.bf16.gmra.mrb[0].mxu0 %v1927
      %v4077 = vpop.f32.mrb[0].mxu0
      %v4078 = vadd.f32 %v3533, %v4077
      %v4079 = vpop.f32.mrb[0].mxu0
      %v4080 = vpop.f32.mrb[0].mxu0
      %v4081 = vadd.f32 %v3536, %v4080
      %v4082 = vpop.f32.mrb[0].mxu0
      %4083 = vmatprep.mubr.bf16.mxu0 0
      %4084 = vmatmul.mubr.bf16.gmra.mrb[0].mxu0 %v1932
      %v4085 = vpop.f32.mrb[0].mxu0
      %v4086 = vadd.f32 %v3541, %v4085
      %v4087 = vpop.f32.mrb[0].mxu0
      %v4088 = vpop.f32.mrb[0].mxu0
      %v4089 = vadd.f32 %v3544, %v4088
      %v4090 = vpop.f32.mrb[0].mxu0
      %4091 = vmatprep.mubr.bf16.mxu0 0
      %4092 = vmatmul.mubr.bf16.gmra.mrb[0].mxu0 %v1937
      %v4093 = vpop.f32.mrb[0].mxu0
      %v4094 = vadd.f32 %v3549, %v4093
      %v4095 = vpop.f32.mrb[0].mxu0
      %v4096 = vpop.f32.mrb[0].mxu0
      %v4097 = vadd.f32 %v3552, %v4096
      %v4098 = vpop.f32.mrb[0].mxu0
      %4099 = vmatprep.mubr.bf16.mxu0 0
      %4100 = vmatmul.mubr.bf16.gmra.mrb[0].mxu0 %v1942
      %v4101 = vpop.f32.mrb[0].mxu0
      %v4102 = vadd.f32 %v3557, %v4101
      %v4103 = vpop.f32.mrb[0].mxu0
      %v4104 = vpop.f32.mrb[0].mxu0
      %v4105 = vadd.f32 %v3560, %v4104
      %v4106 = vpop.f32.mrb[0].mxu0
      %4107 = vmatprep.mubr.bf16.mxu0 0
      %4108 = vmatmul.mubr.bf16.gmra.mrb[0].mxu0 %v1947
      %v4109 = vpop.f32.mrb[0].mxu0
      %v4110 = vadd.f32 %v3565, %v4109
      %v4111 = vpop.f32.mrb[0].mxu0
      %v4112 = vpop.f32.mrb[0].mxu0
      %v4113 = vadd.f32 %v3568, %v4112
      %v4114 = vpop.f32.mrb[0].mxu0
      %4115 = vmatprep.mubr.bf16.mxu0 0
      %4116 = vmatmul.mubr.bf16.gmra.mrb[0].mxu0 %v1952
      %v4117 = vpop.f32.mrb[0].mxu0
      %v4118 = vadd.f32 %v3573, %v4117
      %v4119 = vpop.f32.mrb[0].mxu0
      %v4120 = vpop.f32.mrb[0].mxu0
      %v4121 = vadd.f32 %v3576, %v4120
      %v4122 = vpop.f32.mrb[0].mxu0
      %4123 = vmatprep.mubr.bf16.mxu0 0
      %4124 = vmatmul.mubr.bf16.gmra.mrb[0].mxu0 %v1957
      %v4125 = vpop.f32.mrb[0].mxu0
      %v4126 = vadd.f32 %v3581, %v4125
      %v4127 = vpop.f32.mrb[0].mxu0
      %v4128 = vpop.f32.mrb[0].mxu0
      %v4129 = vadd.f32 %v3584, %v4128
      %v4130 = vpop.f32.mrb[0].mxu0
      %4131 = vmatprep.mubr.bf16.mxu0 0
      %4132 = vmatmul.mubr.bf16.gmra.mrb[0].mxu0 %v1962
      %v4133 = vpop.f32.mrb[0].mxu0
      %v4134 = vadd.f32 %v3589, %v4133
      %v4135 = vpop.f32.mrb[0].mxu0
      %v4136 = vpop.f32.mrb[0].mxu0
      %v4137 = vadd.f32 %v3592, %v4136
      %v4138 = vpop.f32.mrb[0].mxu0
      %4139 = vmatprep.mubr.bf16.mxu0 0
      %4140 = vmatmul.mubr.bf16.gmra.mrb[0].mxu0 %v1967
      %v4141 = vpop.f32.mrb[0].mxu0
      %v4142 = vadd.f32 %v3597, %v4141
      %v4143 = vpop.f32.mrb[0].mxu0
      %v4144 = vpop.f32.mrb[0].mxu0
      %v4145 = vadd.f32 %v3600, %v4144
      %v4146 = vpop.f32.mrb[0].mxu0
      %4147 = vmatprep.mubr.bf16.mxu0 0
      %4148 = vmatmul.mubr.bf16.gmra.mrb[0].mxu0 %v1972
      %v4149 = vpop.f32.mrb[0].mxu0
      %v4150 = vadd.f32 %v3605, %v4149
      %v4151 = vpop.f32.mrb[0].mxu0
      %v4152 = vpop.f32.mrb[0].mxu0
      %v4153 = vadd.f32 %v3608, %v4152
      %v4154 = vpop.f32.mrb[0].mxu0
      %4155 = vmatprep.mubr.bf16.mxu0 0
      %4156 = vmatmul.mubr.bf16.gmra.mrb[0].mxu0 %v1977
      %v4157 = vpop.f32.mrb[0].mxu0
      %v4158 = vadd.f32 %v3613, %v4157
      %v4159 = vpop.f32.mrb[0].mxu0
      %v4160 = vpop.f32.mrb[0].mxu0
      %v4161 = vadd.f32 %v3616, %v4160
      %v4162 = vpop.f32.mrb[0].mxu0
      %4163 = vmatprep.mubr.bf16.mxu0 0
      %4164 = vmatmul.mubr.bf16.gmra.mrb[0].mxu0 %v1982
      %v4165 = vpop.f32.mrb[0].mxu0
      %v4166 = vadd.f32 %v3621, %v4165
      %v4167 = vpop.f32.mrb[0].mxu0
      %v4168 = vpop.f32.mrb[0].mxu0
      %v4169 = vadd.f32 %v3624, %v4168
      %v4170 = vpop.f32.mrb[0].mxu0
      %4171 = vmatprep.mubr.bf16.mxu0 0
      %4172 = vmatmul.mubr.bf16.gmra.mrb[0].mxu0 %v1987
      %v4173 = vpop.f32.mrb[0].mxu0
      %v4174 = vadd.f32 %v3629, %v4173
      %v4175 = vpop.f32.mrb[0].mxu0
      %v4176 = vpop.f32.mrb[0].mxu0
      %v4177 = vadd.f32 %v3632, %v4176
      %v4178 = vpop.f32.mrb[0].mxu0
      %4179 = vmatprep.mubr.bf16.mxu0 0
      %4180 = vmatmul.mubr.bf16.gmra.mrb[0].mxu0 %v1992
      %v4181 = vpop.f32.mrb[0].mxu0
      %v4182 = vadd.f32 %v3637, %v4181
      %v4183 = vpop.f32.mrb[0].mxu0
      %v4184 = vpop.f32.mrb[0].mxu0
      %v4185 = vadd.f32 %v3640, %v4184
      %v4186 = vpop.f32.mrb[0].mxu0
      %4187 = vdwg.mxu0
      %vm4188 = vcmp.gt.f32.partialorder %v3678, 0.0
      %vm4189 = vcmp.gt.f32.partialorder %v3681, 0.0
      %vm4190 = vcmp.gt.f32.partialorder %v3686, 0.0
      %vm4191 = vcmp.gt.f32.partialorder %v3689, 0.0
      %vm4192 = vcmp.gt.f32.partialorder %v3694, 0.0
      %vm4193 = vcmp.gt.f32.partialorder %v3697, 0.0
      %vm4194 = vcmp.gt.f32.partialorder %v3702, 0.0
      %vm4195 = vcmp.gt.f32.partialorder %v3705, 0.0
      %vm4196 = vcmp.gt.f32.partialorder %v3710, 0.0
      %vm4197 = vcmp.gt.f32.partialorder %v3713, 0.0
      %vm4198 = vcmp.gt.f32.partialorder %v3718, 0.0
      %vm4199 = vcmp.gt.f32.partialorder %v3721, 0.0
      %vm4200 = vcmp.gt.f32.partialorder %v3726, 0.0
      %vm4201 = vcmp.gt.f32.partialorder %v3729, 0.0
      %vm4202 = vcmp.gt.f32.partialorder %v3734, 0.0
      %vm4203 = vcmp.gt.f32.partialorder %v3737, 0.0
      %vm4204 = vcmp.gt.f32.partialorder %v3742, 0.0
      %vm4205 = vcmp.gt.f32.partialorder %v3745, 0.0
      %vm4206 = vcmp.gt.f32.partialorder %v3750, 0.0
      %vm4207 = vcmp.gt.f32.partialorder %v3753, 0.0
      %vm4208 = vcmp.gt.f32.partialorder %v3758, 0.0
      %vm4209 = vcmp.gt.f32.partialorder %v3761, 0.0
      %vm4210 = vcmp.gt.f32.partialorder %v3766, 0.0
      %vm4211 = vcmp.gt.f32.partialorder %v3769, 0.0
      %vm4212 = vcmp.gt.f32.partialorder %v3774, 0.0
      %vm4213 = vcmp.gt.f32.partialorder %v3777, 0.0
      %vm4214 = vcmp.gt.f32.partialorder %v3782, 0.0
      %vm4215 = vcmp.gt.f32.partialorder %v3785, 0.0
      %vm4216 = vcmp.gt.f32.partialorder %v3790, 0.0
      %vm4217 = vcmp.gt.f32.partialorder %v3793, 0.0
      %vm4218 = vcmp.gt.f32.partialorder %v3798, 0.0
      %vm4219 = vcmp.gt.f32.partialorder %v3801, 0.0
      %vm4220 = vcmp.gt.f32.partialorder %v3806, 0.0
      %vm4221 = vcmp.gt.f32.partialorder %v3809, 0.0
      %vm4222 = vcmp.gt.f32.partialorder %v3814, 0.0
      %vm4223 = vcmp.gt.f32.partialorder %v3817, 0.0
      %vm4224 = vcmp.gt.f32.partialorder %v3822, 0.0
      %vm4225 = vcmp.gt.f32.partialorder %v3825, 0.0
      %vm4226 = vcmp.gt.f32.partialorder %v3830, 0.0
      %vm4227 = vcmp.gt.f32.partialorder %v3833, 0.0
      %vm4228 = vcmp.gt.f32.partialorder %v3838, 0.0
      %vm4229 = vcmp.gt.f32.partialorder %v3841, 0.0
      %vm4230 = vcmp.gt.f32.partialorder %v3846, 0.0
      %vm4231 = vcmp.gt.f32.partialorder %v3849, 0.0
      %vm4232 = vcmp.gt.f32.partialorder %v3854, 0.0
      %vm4233 = vcmp.gt.f32.partialorder %v3857, 0.0
      %vm4234 = vcmp.gt.f32.partialorder %v3862, 0.0
      %vm4235 = vcmp.gt.f32.partialorder %v3865, 0.0
      %vm4236 = vcmp.gt.f32.partialorder %v3870, 0.0
      %vm4237 = vcmp.gt.f32.partialorder %v3873, 0.0
      %vm4238 = vcmp.gt.f32.partialorder %v3878, 0.0
      %vm4239 = vcmp.gt.f32.partialorder %v3881, 0.0
      %vm4240 = vcmp.gt.f32.partialorder %v3886, 0.0
      %vm4241 = vcmp.gt.f32.partialorder %v3889, 0.0
      %vm4242 = vcmp.gt.f32.partialorder %v3894, 0.0
      %vm4243 = vcmp.gt.f32.partialorder %v3897, 0.0
      %vm4244 = vcmp.gt.f32.partialorder %v3902, 0.0
      %vm4245 = vcmp.gt.f32.partialorder %v3905, 0.0
      %vm4246 = vcmp.gt.f32.partialorder %v3910, 0.0
      %vm4247 = vcmp.gt.f32.partialorder %v3913, 0.0
      %vm4248 = vcmp.gt.f32.partialorder %v3918, 0.0
      %vm4249 = vcmp.gt.f32.partialorder %v3921, 0.0
      %vm4250 = vcmp.gt.f32.partialorder %v3926, 0.0
      %vm4251 = vcmp.gt.f32.partialorder %v3929, 0.0
      %vm4252 = vcmp.gt.f32.partialorder %v3934, 0.0
      %vm4253 = vcmp.gt.f32.partialorder %v3937, 0.0
      %vm4254 = vcmp.gt.f32.partialorder %v3942, 0.0
      %vm4255 = vcmp.gt.f32.partialorder %v3945, 0.0
      %vm4256 = vcmp.gt.f32.partialorder %v3950, 0.0
      %vm4257 = vcmp.gt.f32.partialorder %v3953, 0.0
      %vm4258 = vcmp.gt.f32.partialorder %v3958, 0.0
      %vm4259 = vcmp.gt.f32.partialorder %v3961, 0.0
      %vm4260 = vcmp.gt.f32.partialorder %v3966, 0.0
      %vm4261 = vcmp.gt.f32.partialorder %v3969, 0.0
      %vm4262 = vcmp.gt.f32.partialorder %v3974, 0.0
      %vm4263 = vcmp.gt.f32.partialorder %v3977, 0.0
      %vm4264 = vcmp.gt.f32.partialorder %v3982, 0.0
      %vm4265 = vcmp.gt.f32.partialorder %v3985, 0.0
      %vm4266 = vcmp.gt.f32.partialorder %v3990, 0.0
      %vm4267 = vcmp.gt.f32.partialorder %v3993, 0.0
      %vm4268 = vcmp.gt.f32.partialorder %v3998, 0.0
      %vm4269 = vcmp.gt.f32.partialorder %v4001, 0.0
      %vm4270 = vcmp.gt.f32.partialorder %v4006, 0.0
      %vm4271 = vcmp.gt.f32.partialorder %v4009, 0.0
      %vm4272 = vcmp.gt.f32.partialorder %v4014, 0.0
      %vm4273 = vcmp.gt.f32.partialorder %v4017, 0.0
      %vm4274 = vcmp.gt.f32.partialorder %v4022, 0.0
      %vm4275 = vcmp.gt.f32.partialorder %v4025, 0.0
      %vm4276 = vcmp.gt.f32.partialorder %v4030, 0.0
      %vm4277 = vcmp.gt.f32.partialorder %v4033, 0.0
      %vm4278 = vcmp.gt.f32.partialorder %v4038, 0.0
      %vm4279 = vcmp.gt.f32.partialorder %v4041, 0.0
      %vm4280 = vcmp.gt.f32.partialorder %v4046, 0.0
      %vm4281 = vcmp.gt.f32.partialorder %v4049, 0.0
      %vm4282 = vcmp.gt.f32.partialorder %v4054, 0.0
      %vm4283 = vcmp.gt.f32.partialorder %v4057, 0.0
      %vm4284 = vcmp.gt.f32.partialorder %v4062, 0.0
      %vm4285 = vcmp.gt.f32.partialorder %v4065, 0.0
      %vm4286 = vcmp.gt.f32.partialorder %v4070, 0.0
      %vm4287 = vcmp.gt.f32.partialorder %v4073, 0.0
      %vm4288 = vcmp.gt.f32.partialorder %v4078, 0.0
      %vm4289 = vcmp.gt.f32.partialorder %v4081, 0.0
      %vm4290 = vcmp.gt.f32.partialorder %v4086, 0.0
      %vm4291 = vcmp.gt.f32.partialorder %v4089, 0.0
      %vm4292 = vcmp.gt.f32.partialorder %v4094, 0.0
      %vm4293 = vcmp.gt.f32.partialorder %v4097, 0.0
      %vm4294 = vcmp.gt.f32.partialorder %v4102, 0.0
      %vm4295 = vcmp.gt.f32.partialorder %v4105, 0.0
      %vm4296 = vcmp.gt.f32.partialorder %v4110, 0.0
      %vm4297 = vcmp.gt.f32.partialorder %v4113, 0.0
      %vm4298 = vcmp.gt.f32.partialorder %v4118, 0.0
      %vm4299 = vcmp.gt.f32.partialorder %v4121, 0.0
      %vm4300 = vcmp.gt.f32.partialorder %v4126, 0.0
      %vm4301 = vcmp.gt.f32.partialorder %v4129, 0.0
      %vm4302 = vcmp.gt.f32.partialorder %v4134, 0.0
      %vm4303 = vcmp.gt.f32.partialorder %v4137, 0.0
      %vm4304 = vcmp.gt.f32.partialorder %v4142, 0.0
      %vm4305 = vcmp.gt.f32.partialorder %v4145, 0.0
      %vm4306 = vcmp.gt.f32.partialorder %v4150, 0.0
      %vm4307 = vcmp.gt.f32.partialorder %v4153, 0.0
      %vm4308 = vcmp.gt.f32.partialorder %v4158, 0.0
      %vm4309 = vcmp.gt.f32.partialorder %v4161, 0.0
      %vm4310 = vcmp.gt.f32.partialorder %v4166, 0.0
      %vm4311 = vcmp.gt.f32.partialorder %v4169, 0.0
      %vm4312 = vcmp.gt.f32.partialorder %v4174, 0.0
      %vm4313 = vcmp.gt.f32.partialorder %v4177, 0.0
      %vm4314 = vcmp.gt.f32.partialorder %v4182, 0.0
      %vm4315 = vcmp.gt.f32.partialorder %v4185, 0.0
      %v4316 = vmin.f32 %v3678, 0.0
      %v4317 = vmin.f32 %v3681, 0.0
      %v4318 = vmin.f32 %v3686, 0.0
      %v4319 = vmin.f32 %v3689, 0.0
      %v4320 = vmin.f32 %v3694, 0.0
      %v4321 = vmin.f32 %v3697, 0.0
      %v4322 = vmin.f32 %v3702, 0.0
      %v4323 = vmin.f32 %v3705, 0.0
      %v4324 = vmin.f32 %v3710, 0.0
      %v4325 = vmin.f32 %v3713, 0.0
      %v4326 = vmin.f32 %v3718, 0.0
      %v4327 = vmin.f32 %v3721, 0.0
      %v4328 = vmin.f32 %v3726, 0.0
      %v4329 = vmin.f32 %v3729, 0.0
      %v4330 = vmin.f32 %v3734, 0.0
      %v4331 = vmin.f32 %v3737, 0.0
      %v4332 = vmin.f32 %v3742, 0.0
      %v4333 = vmin.f32 %v3745, 0.0
      %v4334 = vmin.f32 %v3750, 0.0
      %v4335 = vmin.f32 %v3753, 0.0
      %v4336 = vmin.f32 %v3758, 0.0
      %v4337 = vmin.f32 %v3761, 0.0
      %v4338 = vmin.f32 %v3766, 0.0
      %v4339 = vmin.f32 %v3769, 0.0
      %v4340 = vmin.f32 %v3774, 0.0
      %v4341 = vmin.f32 %v3777, 0.0
      %v4342 = vmin.f32 %v3782, 0.0
      %v4343 = vmin.f32 %v3785, 0.0
      %v4344 = vmin.f32 %v3790, 0.0
      %v4345 = vmin.f32 %v3793, 0.0
      %v4346 = vmin.f32 %v3798, 0.0
      %v4347 = vmin.f32 %v3801, 0.0
      %v4348 = vmin.f32 %v3806, 0.0
      %v4349 = vmin.f32 %v3809, 0.0
      %v4350 = vmin.f32 %v3814, 0.0
      %v4351 = vmin.f32 %v3817, 0.0
      %v4352 = vmin.f32 %v3822, 0.0
      %v4353 = vmin.f32 %v3825, 0.0
      %v4354 = vmin.f32 %v3830, 0.0
      %v4355 = vmin.f32 %v3833, 0.0
      %v4356 = vmin.f32 %v3838, 0.0
      %v4357 = vmin.f32 %v3841, 0.0
      %v4358 = vmin.f32 %v3846, 0.0
      %v4359 = vmin.f32 %v3849, 0.0
      %v4360 = vmin.f32 %v3854, 0.0
      %v4361 = vmin.f32 %v3857, 0.0
      %v4362 = vmin.f32 %v3862, 0.0
      %v4363 = vmin.f32 %v3865, 0.0
      %v4364 = vmin.f32 %v3870, 0.0
      %v4365 = vmin.f32 %v3873, 0.0
      %v4366 = vmin.f32 %v3878, 0.0
      %v4367 = vmin.f32 %v3881, 0.0
      %v4368 = vmin.f32 %v3886, 0.0
      %v4369 = vmin.f32 %v3889, 0.0
      %v4370 = vmin.f32 %v3894, 0.0
      %v4371 = vmin.f32 %v3897, 0.0
      %v4372 = vmin.f32 %v3902, 0.0
      %v4373 = vmin.f32 %v3905, 0.0
      %v4374 = vmin.f32 %v3910, 0.0
      %v4375 = vmin.f32 %v3913, 0.0
      %v4376 = vmin.f32 %v3918, 0.0
      %v4377 = vmin.f32 %v3921, 0.0
      %v4378 = vmin.f32 %v3926, 0.0
      %v4379 = vmin.f32 %v3929, 0.0
      %v4380 = vmin.f32 %v3934, 0.0
      %v4381 = vmin.f32 %v3937, 0.0
      %v4382 = vmin.f32 %v3942, 0.0
      %v4383 = vmin.f32 %v3945, 0.0
      %v4384 = vmin.f32 %v3950, 0.0
      %v4385 = vmin.f32 %v3953, 0.0
      %v4386 = vmin.f32 %v3958, 0.0
      %v4387 = vmin.f32 %v3961, 0.0
      %v4388 = vmin.f32 %v3966, 0.0
      %v4389 = vmin.f32 %v3969, 0.0
      %v4390 = vmin.f32 %v3974, 0.0
      %v4391 = vmin.f32 %v3977, 0.0
      %v4392 = vmin.f32 %v3982, 0.0
      %v4393 = vmin.f32 %v3985, 0.0
      %v4394 = vmin.f32 %v3990, 0.0
      %v4395 = vmin.f32 %v3993, 0.0
      %v4396 = vmin.f32 %v3998, 0.0
      %v4397 = vmin.f32 %v4001, 0.0
      %v4398 = vmin.f32 %v4006, 0.0
      %v4399 = vmin.f32 %v4009, 0.0
      %v4400 = vmin.f32 %v4014, 0.0
      %v4401 = vmin.f32 %v4017, 0.0
      %v4402 = vmin.f32 %v4022, 0.0
      %v4403 = vmin.f32 %v4025, 0.0
      %v4404 = vmin.f32 %v4030, 0.0
      %v4405 = vmin.f32 %v4033, 0.0
      %v4406 = vmin.f32 %v4038, 0.0
      %v4407 = vmin.f32 %v4041, 0.0
      %v4408 = vmin.f32 %v4046, 0.0
      %v4409 = vmin.f32 %v4049, 0.0
      %v4410 = vmin.f32 %v4054, 0.0
      %v4411 = vmin.f32 %v4057, 0.0
      %v4412 = vmin.f32 %v4062, 0.0
      %v4413 = vmin.f32 %v4065, 0.0
      %v4414 = vmin.f32 %v4070, 0.0
      %v4415 = vmin.f32 %v4073, 0.0
      %v4416 = vmin.f32 %v4078, 0.0
      %v4417 = vmin.f32 %v4081, 0.0
      %v4418 = vmin.f32 %v4086, 0.0
      %v4419 = vmin.f32 %v4089, 0.0
      %v4420 = vmin.f32 %v4094, 0.0
      %v4421 = vmin.f32 %v4097, 0.0
      %v4422 = vmin.f32 %v4102, 0.0
      %v4423 = vmin.f32 %v4105, 0.0
      %v4424 = vmin.f32 %v4110, 0.0
      %v4425 = vmin.f32 %v4113, 0.0
      %v4426 = vmin.f32 %v4118, 0.0
      %v4427 = vmin.f32 %v4121, 0.0
      %v4428 = vmin.f32 %v4126, 0.0
      %v4429 = vmin.f32 %v4129, 0.0
      %v4430 = vmin.f32 %v4134, 0.0
      %v4431 = vmin.f32 %v4137, 0.0
      %v4432 = vmin.f32 %v4142, 0.0
      %v4433 = vmin.f32 %v4145, 0.0
      %v4434 = vmin.f32 %v4150, 0.0
      %v4435 = vmin.f32 %v4153, 0.0
      %v4436 = vmin.f32 %v4158, 0.0
      %v4437 = vmin.f32 %v4161, 0.0
      %v4438 = vmin.f32 %v4166, 0.0
      %v4439 = vmin.f32 %v4169, 0.0
      %v4440 = vmin.f32 %v4174, 0.0
      %v4441 = vmin.f32 %v4177, 0.0
      %v4442 = vmin.f32 %v4182, 0.0
      %v4443 = vmin.f32 %v4185, 0.0
      %v4444 = vmul.f32 %v4316, 1.442695
      %v4445 = vpow.pop %v4444
      %v4446 = vmul.f32 %v4317, 1.442695
      %v4447 = vpow.pop %v4446
      %v4448 = vmul.f32 %v4318, 1.442695
      %v4449 = vpow.pop %v4448
      %v4450 = vmul.f32 %v4319, 1.442695
      %v4451 = vpow.pop %v4450
      %v4452 = vmul.f32 %v4320, 1.442695
      %v4453 = vpow.pop %v4452
      %v4454 = vmul.f32 %v4321, 1.442695
      %v4455 = vpow.pop %v4454
      %v4456 = vmul.f32 %v4322, 1.442695
      %v4457 = vpow.pop %v4456
      %v4458 = vmul.f32 %v4323, 1.442695
      %v4459 = vpow.pop %v4458
      %v4460 = vmul.f32 %v4324, 1.442695
      %v4461 = vpow.pop %v4460
      %v4462 = vmul.f32 %v4325, 1.442695
      %v4463 = vpow.pop %v4462
      %v4464 = vmul.f32 %v4326, 1.442695
      %v4465 = vpow.pop %v4464
      %v4466 = vmul.f32 %v4327, 1.442695
      %v4467 = vpow.pop %v4466
      %v4468 = vmul.f32 %v4328, 1.442695
      %v4469 = vpow.pop %v4468
      %v4470 = vmul.f32 %v4329, 1.442695
      %v4471 = vpow.pop %v4470
      %v4472 = vmul.f32 %v4330, 1.442695
      %v4473 = vpow.pop %v4472
      %v4474 = vmul.f32 %v4331, 1.442695
      %v4475 = vpow.pop %v4474
      %v4476 = vmul.f32 %v4332, 1.442695
      %v4477 = vpow.pop %v4476
      %v4478 = vmul.f32 %v4333, 1.442695
      %v4479 = vpow.pop %v4478
      %v4480 = vmul.f32 %v4334, 1.442695
      %v4481 = vpow.pop %v4480
      %v4482 = vmul.f32 %v4335, 1.442695
      %v4483 = vpow.pop %v4482
      %v4484 = vmul.f32 %v4336, 1.442695
      %v4485 = vpow.pop %v4484
      %v4486 = vmul.f32 %v4337, 1.442695
      %v4487 = vpow.pop %v4486
      %v4488 = vmul.f32 %v4338, 1.442695
      %v4489 = vpow.pop %v4488
      %v4490 = vmul.f32 %v4339, 1.442695
      %v4491 = vpow.pop %v4490
      %v4492 = vmul.f32 %v4340, 1.442695
      %v4493 = vpow.pop %v4492
      %v4494 = vmul.f32 %v4341, 1.442695
      %v4495 = vpow.pop %v4494
      %v4496 = vmul.f32 %v4342, 1.442695
      %v4497 = vpow.pop %v4496
      %v4498 = vmul.f32 %v4343, 1.442695
      %v4499 = vpow.pop %v4498
      %v4500 = vmul.f32 %v4344, 1.442695
      %v4501 = vpow.pop %v4500
      %v4502 = vmul.f32 %v4345, 1.442695
      %v4503 = vpow.pop %v4502
      %v4504 = vmul.f32 %v4346, 1.442695
      %v4505 = vpow.pop %v4504
      %v4506 = vmul.f32 %v4347, 1.442695
      %v4507 = vpow.pop %v4506
      %v4508 = vmul.f32 %v4348, 1.442695
      %v4509 = vpow.pop %v4508
      %v4510 = vmul.f32 %v4349, 1.442695
      %v4511 = vpow.pop %v4510
      %v4512 = vmul.f32 %v4350, 1.442695
      %v4513 = vpow.pop %v4512
      %v4514 = vmul.f32 %v4351, 1.442695
      %v4515 = vpow.pop %v4514
      %v4516 = vmul.f32 %v4352, 1.442695
      %v4517 = vpow.pop %v4516
      %v4518 = vmul.f32 %v4353, 1.442695
      %v4519 = vpow.pop %v4518
      %v4520 = vmul.f32 %v4354, 1.442695
      %v4521 = vpow.pop %v4520
      %v4522 = vmul.f32 %v4355, 1.442695
      %v4523 = vpow.pop %v4522
      %v4524 = vmul.f32 %v4356, 1.442695
      %v4525 = vpow.pop %v4524
      %v4526 = vmul.f32 %v4357, 1.442695
      %v4527 = vpow.pop %v4526
      %v4528 = vmul.f32 %v4358, 1.442695
      %v4529 = vpow.pop %v4528
      %v4530 = vmul.f32 %v4359, 1.442695
      %v4531 = vpow.pop %v4530
      %v4532 = vmul.f32 %v4360, 1.442695
      %v4533 = vpow.pop %v4532
      %v4534 = vmul.f32 %v4361, 1.442695
      %v4535 = vpow.pop %v4534
      %v4536 = vmul.f32 %v4362, 1.442695
      %v4537 = vpow.pop %v4536
      %v4538 = vmul.f32 %v4363, 1.442695
      %v4539 = vpow.pop %v4538
      %v4540 = vmul.f32 %v4364, 1.442695
      %v4541 = vpow.pop %v4540
      %v4542 = vmul.f32 %v4365, 1.442695
      %v4543 = vpow.pop %v4542
      %v4544 = vmul.f32 %v4366, 1.442695
      %v4545 = vpow.pop %v4544
      %v4546 = vmul.f32 %v4367, 1.442695
      %v4547 = vpow.pop %v4546
      %v4548 = vmul.f32 %v4368, 1.442695
      %v4549 = vpow.pop %v4548
      %v4550 = vmul.f32 %v4369, 1.442695
      %v4551 = vpow.pop %v4550
      %v4552 = vmul.f32 %v4370, 1.442695
      %v4553 = vpow.pop %v4552
      %v4554 = vmul.f32 %v4371, 1.442695
      %v4555 = vpow.pop %v4554
      %v4556 = vmul.f32 %v4372, 1.442695
      %v4557 = vpow.pop %v4556
      %v4558 = vmul.f32 %v4373, 1.442695
      %v4559 = vpow.pop %v4558
      %v4560 = vmul.f32 %v4374, 1.442695
      %v4561 = vpow.pop %v4560
      %v4562 = vmul.f32 %v4375, 1.442695
      %v4563 = vpow.pop %v4562
      %v4564 = vmul.f32 %v4376, 1.442695
      %v4565 = vpow.pop %v4564
      %v4566 = vmul.f32 %v4377, 1.442695
      %v4567 = vpow.pop %v4566
      %v4568 = vmul.f32 %v4378, 1.442695
      %v4569 = vpow.pop %v4568
      %v4570 = vmul.f32 %v4379, 1.442695
      %v4571 = vpow.pop %v4570
      %v4572 = vmul.f32 %v4380, 1.442695
      %v4573 = vpow.pop %v4572
      %v4574 = vmul.f32 %v4381, 1.442695
      %v4575 = vpow.pop %v4574
      %v4576 = vmul.f32 %v4382, 1.442695
      %v4577 = vpow.pop %v4576
      %v4578 = vmul.f32 %v4383, 1.442695
      %v4579 = vpow.pop %v4578
      %v4580 = vmul.f32 %v4384, 1.442695
      %v4581 = vpow.pop %v4580
      %v4582 = vmul.f32 %v4385, 1.442695
      %v4583 = vpow.pop %v4582
      %v4584 = vmul.f32 %v4386, 1.442695
      %v4585 = vpow.pop %v4584
      %v4586 = vmul.f32 %v4387, 1.442695
      %v4587 = vpow.pop %v4586
      %v4588 = vmul.f32 %v4388, 1.442695
      %v4589 = vpow.pop %v4588
      %v4590 = vmul.f32 %v4389, 1.442695
      %v4591 = vpow.pop %v4590
      %v4592 = vmul.f32 %v4390, 1.442695
      %v4593 = vpow.pop %v4592
      %v4594 = vmul.f32 %v4391, 1.442695
      %v4595 = vpow.pop %v4594
      %v4596 = vmul.f32 %v4392, 1.442695
      %v4597 = vpow.pop %v4596
      %v4598 = vmul.f32 %v4393, 1.442695
      %v4599 = vpow.pop %v4598
      %v4600 = vmul.f32 %v4394, 1.442695
      %v4601 = vpow.pop %v4600
      %v4602 = vmul.f32 %v4395, 1.442695
      %v4603 = vpow.pop %v4602
      %v4604 = vmul.f32 %v4396, 1.442695
      %v4605 = vpow.pop %v4604
      %v4606 = vmul.f32 %v4397, 1.442695
      %v4607 = vpow.pop %v4606
      %v4608 = vmul.f32 %v4398, 1.442695
      %v4609 = vpow.pop %v4608
      %v4610 = vmul.f32 %v4399, 1.442695
      %v4611 = vpow.pop %v4610
      %v4612 = vmul.f32 %v4400, 1.442695
      %v4613 = vpow.pop %v4612
      %v4614 = vmul.f32 %v4401, 1.442695
      %v4615 = vpow.pop %v4614
      %v4616 = vmul.f32 %v4402, 1.442695
      %v4617 = vpow.pop %v4616
      %v4618 = vmul.f32 %v4403, 1.442695
      %v4619 = vpow.pop %v4618
      %v4620 = vmul.f32 %v4404, 1.442695
      %v4621 = vpow.pop %v4620
      %v4622 = vmul.f32 %v4405, 1.442695
      %v4623 = vpow.pop %v4622
      %v4624 = vmul.f32 %v4406, 1.442695
      %v4625 = vpow.pop %v4624
      %v4626 = vmul.f32 %v4407, 1.442695
      %v4627 = vpow.pop %v4626
      %v4628 = vmul.f32 %v4408, 1.442695
      %v4629 = vpow.pop %v4628
      %v4630 = vmul.f32 %v4409, 1.442695
      %v4631 = vpow.pop %v4630
      %v4632 = vmul.f32 %v4410, 1.442695
      %v4633 = vpow.pop %v4632
      %v4634 = vmul.f32 %v4411, 1.442695
      %v4635 = vpow.pop %v4634
      %v4636 = vmul.f32 %v4412, 1.442695
      %v4637 = vpow.pop %v4636
      %v4638 = vmul.f32 %v4413, 1.442695
      %v4639 = vpow.pop %v4638
      %v4640 = vmul.f32 %v4414, 1.442695
      %v4641 = vpow.pop %v4640
      %v4642 = vmul.f32 %v4415, 1.442695
      %v4643 = vpow.pop %v4642
      %v4644 = vmul.f32 %v4416, 1.442695
      %v4645 = vpow.pop %v4644
      %v4646 = vmul.f32 %v4417, 1.442695
      %v4647 = vpow.pop %v4646
      %v4648 = vmul.f32 %v4418, 1.442695
      %v4649 = vpow.pop %v4648
      %v4650 = vmul.f32 %v4419, 1.442695
      %v4651 = vpow.pop %v4650
      %v4652 = vmul.f32 %v4420, 1.442695
      %v4653 = vpow.pop %v4652
      %v4654 = vmul.f32 %v4421, 1.442695
      %v4655 = vpow.pop %v4654
      %v4656 = vmul.f32 %v4422, 1.442695
      %v4657 = vpow.pop %v4656
      %v4658 = vmul.f32 %v4423, 1.442695
      %v4659 = vpow.pop %v4658
      %v4660 = vmul.f32 %v4424, 1.442695
      %v4661 = vpow.pop %v4660
      %v4662 = vmul.f32 %v4425, 1.442695
      %v4663 = vpow.pop %v4662
      %v4664 = vmul.f32 %v4426, 1.442695
      %v4665 = vpow.pop %v4664
      %v4666 = vmul.f32 %v4427, 1.442695
      %v4667 = vpow.pop %v4666
      %v4668 = vmul.f32 %v4428, 1.442695
      %v4669 = vpow.pop %v4668
      %v4670 = vmul.f32 %v4429, 1.442695
      %v4671 = vpow.pop %v4670
      %v4672 = vmul.f32 %v4430, 1.442695
      %v4673 = vpow.pop %v4672
      %v4674 = vmul.f32 %v4431, 1.442695
      %v4675 = vpow.pop %v4674
      %v4676 = vmul.f32 %v4432, 1.442695
      %v4677 = vpow.pop %v4676
      %v4678 = vmul.f32 %v4433, 1.442695
      %v4679 = vpow.pop %v4678
      %v4680 = vmul.f32 %v4434, 1.442695
      %v4681 = vpow.pop %v4680
      %v4682 = vmul.f32 %v4435, 1.442695
      %v4683 = vpow.pop %v4682
      %v4684 = vmul.f32 %v4436, 1.442695
      %v4685 = vpow.pop %v4684
      %v4686 = vmul.f32 %v4437, 1.442695
      %v4687 = vpow.pop %v4686
      %v4688 = vmul.f32 %v4438, 1.442695
      %v4689 = vpow.pop %v4688
      %v4690 = vmul.f32 %v4439, 1.442695
      %v4691 = vpow.pop %v4690
      %v4692 = vmul.f32 %v4440, 1.442695
      %v4693 = vpow.pop %v4692
      %v4694 = vmul.f32 %v4441, 1.442695
      %v4695 = vpow.pop %v4694
      %v4696 = vmul.f32 %v4442, 1.442695
      %v4697 = vpow.pop %v4696
      %v4698 = vmul.f32 %v4443, 1.442695
      %v4699 = vpow.pop %v4698
      %v4700 = vsub.f32 %v4445, 1.0
      %v4701 = vsub.f32 %v4447, 1.0
      %v4702 = vsub.f32 %v4449, 1.0
      %v4703 = vsub.f32 %v4451, 1.0
      %v4704 = vsub.f32 %v4453, 1.0
      %v4705 = vsub.f32 %v4455, 1.0
      %v4706 = vsub.f32 %v4457, 1.0
      %v4707 = vsub.f32 %v4459, 1.0
      %v4708 = vsub.f32 %v4461, 1.0
      %v4709 = vsub.f32 %v4463, 1.0
      %v4710 = vsub.f32 %v4465, 1.0
      %v4711 = vsub.f32 %v4467, 1.0
      %v4712 = vsub.f32 %v4469, 1.0
      %v4713 = vsub.f32 %v4471, 1.0
      %v4714 = vsub.f32 %v4473, 1.0
      %v4715 = vsub.f32 %v4475, 1.0
      %v4716 = vsub.f32 %v4477, 1.0
      %v4717 = vsub.f32 %v4479, 1.0
      %v4718 = vsub.f32 %v4481, 1.0
      %v4719 = vsub.f32 %v4483, 1.0
      %v4720 = vsub.f32 %v4485, 1.0
      %v4721 = vsub.f32 %v4487, 1.0
      %v4722 = vsub.f32 %v4489, 1.0
      %v4723 = vsub.f32 %v4491, 1.0
      %v4724 = vsub.f32 %v4493, 1.0
      %v4725 = vsub.f32 %v4495, 1.0
      %v4726 = vsub.f32 %v4497, 1.0
      %v4727 = vsub.f32 %v4499, 1.0
      %v4728 = vsub.f32 %v4501, 1.0
      %v4729 = vsub.f32 %v4503, 1.0
      %v4730 = vsub.f32 %v4505, 1.0
      %v4731 = vsub.f32 %v4507, 1.0
      %v4732 = vsub.f32 %v4509, 1.0
      %v4733 = vsub.f32 %v4511, 1.0
      %v4734 = vsub.f32 %v4513, 1.0
      %v4735 = vsub.f32 %v4515, 1.0
      %v4736 = vsub.f32 %v4517, 1.0
      %v4737 = vsub.f32 %v4519, 1.0
      %v4738 = vsub.f32 %v4521, 1.0
      %v4739 = vsub.f32 %v4523, 1.0
      %v4740 = vsub.f32 %v4525, 1.0
      %v4741 = vsub.f32 %v4527, 1.0
      %v4742 = vsub.f32 %v4529, 1.0
      %v4743 = vsub.f32 %v4531, 1.0
      %v4744 = vsub.f32 %v4533, 1.0
      %v4745 = vsub.f32 %v4535, 1.0
      %v4746 = vsub.f32 %v4537, 1.0
      %v4747 = vsub.f32 %v4539, 1.0
      %v4748 = vsub.f32 %v4541, 1.0
      %v4749 = vsub.f32 %v4543, 1.0
      %v4750 = vsub.f32 %v4545, 1.0
      %v4751 = vsub.f32 %v4547, 1.0
      %v4752 = vsub.f32 %v4549, 1.0
      %v4753 = vsub.f32 %v4551, 1.0
      %v4754 = vsub.f32 %v4553, 1.0
      %v4755 = vsub.f32 %v4555, 1.0
      %v4756 = vsub.f32 %v4557, 1.0
      %v4757 = vsub.f32 %v4559, 1.0
      %v4758 = vsub.f32 %v4561, 1.0
      %v4759 = vsub.f32 %v4563, 1.0
      %v4760 = vsub.f32 %v4565, 1.0
      %v4761 = vsub.f32 %v4567, 1.0
      %v4762 = vsub.f32 %v4569, 1.0
      %v4763 = vsub.f32 %v4571, 1.0
      %v4764 = vsub.f32 %v4573, 1.0
      %v4765 = vsub.f32 %v4575, 1.0
      %v4766 = vsub.f32 %v4577, 1.0
      %v4767 = vsub.f32 %v4579, 1.0
      %v4768 = vsub.f32 %v4581, 1.0
      %v4769 = vsub.f32 %v4583, 1.0
      %v4770 = vsub.f32 %v4585, 1.0
      %v4771 = vsub.f32 %v4587, 1.0
      %v4772 = vsub.f32 %v4589, 1.0
      %v4773 = vsub.f32 %v4591, 1.0
      %v4774 = vsub.f32 %v4593, 1.0
      %v4775 = vsub.f32 %v4595, 1.0
      %v4776 = vsub.f32 %v4597, 1.0
      %v4777 = vsub.f32 %v4599, 1.0
      %v4778 = vsub.f32 %v4601, 1.0
      %v4779 = vsub.f32 %v4603, 1.0
      %v4780 = vsub.f32 %v4605, 1.0
      %v4781 = vsub.f32 %v4607, 1.0
      %v4782 = vsub.f32 %v4609, 1.0
      %v4783 = vsub.f32 %v4611, 1.0
      %v4784 = vsub.f32 %v4613, 1.0
      %v4785 = vsub.f32 %v4615, 1.0
      %v4786 = vsub.f32 %v4617, 1.0
      %v4787 = vsub.f32 %v4619, 1.0
      %v4788 = vsub.f32 %v4621, 1.0
      %v4789 = vsub.f32 %v4623, 1.0
      %v4790 = vsub.f32 %v4625, 1.0
      %v4791 = vsub.f32 %v4627, 1.0
      %v4792 = vsub.f32 %v4629, 1.0
      %v4793 = vsub.f32 %v4631, 1.0
      %v4794 = vsub.f32 %v4633, 1.0
      %v4795 = vsub.f32 %v4635, 1.0
      %v4796 = vsub.f32 %v4637, 1.0
      %v4797 = vsub.f32 %v4639, 1.0
      %v4798 = vsub.f32 %v4641, 1.0
      %v4799 = vsub.f32 %v4643, 1.0
      %v4800 = vsub.f32 %v4645, 1.0
      %v4801 = vsub.f32 %v4647, 1.0
      %v4802 = vsub.f32 %v4649, 1.0
      %v4803 = vsub.f32 %v4651, 1.0
      %v4804 = vsub.f32 %v4653, 1.0
      %v4805 = vsub.f32 %v4655, 1.0
      %v4806 = vsub.f32 %v4657, 1.0
      %v4807 = vsub.f32 %v4659, 1.0
      %v4808 = vsub.f32 %v4661, 1.0
      %v4809 = vsub.f32 %v4663, 1.0
      %v4810 = vsub.f32 %v4665, 1.0
      %v4811 = vsub.f32 %v4667, 1.0
      %v4812 = vsub.f32 %v4669, 1.0
      %v4813 = vsub.f32 %v4671, 1.0
      %v4814 = vsub.f32 %v4673, 1.0
      %v4815 = vsub.f32 %v4675, 1.0
      %v4816 = vsub.f32 %v4677, 1.0
      %v4817 = vsub.f32 %v4679, 1.0
      %v4818 = vsub.f32 %v4681, 1.0
      %v4819 = vsub.f32 %v4683, 1.0
      %v4820 = vsub.f32 %v4685, 1.0
      %v4821 = vsub.f32 %v4687, 1.0
      %v4822 = vsub.f32 %v4689, 1.0
      %v4823 = vsub.f32 %v4691, 1.0
      %v4824 = vsub.f32 %v4693, 1.0
      %v4825 = vsub.f32 %v4695, 1.0
      %v4826 = vsub.f32 %v4697, 1.0
      %v4827 = vsub.f32 %v4699, 1.0
      %v4828 = vsel %vm4188, %v3678, %v4700
      %v4829 = vsel %vm4189, %v3681, %v4701
      %v4830 = vsel %vm4190, %v3686, %v4702
      %v4831 = vsel %vm4191, %v3689, %v4703
      %v4832 = vsel %vm4192, %v3694, %v4704
      %v4833 = vsel %vm4193, %v3697, %v4705
      %v4834 = vsel %vm4194, %v3702, %v4706
      %v4835 = vsel %vm4195, %v3705, %v4707
      %v4836 = vsel %vm4196, %v3710, %v4708
      %v4837 = vsel %vm4197, %v3713, %v4709
      %v4838 = vsel %vm4198, %v3718, %v4710
      %v4839 = vsel %vm4199, %v3721, %v4711
      %v4840 = vsel %vm4200, %v3726, %v4712
      %v4841 = vsel %vm4201, %v3729, %v4713
      %v4842 = vsel %vm4202, %v3734, %v4714
      %v4843 = vsel %vm4203, %v3737, %v4715
      %v4844 = vsel %vm4204, %v3742, %v4716
      %v4845 = vsel %vm4205, %v3745, %v4717
      %v4846 = vsel %vm4206, %v3750, %v4718
      %v4847 = vsel %vm4207, %v3753, %v4719
      %v4848 = vsel %vm4208, %v3758, %v4720
      %v4849 = vsel %vm4209, %v3761, %v4721
      %v4850 = vsel %vm4210, %v3766, %v4722
      %v4851 = vsel %vm4211, %v3769, %v4723
      %v4852 = vsel %vm4212, %v3774, %v4724
      %v4853 = vsel %vm4213, %v3777, %v4725
      %v4854 = vsel %vm4214, %v3782, %v4726
      %v4855 = vsel %vm4215, %v3785, %v4727
      %v4856 = vsel %vm4216, %v3790, %v4728
      %v4857 = vsel %vm4217, %v3793, %v4729
      %v4858 = vsel %vm4218, %v3798, %v4730
      %v4859 = vsel %vm4219, %v3801, %v4731
      %v4860 = vsel %vm4220, %v3806, %v4732
      %v4861 = vsel %vm4221, %v3809, %v4733
      %v4862 = vsel %vm4222, %v3814, %v4734
      %v4863 = vsel %vm4223, %v3817, %v4735
      %v4864 = vsel %vm4224, %v3822, %v4736
      %v4865 = vsel %vm4225, %v3825, %v4737
      %v4866 = vsel %vm4226, %v3830, %v4738
      %v4867 = vsel %vm4227, %v3833, %v4739
      %v4868 = vsel %vm4228, %v3838, %v4740
      %v4869 = vsel %vm4229, %v3841, %v4741
      %v4870 = vsel %vm4230, %v3846, %v4742
      %v4871 = vsel %vm4231, %v3849, %v4743
      %v4872 = vsel %vm4232, %v3854, %v4744
      %v4873 = vsel %vm4233, %v3857, %v4745
      %v4874 = vsel %vm4234, %v3862, %v4746
      %v4875 = vsel %vm4235, %v3865, %v4747
      %v4876 = vsel %vm4236, %v3870, %v4748
      %v4877 = vsel %vm4237, %v3873, %v4749
      %v4878 = vsel %vm4238, %v3878, %v4750
      %v4879 = vsel %vm4239, %v3881, %v4751
      %v4880 = vsel %vm4240, %v3886, %v4752
      %v4881 = vsel %vm4241, %v3889, %v4753
      %v4882 = vsel %vm4242, %v3894, %v4754
      %v4883 = vsel %vm4243, %v3897, %v4755
      %v4884 = vsel %vm4244, %v3902, %v4756
      %v4885 = vsel %vm4245, %v3905, %v4757
      %v4886 = vsel %vm4246, %v3910, %v4758
      %v4887 = vsel %vm4247, %v3913, %v4759
      %v4888 = vsel %vm4248, %v3918, %v4760
      %v4889 = vsel %vm4249, %v3921, %v4761
      %v4890 = vsel %vm4250, %v3926, %v4762
      %v4891 = vsel %vm4251, %v3929, %v4763
      %v4892 = vsel %vm4252, %v3934, %v4764
      %v4893 = vsel %vm4253, %v3937, %v4765
      %v4894 = vsel %vm4254, %v3942, %v4766
      %v4895 = vsel %vm4255, %v3945, %v4767
      %v4896 = vsel %vm4256, %v3950, %v4768
      %v4897 = vsel %vm4257, %v3953, %v4769
      %v4898 = vsel %vm4258, %v3958, %v4770
      %v4899 = vsel %vm4259, %v3961, %v4771
      %v4900 = vsel %vm4260, %v3966, %v4772
      %v4901 = vsel %vm4261, %v3969, %v4773
      %v4902 = vsel %vm4262, %v3974, %v4774
      %v4903 = vsel %vm4263, %v3977, %v4775
      %v4904 = vsel %vm4264, %v3982, %v4776
      %v4905 = vsel %vm4265, %v3985, %v4777
      %v4906 = vsel %vm4266, %v3990, %v4778
      %v4907 = vsel %vm4267, %v3993, %v4779
      %v4908 = vsel %vm4268, %v3998, %v4780
      %v4909 = vsel %vm4269, %v4001, %v4781
      %v4910 = vsel %vm4270, %v4006, %v4782
      %v4911 = vsel %vm4271, %v4009, %v4783
      %v4912 = vsel %vm4272, %v4014, %v4784
      %v4913 = vsel %vm4273, %v4017, %v4785
      %v4914 = vsel %vm4274, %v4022, %v4786
      %v4915 = vsel %vm4275, %v4025, %v4787
      %v4916 = vsel %vm4276, %v4030, %v4788
      %v4917 = vsel %vm4277, %v4033, %v4789
      %v4918 = vsel %vm4278, %v4038, %v4790
      %v4919 = vsel %vm4279, %v4041, %v4791
      %v4920 = vsel %vm4280, %v4046, %v4792
      %v4921 = vsel %vm4281, %v4049, %v4793
      %v4922 = vsel %vm4282, %v4054, %v4794
      %v4923 = vsel %vm4283, %v4057, %v4795
      %v4924 = vsel %vm4284, %v4062, %v4796
      %v4925 = vsel %vm4285, %v4065, %v4797
      %v4926 = vsel %vm4286, %v4070, %v4798
      %v4927 = vsel %vm4287, %v4073, %v4799
      %v4928 = vsel %vm4288, %v4078, %v4800
      %v4929 = vsel %vm4289, %v4081, %v4801
      %v4930 = vsel %vm4290, %v4086, %v4802
      %v4931 = vsel %vm4291, %v4089, %v4803
      %v4932 = vsel %vm4292, %v4094, %v4804
      %v4933 = vsel %vm4293, %v4097, %v4805
      %v4934 = vsel %vm4294, %v4102, %v4806
      %v4935 = vsel %vm4295, %v4105, %v4807
      %v4936 = vsel %vm4296, %v4110, %v4808
      %v4937 = vsel %vm4297, %v4113, %v4809
      %v4938 = vsel %vm4298, %v4118, %v4810
      %v4939 = vsel %vm4299, %v4121, %v4811
      %v4940 = vsel %vm4300, %v4126, %v4812
      %v4941 = vsel %vm4301, %v4129, %v4813
      %v4942 = vsel %vm4302, %v4134, %v4814
      %v4943 = vsel %vm4303, %v4137, %v4815
      %v4944 = vsel %vm4304, %v4142, %v4816
      %v4945 = vsel %vm4305, %v4145, %v4817
      %v4946 = vsel %vm4306, %v4150, %v4818
      %v4947 = vsel %vm4307, %v4153, %v4819
      %v4948 = vsel %vm4308, %v4158, %v4820
      %v4949 = vsel %vm4309, %v4161, %v4821
      %v4950 = vsel %vm4310, %v4166, %v4822
      %v4951 = vsel %vm4311, %v4169, %v4823
      %v4952 = vsel %vm4312, %v4174, %v4824
      %v4953 = vsel %vm4313, %v4177, %v4825
      %v4954 = vsel %vm4314, %v4182, %v4826
      %v4955 = vsel %vm4315, %v4185, %v4827
      %v4956 = vpack.c.bf16 %v4829, %v4828
      %v4957 = vpack.c.bf16 %v4831, %v4830
      %v4958 = vpack.c.bf16 %v4833, %v4832
      %v4959 = vpack.c.bf16 %v4835, %v4834
      %v4960 = vpack.c.bf16 %v4837, %v4836
      %v4961 = vpack.c.bf16 %v4839, %v4838
      %v4962 = vpack.c.bf16 %v4841, %v4840
      %v4963 = vpack.c.bf16 %v4843, %v4842
      %v4964 = vpack.c.bf16 %v4845, %v4844
      %v4965 = vpack.c.bf16 %v4847, %v4846
      %v4966 = vpack.c.bf16 %v4849, %v4848
      %v4967 = vpack.c.bf16 %v4851, %v4850
      %v4968 = vpack.c.bf16 %v4853, %v4852
      %v4969 = vpack.c.bf16 %v4855, %v4854
      %v4970 = vpack.c.bf16 %v4857, %v4856
      %v4971 = vpack.c.bf16 %v4859, %v4858
      %v4972 = vpack.c.bf16 %v4861, %v4860
      %v4973 = vpack.c.bf16 %v4863, %v4862
      %v4974 = vpack.c.bf16 %v4865, %v4864
      %v4975 = vpack.c.bf16 %v4867, %v4866
      %v4976 = vpack.c.bf16 %v4869, %v4868
      %v4977 = vpack.c.bf16 %v4871, %v4870
      %v4978 = vpack.c.bf16 %v4873, %v4872
      %v4979 = vpack.c.bf16 %v4875, %v4874
      %v4980 = vpack.c.bf16 %v4877, %v4876
      %v4981 = vpack.c.bf16 %v4879, %v4878
      %v4982 = vpack.c.bf16 %v4881, %v4880
      %v4983 = vpack.c.bf16 %v4883, %v4882
      %v4984 = vpack.c.bf16 %v4885, %v4884
      %v4985 = vpack.c.bf16 %v4887, %v4886
      %v4986 = vpack.c.bf16 %v4889, %v4888
      %v4987 = vpack.c.bf16 %v4891, %v4890
      %v4988 = vpack.c.bf16 %v4893, %v4892
      %v4989 = vpack.c.bf16 %v4895, %v4894
      %v4990 = vpack.c.bf16 %v4897, %v4896
      %v4991 = vpack.c.bf16 %v4899, %v4898
      %v4992 = vpack.c.bf16 %v4901, %v4900
      %v4993 = vpack.c.bf16 %v4903, %v4902
      %v4994 = vpack.c.bf16 %v4905, %v4904
      %v4995 = vpack.c.bf16 %v4907, %v4906
      %v4996 = vpack.c.bf16 %v4909, %v4908
      %v4997 = vpack.c.bf16 %v4911, %v4910
      %v4998 = vpack.c.bf16 %v4913, %v4912
      %v4999 = vpack.c.bf16 %v4915, %v4914
      %v5000 = vpack.c.bf16 %v4917, %v4916
      %v5001 = vpack.c.bf16 %v4919, %v4918
      %v5002 = vpack.c.bf16 %v4921, %v4920
      %v5003 = vpack.c.bf16 %v4923, %v4922
      %v5004 = vpack.c.bf16 %v4925, %v4924
      %v5005 = vpack.c.bf16 %v4927, %v4926
      %v5006 = vpack.c.bf16 %v4929, %v4928
      %v5007 = vpack.c.bf16 %v4931, %v4930
      %v5008 = vpack.c.bf16 %v4933, %v4932
      %v5009 = vpack.c.bf16 %v4935, %v4934
      %v5010 = vpack.c.bf16 %v4937, %v4936
      %v5011 = vpack.c.bf16 %v4939, %v4938
      %v5012 = vpack.c.bf16 %v4941, %v4940
      %v5013 = vpack.c.bf16 %v4943, %v4942
      %v5014 = vpack.c.bf16 %v4945, %v4944
      %v5015 = vpack.c.bf16 %v4947, %v4946
      %v5016 = vpack.c.bf16 %v4949, %v4948
      %v5017 = vpack.c.bf16 %v4951, %v4950
      %v5018 = vpack.c.bf16 %v4953, %v4952
      %v5019 = vpack.c.bf16 %v4955, %v4954
      %v5084 = vunpack.c.l.b16 %v4956
      %v5085 = vunpack.c.h.b16 %v4956
      %v5086 = vunpack.c.l.b16 %v4957
      %v5087 = vunpack.c.h.b16 %v4957
      %v5088 = vunpack.c.l.b16 %v4958
      %v5089 = vunpack.c.h.b16 %v4958
      %v5090 = vunpack.c.l.b16 %v4959
      %v5091 = vunpack.c.h.b16 %v4959
      %v5092 = vunpack.c.l.b16 %v4960
      %v5093 = vunpack.c.h.b16 %v4960
      %v5094 = vunpack.c.l.b16 %v4961
      %v5095 = vunpack.c.h.b16 %v4961
      %v5096 = vunpack.c.l.b16 %v4962
      %v5097 = vunpack.c.h.b16 %v4962
      %v5098 = vunpack.c.l.b16 %v4963
      %v5099 = vunpack.c.h.b16 %v4963
      %v5100 = vunpack.c.l.b16 %v4964
      %v5101 = vunpack.c.h.b16 %v4964
      %v5102 = vunpack.c.l.b16 %v4965
      %v5103 = vunpack.c.h.b16 %v4965
      %v5104 = vunpack.c.l.b16 %v4966
      %v5105 = vunpack.c.h.b16 %v4966
      %v5106 = vunpack.c.l.b16 %v4967
      %v5107 = vunpack.c.h.b16 %v4967
      %v5108 = vunpack.c.l.b16 %v4968
      %v5109 = vunpack.c.h.b16 %v4968
      %v5110 = vunpack.c.l.b16 %v4969
      %v5111 = vunpack.c.h.b16 %v4969
      %v5112 = vunpack.c.l.b16 %v4970
      %v5113 = vunpack.c.h.b16 %v4970
      %v5114 = vunpack.c.l.b16 %v4971
      %v5115 = vunpack.c.h.b16 %v4971
      %v5116 = vunpack.c.l.b16 %v4972
      %v5117 = vunpack.c.h.b16 %v4972
      %v5118 = vunpack.c.l.b16 %v4973
      %v5119 = vunpack.c.h.b16 %v4973
      %v5120 = vunpack.c.l.b16 %v4974
      %v5121 = vunpack.c.h.b16 %v4974
      %v5122 = vunpack.c.l.b16 %v4975
      %v5123 = vunpack.c.h.b16 %v4975
      %v5124 = vunpack.c.l.b16 %v4976
      %v5125 = vunpack.c.h.b16 %v4976
      %v5126 = vunpack.c.l.b16 %v4977
      %v5127 = vunpack.c.h.b16 %v4977
      %v5128 = vunpack.c.l.b16 %v4978
      %v5129 = vunpack.c.h.b16 %v4978
      %v5130 = vunpack.c.l.b16 %v4979
      %v5131 = vunpack.c.h.b16 %v4979
      %v5132 = vunpack.c.l.b16 %v4980
      %v5133 = vunpack.c.h.b16 %v4980
      %v5134 = vunpack.c.l.b16 %v4981
      %v5135 = vunpack.c.h.b16 %v4981
      %v5136 = vunpack.c.l.b16 %v4982
      %v5137 = vunpack.c.h.b16 %v4982
      %v5138 = vunpack.c.l.b16 %v4983
      %v5139 = vunpack.c.h.b16 %v4983
      %v5140 = vunpack.c.l.b16 %v4984
      %v5141 = vunpack.c.h.b16 %v4984
      %v5142 = vunpack.c.l.b16 %v4985
      %v5143 = vunpack.c.h.b16 %v4985
      %v5144 = vunpack.c.l.b16 %v4986
      %v5145 = vunpack.c.h.b16 %v4986
      %v5146 = vunpack.c.l.b16 %v4987
      %v5147 = vunpack.c.h.b16 %v4987
      %v5148 = vunpack.c.l.b16 %v4988
      %v5149 = vunpack.c.h.b16 %v4988
      %v5150 = vunpack.c.l.b16 %v4989
      %v5151 = vunpack.c.h.b16 %v4989
      %v5152 = vunpack.c.l.b16 %v4990
      %v5153 = vunpack.c.h.b16 %v4990
      %v5154 = vunpack.c.l.b16 %v4991
      %v5155 = vunpack.c.h.b16 %v4991
      %v5156 = vunpack.c.l.b16 %v4992
      %v5157 = vunpack.c.h.b16 %v4992
      %v5158 = vunpack.c.l.b16 %v4993
      %v5159 = vunpack.c.h.b16 %v4993
      %v5160 = vunpack.c.l.b16 %v4994
      %v5161 = vunpack.c.h.b16 %v4994
      %v5162 = vunpack.c.l.b16 %v4995
      %v5163 = vunpack.c.h.b16 %v4995
      %v5164 = vunpack.c.l.b16 %v4996
      %v5165 = vunpack.c.h.b16 %v4996
      %v5166 = vunpack.c.l.b16 %v4997
      %v5167 = vunpack.c.h.b16 %v4997
      %v5168 = vunpack.c.l.b16 %v4998
      %v5169 = vunpack.c.h.b16 %v4998
      %v5170 = vunpack.c.l.b16 %v4999
      %v5171 = vunpack.c.h.b16 %v4999
      %v5172 = vunpack.c.l.b16 %v5000
      %v5173 = vunpack.c.h.b16 %v5000
      %v5174 = vunpack.c.l.b16 %v5001
      %v5175 = vunpack.c.h.b16 %v5001
      %v5176 = vunpack.c.l.b16 %v5002
      %v5177 = vunpack.c.h.b16 %v5002
      %v5178 = vunpack.c.l.b16 %v5003
      %v5179 = vunpack.c.h.b16 %v5003
      %v5180 = vunpack.c.l.b16 %v5004
      %v5181 = vunpack.c.h.b16 %v5004
      %v5182 = vunpack.c.l.b16 %v5005
      %v5183 = vunpack.c.h.b16 %v5005
      %v5184 = vunpack.c.l.b16 %v5006
      %v5185 = vunpack.c.h.b16 %v5006
      %v5186 = vunpack.c.l.b16 %v5007
      %v5187 = vunpack.c.h.b16 %v5007
      %v5188 = vunpack.c.l.b16 %v5008
      %v5189 = vunpack.c.h.b16 %v5008
      %v5190 = vunpack.c.l.b16 %v5009
      %v5191 = vunpack.c.h.b16 %v5009
      %v5192 = vunpack.c.l.b16 %v5010
      %v5193 = vunpack.c.h.b16 %v5010
      %v5194 = vunpack.c.l.b16 %v5011
      %v5195 = vunpack.c.h.b16 %v5011
      %v5196 = vunpack.c.l.b16 %v5012
      %v5197 = vunpack.c.h.b16 %v5012
      %v5198 = vunpack.c.l.b16 %v5013
      %v5199 = vunpack.c.h.b16 %v5013
      %v5200 = vunpack.c.l.b16 %v5014
      %v5201 = vunpack.c.h.b16 %v5014
      %v5202 = vunpack.c.l.b16 %v5015
      %v5203 = vunpack.c.h.b16 %v5015
      %v5204 = vunpack.c.l.b16 %v5016
      %v5205 = vunpack.c.h.b16 %v5016
      %v5206 = vunpack.c.l.b16 %v5017
      %v5207 = vunpack.c.h.b16 %v5017
      %v5208 = vunpack.c.l.b16 %v5018
      %v5209 = vunpack.c.h.b16 %v5018
      %v5210 = vunpack.c.l.b16 %v5019
      %v5211 = vunpack.c.h.b16 %v5019
      %v5212 = vpack.c.b16 %v5084, %v5084
      %v5213 = vpack.c.b16 %v5085, %v5085
      %v5214 = vpack.c.b16 %v5086, %v5086
      %v5215 = vpack.c.b16 %v5087, %v5087
      %v5216 = vpack.c.b16 %v5088, %v5088
      %v5217 = vpack.c.b16 %v5089, %v5089
      %v5218 = vpack.c.b16 %v5090, %v5090
      %v5219 = vpack.c.b16 %v5091, %v5091
      %v5220 = vpack.c.b16 %v5092, %v5092
      %v5221 = vpack.c.b16 %v5093, %v5093
      %v5222 = vpack.c.b16 %v5094, %v5094
      %v5223 = vpack.c.b16 %v5095, %v5095
      %v5224 = vpack.c.b16 %v5096, %v5096
      %v5225 = vpack.c.b16 %v5097, %v5097
      %v5226 = vpack.c.b16 %v5098, %v5098
      %v5227 = vpack.c.b16 %v5099, %v5099
      %v5228 = vpack.c.b16 %v5100, %v5100
      %v5229 = vpack.c.b16 %v5101, %v5101
      %v5230 = vpack.c.b16 %v5102, %v5102
      %v5231 = vpack.c.b16 %v5103, %v5103
      %v5232 = vpack.c.b16 %v5104, %v5104
      %v5233 = vpack.c.b16 %v5105, %v5105
      %v5234 = vpack.c.b16 %v5106, %v5106
      %v5235 = vpack.c.b16 %v5107, %v5107
      %v5236 = vpack.c.b16 %v5108, %v5108
      %v5237 = vpack.c.b16 %v5109, %v5109
      %v5238 = vpack.c.b16 %v5110, %v5110
      %v5239 = vpack.c.b16 %v5111, %v5111
      %v5240 = vpack.c.b16 %v5112, %v5112
      %v5241 = vpack.c.b16 %v5113, %v5113
      %v5242 = vpack.c.b16 %v5114, %v5114
      %v5243 = vpack.c.b16 %v5115, %v5115
      %v5244 = vpack.c.b16 %v5116, %v5116
      %v5245 = vpack.c.b16 %v5117, %v5117
      %v5246 = vpack.c.b16 %v5118, %v5118
      %v5247 = vpack.c.b16 %v5119, %v5119
      %v5248 = vpack.c.b16 %v5120, %v5120
      %v5249 = vpack.c.b16 %v5121, %v5121
      %v5250 = vpack.c.b16 %v5122, %v5122
      %v5251 = vpack.c.b16 %v5123, %v5123
      %v5252 = vpack.c.b16 %v5124, %v5124
      %v5253 = vpack.c.b16 %v5125, %v5125
      %v5254 = vpack.c.b16 %v5126, %v5126
      %v5255 = vpack.c.b16 %v5127, %v5127
      %v5256 = vpack.c.b16 %v5128, %v5128
      %v5257 = vpack.c.b16 %v5129, %v5129
      %v5258 = vpack.c.b16 %v5130, %v5130
      %v5259 = vpack.c.b16 %v5131, %v5131
      %v5260 = vpack.c.b16 %v5132, %v5132
      %v5261 = vpack.c.b16 %v5133, %v5133
      %v5262 = vpack.c.b16 %v5134, %v5134
      %v5263 = vpack.c.b16 %v5135, %v5135
      %v5264 = vpack.c.b16 %v5136, %v5136
      %v5265 = vpack.c.b16 %v5137, %v5137
      %v5266 = vpack.c.b16 %v5138, %v5138
      %v5267 = vpack.c.b16 %v5139, %v5139
      %v5268 = vpack.c.b16 %v5140, %v5140
      %v5269 = vpack.c.b16 %v5141, %v5141
      %v5270 = vpack.c.b16 %v5142, %v5142
      %v5271 = vpack.c.b16 %v5143, %v5143
      %v5272 = vpack.c.b16 %v5144, %v5144
      %v5273 = vpack.c.b16 %v5145, %v5145
      %v5274 = vpack.c.b16 %v5146, %v5146
      %v5275 = vpack.c.b16 %v5147, %v5147
      %v5276 = vpack.c.b16 %v5148, %v5148
      %v5277 = vpack.c.b16 %v5149, %v5149
      %v5278 = vpack.c.b16 %v5150, %v5150
      %v5279 = vpack.c.b16 %v5151, %v5151
      %v5280 = vpack.c.b16 %v5152, %v5152
      %v5281 = vpack.c.b16 %v5153, %v5153
      %v5282 = vpack.c.b16 %v5154, %v5154
      %v5283 = vpack.c.b16 %v5155, %v5155
      %v5284 = vpack.c.b16 %v5156, %v5156
      %v5285 = vpack.c.b16 %v5157, %v5157
      %v5286 = vpack.c.b16 %v5158, %v5158
      %v5287 = vpack.c.b16 %v5159, %v5159
      %v5288 = vpack.c.b16 %v5160, %v5160
      %v5289 = vpack.c.b16 %v5161, %v5161
      %v5290 = vpack.c.b16 %v5162, %v5162
      %v5291 = vpack.c.b16 %v5163, %v5163
      %v5292 = vpack.c.b16 %v5164, %v5164
      %v5293 = vpack.c.b16 %v5165, %v5165
      %v5294 = vpack.c.b16 %v5166, %v5166
      %v5295 = vpack.c.b16 %v5167, %v5167
      %v5296 = vpack.c.b16 %v5168, %v5168
      %v5297 = vpack.c.b16 %v5169, %v5169
      %v5298 = vpack.c.b16 %v5170, %v5170
      %v5299 = vpack.c.b16 %v5171, %v5171
      %v5300 = vpack.c.b16 %v5172, %v5172
      %v5301 = vpack.c.b16 %v5173, %v5173
      %v5302 = vpack.c.b16 %v5174, %v5174
      %v5303 = vpack.c.b16 %v5175, %v5175
      %v5304 = vpack.c.b16 %v5176, %v5176
      %v5305 = vpack.c.b16 %v5177, %v5177
      %v5306 = vpack.c.b16 %v5178, %v5178
      %v5307 = vpack.c.b16 %v5179, %v5179
      %v5308 = vpack.c.b16 %v5180, %v5180
      %v5309 = vpack.c.b16 %v5181, %v5181
      %v5310 = vpack.c.b16 %v5182, %v5182
      %v5311 = vpack.c.b16 %v5183, %v5183
      %v5312 = vpack.c.b16 %v5184, %v5184
      %v5313 = vpack.c.b16 %v5185, %v5185
      %v5314 = vpack.c.b16 %v5186, %v5186
      %v5315 = vpack.c.b16 %v5187, %v5187
      %v5316 = vpack.c.b16 %v5188, %v5188
      %v5317 = vpack.c.b16 %v5189, %v5189
      %v5318 = vpack.c.b16 %v5190, %v5190
      %v5319 = vpack.c.b16 %v5191, %v5191
      %v5320 = vpack.c.b16 %v5192, %v5192
      %v5321 = vpack.c.b16 %v5193, %v5193
      %v5322 = vpack.c.b16 %v5194, %v5194
      %v5323 = vpack.c.b16 %v5195, %v5195
      %v5324 = vpack.c.b16 %v5196, %v5196
      %v5325 = vpack.c.b16 %v5197, %v5197
      %v5326 = vpack.c.b16 %v5198, %v5198
      %v5327 = vpack.c.b16 %v5199, %v5199
      %v5328 = vpack.c.b16 %v5200, %v5200
      %v5329 = vpack.c.b16 %v5201, %v5201
      %v5330 = vpack.c.b16 %v5202, %v5202
      %v5331 = vpack.c.b16 %v5203, %v5203
      %v5332 = vpack.c.b16 %v5204, %v5204
      %v5333 = vpack.c.b16 %v5205, %v5205
      %v5334 = vpack.c.b16 %v5206, %v5206
      %v5335 = vpack.c.b16 %v5207, %v5207
      %v5336 = vpack.c.b16 %v5208, %v5208
      %v5337 = vpack.c.b16 %v5209, %v5209
      %v5338 = vpack.c.b16 %v5210, %v5210
      %v5339 = vpack.c.b16 %v5211, %v5211
      %5468 = vst [vmem:[%s175] sm:$0xf] %v5212
      %5469 = vst [vmem:[%s175 + $0x4] sm:$0xf] %v5213
      %5470 = vst [vmem:[%s175 + $0x8] sm:$0xf] %v5214
      %5471 = vst [vmem:[%s175 + $0xc] sm:$0xf] %v5215
      %5472 = vst [vmem:[%s175 + $0x10] sm:$0xf] %v5216
      %5473 = vst [vmem:[%s175 + $0x14] sm:$0xf] %v5217
      %5474 = vst [vmem:[%s175 + $0x18] sm:$0xf] %v5218
      %5475 = vst [vmem:[%s175 + $0x1c] sm:$0xf] %v5219
      %5476 = vst [vmem:[%s175 + $0x20] sm:$0xf] %v5220
      %5477 = vst [vmem:[%s175 + $0x24] sm:$0xf] %v5221
      %5478 = vst [vmem:[%s175 + $0x28] sm:$0xf] %v5222
      %5479 = vst [vmem:[%s175 + $0x2c] sm:$0xf] %v5223
      %5480 = vst [vmem:[%s175 + $0x30] sm:$0xf] %v5224
      %5481 = vst [vmem:[%s175 + $0x34] sm:$0xf] %v5225
      %5482 = vst [vmem:[%s175 + $0x38] sm:$0xf] %v5226
      %5483 = vst [vmem:[%s175 + $0x3c] sm:$0xf] %v5227
      %5484 = vst [vmem:[%s175 + $0x40] sm:$0xf] %v5228
      %5485 = vst [vmem:[%s175 + $0x44] sm:$0xf] %v5229
      %5486 = vst [vmem:[%s175 + $0x48] sm:$0xf] %v5230
      %5487 = vst [vmem:[%s175 + $0x4c] sm:$0xf] %v5231
      %5488 = vst [vmem:[%s175 + $0x50] sm:$0xf] %v5232
      %5489 = vst [vmem:[%s175 + $0x54] sm:$0xf] %v5233
      %5490 = vst [vmem:[%s175 + $0x58] sm:$0xf] %v5234
      %5491 = vst [vmem:[%s175 + $0x5c] sm:$0xf] %v5235
      %5492 = vst [vmem:[%s175 + $0x60] sm:$0xf] %v5236
      %5493 = vst [vmem:[%s175 + $0x64] sm:$0xf] %v5237
      %5494 = vst [vmem:[%s175 + $0x68] sm:$0xf] %v5238
      %5495 = vst [vmem:[%s175 + $0x6c] sm:$0xf] %v5239
      %5496 = vst [vmem:[%s175 + $0x70] sm:$0xf] %v5240
      %5497 = vst [vmem:[%s175 + $0x74] sm:$0xf] %v5241
      %5498 = vst [vmem:[%s175 + $0x78] sm:$0xf] %v5242
      %5499 = vst [vmem:[%s175 + $0x7c] sm:$0xf] %v5243
      %5500 = vst [vmem:[%s175 + $0x80] sm:$0xf] %v5244
      %5501 = vst [vmem:[%s175 + $0x84] sm:$0xf] %v5245
      %5502 = vst [vmem:[%s175 + $0x88] sm:$0xf] %v5246
      %5503 = vst [vmem:[%s175 + $0x8c] sm:$0xf] %v5247
      %5504 = vst [vmem:[%s175 + $0x90] sm:$0xf] %v5248
      %5505 = vst [vmem:[%s175 + $0x94] sm:$0xf] %v5249
      %5506 = vst [vmem:[%s175 + $0x98] sm:$0xf] %v5250
      %5507 = vst [vmem:[%s175 + $0x9c] sm:$0xf] %v5251
      %5508 = vst [vmem:[%s175 + $0xa0] sm:$0xf] %v5252
      %5509 = vst [vmem:[%s175 + $0xa4] sm:$0xf] %v5253
      %5510 = vst [vmem:[%s175 + $0xa8] sm:$0xf] %v5254
      %5511 = vst [vmem:[%s175 + $0xac] sm:$0xf] %v5255
      %5512 = vst [vmem:[%s175 + $0xb0] sm:$0xf] %v5256
      %5513 = vst [vmem:[%s175 + $0xb4] sm:$0xf] %v5257
      %5514 = vst [vmem:[%s175 + $0xb8] sm:$0xf] %v5258
      %5515 = vst [vmem:[%s175 + $0xbc] sm:$0xf] %v5259
      %5516 = vst [vmem:[%s175 + $0xc0] sm:$0xf] %v5260
      %5517 = vst [vmem:[%s175 + $0xc4] sm:$0xf] %v5261
      %5518 = vst [vmem:[%s175 + $0xc8] sm:$0xf] %v5262
      %5519 = vst [vmem:[%s175 + $0xcc] sm:$0xf] %v5263
      %5520 = vst [vmem:[%s175 + $0xd0] sm:$0xf] %v5264
      %5521 = vst [vmem:[%s175 + $0xd4] sm:$0xf] %v5265
      %5522 = vst [vmem:[%s175 + $0xd8] sm:$0xf] %v5266
      %5523 = vst [vmem:[%s175 + $0xdc] sm:$0xf] %v5267
      %5524 = vst [vmem:[%s175 + $0xe0] sm:$0xf] %v5268
      %5525 = vst [vmem:[%s175 + $0xe4] sm:$0xf] %v5269
      %5526 = vst [vmem:[%s175 + $0xe8] sm:$0xf] %v5270
      %5527 = vst [vmem:[%s175 + $0xec] sm:$0xf] %v5271
      %5528 = vst [vmem:[%s175 + $0xf0] sm:$0xf] %v5272
      %5529 = vst [vmem:[%s175 + $0xf4] sm:$0xf] %v5273
      %5530 = vst [vmem:[%s175 + $0xf8] sm:$0xf] %v5274
      %5531 = vst [vmem:[%s175 + $0xfc] sm:$0xf] %v5275
      %5532 = vst [vmem:[%s175 + $0x100] sm:$0xf] %v5276
      %5533 = vst [vmem:[%s175 + $0x104] sm:$0xf] %v5277
      %5534 = vst [vmem:[%s175 + $0x108] sm:$0xf] %v5278
      %5535 = vst [vmem:[%s175 + $0x10c] sm:$0xf] %v5279
      %5536 = vst [vmem:[%s175 + $0x110] sm:$0xf] %v5280
      %5537 = vst [vmem:[%s175 + $0x114] sm:$0xf] %v5281
      %5538 = vst [vmem:[%s175 + $0x118] sm:$0xf] %v5282
      %5539 = vst [vmem:[%s175 + $0x11c] sm:$0xf] %v5283
      %5540 = vst [vmem:[%s175 + $0x120] sm:$0xf] %v5284
      %5541 = vst [vmem:[%s175 + $0x124] sm:$0xf] %v5285
      %5542 = vst [vmem:[%s175 + $0x128] sm:$0xf] %v5286
      %5543 = vst [vmem:[%s175 + $0x12c] sm:$0xf] %v5287
      %5544 = vst [vmem:[%s175 + $0x130] sm:$0xf] %v5288
      %5545 = vst [vmem:[%s175 + $0x134] sm:$0xf] %v5289
      %5546 = vst [vmem:[%s175 + $0x138] sm:$0xf] %v5290
      %5547 = vst [vmem:[%s175 + $0x13c] sm:$0xf] %v5291
      %5548 = vst [vmem:[%s175 + $0x140] sm:$0xf] %v5292
      %5549 = vst [vmem:[%s175 + $0x144] sm:$0xf] %v5293
      %5550 = vst [vmem:[%s175 + $0x148] sm:$0xf] %v5294
      %5551 = vst [vmem:[%s175 + $0x14c] sm:$0xf] %v5295
      %5552 = vst [vmem:[%s175 + $0x150] sm:$0xf] %v5296
      %5553 = vst [vmem:[%s175 + $0x154] sm:$0xf] %v5297
      %5554 = vst [vmem:[%s175 + $0x158] sm:$0xf] %v5298
      %5555 = vst [vmem:[%s175 + $0x15c] sm:$0xf] %v5299
      %5556 = vst [vmem:[%s175 + $0x160] sm:$0xf] %v5300
      %5557 = vst [vmem:[%s175 + $0x164] sm:$0xf] %v5301
      %5558 = vst [vmem:[%s175 + $0x168] sm:$0xf] %v5302
      %5559 = vst [vmem:[%s175 + $0x16c] sm:$0xf] %v5303
      %5560 = vst [vmem:[%s175 + $0x170] sm:$0xf] %v5304
      %5561 = vst [vmem:[%s175 + $0x174] sm:$0xf] %v5305
      %5562 = vst [vmem:[%s175 + $0x178] sm:$0xf] %v5306
      %5563 = vst [vmem:[%s175 + $0x17c] sm:$0xf] %v5307
      %5564 = vst [vmem:[%s175 + $0x180] sm:$0xf] %v5308
      %5565 = vst [vmem:[%s175 + $0x184] sm:$0xf] %v5309
      %5566 = vst [vmem:[%s175 + $0x188] sm:$0xf] %v5310
      %5567 = vst [vmem:[%s175 + $0x18c] sm:$0xf] %v5311
      %5568 = vst [vmem:[%s175 + $0x190] sm:$0xf] %v5312
      %5569 = vst [vmem:[%s175 + $0x194] sm:$0xf] %v5313
      %5570 = vst [vmem:[%s175 + $0x198] sm:$0xf] %v5314
      %5571 = vst [vmem:[%s175 + $0x19c] sm:$0xf] %v5315
      %5572 = vst [vmem:[%s175 + $0x1a0] sm:$0xf] %v5316
      %5573 = vst [vmem:[%s175 + $0x1a4] sm:$0xf] %v5317
      %5574 = vst [vmem:[%s175 + $0x1a8] sm:$0xf] %v5318
      %5575 = vst [vmem:[%s175 + $0x1ac] sm:$0xf] %v5319
      %5576 = vst [vmem:[%s175 + $0x1b0] sm:$0xf] %v5320
      %5577 = vst [vmem:[%s175 + $0x1b4] sm:$0xf] %v5321
      %5578 = vst [vmem:[%s175 + $0x1b8] sm:$0xf] %v5322
      %5579 = vst [vmem:[%s175 + $0x1bc] sm:$0xf] %v5323
      %5580 = vst [vmem:[%s175 + $0x1c0] sm:$0xf] %v5324
      %5581 = vst [vmem:[%s175 + $0x1c4] sm:$0xf] %v5325
      %5582 = vst [vmem:[%s175 + $0x1c8] sm:$0xf] %v5326
      %5583 = vst [vmem:[%s175 + $0x1cc] sm:$0xf] %v5327
      %5584 = vst [vmem:[%s175 + $0x1d0] sm:$0xf] %v5328
      %5585 = vst [vmem:[%s175 + $0x1d4] sm:$0xf] %v5329
      %5586 = vst [vmem:[%s175 + $0x1d8] sm:$0xf] %v5330
      %5587 = vst [vmem:[%s175 + $0x1dc] sm:$0xf] %v5331
      %5588 = vst [vmem:[%s175 + $0x1e0] sm:$0xf] %v5332
      %5589 = vst [vmem:[%s175 + $0x1e4] sm:$0xf] %v5333
      %5590 = vst [vmem:[%s175 + $0x1e8] sm:$0xf] %v5334
      %5591 = vst [vmem:[%s175 + $0x1ec] sm:$0xf] %v5335
      %5592 = vst [vmem:[%s175 + $0x1f0] sm:$0xf] %v5336
      %5593 = vst [vmem:[%s175 + $0x1f4] sm:$0xf] %v5337
      %5594 = vst [vmem:[%s175 + $0x1f8] sm:$0xf] %v5338
      %5595 = vst [vmem:[%s175 + $0x1fc] sm:$0xf] %v5339
      %s5596 = smul.u32 128, %s14
      %p5597 = scmp.lt.s32.totalorder %s5596, 255
      %s5598 = scalar_select %p5597, %s5596, 255
      %s5599 = smul.addr %s5598, 4
      %s5600 = scalar_lea.vmem %s3, %s5599
      // Predicated region
      $region33: #{end2end_forward.7} parent=31 // pred_check
        %p5601 = pneg %p100
      $region34: #{end2end_forward.7} parent=31 // pred_check_branch
        %5603 = sbr.rel (%p5601) target = $region36
      $region35: #{end2end_forward.7} parent=31 // pred_region
        %s5604 = smul.u32 128, %s14
      $region36: #{end2end_forward.7} parent=31 // pred_fallthru
        _
    $region32: #{end2end_forward.7} parent=5 // pred_fallthru
      _
    %p5605 = scmp.le.s32.totalorder 2, %s9
    // Predicated region
    $region37: #{end2end_forward.7} parent=5 // pred_check
      %p5606 = pneg %p5605
    $region38: #{end2end_forward.7} parent=5 // pred_check_branch
      %5608 = sbr.rel (%p5606) target = $region40
    $region39: #{end2end_forward.7} parent=5 // pred_region
      %s5609 = ssub.s32 %s9, 2
      // Predicated region
      $region41: #{end2end_forward.7} parent=39 // pred_check
        %p5610 = pneg %p106
      $region42: #{end2end_forward.7} parent=39 // pred_check_branch
        %5612 = sbr.rel (%p5610) target = $region44
      $region43: #{end2end_forward.7} parent=39 // pred_region
        %s5613 = smul.u32 128, %s15
        %p5614 = scmp.lt.s32.totalorder %s5613, 255
        %s5615 = scalar_select %p5614, %s5613, 255
        %s5616 = smul.addr %s5615, 4
        %s5617 = scalar_lea.vmem %s3, %s5616
      $region44: #{end2end_forward.7} parent=39 // pred_fallthru
        _
    $region40: #{end2end_forward.7} parent=5 // pred_fallthru
      _
  $region6: #{end2end_forward.7} parent=0 // loop_footer
    %s13 = sadd.s32 1, %s9
  $region7: #{end2end_forward.7} parent=0 // loop_footer_branch
    %8 = sbr.rel target = $region3
  $region8: #{end2end_forward.7} parent=0 // loop_exit
    _

// kernel: end2end_forward.8
$region0: #{end2end_forward.8}
  #allocation0 [shape = 'u32[]', space=smem, size = 0x4, offset = 0x4, fixed_abs, tag = 'smem constant byte address 0x4 - core index']
  #allocation1 [shape = 'u32[144,128]{1,0:T(1,128)}', space=vmem, size = 0x12000, scoped, tag = 'internal scratch']
  %s0 = inlined_call_operand.vmem [shape: bf16[224,1024], index: 0, kind: input, shape index: {}]
  %s1 = inlined_call_operand.vmem [shape: bf16[1024,128], index: 1, kind: input, shape index: {}]
  %s2 = inlined_call_operand.vmem [shape: f32[1,128], index: 2, kind: input, shape index: {}]
  %s3 = inlined_call_operand.vmem [shape: bf16[224,128], index: 3, kind: output, shape index: {}]
  %s4 = sld [smem:[#allocation0]]
  $region22: #{end2end_forward.8} parent=0
    _
  %s6 = ssub.s32 1, %s4
  %s7 = scalar_select 0, %s6, %s4
  // Predicated region
  $region2: #{end2end_forward.8} parent=0 // pred_check
    _
  $region3: #{end2end_forward.8} parent=0 // pred_check_branch
    %9 = sbr.rel (0) target = $region5
  $region4: #{end2end_forward.8} parent=0 // pred_region
    _
  $region5: #{end2end_forward.8} parent=0 // pred_fallthru
    _
  // Predicated region
  $region6: #{end2end_forward.8} parent=0 // pred_check
    _
  $region7: #{end2end_forward.8} parent=0 // pred_check_branch
    %11 = sbr.rel (0) target = $region9
  $region8: #{end2end_forward.8} parent=0 // pred_region
    _
  $region9: #{end2end_forward.8} parent=0 // pred_fallthru
    _
  // Predicated region
  $region10: #{end2end_forward.8} parent=0 // pred_check
    _
  $region11: #{end2end_forward.8} parent=0 // pred_check_branch
    %13 = sbr.rel (0) target = $region13
  $region12: #{end2end_forward.8} parent=0 // pred_region
    _
  $region13: #{end2end_forward.8} parent=0 // pred_fallthru
    _
  %v15 = vld [vmem:[%s0] sm:$0xff]
  %v16 = vld [vmem:[%s0 + $0x8] sm:$0xff]
  %v17 = vld [vmem:[%s0 + $0x10] sm:$0xff]
  %v18 = vld [vmem:[%s0 + $0x18] sm:$0xff]
  %v19 = vld [vmem:[%s0 + $0x20] sm:$0xff]
  %v20 = vld [vmem:[%s0 + $0x28] sm:$0xff]
  %v21 = vld [vmem:[%s0 + $0x30] sm:$0xff]
  %v22 = vld [vmem:[%s0 + $0x38] sm:$0xff]
  %v23 = vld [vmem:[%s0 + $0x40] sm:$0xff]
  %v24 = vld [vmem:[%s0 + $0x48] sm:$0xff]
  %v25 = vld [vmem:[%s0 + $0x50] sm:$0xff]
  %v26 = vld [vmem:[%s0 + $0x58] sm:$0xff]
  %v27 = vld [vmem:[%s0 + $0x60] sm:$0xff]
  %v28 = vld [vmem:[%s0 + $0x68] sm:$0xff]
  %v29 = vld [vmem:[%s0 + $0x70] sm:$0xff]
  %v30 = vld [vmem:[%s0 + $0x78] sm:$0xff]
  %v31 = vld [vmem:[%s0 + $0x80] sm:$0xff]
  %v32 = vld [vmem:[%s0 + $0x88] sm:$0xff]
  %v33 = vld [vmem:[%s0 + $0x90] sm:$0xff]
  %v34 = vld [vmem:[%s0 + $0x98] sm:$0xff]
  %v35 = vld [vmem:[%s0 + $0xa0] sm:$0xff]
  %v36 = vld [vmem:[%s0 + $0xa8] sm:$0xff]
  %v37 = vld [vmem:[%s0 + $0xb0] sm:$0xff]
  %v38 = vld [vmem:[%s0 + $0xb8] sm:$0xff]
  %v39 = vld [vmem:[%s0 + $0xc0] sm:$0xff]
  %v40 = vld [vmem:[%s0 + $0xc8] sm:$0xff]
  %v41 = vld [vmem:[%s0 + $0xd0] sm:$0xff]
  %v42 = vld [vmem:[%s0 + $0xd8] sm:$0xff]
  %v43 = vld [vmem:[%s0 + $0xe0] sm:$0xff]
  %v44 = vld [vmem:[%s0 + $0xe8] sm:$0xff]
  %v45 = vld [vmem:[%s0 + $0xf0] sm:$0xff]
  %v46 = vld [vmem:[%s0 + $0xf8] sm:$0xff]
  %v47 = vld [vmem:[%s0 + $0x100] sm:$0xff]
  %v48 = vld [vmem:[%s0 + $0x108] sm:$0xff]
  %v49 = vld [vmem:[%s0 + $0x110] sm:$0xff]
  %v50 = vld [vmem:[%s0 + $0x118] sm:$0xff]
  %v51 = vld [vmem:[%s0 + $0x120] sm:$0xff]
  %v52 = vld [vmem:[%s0 + $0x128] sm:$0xff]
  %v53 = vld [vmem:[%s0 + $0x130] sm:$0xff]
  %v54 = vld [vmem:[%s0 + $0x138] sm:$0xff]
  %v55 = vld [vmem:[%s0 + $0x140] sm:$0xff]
  %v56 = vld [vmem:[%s0 + $0x148] sm:$0xff]
  %v57 = vld [vmem:[%s0 + $0x150] sm:$0xff]
  %v58 = vld [vmem:[%s0 + $0x158] sm:$0xff]
  %v59 = vld [vmem:[%s0 + $0x160] sm:$0xff]
  %v60 = vld [vmem:[%s0 + $0x168] sm:$0xff]
  %v61 = vld [vmem:[%s0 + $0x170] sm:$0xff]
  %v62 = vld [vmem:[%s0 + $0x178] sm:$0xff]
  %v63 = vld [vmem:[%s0 + $0x180] sm:$0xff]
  %v64 = vld [vmem:[%s0 + $0x188] sm:$0xff]
  %v65 = vld [vmem:[%s0 + $0x190] sm:$0xff]
  %v66 = vld [vmem:[%s0 + $0x198] sm:$0xff]
  %v67 = vld [vmem:[%s0 + $0x1a0] sm:$0xff]
  %v68 = vld [vmem:[%s0 + $0x1a8] sm:$0xff]
  %v69 = vld [vmem:[%s0 + $0x1b0] sm:$0xff]
  %v70 = vld [vmem:[%s0 + $0x1b8] sm:$0xff]
  %v71 = vld [vmem:[%s0 + $0x1c0] sm:$0xff]
  %v72 = vld [vmem:[%s0 + $0x1c8] sm:$0xff]
  %v73 = vld [vmem:[%s0 + $0x1d0] sm:$0xff]
  %v74 = vld [vmem:[%s0 + $0x1d8] sm:$0xff]
  %v75 = vld [vmem:[%s0 + $0x1e0] sm:$0xff]
  %v76 = vld [vmem:[%s0 + $0x1e8] sm:$0xff]
  %v77 = vld [vmem:[%s0 + $0x1f0] sm:$0xff]
  %v78 = vld [vmem:[%s0 + $0x1f8] sm:$0xff]
  %v79 = vld [vmem:[%s0 + $0x200] sm:$0xff]
  %v80 = vld [vmem:[%s0 + $0x208] sm:$0xff]
  %v81 = vld [vmem:[%s0 + $0x210] sm:$0xff]
  %v82 = vld [vmem:[%s0 + $0x218] sm:$0xff]
  %v83 = vld [vmem:[%s0 + $0x220] sm:$0xff]
  %v84 = vld [vmem:[%s0 + $0x228] sm:$0xff]
  %v85 = vld [vmem:[%s0 + $0x230] sm:$0xff]
  %v86 = vld [vmem:[%s0 + $0x238] sm:$0xff]
  %v87 = vld [vmem:[%s0 + $0x240] sm:$0xff]
  %v88 = vld [vmem:[%s0 + $0x248] sm:$0xff]
  %v89 = vld [vmem:[%s0 + $0x250] sm:$0xff]
  %v90 = vld [vmem:[%s0 + $0x258] sm:$0xff]
  %v91 = vld [vmem:[%s0 + $0x260] sm:$0xff]
  %v92 = vld [vmem:[%s0 + $0x268] sm:$0xff]
  %v93 = vld [vmem:[%s0 + $0x270] sm:$0xff]
  %v94 = vld [vmem:[%s0 + $0x278] sm:$0xff]
  %v95 = vld [vmem:[%s0 + $0x280] sm:$0xff]
  %v96 = vld [vmem:[%s0 + $0x288] sm:$0xff]
  %v97 = vld [vmem:[%s0 + $0x290] sm:$0xff]
  %v98 = vld [vmem:[%s0 + $0x298] sm:$0xff]
  %v99 = vld [vmem:[%s0 + $0x2a0] sm:$0xff]
  %v100 = vld [vmem:[%s0 + $0x2a8] sm:$0xff]
  %v101 = vld [vmem:[%s0 + $0x2b0] sm:$0xff]
  %v102 = vld [vmem:[%s0 + $0x2b8] sm:$0xff]
  %v103 = vld [vmem:[%s0 + $0x2c0] sm:$0xff]
  %v104 = vld [vmem:[%s0 + $0x2c8] sm:$0xff]
  %v105 = vld [vmem:[%s0 + $0x2d0] sm:$0xff]
  %v106 = vld [vmem:[%s0 + $0x2d8] sm:$0xff]
  %v107 = vld [vmem:[%s0 + $0x2e0] sm:$0xff]
  %v108 = vld [vmem:[%s0 + $0x2e8] sm:$0xff]
  %v109 = vld [vmem:[%s0 + $0x2f0] sm:$0xff]
  %v110 = vld [vmem:[%s0 + $0x2f8] sm:$0xff]
  %v111 = vld [vmem:[%s0 + $0x300] sm:$0xff]
  %v112 = vld [vmem:[%s0 + $0x308] sm:$0xff]
  %v113 = vld [vmem:[%s0 + $0x310] sm:$0xff]
  %v114 = vld [vmem:[%s0 + $0x318] sm:$0xff]
  %v115 = vld [vmem:[%s0 + $0x320] sm:$0xff]
  %v116 = vld [vmem:[%s0 + $0x328] sm:$0xff]
  %v117 = vld [vmem:[%s0 + $0x330] sm:$0xff]
  %v118 = vld [vmem:[%s0 + $0x338] sm:$0xff]
  %v119 = vld [vmem:[%s0 + $0x340] sm:$0xff]
  %v120 = vld [vmem:[%s0 + $0x348] sm:$0xff]
  %v121 = vld [vmem:[%s0 + $0x350] sm:$0xff]
  %v122 = vld [vmem:[%s0 + $0x358] sm:$0xff]
  %v123 = vld [vmem:[%s0 + $0x360] sm:$0xff]
  %v124 = vld [vmem:[%s0 + $0x368] sm:$0xff]
  %v125 = vld [vmem:[%s0 + $0x370] sm:$0xff]
  %v126 = vld [vmem:[%s0 + $0x378] sm:$0xff]
  %v127 = vld [vmem:[%s1] sm:$0xf]
  %v128 = vld [vmem:[%s1 + $0x4] sm:$0xf]
  %v129 = vld [vmem:[%s1 + $0x8] sm:$0xf]
  %v130 = vld [vmem:[%s1 + $0xc] sm:$0xf]
  %v131 = vld [vmem:[%s1 + $0x10] sm:$0xf]
  %v132 = vld [vmem:[%s1 + $0x14] sm:$0xf]
  %v133 = vld [vmem:[%s1 + $0x18] sm:$0xf]
  %v134 = vld [vmem:[%s1 + $0x1c] sm:$0xf]
  %v135 = vld [vmem:[%s1 + $0x20] sm:$0xf]
  %v136 = vld [vmem:[%s1 + $0x24] sm:$0xf]
  %v137 = vld [vmem:[%s1 + $0x28] sm:$0xf]
  %v138 = vld [vmem:[%s1 + $0x2c] sm:$0xf]
  %v139 = vld [vmem:[%s1 + $0x30] sm:$0xf]
  %v140 = vld [vmem:[%s1 + $0x34] sm:$0xf]
  %v141 = vld [vmem:[%s1 + $0x38] sm:$0xf]
  %v142 = vld [vmem:[%s1 + $0x3c] sm:$0xf]
  %v143 = vld [vmem:[%s1 + $0x40] sm:$0xf]
  %v144 = vld [vmem:[%s1 + $0x44] sm:$0xf]
  %v145 = vld [vmem:[%s1 + $0x48] sm:$0xf]
  %v146 = vld [vmem:[%s1 + $0x4c] sm:$0xf]
  %v147 = vld [vmem:[%s1 + $0x50] sm:$0xf]
  %v148 = vld [vmem:[%s1 + $0x54] sm:$0xf]
  %v149 = vld [vmem:[%s1 + $0x58] sm:$0xf]
  %v150 = vld [vmem:[%s1 + $0x5c] sm:$0xf]
  %v151 = vld [vmem:[%s1 + $0x60] sm:$0xf]
  %v152 = vld [vmem:[%s1 + $0x64] sm:$0xf]
  %v153 = vld [vmem:[%s1 + $0x68] sm:$0xf]
  %v154 = vld [vmem:[%s1 + $0x6c] sm:$0xf]
  %v155 = vld [vmem:[%s1 + $0x70] sm:$0xf]
  %v156 = vld [vmem:[%s1 + $0x74] sm:$0xf]
  %v157 = vld [vmem:[%s1 + $0x78] sm:$0xf]
  %v158 = vld [vmem:[%s1 + $0x7c] sm:$0xf]
  %v159 = vld [vmem:[%s1 + $0x80] sm:$0xf]
  %v160 = vld [vmem:[%s1 + $0x84] sm:$0xf]
  %v161 = vld [vmem:[%s1 + $0x88] sm:$0xf]
  %v162 = vld [vmem:[%s1 + $0x8c] sm:$0xf]
  %v163 = vld [vmem:[%s1 + $0x90] sm:$0xf]
  %v164 = vld [vmem:[%s1 + $0x94] sm:$0xf]
  %v165 = vld [vmem:[%s1 + $0x98] sm:$0xf]
  %v166 = vld [vmem:[%s1 + $0x9c] sm:$0xf]
  %v167 = vld [vmem:[%s1 + $0xa0] sm:$0xf]
  %v168 = vld [vmem:[%s1 + $0xa4] sm:$0xf]
  %v169 = vld [vmem:[%s1 + $0xa8] sm:$0xf]
  %v170 = vld [vmem:[%s1 + $0xac] sm:$0xf]
  %v171 = vld [vmem:[%s1 + $0xb0] sm:$0xf]
  %v172 = vld [vmem:[%s1 + $0xb4] sm:$0xf]
  %v173 = vld [vmem:[%s1 + $0xb8] sm:$0xf]
  %v174 = vld [vmem:[%s1 + $0xbc] sm:$0xf]
  %v175 = vld [vmem:[%s1 + $0xc0] sm:$0xf]
  %v176 = vld [vmem:[%s1 + $0xc4] sm:$0xf]
  %v177 = vld [vmem:[%s1 + $0xc8] sm:$0xf]
  %v178 = vld [vmem:[%s1 + $0xcc] sm:$0xf]
  %v179 = vld [vmem:[%s1 + $0xd0] sm:$0xf]
  %v180 = vld [vmem:[%s1 + $0xd4] sm:$0xf]
  %v181 = vld [vmem:[%s1 + $0xd8] sm:$0xf]
  %v182 = vld [vmem:[%s1 + $0xdc] sm:$0xf]
  %v183 = vld [vmem:[%s1 + $0xe0] sm:$0xf]
  %v184 = vld [vmem:[%s1 + $0xe4] sm:$0xf]
  %v185 = vld [vmem:[%s1 + $0xe8] sm:$0xf]
  %v186 = vld [vmem:[%s1 + $0xec] sm:$0xf]
  %v187 = vld [vmem:[%s1 + $0xf0] sm:$0xf]
  %v188 = vld [vmem:[%s1 + $0xf4] sm:$0xf]
  %v189 = vld [vmem:[%s1 + $0xf8] sm:$0xf]
  %v190 = vld [vmem:[%s1 + $0xfc] sm:$0xf]
  %v191 = vld [vmem:[%s1 + $0x100] sm:$0xf]
  %v192 = vld [vmem:[%s1 + $0x104] sm:$0xf]
  %v193 = vld [vmem:[%s1 + $0x108] sm:$0xf]
  %v194 = vld [vmem:[%s1 + $0x10c] sm:$0xf]
  %v195 = vld [vmem:[%s1 + $0x110] sm:$0xf]
  %v196 = vld [vmem:[%s1 + $0x114] sm:$0xf]
  %v197 = vld [vmem:[%s1 + $0x118] sm:$0xf]
  %v198 = vld [vmem:[%s1 + $0x11c] sm:$0xf]
  %v199 = vld [vmem:[%s1 + $0x120] sm:$0xf]
  %v200 = vld [vmem:[%s1 + $0x124] sm:$0xf]
  %v201 = vld [vmem:[%s1 + $0x128] sm:$0xf]
  %v202 = vld [vmem:[%s1 + $0x12c] sm:$0xf]
  %v203 = vld [vmem:[%s1 + $0x130] sm:$0xf]
  %v204 = vld [vmem:[%s1 + $0x134] sm:$0xf]
  %v205 = vld [vmem:[%s1 + $0x138] sm:$0xf]
  %v206 = vld [vmem:[%s1 + $0x13c] sm:$0xf]
  %v207 = vld [vmem:[%s1 + $0x140] sm:$0xf]
  %v208 = vld [vmem:[%s1 + $0x144] sm:$0xf]
  %v209 = vld [vmem:[%s1 + $0x148] sm:$0xf]
  %v210 = vld [vmem:[%s1 + $0x14c] sm:$0xf]
  %v211 = vld [vmem:[%s1 + $0x150] sm:$0xf]
  %v212 = vld [vmem:[%s1 + $0x154] sm:$0xf]
  %v213 = vld [vmem:[%s1 + $0x158] sm:$0xf]
  %v214 = vld [vmem:[%s1 + $0x15c] sm:$0xf]
  %v215 = vld [vmem:[%s1 + $0x160] sm:$0xf]
  %v216 = vld [vmem:[%s1 + $0x164] sm:$0xf]
  %v217 = vld [vmem:[%s1 + $0x168] sm:$0xf]
  %v218 = vld [vmem:[%s1 + $0x16c] sm:$0xf]
  %v219 = vld [vmem:[%s1 + $0x170] sm:$0xf]
  %v220 = vld [vmem:[%s1 + $0x174] sm:$0xf]
  %v221 = vld [vmem:[%s1 + $0x178] sm:$0xf]
  %v222 = vld [vmem:[%s1 + $0x17c] sm:$0xf]
  %v223 = vld [vmem:[%s1 + $0x180] sm:$0xf]
  %v224 = vld [vmem:[%s1 + $0x184] sm:$0xf]
  %v225 = vld [vmem:[%s1 + $0x188] sm:$0xf]
  %v226 = vld [vmem:[%s1 + $0x18c] sm:$0xf]
  %v227 = vld [vmem:[%s1 + $0x190] sm:$0xf]
  %v228 = vld [vmem:[%s1 + $0x194] sm:$0xf]
  %v229 = vld [vmem:[%s1 + $0x198] sm:$0xf]
  %v230 = vld [vmem:[%s1 + $0x19c] sm:$0xf]
  %v231 = vld [vmem:[%s1 + $0x1a0] sm:$0xf]
  %v232 = vld [vmem:[%s1 + $0x1a4] sm:$0xf]
  %v233 = vld [vmem:[%s1 + $0x1a8] sm:$0xf]
  %v234 = vld [vmem:[%s1 + $0x1ac] sm:$0xf]
  %v235 = vld [vmem:[%s1 + $0x1b0] sm:$0xf]
  %v236 = vld [vmem:[%s1 + $0x1b4] sm:$0xf]
  %v237 = vld [vmem:[%s1 + $0x1b8] sm:$0xf]
  %v238 = vld [vmem:[%s1 + $0x1bc] sm:$0xf]
  %v239 = vld [vmem:[%s1 + $0x1c0] sm:$0xf]
  %v240 = vld [vmem:[%s1 + $0x1c4] sm:$0xf]
  %v241 = vld [vmem:[%s1 + $0x1c8] sm:$0xf]
  %v242 = vld [vmem:[%s1 + $0x1cc] sm:$0xf]
  %v243 = vld [vmem:[%s1 + $0x1d0] sm:$0xf]
  %v244 = vld [vmem:[%s1 + $0x1d4] sm:$0xf]
  %v245 = vld [vmem:[%s1 + $0x1d8] sm:$0xf]
  %v246 = vld [vmem:[%s1 + $0x1dc] sm:$0xf]
  %v247 = vld [vmem:[%s1 + $0x1e0] sm:$0xf]
  %v248 = vld [vmem:[%s1 + $0x1e4] sm:$0xf]
  %v249 = vld [vmem:[%s1 + $0x1e8] sm:$0xf]
  %v250 = vld [vmem:[%s1 + $0x1ec] sm:$0xf]
  %v251 = vld [vmem:[%s1 + $0x1f0] sm:$0xf]
  %v252 = vld [vmem:[%s1 + $0x1f4] sm:$0xf]
  %v253 = vld [vmem:[%s1 + $0x1f8] sm:$0xf]
  %v254 = vld [vmem:[%s1 + $0x1fc] sm:$0xf]
  %v255 = vld [vmem:[%s2] sm:$0x1]
  %v257 = vlaneseq
  %v258 = vshrl.u32 %v257, 7
  %v259 = vsub.s32 0, %v258
  %v260 = vrot.slane %v255, %v259
  %v374 = vunpack.c.l.b16 %v15
  %v375 = vunpack.c.h.b16 %v15
  %v376 = vunpack.c.l.b16 %v16
  %v377 = vunpack.c.h.b16 %v16
  %v378 = vunpack.c.l.b16 %v17
  %v379 = vunpack.c.h.b16 %v17
  %v380 = vunpack.c.l.b16 %v18
  %v381 = vunpack.c.h.b16 %v18
  %v382 = vunpack.c.l.b16 %v19
  %v383 = vunpack.c.h.b16 %v19
  %v384 = vunpack.c.l.b16 %v20
  %v385 = vunpack.c.h.b16 %v20
  %v386 = vunpack.c.l.b16 %v21
  %v387 = vunpack.c.h.b16 %v21
  %v388 = vunpack.c.l.b16 %v22
  %v389 = vunpack.c.h.b16 %v22
  %v390 = vunpack.c.l.b16 %v23
  %v391 = vunpack.c.h.b16 %v23
  %v392 = vunpack.c.l.b16 %v24
  %v393 = vunpack.c.h.b16 %v24
  %v394 = vunpack.c.l.b16 %v25
  %v395 = vunpack.c.h.b16 %v25
  %v396 = vunpack.c.l.b16 %v26
  %v397 = vunpack.c.h.b16 %v26
  %v398 = vunpack.c.l.b16 %v27
  %v399 = vunpack.c.h.b16 %v27
  %v400 = vunpack.c.l.b16 %v28
  %v401 = vunpack.c.h.b16 %v28
  %v402 = vunpack.c.l.b16 %v29
  %v403 = vunpack.c.h.b16 %v29
  %v404 = vunpack.c.l.b16 %v30
  %v405 = vunpack.c.h.b16 %v30
  %v406 = vunpack.c.l.b16 %v31
  %v407 = vunpack.c.h.b16 %v31
  %v408 = vunpack.c.l.b16 %v32
  %v409 = vunpack.c.h.b16 %v32
  %v410 = vunpack.c.l.b16 %v33
  %v411 = vunpack.c.h.b16 %v33
  %v412 = vunpack.c.l.b16 %v34
  %v413 = vunpack.c.h.b16 %v34
  %v414 = vunpack.c.l.b16 %v35
  %v415 = vunpack.c.h.b16 %v35
  %v416 = vunpack.c.l.b16 %v36
  %v417 = vunpack.c.h.b16 %v36
  %v418 = vunpack.c.l.b16 %v37
  %v419 = vunpack.c.h.b16 %v37
  %v420 = vunpack.c.l.b16 %v38
  %v421 = vunpack.c.h.b16 %v38
  %v422 = vunpack.c.l.b16 %v39
  %v423 = vunpack.c.h.b16 %v39
  %v424 = vunpack.c.l.b16 %v40
  %v425 = vunpack.c.h.b16 %v40
  %v426 = vunpack.c.l.b16 %v41
  %v427 = vunpack.c.h.b16 %v41
  %v428 = vunpack.c.l.b16 %v42
  %v429 = vunpack.c.h.b16 %v42
  %v430 = vunpack.c.l.b16 %v43
  %v431 = vunpack.c.h.b16 %v43
  %v432 = vunpack.c.l.b16 %v44
  %v433 = vunpack.c.h.b16 %v44
  %v434 = vunpack.c.l.b16 %v45
  %v435 = vunpack.c.h.b16 %v45
  %v436 = vunpack.c.l.b16 %v46
  %v437 = vunpack.c.h.b16 %v46
  %v438 = vunpack.c.l.b16 %v47
  %v439 = vunpack.c.h.b16 %v47
  %v440 = vunpack.c.l.b16 %v48
  %v441 = vunpack.c.h.b16 %v48
  %v442 = vunpack.c.l.b16 %v49
  %v443 = vunpack.c.h.b16 %v49
  %v444 = vunpack.c.l.b16 %v50
  %v445 = vunpack.c.h.b16 %v50
  %v446 = vunpack.c.l.b16 %v51
  %v447 = vunpack.c.h.b16 %v51
  %v448 = vunpack.c.l.b16 %v52
  %v449 = vunpack.c.h.b16 %v52
  %v450 = vunpack.c.l.b16 %v53
  %v451 = vunpack.c.h.b16 %v53
  %v452 = vunpack.c.l.b16 %v54
  %v453 = vunpack.c.h.b16 %v54
  %v454 = vunpack.c.l.b16 %v55
  %v455 = vunpack.c.h.b16 %v55
  %v456 = vunpack.c.l.b16 %v56
  %v457 = vunpack.c.h.b16 %v56
  %v458 = vunpack.c.l.b16 %v57
  %v459 = vunpack.c.h.b16 %v57
  %v460 = vunpack.c.l.b16 %v58
  %v461 = vunpack.c.h.b16 %v58
  %v462 = vunpack.c.l.b16 %v59
  %v463 = vunpack.c.h.b16 %v59
  %v464 = vunpack.c.l.b16 %v60
  %v465 = vunpack.c.h.b16 %v60
  %v466 = vunpack.c.l.b16 %v61
  %v467 = vunpack.c.h.b16 %v61
  %v468 = vunpack.c.l.b16 %v62
  %v469 = vunpack.c.h.b16 %v62
  %v470 = vunpack.c.l.b16 %v63
  %v471 = vunpack.c.h.b16 %v63
  %v472 = vunpack.c.l.b16 %v64
  %v473 = vunpack.c.h.b16 %v64
  %v474 = vunpack.c.l.b16 %v65
  %v475 = vunpack.c.h.b16 %v65
  %v476 = vunpack.c.l.b16 %v66
  %v477 = vunpack.c.h.b16 %v66
  %v478 = vunpack.c.l.b16 %v67
  %v479 = vunpack.c.h.b16 %v67
  %v480 = vunpack.c.l.b16 %v68
  %v481 = vunpack.c.h.b16 %v68
  %v482 = vunpack.c.l.b16 %v69
  %v483 = vunpack.c.h.b16 %v69
  %v484 = vunpack.c.l.b16 %v70
  %v485 = vunpack.c.h.b16 %v70
  %v486 = vunpack.c.l.b16 %v71
  %v487 = vunpack.c.h.b16 %v71
  %v488 = vunpack.c.l.b16 %v72
  %v489 = vunpack.c.h.b16 %v72
  %v490 = vunpack.c.l.b16 %v73
  %v491 = vunpack.c.h.b16 %v73
  %v492 = vunpack.c.l.b16 %v74
  %v493 = vunpack.c.h.b16 %v74
  %v494 = vunpack.c.l.b16 %v75
  %v495 = vunpack.c.h.b16 %v75
  %v496 = vunpack.c.l.b16 %v76
  %v497 = vunpack.c.h.b16 %v76
  %v498 = vunpack.c.l.b16 %v77
  %v499 = vunpack.c.h.b16 %v77
  %v500 = vunpack.c.l.b16 %v78
  %v501 = vunpack.c.h.b16 %v78
  %v502 = vunpack.c.l.b16 %v79
  %v503 = vunpack.c.h.b16 %v79
  %v504 = vunpack.c.l.b16 %v80
  %v505 = vunpack.c.h.b16 %v80
  %v506 = vunpack.c.l.b16 %v81
  %v507 = vunpack.c.h.b16 %v81
  %v508 = vunpack.c.l.b16 %v82
  %v509 = vunpack.c.h.b16 %v82
  %v510 = vunpack.c.l.b16 %v83
  %v511 = vunpack.c.h.b16 %v83
  %v512 = vunpack.c.l.b16 %v84
  %v513 = vunpack.c.h.b16 %v84
  %v514 = vunpack.c.l.b16 %v85
  %v515 = vunpack.c.h.b16 %v85
  %v516 = vunpack.c.l.b16 %v86
  %v517 = vunpack.c.h.b16 %v86
  %v518 = vunpack.c.l.b16 %v87
  %v519 = vunpack.c.h.b16 %v87
  %v520 = vunpack.c.l.b16 %v88
  %v521 = vunpack.c.h.b16 %v88
  %v522 = vunpack.c.l.b16 %v89
  %v523 = vunpack.c.h.b16 %v89
  %v524 = vunpack.c.l.b16 %v90
  %v525 = vunpack.c.h.b16 %v90
  %v526 = vunpack.c.l.b16 %v91
  %v527 = vunpack.c.h.b16 %v91
  %v528 = vunpack.c.l.b16 %v92
  %v529 = vunpack.c.h.b16 %v92
  %v530 = vunpack.c.l.b16 %v93
  %v531 = vunpack.c.h.b16 %v93
  %v532 = vunpack.c.l.b16 %v94
  %v533 = vunpack.c.h.b16 %v94
  %v534 = vunpack.c.l.b16 %v95
  %v535 = vunpack.c.h.b16 %v95
  %v536 = vunpack.c.l.b16 %v96
  %v537 = vunpack.c.h.b16 %v96
  %v538 = vunpack.c.l.b16 %v97
  %v539 = vunpack.c.h.b16 %v97
  %v540 = vunpack.c.l.b16 %v98
  %v541 = vunpack.c.h.b16 %v98
  %v542 = vunpack.c.l.b16 %v99
  %v543 = vunpack.c.h.b16 %v99
  %v544 = vunpack.c.l.b16 %v100
  %v545 = vunpack.c.h.b16 %v100
  %v546 = vunpack.c.l.b16 %v101
  %v547 = vunpack.c.h.b16 %v101
  %v548 = vunpack.c.l.b16 %v102
  %v549 = vunpack.c.h.b16 %v102
  %v550 = vunpack.c.l.b16 %v103
  %v551 = vunpack.c.h.b16 %v103
  %v552 = vunpack.c.l.b16 %v104
  %v553 = vunpack.c.h.b16 %v104
  %v554 = vunpack.c.l.b16 %v105
  %v555 = vunpack.c.h.b16 %v105
  %v556 = vunpack.c.l.b16 %v106
  %v557 = vunpack.c.h.b16 %v106
  %v558 = vunpack.c.l.b16 %v107
  %v559 = vunpack.c.h.b16 %v107
  %v560 = vunpack.c.l.b16 %v108
  %v561 = vunpack.c.h.b16 %v108
  %v562 = vunpack.c.l.b16 %v109
  %v563 = vunpack.c.h.b16 %v109
  %v564 = vunpack.c.l.b16 %v110
  %v565 = vunpack.c.h.b16 %v110
  %v566 = vunpack.c.l.b16 %v111
  %v567 = vunpack.c.h.b16 %v111
  %v568 = vunpack.c.l.b16 %v112
  %v569 = vunpack.c.h.b16 %v112
  %v570 = vunpack.c.l.b16 %v113
  %v571 = vunpack.c.h.b16 %v113
  %v572 = vunpack.c.l.b16 %v114
  %v573 = vunpack.c.h.b16 %v114
  %v574 = vunpack.c.l.b16 %v115
  %v575 = vunpack.c.h.b16 %v115
  %v576 = vunpack.c.l.b16 %v116
  %v577 = vunpack.c.h.b16 %v116
  %v578 = vunpack.c.l.b16 %v117
  %v579 = vunpack.c.h.b16 %v117
  %v580 = vunpack.c.l.b16 %v118
  %v581 = vunpack.c.h.b16 %v118
  %v582 = vunpack.c.l.b16 %v119
  %v583 = vunpack.c.h.b16 %v119
  %v584 = vunpack.c.l.b16 %v120
  %v585 = vunpack.c.h.b16 %v120
  %v586 = vunpack.c.l.b16 %v121
  %v587 = vunpack.c.h.b16 %v121
  %v588 = vunpack.c.l.b16 %v122
  %v589 = vunpack.c.h.b16 %v122
  %v590 = vunpack.c.l.b16 %v123
  %v591 = vunpack.c.h.b16 %v123
  %v592 = vunpack.c.l.b16 %v124
  %v593 = vunpack.c.h.b16 %v124
  %v594 = vunpack.c.l.b16 %v125
  %v595 = vunpack.c.h.b16 %v125
  %v596 = vunpack.c.l.b16 %v126
  %v597 = vunpack.c.h.b16 %v126
  %v598 = vpack.c.b16 %v382, %v374
  %v599 = vpack.c.b16 %v383, %v375
  %v600 = vpack.c.b16 %v384, %v376
  %v601 = vpack.c.b16 %v385, %v377
  %v602 = vpack.c.b16 %v386, %v378
  %v603 = vpack.c.b16 %v387, %v379
  %v604 = vpack.c.b16 %v388, %v380
  %v605 = vpack.c.b16 %v389, %v381
  %v606 = vpack.c.b16 %v398, %v390
  %v607 = vpack.c.b16 %v399, %v391
  %v608 = vpack.c.b16 %v400, %v392
  %v609 = vpack.c.b16 %v401, %v393
  %v610 = vpack.c.b16 %v402, %v394
  %v611 = vpack.c.b16 %v403, %v395
  %v612 = vpack.c.b16 %v404, %v396
  %v613 = vpack.c.b16 %v405, %v397
  %v614 = vpack.c.b16 %v414, %v406
  %v615 = vpack.c.b16 %v415, %v407
  %v616 = vpack.c.b16 %v416, %v408
  %v617 = vpack.c.b16 %v417, %v409
  %v618 = vpack.c.b16 %v418, %v410
  %v619 = vpack.c.b16 %v419, %v411
  %v620 = vpack.c.b16 %v420, %v412
  %v621 = vpack.c.b16 %v421, %v413
  %v622 = vpack.c.b16 %v430, %v422
  %v623 = vpack.c.b16 %v431, %v423
  %v624 = vpack.c.b16 %v432, %v424
  %v625 = vpack.c.b16 %v433, %v425
  %v626 = vpack.c.b16 %v434, %v426
  %v627 = vpack.c.b16 %v435, %v427
  %v628 = vpack.c.b16 %v436, %v428
  %v629 = vpack.c.b16 %v437, %v429
  %v630 = vpack.c.b16 %v446, %v438
  %v631 = vpack.c.b16 %v447, %v439
  %v632 = vpack.c.b16 %v448, %v440
  %v633 = vpack.c.b16 %v449, %v441
  %v634 = vpack.c.b16 %v450, %v442
  %v635 = vpack.c.b16 %v451, %v443
  %v636 = vpack.c.b16 %v452, %v444
  %v637 = vpack.c.b16 %v453, %v445
  %v638 = vpack.c.b16 %v462, %v454
  %v639 = vpack.c.b16 %v463, %v455
  %v640 = vpack.c.b16 %v464, %v456
  %v641 = vpack.c.b16 %v465, %v457
  %v642 = vpack.c.b16 %v466, %v458
  %v643 = vpack.c.b16 %v467, %v459
  %v644 = vpack.c.b16 %v468, %v460
  %v645 = vpack.c.b16 %v469, %v461
  %v646 = vpack.c.b16 %v478, %v470
  %v647 = vpack.c.b16 %v479, %v471
  %v648 = vpack.c.b16 %v480, %v472
  %v649 = vpack.c.b16 %v481, %v473
  %v650 = vpack.c.b16 %v482, %v474
  %v651 = vpack.c.b16 %v483, %v475
  %v652 = vpack.c.b16 %v484, %v476
  %v653 = vpack.c.b16 %v485, %v477
  %v654 = vpack.c.b16 %v494, %v486
  %v655 = vpack.c.b16 %v495, %v487
  %v656 = vpack.c.b16 %v496, %v488
  %v657 = vpack.c.b16 %v497, %v489
  %v658 = vpack.c.b16 %v498, %v490
  %v659 = vpack.c.b16 %v499, %v491
  %v660 = vpack.c.b16 %v500, %v492
  %v661 = vpack.c.b16 %v501, %v493
  %v662 = vpack.c.b16 %v510, %v502
  %v663 = vpack.c.b16 %v511, %v503
  %v664 = vpack.c.b16 %v512, %v504
  %v665 = vpack.c.b16 %v513, %v505
  %v666 = vpack.c.b16 %v514, %v506
  %v667 = vpack.c.b16 %v515, %v507
  %v668 = vpack.c.b16 %v516, %v508
  %v669 = vpack.c.b16 %v517, %v509
  %v670 = vpack.c.b16 %v526, %v518
  %v671 = vpack.c.b16 %v527, %v519
  %v672 = vpack.c.b16 %v528, %v520
  %v673 = vpack.c.b16 %v529, %v521
  %v674 = vpack.c.b16 %v530, %v522
  %v675 = vpack.c.b16 %v531, %v523
  %v676 = vpack.c.b16 %v532, %v524
  %v677 = vpack.c.b16 %v533, %v525
  %v678 = vpack.c.b16 %v542, %v534
  %v679 = vpack.c.b16 %v543, %v535
  %v680 = vpack.c.b16 %v544, %v536
  %v681 = vpack.c.b16 %v545, %v537
  %v682 = vpack.c.b16 %v546, %v538
  %v683 = vpack.c.b16 %v547, %v539
  %v684 = vpack.c.b16 %v548, %v540
  %v685 = vpack.c.b16 %v549, %v541
  %v686 = vpack.c.b16 %v558, %v550
  %v687 = vpack.c.b16 %v559, %v551
  %v688 = vpack.c.b16 %v560, %v552
  %v689 = vpack.c.b16 %v561, %v553
  %v690 = vpack.c.b16 %v562, %v554
  %v691 = vpack.c.b16 %v563, %v555
  %v692 = vpack.c.b16 %v564, %v556
  %v693 = vpack.c.b16 %v565, %v557
  %v694 = vpack.c.b16 %v574, %v566
  %v695 = vpack.c.b16 %v575, %v567
  %v696 = vpack.c.b16 %v576, %v568
  %v697 = vpack.c.b16 %v577, %v569
  %v698 = vpack.c.b16 %v578, %v570
  %v699 = vpack.c.b16 %v579, %v571
  %v700 = vpack.c.b16 %v580, %v572
  %v701 = vpack.c.b16 %v581, %v573
  %v702 = vpack.c.b16 %v590, %v582
  %v703 = vpack.c.b16 %v591, %v583
  %v704 = vpack.c.b16 %v592, %v584
  %v705 = vpack.c.b16 %v593, %v585
  %v706 = vpack.c.b16 %v594, %v586
  %v707 = vpack.c.b16 %v595, %v587
  %v708 = vpack.c.b16 %v596, %v588
  %v709 = vpack.c.b16 %v597, %v589
  %v950 = vunpack.c.l.b16 %v127
  %v951 = vunpack.c.l.b16 %v128
  %v952 = vunpack.c.l.b16 %v129
  %v953 = vunpack.c.l.b16 %v130
  %v954 = vunpack.c.l.b16 %v131
  %v955 = vunpack.c.l.b16 %v132
  %v956 = vunpack.c.l.b16 %v133
  %v957 = vunpack.c.l.b16 %v134
  %v958 = vunpack.c.l.b16 %v135
  %v959 = vunpack.c.l.b16 %v136
  %v960 = vunpack.c.l.b16 %v137
  %v961 = vunpack.c.l.b16 %v138
  %v962 = vunpack.c.l.b16 %v139
  %v963 = vunpack.c.l.b16 %v140
  %v964 = vunpack.c.l.b16 %v141
  %v965 = vunpack.c.l.b16 %v142
  %v966 = vunpack.c.l.b16 %v143
  %v967 = vunpack.c.l.b16 %v144
  %v968 = vunpack.c.l.b16 %v145
  %v969 = vunpack.c.l.b16 %v146
  %v970 = vunpack.c.l.b16 %v147
  %v971 = vunpack.c.l.b16 %v148
  %v972 = vunpack.c.l.b16 %v149
  %v973 = vunpack.c.l.b16 %v150
  %v974 = vunpack.c.l.b16 %v151
  %v975 = vunpack.c.l.b16 %v152
  %v976 = vunpack.c.l.b16 %v153
  %v977 = vunpack.c.l.b16 %v154
  %v978 = vunpack.c.l.b16 %v155
  %v979 = vunpack.c.l.b16 %v156
  %v980 = vunpack.c.l.b16 %v157
  %v981 = vunpack.c.l.b16 %v158
  %v982 = vunpack.c.l.b16 %v159
  %v983 = vunpack.c.l.b16 %v160
  %v984 = vunpack.c.l.b16 %v161
  %v985 = vunpack.c.l.b16 %v162
  %v986 = vunpack.c.l.b16 %v163
  %v987 = vunpack.c.l.b16 %v164
  %v988 = vunpack.c.l.b16 %v165
  %v989 = vunpack.c.l.b16 %v166
  %v990 = vunpack.c.l.b16 %v167
  %v991 = vunpack.c.l.b16 %v168
  %v992 = vunpack.c.l.b16 %v169
  %v993 = vunpack.c.l.b16 %v170
  %v994 = vunpack.c.l.b16 %v171
  %v995 = vunpack.c.l.b16 %v172
  %v996 = vunpack.c.l.b16 %v173
  %v997 = vunpack.c.l.b16 %v174
  %v998 = vunpack.c.l.b16 %v175
  %v999 = vunpack.c.l.b16 %v176
  %v1000 = vunpack.c.l.b16 %v177
  %v1001 = vunpack.c.l.b16 %v178
  %v1002 = vunpack.c.l.b16 %v179
  %v1003 = vunpack.c.l.b16 %v180
  %v1004 = vunpack.c.l.b16 %v181
  %v1005 = vunpack.c.l.b16 %v182
  %v1006 = vunpack.c.l.b16 %v183
  %v1007 = vunpack.c.l.b16 %v184
  %v1008 = vunpack.c.l.b16 %v185
  %v1009 = vunpack.c.l.b16 %v186
  %v1010 = vunpack.c.l.b16 %v187
  %v1011 = vunpack.c.l.b16 %v188
  %v1012 = vunpack.c.l.b16 %v189
  %v1013 = vunpack.c.l.b16 %v190
  %v1014 = vunpack.c.l.b16 %v191
  %v1015 = vunpack.c.l.b16 %v192
  %v1016 = vunpack.c.l.b16 %v193
  %v1017 = vunpack.c.l.b16 %v194
  %v1018 = vunpack.c.l.b16 %v195
  %v1019 = vunpack.c.l.b16 %v196
  %v1020 = vunpack.c.l.b16 %v197
  %v1021 = vunpack.c.l.b16 %v198
  %v1022 = vunpack.c.l.b16 %v199
  %v1023 = vunpack.c.l.b16 %v200
  %v1024 = vunpack.c.l.b16 %v201
  %v1025 = vunpack.c.l.b16 %v202
  %v1026 = vunpack.c.l.b16 %v203
  %v1027 = vunpack.c.l.b16 %v204
  %v1028 = vunpack.c.l.b16 %v205
  %v1029 = vunpack.c.l.b16 %v206
  %v1030 = vunpack.c.l.b16 %v207
  %v1031 = vunpack.c.l.b16 %v208
  %v1032 = vunpack.c.l.b16 %v209
  %v1033 = vunpack.c.l.b16 %v210
  %v1034 = vunpack.c.l.b16 %v211
  %v1035 = vunpack.c.l.b16 %v212
  %v1036 = vunpack.c.l.b16 %v213
  %v1037 = vunpack.c.l.b16 %v214
  %v1038 = vunpack.c.l.b16 %v215
  %v1039 = vunpack.c.l.b16 %v216
  %v1040 = vunpack.c.l.b16 %v217
  %v1041 = vunpack.c.l.b16 %v218
  %v1042 = vunpack.c.l.b16 %v219
  %v1043 = vunpack.c.l.b16 %v220
  %v1044 = vunpack.c.l.b16 %v221
  %v1045 = vunpack.c.l.b16 %v222
  %v1046 = vunpack.c.l.b16 %v223
  %v1047 = vunpack.c.l.b16 %v224
  %v1048 = vunpack.c.l.b16 %v225
  %v1049 = vunpack.c.l.b16 %v226
  %v1050 = vunpack.c.l.b16 %v227
  %v1051 = vunpack.c.l.b16 %v228
  %v1052 = vunpack.c.l.b16 %v229
  %v1053 = vunpack.c.l.b16 %v230
  %v1054 = vunpack.c.l.b16 %v231
  %v1055 = vunpack.c.l.b16 %v232
  %v1056 = vunpack.c.l.b16 %v233
  %v1057 = vunpack.c.l.b16 %v234
  %v1058 = vunpack.c.l.b16 %v235
  %v1059 = vunpack.c.l.b16 %v236
  %v1060 = vunpack.c.l.b16 %v237
  %v1061 = vunpack.c.l.b16 %v238
  %v1062 = vunpack.c.l.b16 %v239
  %v1063 = vunpack.c.l.b16 %v240
  %v1064 = vunpack.c.l.b16 %v241
  %v1065 = vunpack.c.l.b16 %v242
  %v1066 = vunpack.c.l.b16 %v243
  %v1067 = vunpack.c.l.b16 %v244
  %v1068 = vunpack.c.l.b16 %v245
  %v1069 = vunpack.c.l.b16 %v246
  %v1070 = vunpack.c.l.b16 %v247
  %v1071 = vunpack.c.l.b16 %v248
  %v1072 = vunpack.c.l.b16 %v249
  %v1073 = vunpack.c.l.b16 %v250
  %v1074 = vunpack.c.l.b16 %v251
  %v1075 = vunpack.c.l.b16 %v252
  %v1076 = vunpack.c.l.b16 %v253
  %v1077 = vunpack.c.l.b16 %v254
  %v1078 = vpack.c.b16 %v951, %v950
  %v1079 = vpack.c.b16 %v953, %v952
  %v1080 = vpack.c.b16 %v955, %v954
  %v1081 = vpack.c.b16 %v957, %v956
  %v1082 = vpack.c.b16 %v959, %v958
  %v1083 = vpack.c.b16 %v961, %v960
  %v1084 = vpack.c.b16 %v963, %v962
  %v1085 = vpack.c.b16 %v965, %v964
  %v1086 = vpack.c.b16 %v967, %v966
  %v1087 = vpack.c.b16 %v969, %v968
  %v1088 = vpack.c.b16 %v971, %v970
  %v1089 = vpack.c.b16 %v973, %v972
  %v1090 = vpack.c.b16 %v975, %v974
  %v1091 = vpack.c.b16 %v977, %v976
  %v1092 = vpack.c.b16 %v979, %v978
  %v1093 = vpack.c.b16 %v981, %v980
  %v1094 = vpack.c.b16 %v983, %v982
  %v1095 = vpack.c.b16 %v985, %v984
  %v1096 = vpack.c.b16 %v987, %v986
  %v1097 = vpack.c.b16 %v989, %v988
  %v1098 = vpack.c.b16 %v991, %v990
  %v1099 = vpack.c.b16 %v993, %v992
  %v1100 = vpack.c.b16 %v995, %v994
  %v1101 = vpack.c.b16 %v997, %v996
  %v1102 = vpack.c.b16 %v999, %v998
  %v1103 = vpack.c.b16 %v1001, %v1000
  %v1104 = vpack.c.b16 %v1003, %v1002
  %v1105 = vpack.c.b16 %v1005, %v1004
  %v1106 = vpack.c.b16 %v1007, %v1006
  %v1107 = vpack.c.b16 %v1009, %v1008
  %v1108 = vpack.c.b16 %v1011, %v1010
  %v1109 = vpack.c.b16 %v1013, %v1012
  %v1110 = vpack.c.b16 %v1015, %v1014
  %v1111 = vpack.c.b16 %v1017, %v1016
  %v1112 = vpack.c.b16 %v1019, %v1018
  %v1113 = vpack.c.b16 %v1021, %v1020
  %v1114 = vpack.c.b16 %v1023, %v1022
  %v1115 = vpack.c.b16 %v1025, %v1024
  %v1116 = vpack.c.b16 %v1027, %v1026
  %v1117 = vpack.c.b16 %v1029, %v1028
  %v1118 = vpack.c.b16 %v1031, %v1030
  %v1119 = vpack.c.b16 %v1033, %v1032
  %v1120 = vpack.c.b16 %v1035, %v1034
  %v1121 = vpack.c.b16 %v1037, %v1036
  %v1122 = vpack.c.b16 %v1039, %v1038
  %v1123 = vpack.c.b16 %v1041, %v1040
  %v1124 = vpack.c.b16 %v1043, %v1042
  %v1125 = vpack.c.b16 %v1045, %v1044
  %v1126 = vpack.c.b16 %v1047, %v1046
  %v1127 = vpack.c.b16 %v1049, %v1048
  %v1128 = vpack.c.b16 %v1051, %v1050
  %v1129 = vpack.c.b16 %v1053, %v1052
  %v1130 = vpack.c.b16 %v1055, %v1054
  %v1131 = vpack.c.b16 %v1057, %v1056
  %v1132 = vpack.c.b16 %v1059, %v1058
  %v1133 = vpack.c.b16 %v1061, %v1060
  %v1134 = vpack.c.b16 %v1063, %v1062
  %v1135 = vpack.c.b16 %v1065, %v1064
  %v1136 = vpack.c.b16 %v1067, %v1066
  %v1137 = vpack.c.b16 %v1069, %v1068
  %v1138 = vpack.c.b16 %v1071, %v1070
  %v1139 = vpack.c.b16 %v1073, %v1072
  %v1140 = vpack.c.b16 %v1075, %v1074
  %v1141 = vpack.c.b16 %v1077, %v1076
  %1206 = vmatprep.subr.bf16.mxu0 0
  %1207 = vmatpush1.bf16.msra.mxu0 %v1078
  %1208 = vmatprep.subr.bf16.mxu0 0
  %1209 = vmatpush1.bf16.msra.mxu0 %v1079
  %1210 = vmatprep.subr.bf16.mxu0 0
  %1211 = vmatpush1.bf16.msra.mxu0 %v1080
  %1212 = vmatprep.subr.bf16.mxu0 0
  %1213 = vmatpush1.bf16.msra.mxu0 %v1081
  %1214 = vmatprep.subr.bf16.mxu0 0
  %1215 = vmatpush1.bf16.msra.mxu0 %v1082
  %1216 = vmatprep.subr.bf16.mxu0 0
  %1217 = vmatpush1.bf16.msra.mxu0 %v1083
  %1218 = vmatprep.subr.bf16.mxu0 0
  %1219 = vmatpush1.bf16.msra.mxu0 %v1084
  %1220 = vmatprep.subr.bf16.mxu0 0
  %1221 = vmatpush1.bf16.msra.mxu0 %v1085
  %1222 = vmatprep.subr.bf16.mxu0 0
  %1223 = vmatpush1.bf16.msra.mxu0 %v1086
  %1224 = vmatprep.subr.bf16.mxu0 0
  %1225 = vmatpush1.bf16.msra.mxu0 %v1087
  %1226 = vmatprep.subr.bf16.mxu0 0
  %1227 = vmatpush1.bf16.msra.mxu0 %v1088
  %1228 = vmatprep.subr.bf16.mxu0 0
  %1229 = vmatpush1.bf16.msra.mxu0 %v1089
  %1230 = vmatprep.subr.bf16.mxu0 0
  %1231 = vmatpush1.bf16.msra.mxu0 %v1090
  %1232 = vmatprep.subr.bf16.mxu0 0
  %1233 = vmatpush1.bf16.msra.mxu0 %v1091
  %1234 = vmatprep.subr.bf16.mxu0 0
  %1235 = vmatpush1.bf16.msra.mxu0 %v1092
  %1236 = vmatprep.subr.bf16.mxu0 0
  %1237 = vmatpush1.bf16.msra.mxu0 %v1093
  %1238 = vmatprep.mubr.bf16.mxu0 %v599
  %1239 = vmatmul.mubr.bf16.gmra.mrb[0].mxu0 %v598
  %v1240 = vpop.f32.mrb[0].mxu0
  %v1241 = vadd.f32 %v260, %v1240
  %v1242 = vpop.f32.mrb[0].mxu0
  %v1243 = vpop.f32.mrb[0].mxu0
  %v1244 = vadd.f32 %v260, %v1243
  %v1245 = vpop.f32.mrb[0].mxu0
  %1246 = vmatprep.mubr.bf16.mxu0 %v607
  %1247 = vmatmul.mubr.bf16.gmra.mrb[0].mxu0 %v606
  %v1248 = vpop.f32.mrb[0].mxu0
  %v1249 = vadd.f32 %v260, %v1248
  %v1250 = vpop.f32.mrb[0].mxu0
  %v1251 = vpop.f32.mrb[0].mxu0
  %v1252 = vadd.f32 %v260, %v1251
  %v1253 = vpop.f32.mrb[0].mxu0
  %1254 = vmatprep.mubr.bf16.mxu0 %v615
  %1255 = vmatmul.mubr.bf16.gmra.mrb[0].mxu0 %v614
  %v1256 = vpop.f32.mrb[0].mxu0
  %v1257 = vadd.f32 %v260, %v1256
  %v1258 = vpop.f32.mrb[0].mxu0
  %v1259 = vpop.f32.mrb[0].mxu0
  %v1260 = vadd.f32 %v260, %v1259
  %v1261 = vpop.f32.mrb[0].mxu0
  %1262 = vmatprep.mubr.bf16.mxu0 %v623
  %1263 = vmatmul.mubr.bf16.gmra.mrb[0].mxu0 %v622
  %v1264 = vpop.f32.mrb[0].mxu0
  %v1265 = vadd.f32 %v260, %v1264
  %v1266 = vpop.f32.mrb[0].mxu0
  %v1267 = vpop.f32.mrb[0].mxu0
  %v1268 = vadd.f32 %v260, %v1267
  %v1269 = vpop.f32.mrb[0].mxu0
  %1270 = vmatprep.mubr.bf16.mxu0 %v631
  %1271 = vmatmul.mubr.bf16.gmra.mrb[0].mxu0 %v630
  %v1272 = vpop.f32.mrb[0].mxu0
  %v1273 = vadd.f32 %v260, %v1272
  %v1274 = vpop.f32.mrb[0].mxu0
  %v1275 = vpop.f32.mrb[0].mxu0
  %v1276 = vadd.f32 %v260, %v1275
  %v1277 = vpop.f32.mrb[0].mxu0
  %1278 = vmatprep.mubr.bf16.mxu0 %v639
  %1279 = vmatmul.mubr.bf16.gmra.mrb[0].mxu0 %v638
  %v1280 = vpop.f32.mrb[0].mxu0
  %v1281 = vadd.f32 %v260, %v1280
  %v1282 = vpop.f32.mrb[0].mxu0
  %v1283 = vpop.f32.mrb[0].mxu0
  %v1284 = vadd.f32 %v260, %v1283
  %v1285 = vpop.f32.mrb[0].mxu0
  %1286 = vmatprep.mubr.bf16.mxu0 %v647
  %1287 = vmatmul.mubr.bf16.gmra.mrb[0].mxu0 %v646
  %v1288 = vpop.f32.mrb[0].mxu0
  %v1289 = vadd.f32 %v260, %v1288
  %v1290 = vpop.f32.mrb[0].mxu0
  %v1291 = vpop.f32.mrb[0].mxu0
  %v1292 = vadd.f32 %v260, %v1291
  %v1293 = vpop.f32.mrb[0].mxu0
  %1294 = vmatprep.mubr.bf16.mxu0 %v655
  %1295 = vmatmul.mubr.bf16.gmra.mrb[0].mxu0 %v654
  %v1296 = vpop.f32.mrb[0].mxu0
  %v1297 = vadd.f32 %v260, %v1296
  %v1298 = vpop.f32.mrb[0].mxu0
  %v1299 = vpop.f32.mrb[0].mxu0
  %v1300 = vadd.f32 %v260, %v1299
  %v1301 = vpop.f32.mrb[0].mxu0
  %1302 = vmatprep.mubr.bf16.mxu0 %v663
  %1303 = vmatmul.mubr.bf16.gmra.mrb[0].mxu0 %v662
  %v1304 = vpop.f32.mrb[0].mxu0
  %v1305 = vadd.f32 %v260, %v1304
  %v1306 = vpop.f32.mrb[0].mxu0
  %v1307 = vpop.f32.mrb[0].mxu0
  %v1308 = vadd.f32 %v260, %v1307
  %v1309 = vpop.f32.mrb[0].mxu0
  %1310 = vmatprep.mubr.bf16.mxu0 %v671
  %1311 = vmatmul.mubr.bf16.gmra.mrb[0].mxu0 %v670
  %v1312 = vpop.f32.mrb[0].mxu0
  %v1313 = vadd.f32 %v260, %v1312
  %v1314 = vpop.f32.mrb[0].mxu0
  %v1315 = vpop.f32.mrb[0].mxu0
  %v1316 = vadd.f32 %v260, %v1315
  %v1317 = vpop.f32.mrb[0].mxu0
  %1318 = vmatprep.mubr.bf16.mxu0 %v679
  %1319 = vmatmul.mubr.bf16.gmra.mrb[0].mxu0 %v678
  %v1320 = vpop.f32.mrb[0].mxu0
  %v1321 = vadd.f32 %v260, %v1320
  %v1322 = vpop.f32.mrb[0].mxu0
  %v1323 = vpop.f32.mrb[0].mxu0
  %v1324 = vadd.f32 %v260, %v1323
  %v1325 = vpop.f32.mrb[0].mxu0
  %1326 = vmatprep.mubr.bf16.mxu0 %v687
  %1327 = vmatmul.mubr.bf16.gmra.mrb[0].mxu0 %v686
  %v1328 = vpop.f32.mrb[0].mxu0
  %v1329 = vadd.f32 %v260, %v1328
  %v1330 = vpop.f32.mrb[0].mxu0
  %v1331 = vpop.f32.mrb[0].mxu0
  %v1332 = vadd.f32 %v260, %v1331
  %v1333 = vpop.f32.mrb[0].mxu0
  %1334 = vmatprep.mubr.bf16.mxu0 %v695
  %1335 = vmatmul.mubr.bf16.gmra.mrb[0].mxu0 %v694
  %v1336 = vpop.f32.mrb[0].mxu0
  %v1337 = vadd.f32 %v260, %v1336
  %v1338 = vpop.f32.mrb[0].mxu0
  %v1339 = vpop.f32.mrb[0].mxu0
  %v1340 = vadd.f32 %v260, %v1339
  %v1341 = vpop.f32.mrb[0].mxu0
  %1342 = vmatprep.mubr.bf16.mxu0 %v703
  %1343 = vmatmul.mubr.bf16.gmra.mrb[0].mxu0 %v702
  %v1344 = vpop.f32.mrb[0].mxu0
  %v1345 = vadd.f32 %v260, %v1344
  %v1346 = vpop.f32.mrb[0].mxu0
  %v1347 = vpop.f32.mrb[0].mxu0
  %v1348 = vadd.f32 %v260, %v1347
  %v1349 = vpop.f32.mrb[0].mxu0
  %1350 = vdwg.mxu0
  %1351 = vmatprep.subr.bf16.mxu0 0
  %1352 = vmatpush1.bf16.msra.mxu0 %v1094
  %1353 = vmatprep.subr.bf16.mxu0 0
  %1354 = vmatpush1.bf16.msra.mxu0 %v1095
  %1355 = vmatprep.subr.bf16.mxu0 0
  %1356 = vmatpush1.bf16.msra.mxu0 %v1096
  %1357 = vmatprep.subr.bf16.mxu0 0
  %1358 = vmatpush1.bf16.msra.mxu0 %v1097
  %1359 = vmatprep.subr.bf16.mxu0 0
  %1360 = vmatpush1.bf16.msra.mxu0 %v1098
  %1361 = vmatprep.subr.bf16.mxu0 0
  %1362 = vmatpush1.bf16.msra.mxu0 %v1099
  %1363 = vmatprep.subr.bf16.mxu0 0
  %1364 = vmatpush1.bf16.msra.mxu0 %v1100
  %1365 = vmatprep.subr.bf16.mxu0 0
  %1366 = vmatpush1.bf16.msra.mxu0 %v1101
  %1367 = vmatprep.subr.bf16.mxu0 0
  %1368 = vmatpush1.bf16.msra.mxu0 %v1102
  %1369 = vmatprep.subr.bf16.mxu0 0
  %1370 = vmatpush1.bf16.msra.mxu0 %v1103
  %1371 = vmatprep.subr.bf16.mxu0 0
  %1372 = vmatpush1.bf16.msra.mxu0 %v1104
  %1373 = vmatprep.subr.bf16.mxu0 0
  %1374 = vmatpush1.bf16.msra.mxu0 %v1105
  %1375 = vmatprep.subr.bf16.mxu0 0
  %1376 = vmatpush1.bf16.msra.mxu0 %v1106
  %1377 = vmatprep.subr.bf16.mxu0 0
  %1378 = vmatpush1.bf16.msra.mxu0 %v1107
  %1379 = vmatprep.subr.bf16.mxu0 0
  %1380 = vmatpush1.bf16.msra.mxu0 %v1108
  %1381 = vmatprep.subr.bf16.mxu0 0
  %1382 = vmatpush1.bf16.msra.mxu0 %v1109
  %1383 = vmatprep.mubr.bf16.mxu0 %v601
  %1384 = vmatmul.mubr.bf16.gmra.mrb[0].mxu0 %v600
  %v1385 = vpop.f32.mrb[0].mxu0
  %v1386 = vadd.f32 %v1241, %v1385
  %v1387 = vpop.f32.mrb[0].mxu0
  %v1388 = vpop.f32.mrb[0].mxu0
  %v1389 = vadd.f32 %v1244, %v1388
  %v1390 = vpop.f32.mrb[0].mxu0
  %1391 = vmatprep.mubr.bf16.mxu0 %v609
  %1392 = vmatmul.mubr.bf16.gmra.mrb[0].mxu0 %v608
  %v1393 = vpop.f32.mrb[0].mxu0
  %v1394 = vadd.f32 %v1249, %v1393
  %v1395 = vpop.f32.mrb[0].mxu0
  %v1396 = vpop.f32.mrb[0].mxu0
  %v1397 = vadd.f32 %v1252, %v1396
  %v1398 = vpop.f32.mrb[0].mxu0
  %1399 = vmatprep.mubr.bf16.mxu0 %v617
  %1400 = vmatmul.mubr.bf16.gmra.mrb[0].mxu0 %v616
  %v1401 = vpop.f32.mrb[0].mxu0
  %v1402 = vadd.f32 %v1257, %v1401
  %v1403 = vpop.f32.mrb[0].mxu0
  %v1404 = vpop.f32.mrb[0].mxu0
  %v1405 = vadd.f32 %v1260, %v1404
  %v1406 = vpop.f32.mrb[0].mxu0
  %1407 = vmatprep.mubr.bf16.mxu0 %v625
  %1408 = vmatmul.mubr.bf16.gmra.mrb[0].mxu0 %v624
  %v1409 = vpop.f32.mrb[0].mxu0
  %v1410 = vadd.f32 %v1265, %v1409
  %v1411 = vpop.f32.mrb[0].mxu0
  %v1412 = vpop.f32.mrb[0].mxu0
  %v1413 = vadd.f32 %v1268, %v1412
  %v1414 = vpop.f32.mrb[0].mxu0
  %1415 = vmatprep.mubr.bf16.mxu0 %v633
  %1416 = vmatmul.mubr.bf16.gmra.mrb[0].mxu0 %v632
  %v1417 = vpop.f32.mrb[0].mxu0
  %v1418 = vadd.f32 %v1273, %v1417
  %v1419 = vpop.f32.mrb[0].mxu0
  %v1420 = vpop.f32.mrb[0].mxu0
  %v1421 = vadd.f32 %v1276, %v1420
  %v1422 = vpop.f32.mrb[0].mxu0
  %1423 = vmatprep.mubr.bf16.mxu0 %v641
  %1424 = vmatmul.mubr.bf16.gmra.mrb[0].mxu0 %v640
  %v1425 = vpop.f32.mrb[0].mxu0
  %v1426 = vadd.f32 %v1281, %v1425
  %v1427 = vpop.f32.mrb[0].mxu0
  %v1428 = vpop.f32.mrb[0].mxu0
  %v1429 = vadd.f32 %v1284, %v1428
  %v1430 = vpop.f32.mrb[0].mxu0
  %1431 = vmatprep.mubr.bf16.mxu0 %v649
  %1432 = vmatmul.mubr.bf16.gmra.mrb[0].mxu0 %v648
  %v1433 = vpop.f32.mrb[0].mxu0
  %v1434 = vadd.f32 %v1289, %v1433
  %v1435 = vpop.f32.mrb[0].mxu0
  %v1436 = vpop.f32.mrb[0].mxu0
  %v1437 = vadd.f32 %v1292, %v1436
  %v1438 = vpop.f32.mrb[0].mxu0
  %1439 = vmatprep.mubr.bf16.mxu0 %v657
  %1440 = vmatmul.mubr.bf16.gmra.mrb[0].mxu0 %v656
  %v1441 = vpop.f32.mrb[0].mxu0
  %v1442 = vadd.f32 %v1297, %v1441
  %v1443 = vpop.f32.mrb[0].mxu0
  %v1444 = vpop.f32.mrb[0].mxu0
  %v1445 = vadd.f32 %v1300, %v1444
  %v1446 = vpop.f32.mrb[0].mxu0
  %1447 = vmatprep.mubr.bf16.mxu0 %v665
  %1448 = vmatmul.mubr.bf16.gmra.mrb[0].mxu0 %v664
  %v1449 = vpop.f32.mrb[0].mxu0
  %v1450 = vadd.f32 %v1305, %v1449
  %v1451 = vpop.f32.mrb[0].mxu0
  %v1452 = vpop.f32.mrb[0].mxu0
  %v1453 = vadd.f32 %v1308, %v1452
  %v1454 = vpop.f32.mrb[0].mxu0
  %1455 = vmatprep.mubr.bf16.mxu0 %v673
  %1456 = vmatmul.mubr.bf16.gmra.mrb[0].mxu0 %v672
  %v1457 = vpop.f32.mrb[0].mxu0
  %v1458 = vadd.f32 %v1313, %v1457
  %v1459 = vpop.f32.mrb[0].mxu0
  %v1460 = vpop.f32.mrb[0].mxu0
  %v1461 = vadd.f32 %v1316, %v1460
  %v1462 = vpop.f32.mrb[0].mxu0
  %1463 = vmatprep.mubr.bf16.mxu0 %v681
  %1464 = vmatmul.mubr.bf16.gmra.mrb[0].mxu0 %v680
  %v1465 = vpop.f32.mrb[0].mxu0
  %v1466 = vadd.f32 %v1321, %v1465
  %v1467 = vpop.f32.mrb[0].mxu0
  %v1468 = vpop.f32.mrb[0].mxu0
  %v1469 = vadd.f32 %v1324, %v1468
  %v1470 = vpop.f32.mrb[0].mxu0
  %1471 = vmatprep.mubr.bf16.mxu0 %v689
  %1472 = vmatmul.mubr.bf16.gmra.mrb[0].mxu0 %v688
  %v1473 = vpop.f32.mrb[0].mxu0
  %v1474 = vadd.f32 %v1329, %v1473
  %v1475 = vpop.f32.mrb[0].mxu0
  %v1476 = vpop.f32.mrb[0].mxu0
  %v1477 = vadd.f32 %v1332, %v1476
  %v1478 = vpop.f32.mrb[0].mxu0
  %1479 = vmatprep.mubr.bf16.mxu0 %v697
  %1480 = vmatmul.mubr.bf16.gmra.mrb[0].mxu0 %v696
  %v1481 = vpop.f32.mrb[0].mxu0
  %v1482 = vadd.f32 %v1337, %v1481
  %v1483 = vpop.f32.mrb[0].mxu0
  %v1484 = vpop.f32.mrb[0].mxu0
  %v1485 = vadd.f32 %v1340, %v1484
  %v1486 = vpop.f32.mrb[0].mxu0
  %1487 = vmatprep.mubr.bf16.mxu0 %v705
  %1488 = vmatmul.mubr.bf16.gmra.mrb[0].mxu0 %v704
  %v1489 = vpop.f32.mrb[0].mxu0
  %v1490 = vadd.f32 %v1345, %v1489
  %v1491 = vpop.f32.mrb[0].mxu0
  %v1492 = vpop.f32.mrb[0].mxu0
  %v1493 = vadd.f32 %v1348, %v1492
  %v1494 = vpop.f32.mrb[0].mxu0
  %1495 = vdwg.mxu0
  %1496 = vmatprep.subr.bf16.mxu0 0
  %1497 = vmatpush1.bf16.msra.mxu0 %v1110
  %1498 = vmatprep.subr.bf16.mxu0 0
  %1499 = vmatpush1.bf16.msra.mxu0 %v1111
  %1500 = vmatprep.subr.bf16.mxu0 0
  %1501 = vmatpush1.bf16.msra.mxu0 %v1112
  %1502 = vmatprep.subr.bf16.mxu0 0
  %1503 = vmatpush1.bf16.msra.mxu0 %v1113
  %1504 = vmatprep.subr.bf16.mxu0 0
  %1505 = vmatpush1.bf16.msra.mxu0 %v1114
  %1506 = vmatprep.subr.bf16.mxu0 0
  %1507 = vmatpush1.bf16.msra.mxu0 %v1115
  %1508 = vmatprep.subr.bf16.mxu0 0
  %1509 = vmatpush1.bf16.msra.mxu0 %v1116
  %1510 = vmatprep.subr.bf16.mxu0 0
  %1511 = vmatpush1.bf16.msra.mxu0 %v1117
  %1512 = vmatprep.subr.bf16.mxu0 0
  %1513 = vmatpush1.bf16.msra.mxu0 %v1118
  %1514 = vmatprep.subr.bf16.mxu0 0
  %1515 = vmatpush1.bf16.msra.mxu0 %v1119
  %1516 = vmatprep.subr.bf16.mxu0 0
  %1517 = vmatpush1.bf16.msra.mxu0 %v1120
  %1518 = vmatprep.subr.bf16.mxu0 0
  %1519 = vmatpush1.bf16.msra.mxu0 %v1121
  %1520 = vmatprep.subr.bf16.mxu0 0
  %1521 = vmatpush1.bf16.msra.mxu0 %v1122
  %1522 = vmatprep.subr.bf16.mxu0 0
  %1523 = vmatpush1.bf16.msra.mxu0 %v1123
  %1524 = vmatprep.subr.bf16.mxu0 0
  %1525 = vmatpush1.bf16.msra.mxu0 %v1124
  %1526 = vmatprep.subr.bf16.mxu0 0
  %1527 = vmatpush1.bf16.msra.mxu0 %v1125
  %1528 = vmatprep.mubr.bf16.mxu0 %v603
  %1529 = vmatmul.mubr.bf16.gmra.mrb[0].mxu0 %v602
  %v1530 = vpop.f32.mrb[0].mxu0
  %v1531 = vadd.f32 %v1386, %v1530
  %v1532 = vpop.f32.mrb[0].mxu0
  %v1533 = vpop.f32.mrb[0].mxu0
  %v1534 = vadd.f32 %v1389, %v1533
  %v1535 = vpop.f32.mrb[0].mxu0
  %1536 = vmatprep.mubr.bf16.mxu0 %v611
  %1537 = vmatmul.mubr.bf16.gmra.mrb[0].mxu0 %v610
  %v1538 = vpop.f32.mrb[0].mxu0
  %v1539 = vadd.f32 %v1394, %v1538
  %v1540 = vpop.f32.mrb[0].mxu0
  %v1541 = vpop.f32.mrb[0].mxu0
  %v1542 = vadd.f32 %v1397, %v1541
  %v1543 = vpop.f32.mrb[0].mxu0
  %1544 = vmatprep.mubr.bf16.mxu0 %v619
  %1545 = vmatmul.mubr.bf16.gmra.mrb[0].mxu0 %v618
  %v1546 = vpop.f32.mrb[0].mxu0
  %v1547 = vadd.f32 %v1402, %v1546
  %v1548 = vpop.f32.mrb[0].mxu0
  %v1549 = vpop.f32.mrb[0].mxu0
  %v1550 = vadd.f32 %v1405, %v1549
  %v1551 = vpop.f32.mrb[0].mxu0
  %1552 = vmatprep.mubr.bf16.mxu0 %v627
  %1553 = vmatmul.mubr.bf16.gmra.mrb[0].mxu0 %v626
  %v1554 = vpop.f32.mrb[0].mxu0
  %v1555 = vadd.f32 %v1410, %v1554
  %v1556 = vpop.f32.mrb[0].mxu0
  %v1557 = vpop.f32.mrb[0].mxu0
  %v1558 = vadd.f32 %v1413, %v1557
  %v1559 = vpop.f32.mrb[0].mxu0
  %1560 = vmatprep.mubr.bf16.mxu0 %v635
  %1561 = vmatmul.mubr.bf16.gmra.mrb[0].mxu0 %v634
  %v1562 = vpop.f32.mrb[0].mxu0
  %v1563 = vadd.f32 %v1418, %v1562
  %v1564 = vpop.f32.mrb[0].mxu0
  %v1565 = vpop.f32.mrb[0].mxu0
  %v1566 = vadd.f32 %v1421, %v1565
  %v1567 = vpop.f32.mrb[0].mxu0
  %1568 = vmatprep.mubr.bf16.mxu0 %v643
  %1569 = vmatmul.mubr.bf16.gmra.mrb[0].mxu0 %v642
  %v1570 = vpop.f32.mrb[0].mxu0
  %v1571 = vadd.f32 %v1426, %v1570
  %v1572 = vpop.f32.mrb[0].mxu0
  %v1573 = vpop.f32.mrb[0].mxu0
  %v1574 = vadd.f32 %v1429, %v1573
  %v1575 = vpop.f32.mrb[0].mxu0
  %1576 = vmatprep.mubr.bf16.mxu0 %v651
  %1577 = vmatmul.mubr.bf16.gmra.mrb[0].mxu0 %v650
  %v1578 = vpop.f32.mrb[0].mxu0
  %v1579 = vadd.f32 %v1434, %v1578
  %v1580 = vpop.f32.mrb[0].mxu0
  %v1581 = vpop.f32.mrb[0].mxu0
  %v1582 = vadd.f32 %v1437, %v1581
  %v1583 = vpop.f32.mrb[0].mxu0
  %1584 = vmatprep.mubr.bf16.mxu0 %v659
  %1585 = vmatmul.mubr.bf16.gmra.mrb[0].mxu0 %v658
  %v1586 = vpop.f32.mrb[0].mxu0
  %v1587 = vadd.f32 %v1442, %v1586
  %v1588 = vpop.f32.mrb[0].mxu0
  %v1589 = vpop.f32.mrb[0].mxu0
  %v1590 = vadd.f32 %v1445, %v1589
  %v1591 = vpop.f32.mrb[0].mxu0
  %1592 = vmatprep.mubr.bf16.mxu0 %v667
  %1593 = vmatmul.mubr.bf16.gmra.mrb[0].mxu0 %v666
  %v1594 = vpop.f32.mrb[0].mxu0
  %v1595 = vadd.f32 %v1450, %v1594
  %v1596 = vpop.f32.mrb[0].mxu0
  %v1597 = vpop.f32.mrb[0].mxu0
  %v1598 = vadd.f32 %v1453, %v1597
  %v1599 = vpop.f32.mrb[0].mxu0
  %1600 = vmatprep.mubr.bf16.mxu0 %v675
  %1601 = vmatmul.mubr.bf16.gmra.mrb[0].mxu0 %v674
  %v1602 = vpop.f32.mrb[0].mxu0
  %v1603 = vadd.f32 %v1458, %v1602
  %v1604 = vpop.f32.mrb[0].mxu0
  %v1605 = vpop.f32.mrb[0].mxu0
  %v1606 = vadd.f32 %v1461, %v1605
  %v1607 = vpop.f32.mrb[0].mxu0
  %1608 = vmatprep.mubr.bf16.mxu0 %v683
  %1609 = vmatmul.mubr.bf16.gmra.mrb[0].mxu0 %v682
  %v1610 = vpop.f32.mrb[0].mxu0
  %v1611 = vadd.f32 %v1466, %v1610
  %v1612 = vpop.f32.mrb[0].mxu0
  %v1613 = vpop.f32.mrb[0].mxu0
  %v1614 = vadd.f32 %v1469, %v1613
  %v1615 = vpop.f32.mrb[0].mxu0
  %1616 = vmatprep.mubr.bf16.mxu0 %v691
  %1617 = vmatmul.mubr.bf16.gmra.mrb[0].mxu0 %v690
  %v1618 = vpop.f32.mrb[0].mxu0
  %v1619 = vadd.f32 %v1474, %v1618
  %v1620 = vpop.f32.mrb[0].mxu0
  %v1621 = vpop.f32.mrb[0].mxu0
  %v1622 = vadd.f32 %v1477, %v1621
  %v1623 = vpop.f32.mrb[0].mxu0
  %1624 = vmatprep.mubr.bf16.mxu0 %v699
  %1625 = vmatmul.mubr.bf16.gmra.mrb[0].mxu0 %v698
  %v1626 = vpop.f32.mrb[0].mxu0
  %v1627 = vadd.f32 %v1482, %v1626
  %v1628 = vpop.f32.mrb[0].mxu0
  %v1629 = vpop.f32.mrb[0].mxu0
  %v1630 = vadd.f32 %v1485, %v1629
  %v1631 = vpop.f32.mrb[0].mxu0
  %1632 = vmatprep.mubr.bf16.mxu0 %v707
  %1633 = vmatmul.mubr.bf16.gmra.mrb[0].mxu0 %v706
  %v1634 = vpop.f32.mrb[0].mxu0
  %v1635 = vadd.f32 %v1490, %v1634
  %v1636 = vpop.f32.mrb[0].mxu0
  %v1637 = vpop.f32.mrb[0].mxu0
  %v1638 = vadd.f32 %v1493, %v1637
  %v1639 = vpop.f32.mrb[0].mxu0
  %1640 = vdwg.mxu0
  %1641 = vmatprep.subr.bf16.mxu0 0
  %1642 = vmatpush1.bf16.msra.mxu0 %v1126
  %1643 = vmatprep.subr.bf16.mxu0 0
  %1644 = vmatpush1.bf16.msra.mxu0 %v1127
  %1645 = vmatprep.subr.bf16.mxu0 0
  %1646 = vmatpush1.bf16.msra.mxu0 %v1128
  %1647 = vmatprep.subr.bf16.mxu0 0
  %1648 = vmatpush1.bf16.msra.mxu0 %v1129
  %1649 = vmatprep.subr.bf16.mxu0 0
  %1650 = vmatpush1.bf16.msra.mxu0 %v1130
  %1651 = vmatprep.subr.bf16.mxu0 0
  %1652 = vmatpush1.bf16.msra.mxu0 %v1131
  %1653 = vmatprep.subr.bf16.mxu0 0
  %1654 = vmatpush1.bf16.msra.mxu0 %v1132
  %1655 = vmatprep.subr.bf16.mxu0 0
  %1656 = vmatpush1.bf16.msra.mxu0 %v1133
  %1657 = vmatprep.subr.bf16.mxu0 0
  %1658 = vmatpush1.bf16.msra.mxu0 %v1134
  %1659 = vmatprep.subr.bf16.mxu0 0
  %1660 = vmatpush1.bf16.msra.mxu0 %v1135
  %1661 = vmatprep.subr.bf16.mxu0 0
  %1662 = vmatpush1.bf16.msra.mxu0 %v1136
  %1663 = vmatprep.subr.bf16.mxu0 0
  %1664 = vmatpush1.bf16.msra.mxu0 %v1137
  %1665 = vmatprep.subr.bf16.mxu0 0
  %1666 = vmatpush1.bf16.msra.mxu0 %v1138
  %1667 = vmatprep.subr.bf16.mxu0 0
  %1668 = vmatpush1.bf16.msra.mxu0 %v1139
  %1669 = vmatprep.subr.bf16.mxu0 0
  %1670 = vmatpush1.bf16.msra.mxu0 %v1140
  %1671 = vmatprep.subr.bf16.mxu0 0
  %1672 = vmatpush1.bf16.msra.mxu0 %v1141
  %1673 = vmatprep.mubr.bf16.mxu0 %v605
  %1674 = vmatmul.mubr.bf16.gmra.mrb[0].mxu0 %v604
  %v1675 = vpop.f32.mrb[0].mxu0
  %v1676 = vadd.f32 %v1531, %v1675
  %v1677 = vpop.f32.mrb[0].mxu0
  %v1678 = vpop.f32.mrb[0].mxu0
  %v1679 = vadd.f32 %v1534, %v1678
  %v1680 = vpop.f32.mrb[0].mxu0
  %1681 = vmatprep.mubr.bf16.mxu0 %v613
  %1682 = vmatmul.mubr.bf16.gmra.mrb[0].mxu0 %v612
  %v1683 = vpop.f32.mrb[0].mxu0
  %v1684 = vadd.f32 %v1539, %v1683
  %v1685 = vpop.f32.mrb[0].mxu0
  %v1686 = vpop.f32.mrb[0].mxu0
  %v1687 = vadd.f32 %v1542, %v1686
  %v1688 = vpop.f32.mrb[0].mxu0
  %1689 = vmatprep.mubr.bf16.mxu0 %v621
  %1690 = vmatmul.mubr.bf16.gmra.mrb[0].mxu0 %v620
  %v1691 = vpop.f32.mrb[0].mxu0
  %v1692 = vadd.f32 %v1547, %v1691
  %v1693 = vpop.f32.mrb[0].mxu0
  %v1694 = vpop.f32.mrb[0].mxu0
  %v1695 = vadd.f32 %v1550, %v1694
  %v1696 = vpop.f32.mrb[0].mxu0
  %1697 = vmatprep.mubr.bf16.mxu0 %v629
  %1698 = vmatmul.mubr.bf16.gmra.mrb[0].mxu0 %v628
  %v1699 = vpop.f32.mrb[0].mxu0
  %v1700 = vadd.f32 %v1555, %v1699
  %v1701 = vpop.f32.mrb[0].mxu0
  %v1702 = vpop.f32.mrb[0].mxu0
  %v1703 = vadd.f32 %v1558, %v1702
  %v1704 = vpop.f32.mrb[0].mxu0
  %1705 = vmatprep.mubr.bf16.mxu0 %v637
  %1706 = vmatmul.mubr.bf16.gmra.mrb[0].mxu0 %v636
  %v1707 = vpop.f32.mrb[0].mxu0
  %v1708 = vadd.f32 %v1563, %v1707
  %v1709 = vpop.f32.mrb[0].mxu0
  %v1710 = vpop.f32.mrb[0].mxu0
  %v1711 = vadd.f32 %v1566, %v1710
  %v1712 = vpop.f32.mrb[0].mxu0
  %1713 = vmatprep.mubr.bf16.mxu0 %v645
  %1714 = vmatmul.mubr.bf16.gmra.mrb[0].mxu0 %v644
  %v1715 = vpop.f32.mrb[0].mxu0
  %v1716 = vadd.f32 %v1571, %v1715
  %v1717 = vpop.f32.mrb[0].mxu0
  %v1718 = vpop.f32.mrb[0].mxu0
  %v1719 = vadd.f32 %v1574, %v1718
  %v1720 = vpop.f32.mrb[0].mxu0
  %1721 = vmatprep.mubr.bf16.mxu0 %v653
  %1722 = vmatmul.mubr.bf16.gmra.mrb[0].mxu0 %v652
  %v1723 = vpop.f32.mrb[0].mxu0
  %v1724 = vadd.f32 %v1579, %v1723
  %v1725 = vpop.f32.mrb[0].mxu0
  %v1726 = vpop.f32.mrb[0].mxu0
  %v1727 = vadd.f32 %v1582, %v1726
  %v1728 = vpop.f32.mrb[0].mxu0
  %1729 = vmatprep.mubr.bf16.mxu0 %v661
  %1730 = vmatmul.mubr.bf16.gmra.mrb[0].mxu0 %v660
  %v1731 = vpop.f32.mrb[0].mxu0
  %v1732 = vadd.f32 %v1587, %v1731
  %v1733 = vpop.f32.mrb[0].mxu0
  %v1734 = vpop.f32.mrb[0].mxu0
  %v1735 = vadd.f32 %v1590, %v1734
  %v1736 = vpop.f32.mrb[0].mxu0
  %1737 = vmatprep.mubr.bf16.mxu0 %v669
  %1738 = vmatmul.mubr.bf16.gmra.mrb[0].mxu0 %v668
  %v1739 = vpop.f32.mrb[0].mxu0
  %v1740 = vadd.f32 %v1595, %v1739
  %v1741 = vpop.f32.mrb[0].mxu0
  %v1742 = vpop.f32.mrb[0].mxu0
  %v1743 = vadd.f32 %v1598, %v1742
  %v1744 = vpop.f32.mrb[0].mxu0
  %1745 = vmatprep.mubr.bf16.mxu0 %v677
  %1746 = vmatmul.mubr.bf16.gmra.mrb[0].mxu0 %v676
  %v1747 = vpop.f32.mrb[0].mxu0
  %v1748 = vadd.f32 %v1603, %v1747
  %v1749 = vpop.f32.mrb[0].mxu0
  %v1750 = vpop.f32.mrb[0].mxu0
  %v1751 = vadd.f32 %v1606, %v1750
  %v1752 = vpop.f32.mrb[0].mxu0
  %1753 = vmatprep.mubr.bf16.mxu0 %v685
  %1754 = vmatmul.mubr.bf16.gmra.mrb[0].mxu0 %v684
  %v1755 = vpop.f32.mrb[0].mxu0
  %v1756 = vadd.f32 %v1611, %v1755
  %v1757 = vpop.f32.mrb[0].mxu0
  %v1758 = vpop.f32.mrb[0].mxu0
  %v1759 = vadd.f32 %v1614, %v1758
  %v1760 = vpop.f32.mrb[0].mxu0
  %1761 = vmatprep.mubr.bf16.mxu0 %v693
  %1762 = vmatmul.mubr.bf16.gmra.mrb[0].mxu0 %v692
  %v1763 = vpop.f32.mrb[0].mxu0
  %v1764 = vadd.f32 %v1619, %v1763
  %v1765 = vpop.f32.mrb[0].mxu0
  %v1766 = vpop.f32.mrb[0].mxu0
  %v1767 = vadd.f32 %v1622, %v1766
  %v1768 = vpop.f32.mrb[0].mxu0
  %1769 = vmatprep.mubr.bf16.mxu0 %v701
  %1770 = vmatmul.mubr.bf16.gmra.mrb[0].mxu0 %v700
  %v1771 = vpop.f32.mrb[0].mxu0
  %v1772 = vadd.f32 %v1627, %v1771
  %v1773 = vpop.f32.mrb[0].mxu0
  %v1774 = vpop.f32.mrb[0].mxu0
  %v1775 = vadd.f32 %v1630, %v1774
  %v1776 = vpop.f32.mrb[0].mxu0
  %1777 = vmatprep.mubr.bf16.mxu0 %v709
  %1778 = vmatmul.mubr.bf16.gmra.mrb[0].mxu0 %v708
  %v1779 = vpop.f32.mrb[0].mxu0
  %v1780 = vadd.f32 %v1635, %v1779
  %v1781 = vpop.f32.mrb[0].mxu0
  %v1782 = vpop.f32.mrb[0].mxu0
  %v1783 = vadd.f32 %v1638, %v1782
  %v1784 = vpop.f32.mrb[0].mxu0
  %1785 = vdwg.mxu0
  %vm1786 = vcmp.gt.f32.partialorder %v1676, 0.0
  %vm1787 = vcmp.gt.f32.partialorder %v1679, 0.0
  %vm1788 = vcmp.gt.f32.partialorder %v1684, 0.0
  %vm1789 = vcmp.gt.f32.partialorder %v1687, 0.0
  %vm1790 = vcmp.gt.f32.partialorder %v1692, 0.0
  %vm1791 = vcmp.gt.f32.partialorder %v1695, 0.0
  %vm1792 = vcmp.gt.f32.partialorder %v1700, 0.0
  %vm1793 = vcmp.gt.f32.partialorder %v1703, 0.0
  %vm1794 = vcmp.gt.f32.partialorder %v1708, 0.0
  %vm1795 = vcmp.gt.f32.partialorder %v1711, 0.0
  %vm1796 = vcmp.gt.f32.partialorder %v1716, 0.0
  %vm1797 = vcmp.gt.f32.partialorder %v1719, 0.0
  %vm1798 = vcmp.gt.f32.partialorder %v1724, 0.0
  %vm1799 = vcmp.gt.f32.partialorder %v1727, 0.0
  %vm1800 = vcmp.gt.f32.partialorder %v1732, 0.0
  %vm1801 = vcmp.gt.f32.partialorder %v1735, 0.0
  %vm1802 = vcmp.gt.f32.partialorder %v1740, 0.0
  %vm1803 = vcmp.gt.f32.partialorder %v1743, 0.0
  %vm1804 = vcmp.gt.f32.partialorder %v1748, 0.0
  %vm1805 = vcmp.gt.f32.partialorder %v1751, 0.0
  %vm1806 = vcmp.gt.f32.partialorder %v1756, 0.0
  %vm1807 = vcmp.gt.f32.partialorder %v1759, 0.0
  %vm1808 = vcmp.gt.f32.partialorder %v1764, 0.0
  %vm1809 = vcmp.gt.f32.partialorder %v1767, 0.0
  %vm1810 = vcmp.gt.f32.partialorder %v1772, 0.0
  %vm1811 = vcmp.gt.f32.partialorder %v1775, 0.0
  %vm1812 = vcmp.gt.f32.partialorder %v1780, 0.0
  %vm1813 = vcmp.gt.f32.partialorder %v1783, 0.0
  %v1814 = vmin.f32 %v1676, 0.0
  %v1815 = vmin.f32 %v1679, 0.0
  %v1816 = vmin.f32 %v1684, 0.0
  %v1817 = vmin.f32 %v1687, 0.0
  %v1818 = vmin.f32 %v1692, 0.0
  %v1819 = vmin.f32 %v1695, 0.0
  %v1820 = vmin.f32 %v1700, 0.0
  %v1821 = vmin.f32 %v1703, 0.0
  %v1822 = vmin.f32 %v1708, 0.0
  %v1823 = vmin.f32 %v1711, 0.0
  %v1824 = vmin.f32 %v1716, 0.0
  %v1825 = vmin.f32 %v1719, 0.0
  %v1826 = vmin.f32 %v1724, 0.0
  %v1827 = vmin.f32 %v1727, 0.0
  %v1828 = vmin.f32 %v1732, 0.0
  %v1829 = vmin.f32 %v1735, 0.0
  %v1830 = vmin.f32 %v1740, 0.0
  %v1831 = vmin.f32 %v1743, 0.0
  %v1832 = vmin.f32 %v1748, 0.0
  %v1833 = vmin.f32 %v1751, 0.0
  %v1834 = vmin.f32 %v1756, 0.0
  %v1835 = vmin.f32 %v1759, 0.0
  %v1836 = vmin.f32 %v1764, 0.0
  %v1837 = vmin.f32 %v1767, 0.0
  %v1838 = vmin.f32 %v1772, 0.0
  %v1839 = vmin.f32 %v1775, 0.0
  %v1840 = vmin.f32 %v1780, 0.0
  %v1841 = vmin.f32 %v1783, 0.0
  %v1842 = vmul.f32 %v1814, 1.442695
  %v1843 = vpow.pop %v1842
  %v1844 = vmul.f32 %v1815, 1.442695
  %v1845 = vpow.pop %v1844
  %v1846 = vmul.f32 %v1816, 1.442695
  %v1847 = vpow.pop %v1846
  %v1848 = vmul.f32 %v1817, 1.442695
  %v1849 = vpow.pop %v1848
  %v1850 = vmul.f32 %v1818, 1.442695
  %v1851 = vpow.pop %v1850
  %v1852 = vmul.f32 %v1819, 1.442695
  %v1853 = vpow.pop %v1852
  %v1854 = vmul.f32 %v1820, 1.442695
  %v1855 = vpow.pop %v1854
  %v1856 = vmul.f32 %v1821, 1.442695
  %v1857 = vpow.pop %v1856
  %v1858 = vmul.f32 %v1822, 1.442695
  %v1859 = vpow.pop %v1858
  %v1860 = vmul.f32 %v1823, 1.442695
  %v1861 = vpow.pop %v1860
  %v1862 = vmul.f32 %v1824, 1.442695
  %v1863 = vpow.pop %v1862
  %v1864 = vmul.f32 %v1825, 1.442695
  %v1865 = vpow.pop %v1864
  %v1866 = vmul.f32 %v1826, 1.442695
  %v1867 = vpow.pop %v1866
  %v1868 = vmul.f32 %v1827, 1.442695
  %v1869 = vpow.pop %v1868
  %v1870 = vmul.f32 %v1828, 1.442695
  %v1871 = vpow.pop %v1870
  %v1872 = vmul.f32 %v1829, 1.442695
  %v1873 = vpow.pop %v1872
  %v1874 = vmul.f32 %v1830, 1.442695
  %v1875 = vpow.pop %v1874
  %v1876 = vmul.f32 %v1831, 1.442695
  %v1877 = vpow.pop %v1876
  %v1878 = vmul.f32 %v1832, 1.442695
  %v1879 = vpow.pop %v1878
  %v1880 = vmul.f32 %v1833, 1.442695
  %v1881 = vpow.pop %v1880
  %v1882 = vmul.f32 %v1834, 1.442695
  %v1883 = vpow.pop %v1882
  %v1884 = vmul.f32 %v1835, 1.442695
  %v1885 = vpow.pop %v1884
  %v1886 = vmul.f32 %v1836, 1.442695
  %v1887 = vpow.pop %v1886
  %v1888 = vmul.f32 %v1837, 1.442695
  %v1889 = vpow.pop %v1888
  %v1890 = vmul.f32 %v1838, 1.442695
  %v1891 = vpow.pop %v1890
  %v1892 = vmul.f32 %v1839, 1.442695
  %v1893 = vpow.pop %v1892
  %v1894 = vmul.f32 %v1840, 1.442695
  %v1895 = vpow.pop %v1894
  %v1896 = vmul.f32 %v1841, 1.442695
  %v1897 = vpow.pop %v1896
  %v1898 = vsub.f32 %v1843, 1.0
  %v1899 = vsub.f32 %v1845, 1.0
  %v1900 = vsub.f32 %v1847, 1.0
  %v1901 = vsub.f32 %v1849, 1.0
  %v1902 = vsub.f32 %v1851, 1.0
  %v1903 = vsub.f32 %v1853, 1.0
  %v1904 = vsub.f32 %v1855, 1.0
  %v1905 = vsub.f32 %v1857, 1.0
  %v1906 = vsub.f32 %v1859, 1.0
  %v1907 = vsub.f32 %v1861, 1.0
  %v1908 = vsub.f32 %v1863, 1.0
  %v1909 = vsub.f32 %v1865, 1.0
  %v1910 = vsub.f32 %v1867, 1.0
  %v1911 = vsub.f32 %v1869, 1.0
  %v1912 = vsub.f32 %v1871, 1.0
  %v1913 = vsub.f32 %v1873, 1.0
  %v1914 = vsub.f32 %v1875, 1.0
  %v1915 = vsub.f32 %v1877, 1.0
  %v1916 = vsub.f32 %v1879, 1.0
  %v1917 = vsub.f32 %v1881, 1.0
  %v1918 = vsub.f32 %v1883, 1.0
  %v1919 = vsub.f32 %v1885, 1.0
  %v1920 = vsub.f32 %v1887, 1.0
  %v1921 = vsub.f32 %v1889, 1.0
  %v1922 = vsub.f32 %v1891, 1.0
  %v1923 = vsub.f32 %v1893, 1.0
  %v1924 = vsub.f32 %v1895, 1.0
  %v1925 = vsub.f32 %v1897, 1.0
  %v1926 = vsel %vm1786, %v1676, %v1898
  %v1927 = vsel %vm1787, %v1679, %v1899
  %v1928 = vsel %vm1788, %v1684, %v1900
  %v1929 = vsel %vm1789, %v1687, %v1901
  %v1930 = vsel %vm1790, %v1692, %v1902
  %v1931 = vsel %vm1791, %v1695, %v1903
  %v1932 = vsel %vm1792, %v1700, %v1904
  %v1933 = vsel %vm1793, %v1703, %v1905
  %v1934 = vsel %vm1794, %v1708, %v1906
  %v1935 = vsel %vm1795, %v1711, %v1907
  %v1936 = vsel %vm1796, %v1716, %v1908
  %v1937 = vsel %vm1797, %v1719, %v1909
  %v1938 = vsel %vm1798, %v1724, %v1910
  %v1939 = vsel %vm1799, %v1727, %v1911
  %v1940 = vsel %vm1800, %v1732, %v1912
  %v1941 = vsel %vm1801, %v1735, %v1913
  %v1942 = vsel %vm1802, %v1740, %v1914
  %v1943 = vsel %vm1803, %v1743, %v1915
  %v1944 = vsel %vm1804, %v1748, %v1916
  %v1945 = vsel %vm1805, %v1751, %v1917
  %v1946 = vsel %vm1806, %v1756, %v1918
  %v1947 = vsel %vm1807, %v1759, %v1919
  %v1948 = vsel %vm1808, %v1764, %v1920
  %v1949 = vsel %vm1809, %v1767, %v1921
  %v1950 = vsel %vm1810, %v1772, %v1922
  %v1951 = vsel %vm1811, %v1775, %v1923
  %v1952 = vsel %vm1812, %v1780, %v1924
  %v1953 = vsel %vm1813, %v1783, %v1925
  %v1954 = vpack.c.bf16 %v1927, %v1926
  %v1955 = vpack.c.bf16 %v1929, %v1928
  %v1956 = vpack.c.bf16 %v1931, %v1930
  %v1957 = vpack.c.bf16 %v1933, %v1932
  %v1958 = vpack.c.bf16 %v1935, %v1934
  %v1959 = vpack.c.bf16 %v1937, %v1936
  %v1960 = vpack.c.bf16 %v1939, %v1938
  %v1961 = vpack.c.bf16 %v1941, %v1940
  %v1962 = vpack.c.bf16 %v1943, %v1942
  %v1963 = vpack.c.bf16 %v1945, %v1944
  %v1964 = vpack.c.bf16 %v1947, %v1946
  %v1965 = vpack.c.bf16 %v1949, %v1948
  %v1966 = vpack.c.bf16 %v1951, %v1950
  %v1967 = vpack.c.bf16 %v1953, %v1952
  %v1982 = vunpack.c.l.b16 %v1954
  %v1983 = vunpack.c.h.b16 %v1954
  %v1984 = vunpack.c.l.b16 %v1955
  %v1985 = vunpack.c.h.b16 %v1955
  %v1986 = vunpack.c.l.b16 %v1956
  %v1987 = vunpack.c.h.b16 %v1956
  %v1988 = vunpack.c.l.b16 %v1957
  %v1989 = vunpack.c.h.b16 %v1957
  %v1990 = vunpack.c.l.b16 %v1958
  %v1991 = vunpack.c.h.b16 %v1958
  %v1992 = vunpack.c.l.b16 %v1959
  %v1993 = vunpack.c.h.b16 %v1959
  %v1994 = vunpack.c.l.b16 %v1960
  %v1995 = vunpack.c.h.b16 %v1960
  %v1996 = vunpack.c.l.b16 %v1961
  %v1997 = vunpack.c.h.b16 %v1961
  %v1998 = vunpack.c.l.b16 %v1962
  %v1999 = vunpack.c.h.b16 %v1962
  %v2000 = vunpack.c.l.b16 %v1963
  %v2001 = vunpack.c.h.b16 %v1963
  %v2002 = vunpack.c.l.b16 %v1964
  %v2003 = vunpack.c.h.b16 %v1964
  %v2004 = vunpack.c.l.b16 %v1965
  %v2005 = vunpack.c.h.b16 %v1965
  %v2006 = vunpack.c.l.b16 %v1966
  %v2007 = vunpack.c.h.b16 %v1966
  %v2008 = vunpack.c.l.b16 %v1967
  %v2009 = vunpack.c.h.b16 %v1967
  %v2010 = vpack.c.b16 %v1982, %v1982
  %v2011 = vpack.c.b16 %v1983, %v1983
  %v2012 = vpack.c.b16 %v1984, %v1984
  %v2013 = vpack.c.b16 %v1985, %v1985
  %v2014 = vpack.c.b16 %v1986, %v1986
  %v2015 = vpack.c.b16 %v1987, %v1987
  %v2016 = vpack.c.b16 %v1988, %v1988
  %v2017 = vpack.c.b16 %v1989, %v1989
  %v2018 = vpack.c.b16 %v1990, %v1990
  %v2019 = vpack.c.b16 %v1991, %v1991
  %v2020 = vpack.c.b16 %v1992, %v1992
  %v2021 = vpack.c.b16 %v1993, %v1993
  %v2022 = vpack.c.b16 %v1994, %v1994
  %v2023 = vpack.c.b16 %v1995, %v1995
  %v2024 = vpack.c.b16 %v1996, %v1996
  %v2025 = vpack.c.b16 %v1997, %v1997
  %v2026 = vpack.c.b16 %v1998, %v1998
  %v2027 = vpack.c.b16 %v1999, %v1999
  %v2028 = vpack.c.b16 %v2000, %v2000
  %v2029 = vpack.c.b16 %v2001, %v2001
  %v2030 = vpack.c.b16 %v2002, %v2002
  %v2031 = vpack.c.b16 %v2003, %v2003
  %v2032 = vpack.c.b16 %v2004, %v2004
  %v2033 = vpack.c.b16 %v2005, %v2005
  %v2034 = vpack.c.b16 %v2006, %v2006
  %v2035 = vpack.c.b16 %v2007, %v2007
  %v2036 = vpack.c.b16 %v2008, %v2008
  %v2037 = vpack.c.b16 %v2009, %v2009
  %2066 = vst [vmem:[%s3] sm:$0xf] %v2010
  %2067 = vst [vmem:[%s3 + $0x4] sm:$0xf] %v2011
  %2068 = vst [vmem:[%s3 + $0x8] sm:$0xf] %v2012
  %2069 = vst [vmem:[%s3 + $0xc] sm:$0xf] %v2013
  %2070 = vst [vmem:[%s3 + $0x10] sm:$0xf] %v2014
  %2071 = vst [vmem:[%s3 + $0x14] sm:$0xf] %v2015
  %2072 = vst [vmem:[%s3 + $0x18] sm:$0xf] %v2016
  %2073 = vst [vmem:[%s3 + $0x1c] sm:$0xf] %v2017
  %2074 = vst [vmem:[%s3 + $0x20] sm:$0xf] %v2018
  %2075 = vst [vmem:[%s3 + $0x24] sm:$0xf] %v2019
  %2076 = vst [vmem:[%s3 + $0x28] sm:$0xf] %v2020
  %2077 = vst [vmem:[%s3 + $0x2c] sm:$0xf] %v2021
  %2078 = vst [vmem:[%s3 + $0x30] sm:$0xf] %v2022
  %2079 = vst [vmem:[%s3 + $0x34] sm:$0xf] %v2023
  %2080 = vst [vmem:[%s3 + $0x38] sm:$0xf] %v2024
  %2081 = vst [vmem:[%s3 + $0x3c] sm:$0xf] %v2025
  %2082 = vst [vmem:[%s3 + $0x40] sm:$0xf] %v2026
  %2083 = vst [vmem:[%s3 + $0x44] sm:$0xf] %v2027
  %2084 = vst [vmem:[%s3 + $0x48] sm:$0xf] %v2028
  %2085 = vst [vmem:[%s3 + $0x4c] sm:$0xf] %v2029
  %2086 = vst [vmem:[%s3 + $0x50] sm:$0xf] %v2030
  %2087 = vst [vmem:[%s3 + $0x54] sm:$0xf] %v2031
  %2088 = vst [vmem:[%s3 + $0x58] sm:$0xf] %v2032
  %2089 = vst [vmem:[%s3 + $0x5c] sm:$0xf] %v2033
  %2090 = vst [vmem:[%s3 + $0x60] sm:$0xf] %v2034
  %2091 = vst [vmem:[%s3 + $0x64] sm:$0xf] %v2035
  %2092 = vst [vmem:[%s3 + $0x68] sm:$0xf] %v2036
  %2093 = vst [vmem:[%s3 + $0x6c] sm:$0xf] %v2037
  // Predicated region
  $region14: #{end2end_forward.8} parent=0 // pred_check
    _
  $region15: #{end2end_forward.8} parent=0 // pred_check_branch
    %2095 = sbr.rel (0) target = $region17
  $region16: #{end2end_forward.8} parent=0 // pred_region
    _
  $region17: #{end2end_forward.8} parent=0 // pred_fallthru
    _
  // Predicated region
  $region18: #{end2end_forward.8} parent=0 // pred_check
    _
  $region19: #{end2end_forward.8} parent=0 // pred_check_branch
    %2097 = sbr.rel (0) target = $region21
  $region20: #{end2end_forward.8} parent=0 // pred_region
    _
  $region21: #{end2end_forward.8} parent=0 // pred_fallthru
    _

// kernel: end2end_forward.9
$region0: #{end2end_forward.9}
  #allocation0 [shape = 'u32[]', space=smem, size = 0x4, offset = 0x4, fixed_abs, tag = 'smem constant byte address 0x4 - core index']
  #allocation1 [shape = 'u32[144,128]{1,0:T(1,128)}', space=vmem, size = 0x12000, scoped, tag = 'internal scratch']
  %s0 = inlined_call_operand.vmem [shape: bf16[128,512], index: 0, kind: input, shape index: {}]
  %s1 = inlined_call_operand.vmem [shape: bf16[512,128], index: 1, kind: input, shape index: {}]
  %s2 = inlined_call_operand.vmem [shape: f32[1,128], index: 2, kind: input, shape index: {}]
  %s3 = inlined_call_operand.vmem [shape: bf16[128,128], index: 3, kind: output, shape index: {}]
  %s4 = sld [smem:[#allocation0]]
  $region22: #{end2end_forward.9} parent=0
    _
  %s6 = ssub.s32 1, %s4
  %s7 = scalar_select 0, %s6, %s4
  // Predicated region
  $region2: #{end2end_forward.9} parent=0 // pred_check
    _
  $region3: #{end2end_forward.9} parent=0 // pred_check_branch
    %9 = sbr.rel (0) target = $region5
  $region4: #{end2end_forward.9} parent=0 // pred_region
    _
  $region5: #{end2end_forward.9} parent=0 // pred_fallthru
    _
  // Predicated region
  $region6: #{end2end_forward.9} parent=0 // pred_check
    _
  $region7: #{end2end_forward.9} parent=0 // pred_check_branch
    %11 = sbr.rel (0) target = $region9
  $region8: #{end2end_forward.9} parent=0 // pred_region
    _
  $region9: #{end2end_forward.9} parent=0 // pred_fallthru
    _
  // Predicated region
  $region10: #{end2end_forward.9} parent=0 // pred_check
    _
  $region11: #{end2end_forward.9} parent=0 // pred_check_branch
    %13 = sbr.rel (0) target = $region13
  $region12: #{end2end_forward.9} parent=0 // pred_region
    _
  $region13: #{end2end_forward.9} parent=0 // pred_fallthru
    _
  %v15 = vld [vmem:[%s0] sm:$0xff]
  %v16 = vld [vmem:[%s0 + $0x8] sm:$0xff]
  %v17 = vld [vmem:[%s0 + $0x10] sm:$0xff]
  %v18 = vld [vmem:[%s0 + $0x18] sm:$0xff]
  %v19 = vld [vmem:[%s0 + $0x20] sm:$0xff]
  %v20 = vld [vmem:[%s0 + $0x28] sm:$0xff]
  %v21 = vld [vmem:[%s0 + $0x30] sm:$0xff]
  %v22 = vld [vmem:[%s0 + $0x38] sm:$0xff]
  %v23 = vld [vmem:[%s0 + $0x40] sm:$0xff]
  %v24 = vld [vmem:[%s0 + $0x48] sm:$0xff]
  %v25 = vld [vmem:[%s0 + $0x50] sm:$0xff]
  %v26 = vld [vmem:[%s0 + $0x58] sm:$0xff]
  %v27 = vld [vmem:[%s0 + $0x60] sm:$0xff]
  %v28 = vld [vmem:[%s0 + $0x68] sm:$0xff]
  %v29 = vld [vmem:[%s0 + $0x70] sm:$0xff]
  %v30 = vld [vmem:[%s0 + $0x78] sm:$0xff]
  %v31 = vld [vmem:[%s0 + $0x80] sm:$0xff]
  %v32 = vld [vmem:[%s0 + $0x88] sm:$0xff]
  %v33 = vld [vmem:[%s0 + $0x90] sm:$0xff]
  %v34 = vld [vmem:[%s0 + $0x98] sm:$0xff]
  %v35 = vld [vmem:[%s0 + $0xa0] sm:$0xff]
  %v36 = vld [vmem:[%s0 + $0xa8] sm:$0xff]
  %v37 = vld [vmem:[%s0 + $0xb0] sm:$0xff]
  %v38 = vld [vmem:[%s0 + $0xb8] sm:$0xff]
  %v39 = vld [vmem:[%s0 + $0xc0] sm:$0xff]
  %v40 = vld [vmem:[%s0 + $0xc8] sm:$0xff]
  %v41 = vld [vmem:[%s0 + $0xd0] sm:$0xff]
  %v42 = vld [vmem:[%s0 + $0xd8] sm:$0xff]
  %v43 = vld [vmem:[%s0 + $0xe0] sm:$0xff]
  %v44 = vld [vmem:[%s0 + $0xe8] sm:$0xff]
  %v45 = vld [vmem:[%s0 + $0xf0] sm:$0xff]
  %v46 = vld [vmem:[%s0 + $0xf8] sm:$0xff]
  %v47 = vld [vmem:[%s1] sm:$0xf]
  %v48 = vld [vmem:[%s1 + $0x4] sm:$0xf]
  %v49 = vld [vmem:[%s1 + $0x8] sm:$0xf]
  %v50 = vld [vmem:[%s1 + $0xc] sm:$0xf]
  %v51 = vld [vmem:[%s1 + $0x10] sm:$0xf]
  %v52 = vld [vmem:[%s1 + $0x14] sm:$0xf]
  %v53 = vld [vmem:[%s1 + $0x18] sm:$0xf]
  %v54 = vld [vmem:[%s1 + $0x1c] sm:$0xf]
  %v55 = vld [vmem:[%s1 + $0x20] sm:$0xf]
  %v56 = vld [vmem:[%s1 + $0x24] sm:$0xf]
  %v57 = vld [vmem:[%s1 + $0x28] sm:$0xf]
  %v58 = vld [vmem:[%s1 + $0x2c] sm:$0xf]
  %v59 = vld [vmem:[%s1 + $0x30] sm:$0xf]
  %v60 = vld [vmem:[%s1 + $0x34] sm:$0xf]
  %v61 = vld [vmem:[%s1 + $0x38] sm:$0xf]
  %v62 = vld [vmem:[%s1 + $0x3c] sm:$0xf]
  %v63 = vld [vmem:[%s1 + $0x40] sm:$0xf]
  %v64 = vld [vmem:[%s1 + $0x44] sm:$0xf]
  %v65 = vld [vmem:[%s1 + $0x48] sm:$0xf]
  %v66 = vld [vmem:[%s1 + $0x4c] sm:$0xf]
  %v67 = vld [vmem:[%s1 + $0x50] sm:$0xf]
  %v68 = vld [vmem:[%s1 + $0x54] sm:$0xf]
  %v69 = vld [vmem:[%s1 + $0x58] sm:$0xf]
  %v70 = vld [vmem:[%s1 + $0x5c] sm:$0xf]
  %v71 = vld [vmem:[%s1 + $0x60] sm:$0xf]
  %v72 = vld [vmem:[%s1 + $0x64] sm:$0xf]
  %v73 = vld [vmem:[%s1 + $0x68] sm:$0xf]
  %v74 = vld [vmem:[%s1 + $0x6c] sm:$0xf]
  %v75 = vld [vmem:[%s1 + $0x70] sm:$0xf]
  %v76 = vld [vmem:[%s1 + $0x74] sm:$0xf]
  %v77 = vld [vmem:[%s1 + $0x78] sm:$0xf]
  %v78 = vld [vmem:[%s1 + $0x7c] sm:$0xf]
  %v79 = vld [vmem:[%s1 + $0x80] sm:$0xf]
  %v80 = vld [vmem:[%s1 + $0x84] sm:$0xf]
  %v81 = vld [vmem:[%s1 + $0x88] sm:$0xf]
  %v82 = vld [vmem:[%s1 + $0x8c] sm:$0xf]
  %v83 = vld [vmem:[%s1 + $0x90] sm:$0xf]
  %v84 = vld [vmem:[%s1 + $0x94] sm:$0xf]
  %v85 = vld [vmem:[%s1 + $0x98] sm:$0xf]
  %v86 = vld [vmem:[%s1 + $0x9c] sm:$0xf]
  %v87 = vld [vmem:[%s1 + $0xa0] sm:$0xf]
  %v88 = vld [vmem:[%s1 + $0xa4] sm:$0xf]
  %v89 = vld [vmem:[%s1 + $0xa8] sm:$0xf]
  %v90 = vld [vmem:[%s1 + $0xac] sm:$0xf]
  %v91 = vld [vmem:[%s1 + $0xb0] sm:$0xf]
  %v92 = vld [vmem:[%s1 + $0xb4] sm:$0xf]
  %v93 = vld [vmem:[%s1 + $0xb8] sm:$0xf]
  %v94 = vld [vmem:[%s1 + $0xbc] sm:$0xf]
  %v95 = vld [vmem:[%s1 + $0xc0] sm:$0xf]
  %v96 = vld [vmem:[%s1 + $0xc4] sm:$0xf]
  %v97 = vld [vmem:[%s1 + $0xc8] sm:$0xf]
  %v98 = vld [vmem:[%s1 + $0xcc] sm:$0xf]
  %v99 = vld [vmem:[%s1 + $0xd0] sm:$0xf]
  %v100 = vld [vmem:[%s1 + $0xd4] sm:$0xf]
  %v101 = vld [vmem:[%s1 + $0xd8] sm:$0xf]
  %v102 = vld [vmem:[%s1 + $0xdc] sm:$0xf]
  %v103 = vld [vmem:[%s1 + $0xe0] sm:$0xf]
  %v104 = vld [vmem:[%s1 + $0xe4] sm:$0xf]
  %v105 = vld [vmem:[%s1 + $0xe8] sm:$0xf]
  %v106 = vld [vmem:[%s1 + $0xec] sm:$0xf]
  %v107 = vld [vmem:[%s1 + $0xf0] sm:$0xf]
  %v108 = vld [vmem:[%s1 + $0xf4] sm:$0xf]
  %v109 = vld [vmem:[%s1 + $0xf8] sm:$0xf]
  %v110 = vld [vmem:[%s1 + $0xfc] sm:$0xf]
  %v111 = vld [vmem:[%s2] sm:$0x1]
  %v113 = vlaneseq
  %v114 = vshrl.u32 %v113, 7
  %v115 = vsub.s32 0, %v114
  %v116 = vrot.slane %v111, %v115
  %v150 = vunpack.c.l.b16 %v15
  %v151 = vunpack.c.h.b16 %v15
  %v152 = vunpack.c.l.b16 %v16
  %v153 = vunpack.c.h.b16 %v16
  %v154 = vunpack.c.l.b16 %v17
  %v155 = vunpack.c.h.b16 %v17
  %v156 = vunpack.c.l.b16 %v18
  %v157 = vunpack.c.h.b16 %v18
  %v158 = vunpack.c.l.b16 %v19
  %v159 = vunpack.c.h.b16 %v19
  %v160 = vunpack.c.l.b16 %v20
  %v161 = vunpack.c.h.b16 %v20
  %v162 = vunpack.c.l.b16 %v21
  %v163 = vunpack.c.h.b16 %v21
  %v164 = vunpack.c.l.b16 %v22
  %v165 = vunpack.c.h.b16 %v22
  %v166 = vunpack.c.l.b16 %v23
  %v167 = vunpack.c.h.b16 %v23
  %v168 = vunpack.c.l.b16 %v24
  %v169 = vunpack.c.h.b16 %v24
  %v170 = vunpack.c.l.b16 %v25
  %v171 = vunpack.c.h.b16 %v25
  %v172 = vunpack.c.l.b16 %v26
  %v173 = vunpack.c.h.b16 %v26
  %v174 = vunpack.c.l.b16 %v27
  %v175 = vunpack.c.h.b16 %v27
  %v176 = vunpack.c.l.b16 %v28
  %v177 = vunpack.c.h.b16 %v28
  %v178 = vunpack.c.l.b16 %v29
  %v179 = vunpack.c.h.b16 %v29
  %v180 = vunpack.c.l.b16 %v30
  %v181 = vunpack.c.h.b16 %v30
  %v182 = vunpack.c.l.b16 %v31
  %v183 = vunpack.c.h.b16 %v31
  %v184 = vunpack.c.l.b16 %v32
  %v185 = vunpack.c.h.b16 %v32
  %v186 = vunpack.c.l.b16 %v33
  %v187 = vunpack.c.h.b16 %v33
  %v188 = vunpack.c.l.b16 %v34
  %v189 = vunpack.c.h.b16 %v34
  %v190 = vunpack.c.l.b16 %v35
  %v191 = vunpack.c.h.b16 %v35
  %v192 = vunpack.c.l.b16 %v36
  %v193 = vunpack.c.h.b16 %v36
  %v194 = vunpack.c.l.b16 %v37
  %v195 = vunpack.c.h.b16 %v37
  %v196 = vunpack.c.l.b16 %v38
  %v197 = vunpack.c.h.b16 %v38
  %v198 = vunpack.c.l.b16 %v39
  %v199 = vunpack.c.h.b16 %v39
  %v200 = vunpack.c.l.b16 %v40
  %v201 = vunpack.c.h.b16 %v40
  %v202 = vunpack.c.l.b16 %v41
  %v203 = vunpack.c.h.b16 %v41
  %v204 = vunpack.c.l.b16 %v42
  %v205 = vunpack.c.h.b16 %v42
  %v206 = vunpack.c.l.b16 %v43
  %v207 = vunpack.c.h.b16 %v43
  %v208 = vunpack.c.l.b16 %v44
  %v209 = vunpack.c.h.b16 %v44
  %v210 = vunpack.c.l.b16 %v45
  %v211 = vunpack.c.h.b16 %v45
  %v212 = vunpack.c.l.b16 %v46
  %v213 = vunpack.c.h.b16 %v46
  %v214 = vpack.c.b16 %v154, %v150
  %v215 = vpack.c.b16 %v155, %v151
  %v216 = vpack.c.b16 %v156, %v152
  %v217 = vpack.c.b16 %v157, %v153
  %v218 = vpack.c.b16 %v162, %v158
  %v219 = vpack.c.b16 %v163, %v159
  %v220 = vpack.c.b16 %v164, %v160
  %v221 = vpack.c.b16 %v165, %v161
  %v222 = vpack.c.b16 %v170, %v166
  %v223 = vpack.c.b16 %v171, %v167
  %v224 = vpack.c.b16 %v172, %v168
  %v225 = vpack.c.b16 %v173, %v169
  %v226 = vpack.c.b16 %v178, %v174
  %v227 = vpack.c.b16 %v179, %v175
  %v228 = vpack.c.b16 %v180, %v176
  %v229 = vpack.c.b16 %v181, %v177
  %v230 = vpack.c.b16 %v186, %v182
  %v231 = vpack.c.b16 %v187, %v183
  %v232 = vpack.c.b16 %v188, %v184
  %v233 = vpack.c.b16 %v189, %v185
  %v234 = vpack.c.b16 %v194, %v190
  %v235 = vpack.c.b16 %v195, %v191
  %v236 = vpack.c.b16 %v196, %v192
  %v237 = vpack.c.b16 %v197, %v193
  %v238 = vpack.c.b16 %v202, %v198
  %v239 = vpack.c.b16 %v203, %v199
  %v240 = vpack.c.b16 %v204, %v200
  %v241 = vpack.c.b16 %v205, %v201
  %v242 = vpack.c.b16 %v210, %v206
  %v243 = vpack.c.b16 %v211, %v207
  %v244 = vpack.c.b16 %v212, %v208
  %v245 = vpack.c.b16 %v213, %v209
  %v342 = vunpack.c.l.b16 %v47
  %v343 = vunpack.c.l.b16 %v48
  %v344 = vunpack.c.l.b16 %v49
  %v345 = vunpack.c.l.b16 %v50
  %v346 = vunpack.c.l.b16 %v51
  %v347 = vunpack.c.l.b16 %v52
  %v348 = vunpack.c.l.b16 %v53
  %v349 = vunpack.c.l.b16 %v54
  %v350 = vunpack.c.l.b16 %v55
  %v351 = vunpack.c.l.b16 %v56
  %v352 = vunpack.c.l.b16 %v57
  %v353 = vunpack.c.l.b16 %v58
  %v354 = vunpack.c.l.b16 %v59
  %v355 = vunpack.c.l.b16 %v60
  %v356 = vunpack.c.l.b16 %v61
  %v357 = vunpack.c.l.b16 %v62
  %v358 = vunpack.c.l.b16 %v63
  %v359 = vunpack.c.l.b16 %v64
  %v360 = vunpack.c.l.b16 %v65
  %v361 = vunpack.c.l.b16 %v66
  %v362 = vunpack.c.l.b16 %v67
  %v363 = vunpack.c.l.b16 %v68
  %v364 = vunpack.c.l.b16 %v69
  %v365 = vunpack.c.l.b16 %v70
  %v366 = vunpack.c.l.b16 %v71
  %v367 = vunpack.c.l.b16 %v72
  %v368 = vunpack.c.l.b16 %v73
  %v369 = vunpack.c.l.b16 %v74
  %v370 = vunpack.c.l.b16 %v75
  %v371 = vunpack.c.l.b16 %v76
  %v372 = vunpack.c.l.b16 %v77
  %v373 = vunpack.c.l.b16 %v78
  %v374 = vunpack.c.l.b16 %v79
  %v375 = vunpack.c.l.b16 %v80
  %v376 = vunpack.c.l.b16 %v81
  %v377 = vunpack.c.l.b16 %v82
  %v378 = vunpack.c.l.b16 %v83
  %v379 = vunpack.c.l.b16 %v84
  %v380 = vunpack.c.l.b16 %v85
  %v381 = vunpack.c.l.b16 %v86
  %v382 = vunpack.c.l.b16 %v87
  %v383 = vunpack.c.l.b16 %v88
  %v384 = vunpack.c.l.b16 %v89
  %v385 = vunpack.c.l.b16 %v90
  %v386 = vunpack.c.l.b16 %v91
  %v387 = vunpack.c.l.b16 %v92
  %v388 = vunpack.c.l.b16 %v93
  %v389 = vunpack.c.l.b16 %v94
  %v390 = vunpack.c.l.b16 %v95
  %v391 = vunpack.c.l.b16 %v96
  %v392 = vunpack.c.l.b16 %v97
  %v393 = vunpack.c.l.b16 %v98
  %v394 = vunpack.c.l.b16 %v99
  %v395 = vunpack.c.l.b16 %v100
  %v396 = vunpack.c.l.b16 %v101
  %v397 = vunpack.c.l.b16 %v102
  %v398 = vunpack.c.l.b16 %v103
  %v399 = vunpack.c.l.b16 %v104
  %v400 = vunpack.c.l.b16 %v105
  %v401 = vunpack.c.l.b16 %v106
  %v402 = vunpack.c.l.b16 %v107
  %v403 = vunpack.c.l.b16 %v108
  %v404 = vunpack.c.l.b16 %v109
  %v405 = vunpack.c.l.b16 %v110
  %v406 = vpack.c.b16 %v343, %v342
  %v407 = vpack.c.b16 %v345, %v344
  %v408 = vpack.c.b16 %v347, %v346
  %v409 = vpack.c.b16 %v349, %v348
  %v410 = vpack.c.b16 %v351, %v350
  %v411 = vpack.c.b16 %v353, %v352
  %v412 = vpack.c.b16 %v355, %v354
  %v413 = vpack.c.b16 %v357, %v356
  %v414 = vpack.c.b16 %v359, %v358
  %v415 = vpack.c.b16 %v361, %v360
  %v416 = vpack.c.b16 %v363, %v362
  %v417 = vpack.c.b16 %v365, %v364
  %v418 = vpack.c.b16 %v367, %v366
  %v419 = vpack.c.b16 %v369, %v368
  %v420 = vpack.c.b16 %v371, %v370
  %v421 = vpack.c.b16 %v373, %v372
  %v422 = vpack.c.b16 %v375, %v374
  %v423 = vpack.c.b16 %v377, %v376
  %v424 = vpack.c.b16 %v379, %v378
  %v425 = vpack.c.b16 %v381, %v380
  %v426 = vpack.c.b16 %v383, %v382
  %v427 = vpack.c.b16 %v385, %v384
  %v428 = vpack.c.b16 %v387, %v386
  %v429 = vpack.c.b16 %v389, %v388
  %v430 = vpack.c.b16 %v391, %v390
  %v431 = vpack.c.b16 %v393, %v392
  %v432 = vpack.c.b16 %v395, %v394
  %v433 = vpack.c.b16 %v397, %v396
  %v434 = vpack.c.b16 %v399, %v398
  %v435 = vpack.c.b16 %v401, %v400
  %v436 = vpack.c.b16 %v403, %v402
  %v437 = vpack.c.b16 %v405, %v404
  %470 = vmatprep.subr.bf16.mxu0 0
  %471 = vmatpush1.bf16.msra.mxu0 %v406
  %472 = vmatprep.subr.bf16.mxu0 0
  %473 = vmatpush1.bf16.msra.mxu0 %v407
  %474 = vmatprep.subr.bf16.mxu0 0
  %475 = vmatpush1.bf16.msra.mxu0 %v408
  %476 = vmatprep.subr.bf16.mxu0 0
  %477 = vmatpush1.bf16.msra.mxu0 %v409
  %478 = vmatprep.subr.bf16.mxu0 0
  %479 = vmatpush1.bf16.msra.mxu0 %v410
  %480 = vmatprep.subr.bf16.mxu0 0
  %481 = vmatpush1.bf16.msra.mxu0 %v411
  %482 = vmatprep.subr.bf16.mxu0 0
  %483 = vmatpush1.bf16.msra.mxu0 %v412
  %484 = vmatprep.subr.bf16.mxu0 0
  %485 = vmatpush1.bf16.msra.mxu0 %v413
  %486 = vmatprep.subr.bf16.mxu0 0
  %487 = vmatpush1.bf16.msra.mxu0 %v414
  %488 = vmatprep.subr.bf16.mxu0 0
  %489 = vmatpush1.bf16.msra.mxu0 %v415
  %490 = vmatprep.subr.bf16.mxu0 0
  %491 = vmatpush1.bf16.msra.mxu0 %v416
  %492 = vmatprep.subr.bf16.mxu0 0
  %493 = vmatpush1.bf16.msra.mxu0 %v417
  %494 = vmatprep.subr.bf16.mxu0 0
  %495 = vmatpush1.bf16.msra.mxu0 %v418
  %496 = vmatprep.subr.bf16.mxu0 0
  %497 = vmatpush1.bf16.msra.mxu0 %v419
  %498 = vmatprep.subr.bf16.mxu0 0
  %499 = vmatpush1.bf16.msra.mxu0 %v420
  %500 = vmatprep.subr.bf16.mxu0 0
  %501 = vmatpush1.bf16.msra.mxu0 %v421
  %502 = vmatprep.mubr.bf16.mxu0 %v215
  %503 = vmatmul.mubr.bf16.gmra.mrb[0].mxu0 %v214
  %v504 = vpop.f32.mrb[0].mxu0
  %v505 = vadd.f32 %v116, %v504
  %v506 = vpop.f32.mrb[0].mxu0
  %v507 = vpop.f32.mrb[0].mxu0
  %v508 = vadd.f32 %v116, %v507
  %v509 = vpop.f32.mrb[0].mxu0
  %510 = vmatprep.mubr.bf16.mxu0 %v219
  %511 = vmatmul.mubr.bf16.gmra.mrb[0].mxu0 %v218
  %v512 = vpop.f32.mrb[0].mxu0
  %v513 = vadd.f32 %v116, %v512
  %v514 = vpop.f32.mrb[0].mxu0
  %v515 = vpop.f32.mrb[0].mxu0
  %v516 = vadd.f32 %v116, %v515
  %v517 = vpop.f32.mrb[0].mxu0
  %518 = vmatprep.mubr.bf16.mxu0 %v223
  %519 = vmatmul.mubr.bf16.gmra.mrb[0].mxu0 %v222
  %v520 = vpop.f32.mrb[0].mxu0
  %v521 = vadd.f32 %v116, %v520
  %v522 = vpop.f32.mrb[0].mxu0
  %v523 = vpop.f32.mrb[0].mxu0
  %v524 = vadd.f32 %v116, %v523
  %v525 = vpop.f32.mrb[0].mxu0
  %526 = vmatprep.mubr.bf16.mxu0 %v227
  %527 = vmatmul.mubr.bf16.gmra.mrb[0].mxu0 %v226
  %v528 = vpop.f32.mrb[0].mxu0
  %v529 = vadd.f32 %v116, %v528
  %v530 = vpop.f32.mrb[0].mxu0
  %v531 = vpop.f32.mrb[0].mxu0
  %v532 = vadd.f32 %v116, %v531
  %v533 = vpop.f32.mrb[0].mxu0
  %534 = vmatprep.mubr.bf16.mxu0 %v231
  %535 = vmatmul.mubr.bf16.gmra.mrb[0].mxu0 %v230
  %v536 = vpop.f32.mrb[0].mxu0
  %v537 = vadd.f32 %v116, %v536
  %v538 = vpop.f32.mrb[0].mxu0
  %v539 = vpop.f32.mrb[0].mxu0
  %v540 = vadd.f32 %v116, %v539
  %v541 = vpop.f32.mrb[0].mxu0
  %542 = vmatprep.mubr.bf16.mxu0 %v235
  %543 = vmatmul.mubr.bf16.gmra.mrb[0].mxu0 %v234
  %v544 = vpop.f32.mrb[0].mxu0
  %v545 = vadd.f32 %v116, %v544
  %v546 = vpop.f32.mrb[0].mxu0
  %v547 = vpop.f32.mrb[0].mxu0
  %v548 = vadd.f32 %v116, %v547
  %v549 = vpop.f32.mrb[0].mxu0
  %550 = vmatprep.mubr.bf16.mxu0 %v239
  %551 = vmatmul.mubr.bf16.gmra.mrb[0].mxu0 %v238
  %v552 = vpop.f32.mrb[0].mxu0
  %v553 = vadd.f32 %v116, %v552
  %v554 = vpop.f32.mrb[0].mxu0
  %v555 = vpop.f32.mrb[0].mxu0
  %v556 = vadd.f32 %v116, %v555
  %v557 = vpop.f32.mrb[0].mxu0
  %558 = vmatprep.mubr.bf16.mxu0 %v243
  %559 = vmatmul.mubr.bf16.gmra.mrb[0].mxu0 %v242
  %v560 = vpop.f32.mrb[0].mxu0
  %v561 = vadd.f32 %v116, %v560
  %v562 = vpop.f32.mrb[0].mxu0
  %v563 = vpop.f32.mrb[0].mxu0
  %v564 = vadd.f32 %v116, %v563
  %v565 = vpop.f32.mrb[0].mxu0
  %566 = vdwg.mxu0
  %567 = vmatprep.subr.bf16.mxu0 0
  %568 = vmatpush1.bf16.msra.mxu0 %v422
  %569 = vmatprep.subr.bf16.mxu0 0
  %570 = vmatpush1.bf16.msra.mxu0 %v423
  %571 = vmatprep.subr.bf16.mxu0 0
  %572 = vmatpush1.bf16.msra.mxu0 %v424
  %573 = vmatprep.subr.bf16.mxu0 0
  %574 = vmatpush1.bf16.msra.mxu0 %v425
  %575 = vmatprep.subr.bf16.mxu0 0
  %576 = vmatpush1.bf16.msra.mxu0 %v426
  %577 = vmatprep.subr.bf16.mxu0 0
  %578 = vmatpush1.bf16.msra.mxu0 %v427
  %579 = vmatprep.subr.bf16.mxu0 0
  %580 = vmatpush1.bf16.msra.mxu0 %v428
  %581 = vmatprep.subr.bf16.mxu0 0
  %582 = vmatpush1.bf16.msra.mxu0 %v429
  %583 = vmatprep.subr.bf16.mxu0 0
  %584 = vmatpush1.bf16.msra.mxu0 %v430
  %585 = vmatprep.subr.bf16.mxu0 0
  %586 = vmatpush1.bf16.msra.mxu0 %v431
  %587 = vmatprep.subr.bf16.mxu0 0
  %588 = vmatpush1.bf16.msra.mxu0 %v432
  %589 = vmatprep.subr.bf16.mxu0 0
  %590 = vmatpush1.bf16.msra.mxu0 %v433
  %591 = vmatprep.subr.bf16.mxu0 0
  %592 = vmatpush1.bf16.msra.mxu0 %v434
  %593 = vmatprep.subr.bf16.mxu0 0
  %594 = vmatpush1.bf16.msra.mxu0 %v435
  %595 = vmatprep.subr.bf16.mxu0 0
  %596 = vmatpush1.bf16.msra.mxu0 %v436
  %597 = vmatprep.subr.bf16.mxu0 0
  %598 = vmatpush1.bf16.msra.mxu0 %v437
  %599 = vmatprep.mubr.bf16.mxu0 %v217
  %600 = vmatmul.mubr.bf16.gmra.mrb[0].mxu0 %v216
  %v601 = vpop.f32.mrb[0].mxu0
  %v602 = vadd.f32 %v505, %v601
  %v603 = vpop.f32.mrb[0].mxu0
  %v604 = vpop.f32.mrb[0].mxu0
  %v605 = vadd.f32 %v508, %v604
  %v606 = vpop.f32.mrb[0].mxu0
  %607 = vmatprep.mubr.bf16.mxu0 %v221
  %608 = vmatmul.mubr.bf16.gmra.mrb[0].mxu0 %v220
  %v609 = vpop.f32.mrb[0].mxu0
  %v610 = vadd.f32 %v513, %v609
  %v611 = vpop.f32.mrb[0].mxu0
  %v612 = vpop.f32.mrb[0].mxu0
  %v613 = vadd.f32 %v516, %v612
  %v614 = vpop.f32.mrb[0].mxu0
  %615 = vmatprep.mubr.bf16.mxu0 %v225
  %616 = vmatmul.mubr.bf16.gmra.mrb[0].mxu0 %v224
  %v617 = vpop.f32.mrb[0].mxu0
  %v618 = vadd.f32 %v521, %v617
  %v619 = vpop.f32.mrb[0].mxu0
  %v620 = vpop.f32.mrb[0].mxu0
  %v621 = vadd.f32 %v524, %v620
  %v622 = vpop.f32.mrb[0].mxu0
  %623 = vmatprep.mubr.bf16.mxu0 %v229
  %624 = vmatmul.mubr.bf16.gmra.mrb[0].mxu0 %v228
  %v625 = vpop.f32.mrb[0].mxu0
  %v626 = vadd.f32 %v529, %v625
  %v627 = vpop.f32.mrb[0].mxu0
  %v628 = vpop.f32.mrb[0].mxu0
  %v629 = vadd.f32 %v532, %v628
  %v630 = vpop.f32.mrb[0].mxu0
  %631 = vmatprep.mubr.bf16.mxu0 %v233
  %632 = vmatmul.mubr.bf16.gmra.mrb[0].mxu0 %v232
  %v633 = vpop.f32.mrb[0].mxu0
  %v634 = vadd.f32 %v537, %v633
  %v635 = vpop.f32.mrb[0].mxu0
  %v636 = vpop.f32.mrb[0].mxu0
  %v637 = vadd.f32 %v540, %v636
  %v638 = vpop.f32.mrb[0].mxu0
  %639 = vmatprep.mubr.bf16.mxu0 %v237
  %640 = vmatmul.mubr.bf16.gmra.mrb[0].mxu0 %v236
  %v641 = vpop.f32.mrb[0].mxu0
  %v642 = vadd.f32 %v545, %v641
  %v643 = vpop.f32.mrb[0].mxu0
  %v644 = vpop.f32.mrb[0].mxu0
  %v645 = vadd.f32 %v548, %v644
  %v646 = vpop.f32.mrb[0].mxu0
  %647 = vmatprep.mubr.bf16.mxu0 %v241
  %648 = vmatmul.mubr.bf16.gmra.mrb[0].mxu0 %v240
  %v649 = vpop.f32.mrb[0].mxu0
  %v650 = vadd.f32 %v553, %v649
  %v651 = vpop.f32.mrb[0].mxu0
  %v652 = vpop.f32.mrb[0].mxu0
  %v653 = vadd.f32 %v556, %v652
  %v654 = vpop.f32.mrb[0].mxu0
  %655 = vmatprep.mubr.bf16.mxu0 %v245
  %656 = vmatmul.mubr.bf16.gmra.mrb[0].mxu0 %v244
  %v657 = vpop.f32.mrb[0].mxu0
  %v658 = vadd.f32 %v561, %v657
  %v659 = vpop.f32.mrb[0].mxu0
  %v660 = vpop.f32.mrb[0].mxu0
  %v661 = vadd.f32 %v564, %v660
  %v662 = vpop.f32.mrb[0].mxu0
  %663 = vdwg.mxu0
  %vm664 = vcmp.gt.f32.partialorder %v602, 0.0
  %vm665 = vcmp.gt.f32.partialorder %v605, 0.0
  %vm666 = vcmp.gt.f32.partialorder %v610, 0.0
  %vm667 = vcmp.gt.f32.partialorder %v613, 0.0
  %vm668 = vcmp.gt.f32.partialorder %v618, 0.0
  %vm669 = vcmp.gt.f32.partialorder %v621, 0.0
  %vm670 = vcmp.gt.f32.partialorder %v626, 0.0
  %vm671 = vcmp.gt.f32.partialorder %v629, 0.0
  %vm672 = vcmp.gt.f32.partialorder %v634, 0.0
  %vm673 = vcmp.gt.f32.partialorder %v637, 0.0
  %vm674 = vcmp.gt.f32.partialorder %v642, 0.0
  %vm675 = vcmp.gt.f32.partialorder %v645, 0.0
  %vm676 = vcmp.gt.f32.partialorder %v650, 0.0
  %vm677 = vcmp.gt.f32.partialorder %v653, 0.0
  %vm678 = vcmp.gt.f32.partialorder %v658, 0.0
  %vm679 = vcmp.gt.f32.partialorder %v661, 0.0
  %v680 = vmin.f32 %v602, 0.0
  %v681 = vmin.f32 %v605, 0.0
  %v682 = vmin.f32 %v610, 0.0
  %v683 = vmin.f32 %v613, 0.0
  %v684 = vmin.f32 %v618, 0.0
  %v685 = vmin.f32 %v621, 0.0
  %v686 = vmin.f32 %v626, 0.0
  %v687 = vmin.f32 %v629, 0.0
  %v688 = vmin.f32 %v634, 0.0
  %v689 = vmin.f32 %v637, 0.0
  %v690 = vmin.f32 %v642, 0.0
  %v691 = vmin.f32 %v645, 0.0
  %v692 = vmin.f32 %v650, 0.0
  %v693 = vmin.f32 %v653, 0.0
  %v694 = vmin.f32 %v658, 0.0
  %v695 = vmin.f32 %v661, 0.0
  %v696 = vmul.f32 %v680, 1.442695
  %v697 = vpow.pop %v696
  %v698 = vmul.f32 %v681, 1.442695
  %v699 = vpow.pop %v698
  %v700 = vmul.f32 %v682, 1.442695
  %v701 = vpow.pop %v700
  %v702 = vmul.f32 %v683, 1.442695
  %v703 = vpow.pop %v702
  %v704 = vmul.f32 %v684, 1.442695
  %v705 = vpow.pop %v704
  %v706 = vmul.f32 %v685, 1.442695
  %v707 = vpow.pop %v706
  %v708 = vmul.f32 %v686, 1.442695
  %v709 = vpow.pop %v708
  %v710 = vmul.f32 %v687, 1.442695
  %v711 = vpow.pop %v710
  %v712 = vmul.f32 %v688, 1.442695
  %v713 = vpow.pop %v712
  %v714 = vmul.f32 %v689, 1.442695
  %v715 = vpow.pop %v714
  %v716 = vmul.f32 %v690, 1.442695
  %v717 = vpow.pop %v716
  %v718 = vmul.f32 %v691, 1.442695
  %v719 = vpow.pop %v718
  %v720 = vmul.f32 %v692, 1.442695
  %v721 = vpow.pop %v720
  %v722 = vmul.f32 %v693, 1.442695
  %v723 = vpow.pop %v722
  %v724 = vmul.f32 %v694, 1.442695
  %v725 = vpow.pop %v724
  %v726 = vmul.f32 %v695, 1.442695
  %v727 = vpow.pop %v726
  %v728 = vsub.f32 %v697, 1.0
  %v729 = vsub.f32 %v699, 1.0
  %v730 = vsub.f32 %v701, 1.0
  %v731 = vsub.f32 %v703, 1.0
  %v732 = vsub.f32 %v705, 1.0
  %v733 = vsub.f32 %v707, 1.0
  %v734 = vsub.f32 %v709, 1.0
  %v735 = vsub.f32 %v711, 1.0
  %v736 = vsub.f32 %v713, 1.0
  %v737 = vsub.f32 %v715, 1.0
  %v738 = vsub.f32 %v717, 1.0
  %v739 = vsub.f32 %v719, 1.0
  %v740 = vsub.f32 %v721, 1.0
  %v741 = vsub.f32 %v723, 1.0
  %v742 = vsub.f32 %v725, 1.0
  %v743 = vsub.f32 %v727, 1.0
  %v744 = vsel %vm664, %v602, %v728
  %v745 = vsel %vm665, %v605, %v729
  %v746 = vsel %vm666, %v610, %v730
  %v747 = vsel %vm667, %v613, %v731
  %v748 = vsel %vm668, %v618, %v732
  %v749 = vsel %vm669, %v621, %v733
  %v750 = vsel %vm670, %v626, %v734
  %v751 = vsel %vm671, %v629, %v735
  %v752 = vsel %vm672, %v634, %v736
  %v753 = vsel %vm673, %v637, %v737
  %v754 = vsel %vm674, %v642, %v738
  %v755 = vsel %vm675, %v645, %v739
  %v756 = vsel %vm676, %v650, %v740
  %v757 = vsel %vm677, %v653, %v741
  %v758 = vsel %vm678, %v658, %v742
  %v759 = vsel %vm679, %v661, %v743
  %v760 = vpack.c.bf16 %v745, %v744
  %v761 = vpack.c.bf16 %v747, %v746
  %v762 = vpack.c.bf16 %v749, %v748
  %v763 = vpack.c.bf16 %v751, %v750
  %v764 = vpack.c.bf16 %v753, %v752
  %v765 = vpack.c.bf16 %v755, %v754
  %v766 = vpack.c.bf16 %v757, %v756
  %v767 = vpack.c.bf16 %v759, %v758
  %v776 = vunpack.c.l.b16 %v760
  %v777 = vunpack.c.h.b16 %v760
  %v778 = vunpack.c.l.b16 %v761
  %v779 = vunpack.c.h.b16 %v761
  %v780 = vunpack.c.l.b16 %v762
  %v781 = vunpack.c.h.b16 %v762
  %v782 = vunpack.c.l.b16 %v763
  %v783 = vunpack.c.h.b16 %v763
  %v784 = vunpack.c.l.b16 %v764
  %v785 = vunpack.c.h.b16 %v764
  %v786 = vunpack.c.l.b16 %v765
  %v787 = vunpack.c.h.b16 %v765
  %v788 = vunpack.c.l.b16 %v766
  %v789 = vunpack.c.h.b16 %v766
  %v790 = vunpack.c.l.b16 %v767
  %v791 = vunpack.c.h.b16 %v767
  %v792 = vpack.c.b16 %v776, %v776
  %v793 = vpack.c.b16 %v777, %v777
  %v794 = vpack.c.b16 %v778, %v778
  %v795 = vpack.c.b16 %v779, %v779
  %v796 = vpack.c.b16 %v780, %v780
  %v797 = vpack.c.b16 %v781, %v781
  %v798 = vpack.c.b16 %v782, %v782
  %v799 = vpack.c.b16 %v783, %v783
  %v800 = vpack.c.b16 %v784, %v784
  %v801 = vpack.c.b16 %v785, %v785
  %v802 = vpack.c.b16 %v786, %v786
  %v803 = vpack.c.b16 %v787, %v787
  %v804 = vpack.c.b16 %v788, %v788
  %v805 = vpack.c.b16 %v789, %v789
  %v806 = vpack.c.b16 %v790, %v790
  %v807 = vpack.c.b16 %v791, %v791
  %824 = vst [vmem:[%s3] sm:$0xf] %v792
  %825 = vst [vmem:[%s3 + $0x4] sm:$0xf] %v793
  %826 = vst [vmem:[%s3 + $0x8] sm:$0xf] %v794
  %827 = vst [vmem:[%s3 + $0xc] sm:$0xf] %v795
  %828 = vst [vmem:[%s3 + $0x10] sm:$0xf] %v796
  %829 = vst [vmem:[%s3 + $0x14] sm:$0xf] %v797
  %830 = vst [vmem:[%s3 + $0x18] sm:$0xf] %v798
  %831 = vst [vmem:[%s3 + $0x1c] sm:$0xf] %v799
  %832 = vst [vmem:[%s3 + $0x20] sm:$0xf] %v800
  %833 = vst [vmem:[%s3 + $0x24] sm:$0xf] %v801
  %834 = vst [vmem:[%s3 + $0x28] sm:$0xf] %v802
  %835 = vst [vmem:[%s3 + $0x2c] sm:$0xf] %v803
  %836 = vst [vmem:[%s3 + $0x30] sm:$0xf] %v804
  %837 = vst [vmem:[%s3 + $0x34] sm:$0xf] %v805
  %838 = vst [vmem:[%s3 + $0x38] sm:$0xf] %v806
  %839 = vst [vmem:[%s3 + $0x3c] sm:$0xf] %v807
  // Predicated region
  $region14: #{end2end_forward.9} parent=0 // pred_check
    _
  $region15: #{end2end_forward.9} parent=0 // pred_check_branch
    %841 = sbr.rel (0) target = $region17
  $region16: #{end2end_forward.9} parent=0 // pred_region
    _
  $region17: #{end2end_forward.9} parent=0 // pred_fallthru
    _
  // Predicated region
  $region18: #{end2end_forward.9} parent=0 // pred_check
    _
  $region19: #{end2end_forward.9} parent=0 // pred_check_branch
    %843 = sbr.rel (0) target = $region21
  $region20: #{end2end_forward.9} parent=0 // pred_region
    _
  $region21: #{end2end_forward.9} parent=0 // pred_fallthru
    _

// kernel: end2end_forward.10
$region0: #{end2end_forward.10}
  #allocation0 [shape = 'u32[]', space=smem, size = 0x4, offset = 0x4, fixed_abs, tag = 'smem constant byte address 0x4 - core index']
  #allocation1 [shape = 'u32[144,128]{1,0:T(1,128)}', space=vmem, size = 0x12000, scoped, tag = 'internal scratch']
  %s0 = inlined_call_operand.vmem [shape: bf16[48,640], index: 0, kind: input, shape index: {}]
  %s1 = inlined_call_operand.vmem [shape: bf16[640,128], index: 1, kind: input, shape index: {}]
  %s2 = inlined_call_operand.vmem [shape: f32[1,128], index: 2, kind: input, shape index: {}]
  %s3 = inlined_call_operand.vmem [shape: bf16[48,128], index: 3, kind: output, shape index: {}]
  %s4 = sld [smem:[#allocation0]]
  $region22: #{end2end_forward.10} parent=0
    _
  %s6 = ssub.s32 1, %s4
  %s7 = scalar_select 0, %s6, %s4
  // Predicated region
  $region2: #{end2end_forward.10} parent=0 // pred_check
    _
  $region3: #{end2end_forward.10} parent=0 // pred_check_branch
    %9 = sbr.rel (0) target = $region5
  $region4: #{end2end_forward.10} parent=0 // pred_region
    _
  $region5: #{end2end_forward.10} parent=0 // pred_fallthru
    _
  // Predicated region
  $region6: #{end2end_forward.10} parent=0 // pred_check
    _
  $region7: #{end2end_forward.10} parent=0 // pred_check_branch
    %11 = sbr.rel (0) target = $region9
  $region8: #{end2end_forward.10} parent=0 // pred_region
    _
  $region9: #{end2end_forward.10} parent=0 // pred_fallthru
    _
  // Predicated region
  $region10: #{end2end_forward.10} parent=0 // pred_check
    _
  $region11: #{end2end_forward.10} parent=0 // pred_check_branch
    %13 = sbr.rel (0) target = $region13
  $region12: #{end2end_forward.10} parent=0 // pred_region
    _
  $region13: #{end2end_forward.10} parent=0 // pred_fallthru
    _
  %v15 = vld [vmem:[%s0] sm:$0xff]
  %v16 = vld [vmem:[%s0 + $0x8] sm:$0xff]
  %v17 = vld [vmem:[%s0 + $0x10] sm:$0xf]
  %v18 = vld [vmem:[%s0 + $0x14] sm:$0xff]
  %v19 = vld [vmem:[%s0 + $0x1c] sm:$0xff]
  %v20 = vld [vmem:[%s0 + $0x24] sm:$0xf]
  %v21 = vld [vmem:[%s0 + $0x28] sm:$0xff]
  %v22 = vld [vmem:[%s0 + $0x30] sm:$0xff]
  %v23 = vld [vmem:[%s0 + $0x38] sm:$0xf]
  %v24 = vld [vmem:[%s0 + $0x3c] sm:$0xff]
  %v25 = vld [vmem:[%s0 + $0x44] sm:$0xff]
  %v26 = vld [vmem:[%s0 + $0x4c] sm:$0xf]
  %v27 = vld [vmem:[%s0 + $0x50] sm:$0xff]
  %v28 = vld [vmem:[%s0 + $0x58] sm:$0xff]
  %v29 = vld [vmem:[%s0 + $0x60] sm:$0xf]
  %v30 = vld [vmem:[%s0 + $0x64] sm:$0xff]
  %v31 = vld [vmem:[%s0 + $0x6c] sm:$0xff]
  %v32 = vld [vmem:[%s0 + $0x74] sm:$0xf]
  %v33 = vld [vmem:[%s1] sm:$0xf]
  %v34 = vld [vmem:[%s1 + $0x4] sm:$0xf]
  %v35 = vld [vmem:[%s1 + $0x8] sm:$0xf]
  %v36 = vld [vmem:[%s1 + $0xc] sm:$0xf]
  %v37 = vld [vmem:[%s1 + $0x10] sm:$0xf]
  %v38 = vld [vmem:[%s1 + $0x14] sm:$0xf]
  %v39 = vld [vmem:[%s1 + $0x18] sm:$0xf]
  %v40 = vld [vmem:[%s1 + $0x1c] sm:$0xf]
  %v41 = vld [vmem:[%s1 + $0x20] sm:$0xf]
  %v42 = vld [vmem:[%s1 + $0x24] sm:$0xf]
  %v43 = vld [vmem:[%s1 + $0x28] sm:$0xf]
  %v44 = vld [vmem:[%s1 + $0x2c] sm:$0xf]
  %v45 = vld [vmem:[%s1 + $0x30] sm:$0xf]
  %v46 = vld [vmem:[%s1 + $0x34] sm:$0xf]
  %v47 = vld [vmem:[%s1 + $0x38] sm:$0xf]
  %v48 = vld [vmem:[%s1 + $0x3c] sm:$0xf]
  %v49 = vld [vmem:[%s1 + $0x40] sm:$0xf]
  %v50 = vld [vmem:[%s1 + $0x44] sm:$0xf]
  %v51 = vld [vmem:[%s1 + $0x48] sm:$0xf]
  %v52 = vld [vmem:[%s1 + $0x4c] sm:$0xf]
  %v53 = vld [vmem:[%s1 + $0x50] sm:$0xf]
  %v54 = vld [vmem:[%s1 + $0x54] sm:$0xf]
  %v55 = vld [vmem:[%s1 + $0x58] sm:$0xf]
  %v56 = vld [vmem:[%s1 + $0x5c] sm:$0xf]
  %v57 = vld [vmem:[%s1 + $0x60] sm:$0xf]
  %v58 = vld [vmem:[%s1 + $0x64] sm:$0xf]
  %v59 = vld [vmem:[%s1 + $0x68] sm:$0xf]
  %v60 = vld [vmem:[%s1 + $0x6c] sm:$0xf]
  %v61 = vld [vmem:[%s1 + $0x70] sm:$0xf]
  %v62 = vld [vmem:[%s1 + $0x74] sm:$0xf]
  %v63 = vld [vmem:[%s1 + $0x78] sm:$0xf]
  %v64 = vld [vmem:[%s1 + $0x7c] sm:$0xf]
  %v65 = vld [vmem:[%s1 + $0x80] sm:$0xf]
  %v66 = vld [vmem:[%s1 + $0x84] sm:$0xf]
  %v67 = vld [vmem:[%s1 + $0x88] sm:$0xf]
  %v68 = vld [vmem:[%s1 + $0x8c] sm:$0xf]
  %v69 = vld [vmem:[%s1 + $0x90] sm:$0xf]
  %v70 = vld [vmem:[%s1 + $0x94] sm:$0xf]
  %v71 = vld [vmem:[%s1 + $0x98] sm:$0xf]
  %v72 = vld [vmem:[%s1 + $0x9c] sm:$0xf]
  %v73 = vld [vmem:[%s1 + $0xa0] sm:$0xf]
  %v74 = vld [vmem:[%s1 + $0xa4] sm:$0xf]
  %v75 = vld [vmem:[%s1 + $0xa8] sm:$0xf]
  %v76 = vld [vmem:[%s1 + $0xac] sm:$0xf]
  %v77 = vld [vmem:[%s1 + $0xb0] sm:$0xf]
  %v78 = vld [vmem:[%s1 + $0xb4] sm:$0xf]
  %v79 = vld [vmem:[%s1 + $0xb8] sm:$0xf]
  %v80 = vld [vmem:[%s1 + $0xbc] sm:$0xf]
  %v81 = vld [vmem:[%s1 + $0xc0] sm:$0xf]
  %v82 = vld [vmem:[%s1 + $0xc4] sm:$0xf]
  %v83 = vld [vmem:[%s1 + $0xc8] sm:$0xf]
  %v84 = vld [vmem:[%s1 + $0xcc] sm:$0xf]
  %v85 = vld [vmem:[%s1 + $0xd0] sm:$0xf]
  %v86 = vld [vmem:[%s1 + $0xd4] sm:$0xf]
  %v87 = vld [vmem:[%s1 + $0xd8] sm:$0xf]
  %v88 = vld [vmem:[%s1 + $0xdc] sm:$0xf]
  %v89 = vld [vmem:[%s1 + $0xe0] sm:$0xf]
  %v90 = vld [vmem:[%s1 + $0xe4] sm:$0xf]
  %v91 = vld [vmem:[%s1 + $0xe8] sm:$0xf]
  %v92 = vld [vmem:[%s1 + $0xec] sm:$0xf]
  %v93 = vld [vmem:[%s1 + $0xf0] sm:$0xf]
  %v94 = vld [vmem:[%s1 + $0xf4] sm:$0xf]
  %v95 = vld [vmem:[%s1 + $0xf8] sm:$0xf]
  %v96 = vld [vmem:[%s1 + $0xfc] sm:$0xf]
  %v97 = vld [vmem:[%s1 + $0x100] sm:$0xf]
  %v98 = vld [vmem:[%s1 + $0x104] sm:$0xf]
  %v99 = vld [vmem:[%s1 + $0x108] sm:$0xf]
  %v100 = vld [vmem:[%s1 + $0x10c] sm:$0xf]
  %v101 = vld [vmem:[%s1 + $0x110] sm:$0xf]
  %v102 = vld [vmem:[%s1 + $0x114] sm:$0xf]
  %v103 = vld [vmem:[%s1 + $0x118] sm:$0xf]
  %v104 = vld [vmem:[%s1 + $0x11c] sm:$0xf]
  %v105 = vld [vmem:[%s1 + $0x120] sm:$0xf]
  %v106 = vld [vmem:[%s1 + $0x124] sm:$0xf]
  %v107 = vld [vmem:[%s1 + $0x128] sm:$0xf]
  %v108 = vld [vmem:[%s1 + $0x12c] sm:$0xf]
  %v109 = vld [vmem:[%s1 + $0x130] sm:$0xf]
  %v110 = vld [vmem:[%s1 + $0x134] sm:$0xf]
  %v111 = vld [vmem:[%s1 + $0x138] sm:$0xf]
  %v112 = vld [vmem:[%s1 + $0x13c] sm:$0xf]
  %v113 = vld [vmem:[%s2] sm:$0x1]
  %v115 = vlaneseq
  %v116 = vshrl.u32 %v115, 7
  %v117 = vsub.s32 0, %v116
  %v118 = vrot.slane %v113, %v117
  %v138 = vunpack.c.l.b16 %v15
  %v139 = vunpack.c.h.b16 %v15
  %v140 = vunpack.c.l.b16 %v16
  %v141 = vunpack.c.h.b16 %v16
  %v142 = vunpack.c.l.b16 %v17
  %v143 = vunpack.c.l.b16 %v18
  %v144 = vunpack.c.h.b16 %v18
  %v145 = vunpack.c.l.b16 %v19
  %v146 = vunpack.c.h.b16 %v19
  %v147 = vunpack.c.l.b16 %v20
  %v148 = vunpack.c.l.b16 %v21
  %v149 = vunpack.c.h.b16 %v21
  %v150 = vunpack.c.l.b16 %v22
  %v151 = vunpack.c.h.b16 %v22
  %v152 = vunpack.c.l.b16 %v23
  %v153 = vunpack.c.l.b16 %v24
  %v154 = vunpack.c.h.b16 %v24
  %v155 = vunpack.c.l.b16 %v25
  %v156 = vunpack.c.h.b16 %v25
  %v157 = vunpack.c.l.b16 %v26
  %v158 = vunpack.c.l.b16 %v27
  %v159 = vunpack.c.h.b16 %v27
  %v160 = vunpack.c.l.b16 %v28
  %v161 = vunpack.c.h.b16 %v28
  %v162 = vunpack.c.l.b16 %v29
  %v163 = vunpack.c.l.b16 %v30
  %v164 = vunpack.c.h.b16 %v30
  %v165 = vunpack.c.l.b16 %v31
  %v166 = vunpack.c.h.b16 %v31
  %v167 = vunpack.c.l.b16 %v32
  %v168 = vpack.c.b16 %v143, %v138
  %v169 = vpack.c.b16 %v144, %v139
  %v170 = vpack.c.b16 %v145, %v140
  %v171 = vpack.c.b16 %v146, %v141
  %v172 = vpack.c.b16 %v147, %v142
  %v173 = vpack.c.b16 %v153, %v148
  %v174 = vpack.c.b16 %v154, %v149
  %v175 = vpack.c.b16 %v155, %v150
  %v176 = vpack.c.b16 %v156, %v151
  %v177 = vpack.c.b16 %v157, %v152
  %v178 = vpack.c.b16 %v163, %v158
  %v179 = vpack.c.b16 %v164, %v159
  %v180 = vpack.c.b16 %v165, %v160
  %v181 = vpack.c.b16 %v166, %v161
  %v182 = vpack.c.b16 %v167, %v162
  %v278 = vunpack.c.l.b16 %v33
  %v279 = vunpack.c.l.b16 %v34
  %v280 = vunpack.c.l.b16 %v35
  %v281 = vunpack.c.l.b16 %v36
  %v282 = vunpack.c.l.b16 %v37
  %v283 = vunpack.c.l.b16 %v38
  %v284 = vunpack.c.l.b16 %v39
  %v285 = vunpack.c.l.b16 %v40
  %v286 = vunpack.c.l.b16 %v41
  %v287 = vunpack.c.l.b16 %v42
  %v288 = vunpack.c.l.b16 %v43
  %v289 = vunpack.c.l.b16 %v44
  %v290 = vunpack.c.l.b16 %v45
  %v291 = vunpack.c.l.b16 %v46
  %v292 = vunpack.c.l.b16 %v47
  %v293 = vunpack.c.l.b16 %v48
  %v294 = vunpack.c.l.b16 %v49
  %v295 = vunpack.c.l.b16 %v50
  %v296 = vunpack.c.l.b16 %v51
  %v297 = vunpack.c.l.b16 %v52
  %v298 = vunpack.c.l.b16 %v53
  %v299 = vunpack.c.l.b16 %v54
  %v300 = vunpack.c.l.b16 %v55
  %v301 = vunpack.c.l.b16 %v56
  %v302 = vunpack.c.l.b16 %v57
  %v303 = vunpack.c.l.b16 %v58
  %v304 = vunpack.c.l.b16 %v59
  %v305 = vunpack.c.l.b16 %v60
  %v306 = vunpack.c.l.b16 %v61
  %v307 = vunpack.c.l.b16 %v62
  %v308 = vunpack.c.l.b16 %v63
  %v309 = vunpack.c.l.b16 %v64
  %v310 = vunpack.c.l.b16 %v65
  %v311 = vunpack.c.l.b16 %v66
  %v312 = vunpack.c.l.b16 %v67
  %v313 = vunpack.c.l.b16 %v68
  %v314 = vunpack.c.l.b16 %v69
  %v315 = vunpack.c.l.b16 %v70
  %v316 = vunpack.c.l.b16 %v71
  %v317 = vunpack.c.l.b16 %v72
  %v318 = vunpack.c.l.b16 %v73
  %v319 = vunpack.c.l.b16 %v74
  %v320 = vunpack.c.l.b16 %v75
  %v321 = vunpack.c.l.b16 %v76
  %v322 = vunpack.c.l.b16 %v77
  %v323 = vunpack.c.l.b16 %v78
  %v324 = vunpack.c.l.b16 %v79
  %v325 = vunpack.c.l.b16 %v80
  %v326 = vunpack.c.l.b16 %v81
  %v327 = vunpack.c.l.b16 %v82
  %v328 = vunpack.c.l.b16 %v83
  %v329 = vunpack.c.l.b16 %v84
  %v330 = vunpack.c.l.b16 %v85
  %v331 = vunpack.c.l.b16 %v86
  %v332 = vunpack.c.l.b16 %v87
  %v333 = vunpack.c.l.b16 %v88
  %v334 = vunpack.c.l.b16 %v89
  %v335 = vunpack.c.l.b16 %v90
  %v336 = vunpack.c.l.b16 %v91
  %v337 = vunpack.c.l.b16 %v92
  %v338 = vunpack.c.l.b16 %v93
  %v339 = vunpack.c.l.b16 %v94
  %v340 = vunpack.c.l.b16 %v95
  %v341 = vunpack.c.l.b16 %v96
  %v342 = vunpack.c.l.b16 %v97
  %v343 = vunpack.c.l.b16 %v98
  %v344 = vunpack.c.l.b16 %v99
  %v345 = vunpack.c.l.b16 %v100
  %v346 = vunpack.c.l.b16 %v101
  %v347 = vunpack.c.l.b16 %v102
  %v348 = vunpack.c.l.b16 %v103
  %v349 = vunpack.c.l.b16 %v104
  %v350 = vunpack.c.l.b16 %v105
  %v351 = vunpack.c.l.b16 %v106
  %v352 = vunpack.c.l.b16 %v107
  %v353 = vunpack.c.l.b16 %v108
  %v354 = vunpack.c.l.b16 %v109
  %v355 = vunpack.c.l.b16 %v110
  %v356 = vunpack.c.l.b16 %v111
  %v357 = vunpack.c.l.b16 %v112
  %v358 = vpack.c.b16 %v279, %v278
  %v359 = vpack.c.b16 %v281, %v280
  %v360 = vpack.c.b16 %v283, %v282
  %v361 = vpack.c.b16 %v285, %v284
  %v362 = vpack.c.b16 %v287, %v286
  %v363 = vpack.c.b16 %v289, %v288
  %v364 = vpack.c.b16 %v291, %v290
  %v365 = vpack.c.b16 %v293, %v292
  %v366 = vpack.c.b16 %v295, %v294
  %v367 = vpack.c.b16 %v297, %v296
  %v368 = vpack.c.b16 %v299, %v298
  %v369 = vpack.c.b16 %v301, %v300
  %v370 = vpack.c.b16 %v303, %v302
  %v371 = vpack.c.b16 %v305, %v304
  %v372 = vpack.c.b16 %v307, %v306
  %v373 = vpack.c.b16 %v309, %v308
  %v374 = vpack.c.b16 %v311, %v310
  %v375 = vpack.c.b16 %v313, %v312
  %v376 = vpack.c.b16 %v315, %v314
  %v377 = vpack.c.b16 %v317, %v316
  %v378 = vpack.c.b16 %v319, %v318
  %v379 = vpack.c.b16 %v321, %v320
  %v380 = vpack.c.b16 %v323, %v322
  %v381 = vpack.c.b16 %v325, %v324
  %v382 = vpack.c.b16 %v327, %v326
  %v383 = vpack.c.b16 %v329, %v328
  %v384 = vpack.c.b16 %v331, %v330
  %v385 = vpack.c.b16 %v333, %v332
  %v386 = vpack.c.b16 %v335, %v334
  %v387 = vpack.c.b16 %v337, %v336
  %v388 = vpack.c.b16 %v339, %v338
  %v389 = vpack.c.b16 %v341, %v340
  %v390 = vpack.c.b16 %v343, %v342
  %v391 = vpack.c.b16 %v345, %v344
  %v392 = vpack.c.b16 %v347, %v346
  %v393 = vpack.c.b16 %v349, %v348
  %v394 = vpack.c.b16 %v351, %v350
  %v395 = vpack.c.b16 %v353, %v352
  %v396 = vpack.c.b16 %v355, %v354
  %v397 = vpack.c.b16 %v357, %v356
  %438 = vmatprep.subr.bf16.mxu0 0
  %439 = vmatpush1.bf16.msra.mxu0 %v358
  %440 = vmatprep.subr.bf16.mxu0 0
  %441 = vmatpush1.bf16.msra.mxu0 %v359
  %442 = vmatprep.subr.bf16.mxu0 0
  %443 = vmatpush1.bf16.msra.mxu0 %v360
  %444 = vmatprep.subr.bf16.mxu0 0
  %445 = vmatpush1.bf16.msra.mxu0 %v361
  %446 = vmatprep.subr.bf16.mxu0 0
  %447 = vmatpush1.bf16.msra.mxu0 %v362
  %448 = vmatprep.subr.bf16.mxu0 0
  %449 = vmatpush1.bf16.msra.mxu0 %v363
  %450 = vmatprep.subr.bf16.mxu0 0
  %451 = vmatpush1.bf16.msra.mxu0 %v364
  %452 = vmatprep.subr.bf16.mxu0 0
  %453 = vmatpush1.bf16.msra.mxu0 %v365
  %454 = vmatprep.subr.bf16.mxu0 0
  %455 = vmatpush1.bf16.msra.mxu0 %v366
  %456 = vmatprep.subr.bf16.mxu0 0
  %457 = vmatpush1.bf16.msra.mxu0 %v367
  %458 = vmatprep.subr.bf16.mxu0 0
  %459 = vmatpush1.bf16.msra.mxu0 %v368
  %460 = vmatprep.subr.bf16.mxu0 0
  %461 = vmatpush1.bf16.msra.mxu0 %v369
  %462 = vmatprep.subr.bf16.mxu0 0
  %463 = vmatpush1.bf16.msra.mxu0 %v370
  %464 = vmatprep.subr.bf16.mxu0 0
  %465 = vmatpush1.bf16.msra.mxu0 %v371
  %466 = vmatprep.subr.bf16.mxu0 0
  %467 = vmatpush1.bf16.msra.mxu0 %v372
  %468 = vmatprep.subr.bf16.mxu0 0
  %469 = vmatpush1.bf16.msra.mxu0 %v373
  %470 = vmatprep.mubr.bf16.mxu0 %v169
  %471 = vmatmul.mubr.bf16.gmra.mrb[0].mxu0 %v168
  %v472 = vpop.f32.mrb[0].mxu0
  %v473 = vadd.f32 %v118, %v472
  %v474 = vpop.f32.mrb[0].mxu0
  %v475 = vpop.f32.mrb[0].mxu0
  %v476 = vadd.f32 %v118, %v475
  %v477 = vpop.f32.mrb[0].mxu0
  %478 = vmatprep.mubr.bf16.mxu0 %v174
  %479 = vmatmul.mubr.bf16.gmra.mrb[0].mxu0 %v173
  %v480 = vpop.f32.mrb[0].mxu0
  %v481 = vadd.f32 %v118, %v480
  %v482 = vpop.f32.mrb[0].mxu0
  %v483 = vpop.f32.mrb[0].mxu0
  %v484 = vadd.f32 %v118, %v483
  %v485 = vpop.f32.mrb[0].mxu0
  %486 = vmatprep.mubr.bf16.mxu0 %v179
  %487 = vmatmul.mubr.bf16.gmra.mrb[0].mxu0 %v178
  %v488 = vpop.f32.mrb[0].mxu0
  %v489 = vadd.f32 %v118, %v488
  %v490 = vpop.f32.mrb[0].mxu0
  %v491 = vpop.f32.mrb[0].mxu0
  %v492 = vadd.f32 %v118, %v491
  %v493 = vpop.f32.mrb[0].mxu0
  %494 = vdwg.mxu0
  %495 = vmatprep.subr.bf16.mxu0 0
  %496 = vmatpush1.bf16.msra.mxu0 %v374
  %497 = vmatprep.subr.bf16.mxu0 0
  %498 = vmatpush1.bf16.msra.mxu0 %v375
  %499 = vmatprep.subr.bf16.mxu0 0
  %500 = vmatpush1.bf16.msra.mxu0 %v376
  %501 = vmatprep.subr.bf16.mxu0 0
  %502 = vmatpush1.bf16.msra.mxu0 %v377
  %503 = vmatprep.subr.bf16.mxu0 0
  %504 = vmatpush1.bf16.msra.mxu0 %v378
  %505 = vmatprep.subr.bf16.mxu0 0
  %506 = vmatpush1.bf16.msra.mxu0 %v379
  %507 = vmatprep.subr.bf16.mxu0 0
  %508 = vmatpush1.bf16.msra.mxu0 %v380
  %509 = vmatprep.subr.bf16.mxu0 0
  %510 = vmatpush1.bf16.msra.mxu0 %v381
  %511 = vmatprep.subr.bf16.mxu0 0
  %512 = vmatpush1.bf16.msra.mxu0 %v382
  %513 = vmatprep.subr.bf16.mxu0 0
  %514 = vmatpush1.bf16.msra.mxu0 %v383
  %515 = vmatprep.subr.bf16.mxu0 0
  %516 = vmatpush1.bf16.msra.mxu0 %v384
  %517 = vmatprep.subr.bf16.mxu0 0
  %518 = vmatpush1.bf16.msra.mxu0 %v385
  %519 = vmatprep.subr.bf16.mxu0 0
  %520 = vmatpush1.bf16.msra.mxu0 %v386
  %521 = vmatprep.subr.bf16.mxu0 0
  %522 = vmatpush1.bf16.msra.mxu0 %v387
  %523 = vmatprep.subr.bf16.mxu0 0
  %524 = vmatpush1.bf16.msra.mxu0 %v388
  %525 = vmatprep.subr.bf16.mxu0 0
  %526 = vmatpush1.bf16.msra.mxu0 %v389
  %527 = vmatprep.mubr.bf16.mxu0 %v171
  %528 = vmatmul.mubr.bf16.gmra.mrb[0].mxu0 %v170
  %v529 = vpop.f32.mrb[0].mxu0
  %v530 = vadd.f32 %v473, %v529
  %v531 = vpop.f32.mrb[0].mxu0
  %v532 = vpop.f32.mrb[0].mxu0
  %v533 = vadd.f32 %v476, %v532
  %v534 = vpop.f32.mrb[0].mxu0
  %535 = vmatprep.mubr.bf16.mxu0 %v176
  %536 = vmatmul.mubr.bf16.gmra.mrb[0].mxu0 %v175
  %v537 = vpop.f32.mrb[0].mxu0
  %v538 = vadd.f32 %v481, %v537
  %v539 = vpop.f32.mrb[0].mxu0
  %v540 = vpop.f32.mrb[0].mxu0
  %v541 = vadd.f32 %v484, %v540
  %v542 = vpop.f32.mrb[0].mxu0
  %543 = vmatprep.mubr.bf16.mxu0 %v181
  %544 = vmatmul.mubr.bf16.gmra.mrb[0].mxu0 %v180
  %v545 = vpop.f32.mrb[0].mxu0
  %v546 = vadd.f32 %v489, %v545
  %v547 = vpop.f32.mrb[0].mxu0
  %v548 = vpop.f32.mrb[0].mxu0
  %v549 = vadd.f32 %v492, %v548
  %v550 = vpop.f32.mrb[0].mxu0
  %551 = vdwg.mxu0
  %552 = vmatprep.subr.bf16.mxu0 0
  %553 = vmatpush1.bf16.msra.mxu0 %v390
  %554 = vmatprep.subr.bf16.mxu0 0
  %555 = vmatpush1.bf16.msra.mxu0 %v391
  %556 = vmatprep.subr.bf16.mxu0 0
  %557 = vmatpush1.bf16.msra.mxu0 %v392
  %558 = vmatprep.subr.bf16.mxu0 0
  %559 = vmatpush1.bf16.msra.mxu0 %v393
  %560 = vmatprep.subr.bf16.mxu0 0
  %561 = vmatpush1.bf16.msra.mxu0 %v394
  %562 = vmatprep.subr.bf16.mxu0 0
  %563 = vmatpush1.bf16.msra.mxu0 %v395
  %564 = vmatprep.subr.bf16.mxu0 0
  %565 = vmatpush1.bf16.msra.mxu0 %v396
  %566 = vmatprep.subr.bf16.mxu0 0
  %567 = vmatpush1.bf16.msra.mxu0 %v397
  %568 = vmatprep.subr.bf16.mxu0 0
  %569 = vmatpush1.bf16.msra.mxu0 0
  %570 = vmatprep.subr.bf16.mxu0 0
  %571 = vmatpush1.bf16.msra.mxu0 0
  %572 = vmatprep.subr.bf16.mxu0 0
  %573 = vmatpush1.bf16.msra.mxu0 0
  %574 = vmatprep.subr.bf16.mxu0 0
  %575 = vmatpush1.bf16.msra.mxu0 0
  %576 = vmatprep.subr.bf16.mxu0 0
  %577 = vmatpush1.bf16.msra.mxu0 0
  %578 = vmatprep.subr.bf16.mxu0 0
  %579 = vmatpush1.bf16.msra.mxu0 0
  %580 = vmatprep.subr.bf16.mxu0 0
  %581 = vmatpush1.bf16.msra.mxu0 0
  %582 = vmatprep.subr.bf16.mxu0 0
  %583 = vmatpush1.bf16.msra.mxu0 0
  %584 = vmatprep.mubr.bf16.mxu0 0
  %585 = vmatmul.mubr.bf16.gmra.mrb[0].mxu0 %v172
  %v586 = vpop.f32.mrb[0].mxu0
  %v587 = vadd.f32 %v530, %v586
  %v588 = vpop.f32.mrb[0].mxu0
  %v589 = vpop.f32.mrb[0].mxu0
  %v590 = vadd.f32 %v533, %v589
  %v591 = vpop.f32.mrb[0].mxu0
  %592 = vmatprep.mubr.bf16.mxu0 0
  %593 = vmatmul.mubr.bf16.gmra.mrb[0].mxu0 %v177
  %v594 = vpop.f32.mrb[0].mxu0
  %v595 = vadd.f32 %v538, %v594
  %v596 = vpop.f32.mrb[0].mxu0
  %v597 = vpop.f32.mrb[0].mxu0
  %v598 = vadd.f32 %v541, %v597
  %v599 = vpop.f32.mrb[0].mxu0
  %600 = vmatprep.mubr.bf16.mxu0 0
  %601 = vmatmul.mubr.bf16.gmra.mrb[0].mxu0 %v182
  %v602 = vpop.f32.mrb[0].mxu0
  %v603 = vadd.f32 %v546, %v602
  %v604 = vpop.f32.mrb[0].mxu0
  %v605 = vpop.f32.mrb[0].mxu0
  %v606 = vadd.f32 %v549, %v605
  %v607 = vpop.f32.mrb[0].mxu0
  %608 = vdwg.mxu0
  %v609 = vpack.c.bf16 %v590, %v587
  %v610 = vpack.c.bf16 %v598, %v595
  %v611 = vpack.c.bf16 %v606, %v603
  %v615 = vunpack.c.l.b16 %v609
  %v616 = vunpack.c.h.b16 %v609
  %v617 = vunpack.c.l.b16 %v610
  %v618 = vunpack.c.h.b16 %v610
  %v619 = vunpack.c.l.b16 %v611
  %v620 = vunpack.c.h.b16 %v611
  %v621 = vpack.c.b16 %v615, %v615
  %v622 = vpack.c.b16 %v616, %v616
  %v623 = vpack.c.b16 %v617, %v617
  %v624 = vpack.c.b16 %v618, %v618
  %v625 = vpack.c.b16 %v619, %v619
  %v626 = vpack.c.b16 %v620, %v620
  %633 = vst [vmem:[%s3] sm:$0xf] %v621
  %634 = vst [vmem:[%s3 + $0x4] sm:$0xf] %v622
  %635 = vst [vmem:[%s3 + $0x8] sm:$0xf] %v623
  %636 = vst [vmem:[%s3 + $0xc] sm:$0xf] %v624
  %637 = vst [vmem:[%s3 + $0x10] sm:$0xf] %v625
  %638 = vst [vmem:[%s3 + $0x14] sm:$0xf] %v626
  // Predicated region
  $region14: #{end2end_forward.10} parent=0 // pred_check
    _
  $region15: #{end2end_forward.10} parent=0 // pred_check_branch
    %640 = sbr.rel (0) target = $region17
  $region16: #{end2end_forward.10} parent=0 // pred_region
    _
  $region17: #{end2end_forward.10} parent=0 // pred_fallthru
    _
  // Predicated region
  $region18: #{end2end_forward.10} parent=0 // pred_check
    _
  $region19: #{end2end_forward.10} parent=0 // pred_check_branch
    %642 = sbr.rel (0) target = $region21
  $region20: #{end2end_forward.10} parent=0 // pred_region
    _
  $region21: #{end2end_forward.10} parent=0 // pred_fallthru
    _

// kernel: end2end_forward.11
$region0: #{end2end_forward.11}
  #allocation0 [shape = 'u32[]', space=smem, size = 0x4, offset = 0x4, fixed_abs, tag = 'smem constant byte address 0x4 - core index']
  #allocation1 [shape = 'u32[144,128]{1,0:T(1,128)}', space=vmem, size = 0x12000, scoped, tag = 'internal scratch']
  %s0 = inlined_call_operand.vmem [shape: bf16[16,1152], index: 0, kind: input, shape index: {}]
  %s1 = inlined_call_operand.vmem [shape: bf16[1152,128], index: 1, kind: input, shape index: {}]
  %s2 = inlined_call_operand.vmem [shape: f32[1,128], index: 2, kind: input, shape index: {}]
  %s3 = inlined_call_operand.vmem [shape: bf16[128,128], index: 3, kind: input, shape index: {}]
  %s4 = inlined_call_operand.vmem [shape: f32[1,128], index: 4, kind: input, shape index: {}]
  %s5 = inlined_call_operand.vmem [shape: bf16[128,128], index: 5, kind: input, shape index: {}]
  %s6 = inlined_call_operand.vmem [shape: f32[1,128], index: 6, kind: input, shape index: {}]
  %s7 = inlined_call_operand.vmem [shape: bf16[128,128], index: 7, kind: input, shape index: {}]
  %s8 = inlined_call_operand.vmem [shape: f32[1,128], index: 8, kind: input, shape index: {}]
  %s9 = inlined_call_operand.vmem [shape: f32[16,128], index: 9, kind: output, shape index: {}]
  %s10 = sld [smem:[#allocation0]]
  $region46: #{end2end_forward.11} parent=0
    _
  %s12 = ssub.s32 1, %s10
  %s13 = scalar_select 0, %s12, %s10
  // Predicated region
  $region2: #{end2end_forward.11} parent=0 // pred_check
    _
  $region3: #{end2end_forward.11} parent=0 // pred_check_branch
    %15 = sbr.rel (0) target = $region5
  $region4: #{end2end_forward.11} parent=0 // pred_region
    _
  $region5: #{end2end_forward.11} parent=0 // pred_fallthru
    _
  // Predicated region
  $region6: #{end2end_forward.11} parent=0 // pred_check
    _
  $region7: #{end2end_forward.11} parent=0 // pred_check_branch
    %17 = sbr.rel (0) target = $region9
  $region8: #{end2end_forward.11} parent=0 // pred_region
    _
  $region9: #{end2end_forward.11} parent=0 // pred_fallthru
    _
  // Predicated region
  $region10: #{end2end_forward.11} parent=0 // pred_check
    _
  $region11: #{end2end_forward.11} parent=0 // pred_check_branch
    %19 = sbr.rel (0) target = $region13
  $region12: #{end2end_forward.11} parent=0 // pred_region
    _
  $region13: #{end2end_forward.11} parent=0 // pred_fallthru
    _
  // Predicated region
  $region14: #{end2end_forward.11} parent=0 // pred_check
    _
  $region15: #{end2end_forward.11} parent=0 // pred_check_branch
    %21 = sbr.rel (0) target = $region17
  $region16: #{end2end_forward.11} parent=0 // pred_region
    _
  $region17: #{end2end_forward.11} parent=0 // pred_fallthru
    _
  // Predicated region
  $region18: #{end2end_forward.11} parent=0 // pred_check
    _
  $region19: #{end2end_forward.11} parent=0 // pred_check_branch
    %23 = sbr.rel (0) target = $region21
  $region20: #{end2end_forward.11} parent=0 // pred_region
    _
  $region21: #{end2end_forward.11} parent=0 // pred_fallthru
    _
  // Predicated region
  $region22: #{end2end_forward.11} parent=0 // pred_check
    _
  $region23: #{end2end_forward.11} parent=0 // pred_check_branch
    %25 = sbr.rel (0) target = $region25
  $region24: #{end2end_forward.11} parent=0 // pred_region
    _
  $region25: #{end2end_forward.11} parent=0 // pred_fallthru
    _
  // Predicated region
  $region26: #{end2end_forward.11} parent=0 // pred_check
    _
  $region27: #{end2end_forward.11} parent=0 // pred_check_branch
    %27 = sbr.rel (0) target = $region29
  $region28: #{end2end_forward.11} parent=0 // pred_region
    _
  $region29: #{end2end_forward.11} parent=0 // pred_fallthru
    _
  // Predicated region
  $region30: #{end2end_forward.11} parent=0 // pred_check
    _
  $region31: #{end2end_forward.11} parent=0 // pred_check_branch
    %29 = sbr.rel (0) target = $region33
  $region32: #{end2end_forward.11} parent=0 // pred_region
    _
  $region33: #{end2end_forward.11} parent=0 // pred_fallthru
    _
  // Predicated region
  $region34: #{end2end_forward.11} parent=0 // pred_check
    _
  $region35: #{end2end_forward.11} parent=0 // pred_check_branch
    %31 = sbr.rel (0) target = $region37
  $region36: #{end2end_forward.11} parent=0 // pred_region
    _
  $region37: #{end2end_forward.11} parent=0 // pred_fallthru
    _
  %v33 = vld [vmem:[%s0] sm:$0xff]
  %v34 = vld [vmem:[%s0 + $0x8] sm:$0xff]
  %v35 = vld [vmem:[%s0 + $0x10] sm:$0xff]
  %v36 = vld [vmem:[%s0 + $0x18] sm:$0xff]
  %v37 = vld [vmem:[%s0 + $0x20] sm:$0xf]
  %v38 = vld [vmem:[%s0 + $0x24] sm:$0xff]
  %v39 = vld [vmem:[%s0 + $0x2c] sm:$0xff]
  %v40 = vld [vmem:[%s0 + $0x34] sm:$0xff]
  %v41 = vld [vmem:[%s0 + $0x3c] sm:$0xff]
  %v42 = vld [vmem:[%s0 + $0x44] sm:$0xf]
  %v43 = vld [vmem:[%s1] sm:$0xf]
  %v44 = vld [vmem:[%s1 + $0x4] sm:$0xf]
  %v45 = vld [vmem:[%s1 + $0x8] sm:$0xf]
  %v46 = vld [vmem:[%s1 + $0xc] sm:$0xf]
  %v47 = vld [vmem:[%s1 + $0x10] sm:$0xf]
  %v48 = vld [vmem:[%s1 + $0x14] sm:$0xf]
  %v49 = vld [vmem:[%s1 + $0x18] sm:$0xf]
  %v50 = vld [vmem:[%s1 + $0x1c] sm:$0xf]
  %v51 = vld [vmem:[%s1 + $0x20] sm:$0xf]
  %v52 = vld [vmem:[%s1 + $0x24] sm:$0xf]
  %v53 = vld [vmem:[%s1 + $0x28] sm:$0xf]
  %v54 = vld [vmem:[%s1 + $0x2c] sm:$0xf]
  %v55 = vld [vmem:[%s1 + $0x30] sm:$0xf]
  %v56 = vld [vmem:[%s1 + $0x34] sm:$0xf]
  %v57 = vld [vmem:[%s1 + $0x38] sm:$0xf]
  %v58 = vld [vmem:[%s1 + $0x3c] sm:$0xf]
  %v59 = vld [vmem:[%s1 + $0x40] sm:$0xf]
  %v60 = vld [vmem:[%s1 + $0x44] sm:$0xf]
  %v61 = vld [vmem:[%s1 + $0x48] sm:$0xf]
  %v62 = vld [vmem:[%s1 + $0x4c] sm:$0xf]
  %v63 = vld [vmem:[%s1 + $0x50] sm:$0xf]
  %v64 = vld [vmem:[%s1 + $0x54] sm:$0xf]
  %v65 = vld [vmem:[%s1 + $0x58] sm:$0xf]
  %v66 = vld [vmem:[%s1 + $0x5c] sm:$0xf]
  %v67 = vld [vmem:[%s1 + $0x60] sm:$0xf]
  %v68 = vld [vmem:[%s1 + $0x64] sm:$0xf]
  %v69 = vld [vmem:[%s1 + $0x68] sm:$0xf]
  %v70 = vld [vmem:[%s1 + $0x6c] sm:$0xf]
  %v71 = vld [vmem:[%s1 + $0x70] sm:$0xf]
  %v72 = vld [vmem:[%s1 + $0x74] sm:$0xf]
  %v73 = vld [vmem:[%s1 + $0x78] sm:$0xf]
  %v74 = vld [vmem:[%s1 + $0x7c] sm:$0xf]
  %v75 = vld [vmem:[%s1 + $0x80] sm:$0xf]
  %v76 = vld [vmem:[%s1 + $0x84] sm:$0xf]
  %v77 = vld [vmem:[%s1 + $0x88] sm:$0xf]
  %v78 = vld [vmem:[%s1 + $0x8c] sm:$0xf]
  %v79 = vld [vmem:[%s1 + $0x90] sm:$0xf]
  %v80 = vld [vmem:[%s1 + $0x94] sm:$0xf]
  %v81 = vld [vmem:[%s1 + $0x98] sm:$0xf]
  %v82 = vld [vmem:[%s1 + $0x9c] sm:$0xf]
  %v83 = vld [vmem:[%s1 + $0xa0] sm:$0xf]
  %v84 = vld [vmem:[%s1 + $0xa4] sm:$0xf]
  %v85 = vld [vmem:[%s1 + $0xa8] sm:$0xf]
  %v86 = vld [vmem:[%s1 + $0xac] sm:$0xf]
  %v87 = vld [vmem:[%s1 + $0xb0] sm:$0xf]
  %v88 = vld [vmem:[%s1 + $0xb4] sm:$0xf]
  %v89 = vld [vmem:[%s1 + $0xb8] sm:$0xf]
  %v90 = vld [vmem:[%s1 + $0xbc] sm:$0xf]
  %v91 = vld [vmem:[%s1 + $0xc0] sm:$0xf]
  %v92 = vld [vmem:[%s1 + $0xc4] sm:$0xf]
  %v93 = vld [vmem:[%s1 + $0xc8] sm:$0xf]
  %v94 = vld [vmem:[%s1 + $0xcc] sm:$0xf]
  %v95 = vld [vmem:[%s1 + $0xd0] sm:$0xf]
  %v96 = vld [vmem:[%s1 + $0xd4] sm:$0xf]
  %v97 = vld [vmem:[%s1 + $0xd8] sm:$0xf]
  %v98 = vld [vmem:[%s1 + $0xdc] sm:$0xf]
  %v99 = vld [vmem:[%s1 + $0xe0] sm:$0xf]
  %v100 = vld [vmem:[%s1 + $0xe4] sm:$0xf]
  %v101 = vld [vmem:[%s1 + $0xe8] sm:$0xf]
  %v102 = vld [vmem:[%s1 + $0xec] sm:$0xf]
  %v103 = vld [vmem:[%s1 + $0xf0] sm:$0xf]
  %v104 = vld [vmem:[%s1 + $0xf4] sm:$0xf]
  %v105 = vld [vmem:[%s1 + $0xf8] sm:$0xf]
  %v106 = vld [vmem:[%s1 + $0xfc] sm:$0xf]
  %v107 = vld [vmem:[%s1 + $0x100] sm:$0xf]
  %v108 = vld [vmem:[%s1 + $0x104] sm:$0xf]
  %v109 = vld [vmem:[%s1 + $0x108] sm:$0xf]
  %v110 = vld [vmem:[%s1 + $0x10c] sm:$0xf]
  %v111 = vld [vmem:[%s1 + $0x110] sm:$0xf]
  %v112 = vld [vmem:[%s1 + $0x114] sm:$0xf]
  %v113 = vld [vmem:[%s1 + $0x118] sm:$0xf]
  %v114 = vld [vmem:[%s1 + $0x11c] sm:$0xf]
  %v115 = vld [vmem:[%s1 + $0x120] sm:$0xf]
  %v116 = vld [vmem:[%s1 + $0x124] sm:$0xf]
  %v117 = vld [vmem:[%s1 + $0x128] sm:$0xf]
  %v118 = vld [vmem:[%s1 + $0x12c] sm:$0xf]
  %v119 = vld [vmem:[%s1 + $0x130] sm:$0xf]
  %v120 = vld [vmem:[%s1 + $0x134] sm:$0xf]
  %v121 = vld [vmem:[%s1 + $0x138] sm:$0xf]
  %v122 = vld [vmem:[%s1 + $0x13c] sm:$0xf]
  %v123 = vld [vmem:[%s1 + $0x140] sm:$0xf]
  %v124 = vld [vmem:[%s1 + $0x144] sm:$0xf]
  %v125 = vld [vmem:[%s1 + $0x148] sm:$0xf]
  %v126 = vld [vmem:[%s1 + $0x14c] sm:$0xf]
  %v127 = vld [vmem:[%s1 + $0x150] sm:$0xf]
  %v128 = vld [vmem:[%s1 + $0x154] sm:$0xf]
  %v129 = vld [vmem:[%s1 + $0x158] sm:$0xf]
  %v130 = vld [vmem:[%s1 + $0x15c] sm:$0xf]
  %v131 = vld [vmem:[%s1 + $0x160] sm:$0xf]
  %v132 = vld [vmem:[%s1 + $0x164] sm:$0xf]
  %v133 = vld [vmem:[%s1 + $0x168] sm:$0xf]
  %v134 = vld [vmem:[%s1 + $0x16c] sm:$0xf]
  %v135 = vld [vmem:[%s1 + $0x170] sm:$0xf]
  %v136 = vld [vmem:[%s1 + $0x174] sm:$0xf]
  %v137 = vld [vmem:[%s1 + $0x178] sm:$0xf]
  %v138 = vld [vmem:[%s1 + $0x17c] sm:$0xf]
  %v139 = vld [vmem:[%s1 + $0x180] sm:$0xf]
  %v140 = vld [vmem:[%s1 + $0x184] sm:$0xf]
  %v141 = vld [vmem:[%s1 + $0x188] sm:$0xf]
  %v142 = vld [vmem:[%s1 + $0x18c] sm:$0xf]
  %v143 = vld [vmem:[%s1 + $0x190] sm:$0xf]
  %v144 = vld [vmem:[%s1 + $0x194] sm:$0xf]
  %v145 = vld [vmem:[%s1 + $0x198] sm:$0xf]
  %v146 = vld [vmem:[%s1 + $0x19c] sm:$0xf]
  %v147 = vld [vmem:[%s1 + $0x1a0] sm:$0xf]
  %v148 = vld [vmem:[%s1 + $0x1a4] sm:$0xf]
  %v149 = vld [vmem:[%s1 + $0x1a8] sm:$0xf]
  %v150 = vld [vmem:[%s1 + $0x1ac] sm:$0xf]
  %v151 = vld [vmem:[%s1 + $0x1b0] sm:$0xf]
  %v152 = vld [vmem:[%s1 + $0x1b4] sm:$0xf]
  %v153 = vld [vmem:[%s1 + $0x1b8] sm:$0xf]
  %v154 = vld [vmem:[%s1 + $0x1bc] sm:$0xf]
  %v155 = vld [vmem:[%s1 + $0x1c0] sm:$0xf]
  %v156 = vld [vmem:[%s1 + $0x1c4] sm:$0xf]
  %v157 = vld [vmem:[%s1 + $0x1c8] sm:$0xf]
  %v158 = vld [vmem:[%s1 + $0x1cc] sm:$0xf]
  %v159 = vld [vmem:[%s1 + $0x1d0] sm:$0xf]
  %v160 = vld [vmem:[%s1 + $0x1d4] sm:$0xf]
  %v161 = vld [vmem:[%s1 + $0x1d8] sm:$0xf]
  %v162 = vld [vmem:[%s1 + $0x1dc] sm:$0xf]
  %v163 = vld [vmem:[%s1 + $0x1e0] sm:$0xf]
  %v164 = vld [vmem:[%s1 + $0x1e4] sm:$0xf]
  %v165 = vld [vmem:[%s1 + $0x1e8] sm:$0xf]
  %v166 = vld [vmem:[%s1 + $0x1ec] sm:$0xf]
  %v167 = vld [vmem:[%s1 + $0x1f0] sm:$0xf]
  %v168 = vld [vmem:[%s1 + $0x1f4] sm:$0xf]
  %v169 = vld [vmem:[%s1 + $0x1f8] sm:$0xf]
  %v170 = vld [vmem:[%s1 + $0x1fc] sm:$0xf]
  %v171 = vld [vmem:[%s1 + $0x200] sm:$0xf]
  %v172 = vld [vmem:[%s1 + $0x204] sm:$0xf]
  %v173 = vld [vmem:[%s1 + $0x208] sm:$0xf]
  %v174 = vld [vmem:[%s1 + $0x20c] sm:$0xf]
  %v175 = vld [vmem:[%s1 + $0x210] sm:$0xf]
  %v176 = vld [vmem:[%s1 + $0x214] sm:$0xf]
  %v177 = vld [vmem:[%s1 + $0x218] sm:$0xf]
  %v178 = vld [vmem:[%s1 + $0x21c] sm:$0xf]
  %v179 = vld [vmem:[%s1 + $0x220] sm:$0xf]
  %v180 = vld [vmem:[%s1 + $0x224] sm:$0xf]
  %v181 = vld [vmem:[%s1 + $0x228] sm:$0xf]
  %v182 = vld [vmem:[%s1 + $0x22c] sm:$0xf]
  %v183 = vld [vmem:[%s1 + $0x230] sm:$0xf]
  %v184 = vld [vmem:[%s1 + $0x234] sm:$0xf]
  %v185 = vld [vmem:[%s1 + $0x238] sm:$0xf]
  %v186 = vld [vmem:[%s1 + $0x23c] sm:$0xf]
  %v187 = vld [vmem:[%s2] sm:$0x1]
  %v189 = vlaneseq
  %v190 = vshrl.u32 %v189, 7
  %v191 = vsub.s32 0, %v190
  %v192 = vrot.slane %v187, %v191
  %v204 = vunpack.c.l.b16 %v33
  %v205 = vunpack.c.h.b16 %v33
  %v206 = vunpack.c.l.b16 %v34
  %v207 = vunpack.c.h.b16 %v34
  %v208 = vunpack.c.l.b16 %v35
  %v209 = vunpack.c.h.b16 %v35
  %v210 = vunpack.c.l.b16 %v36
  %v211 = vunpack.c.h.b16 %v36
  %v212 = vunpack.c.l.b16 %v37
  %v213 = vunpack.c.l.b16 %v38
  %v214 = vunpack.c.h.b16 %v38
  %v215 = vunpack.c.l.b16 %v39
  %v216 = vunpack.c.h.b16 %v39
  %v217 = vunpack.c.l.b16 %v40
  %v218 = vunpack.c.h.b16 %v40
  %v219 = vunpack.c.l.b16 %v41
  %v220 = vunpack.c.h.b16 %v41
  %v221 = vunpack.c.l.b16 %v42
  %v222 = vpack.c.b16 %v213, %v204
  %v223 = vpack.c.b16 %v214, %v205
  %v224 = vpack.c.b16 %v215, %v206
  %v225 = vpack.c.b16 %v216, %v207
  %v226 = vpack.c.b16 %v217, %v208
  %v227 = vpack.c.b16 %v218, %v209
  %v228 = vpack.c.b16 %v219, %v210
  %v229 = vpack.c.b16 %v220, %v211
  %v230 = vpack.c.b16 %v221, %v212
  %v384 = vunpack.c.l.b16 %v43
  %v385 = vunpack.c.l.b16 %v44
  %v386 = vunpack.c.l.b16 %v45
  %v387 = vunpack.c.l.b16 %v46
  %v388 = vunpack.c.l.b16 %v47
  %v389 = vunpack.c.l.b16 %v48
  %v390 = vunpack.c.l.b16 %v49
  %v391 = vunpack.c.l.b16 %v50
  %v392 = vunpack.c.l.b16 %v51
  %v393 = vunpack.c.l.b16 %v52
  %v394 = vunpack.c.l.b16 %v53
  %v395 = vunpack.c.l.b16 %v54
  %v396 = vunpack.c.l.b16 %v55
  %v397 = vunpack.c.l.b16 %v56
  %v398 = vunpack.c.l.b16 %v57
  %v399 = vunpack.c.l.b16 %v58
  %v400 = vunpack.c.l.b16 %v59
  %v401 = vunpack.c.l.b16 %v60
  %v402 = vunpack.c.l.b16 %v61
  %v403 = vunpack.c.l.b16 %v62
  %v404 = vunpack.c.l.b16 %v63
  %v405 = vunpack.c.l.b16 %v64
  %v406 = vunpack.c.l.b16 %v65
  %v407 = vunpack.c.l.b16 %v66
  %v408 = vunpack.c.l.b16 %v67
  %v409 = vunpack.c.l.b16 %v68
  %v410 = vunpack.c.l.b16 %v69
  %v411 = vunpack.c.l.b16 %v70
  %v412 = vunpack.c.l.b16 %v71
  %v413 = vunpack.c.l.b16 %v72
  %v414 = vunpack.c.l.b16 %v73
  %v415 = vunpack.c.l.b16 %v74
  %v416 = vunpack.c.l.b16 %v75
  %v417 = vunpack.c.l.b16 %v76
  %v418 = vunpack.c.l.b16 %v77
  %v419 = vunpack.c.l.b16 %v78
  %v420 = vunpack.c.l.b16 %v79
  %v421 = vunpack.c.l.b16 %v80
  %v422 = vunpack.c.l.b16 %v81
  %v423 = vunpack.c.l.b16 %v82
  %v424 = vunpack.c.l.b16 %v83
  %v425 = vunpack.c.l.b16 %v84
  %v426 = vunpack.c.l.b16 %v85
  %v427 = vunpack.c.l.b16 %v86
  %v428 = vunpack.c.l.b16 %v87
  %v429 = vunpack.c.l.b16 %v88
  %v430 = vunpack.c.l.b16 %v89
  %v431 = vunpack.c.l.b16 %v90
  %v432 = vunpack.c.l.b16 %v91
  %v433 = vunpack.c.l.b16 %v92
  %v434 = vunpack.c.l.b16 %v93
  %v435 = vunpack.c.l.b16 %v94
  %v436 = vunpack.c.l.b16 %v95
  %v437 = vunpack.c.l.b16 %v96
  %v438 = vunpack.c.l.b16 %v97
  %v439 = vunpack.c.l.b16 %v98
  %v440 = vunpack.c.l.b16 %v99
  %v441 = vunpack.c.l.b16 %v100
  %v442 = vunpack.c.l.b16 %v101
  %v443 = vunpack.c.l.b16 %v102
  %v444 = vunpack.c.l.b16 %v103
  %v445 = vunpack.c.l.b16 %v104
  %v446 = vunpack.c.l.b16 %v105
  %v447 = vunpack.c.l.b16 %v106
  %v448 = vunpack.c.l.b16 %v107
  %v449 = vunpack.c.l.b16 %v108
  %v450 = vunpack.c.l.b16 %v109
  %v451 = vunpack.c.l.b16 %v110
  %v452 = vunpack.c.l.b16 %v111
  %v453 = vunpack.c.l.b16 %v112
  %v454 = vunpack.c.l.b16 %v113
  %v455 = vunpack.c.l.b16 %v114
  %v456 = vunpack.c.l.b16 %v115
  %v457 = vunpack.c.l.b16 %v116
  %v458 = vunpack.c.l.b16 %v117
  %v459 = vunpack.c.l.b16 %v118
  %v460 = vunpack.c.l.b16 %v119
  %v461 = vunpack.c.l.b16 %v120
  %v462 = vunpack.c.l.b16 %v121
  %v463 = vunpack.c.l.b16 %v122
  %v464 = vunpack.c.l.b16 %v123
  %v465 = vunpack.c.l.b16 %v124
  %v466 = vunpack.c.l.b16 %v125
  %v467 = vunpack.c.l.b16 %v126
  %v468 = vunpack.c.l.b16 %v127
  %v469 = vunpack.c.l.b16 %v128
  %v470 = vunpack.c.l.b16 %v129
  %v471 = vunpack.c.l.b16 %v130
  %v472 = vunpack.c.l.b16 %v131
  %v473 = vunpack.c.l.b16 %v132
  %v474 = vunpack.c.l.b16 %v133
  %v475 = vunpack.c.l.b16 %v134
  %v476 = vunpack.c.l.b16 %v135
  %v477 = vunpack.c.l.b16 %v136
  %v478 = vunpack.c.l.b16 %v137
  %v479 = vunpack.c.l.b16 %v138
  %v480 = vunpack.c.l.b16 %v139
  %v481 = vunpack.c.l.b16 %v140
  %v482 = vunpack.c.l.b16 %v141
  %v483 = vunpack.c.l.b16 %v142
  %v484 = vunpack.c.l.b16 %v143
  %v485 = vunpack.c.l.b16 %v144
  %v486 = vunpack.c.l.b16 %v145
  %v487 = vunpack.c.l.b16 %v146
  %v488 = vunpack.c.l.b16 %v147
  %v489 = vunpack.c.l.b16 %v148
  %v490 = vunpack.c.l.b16 %v149
  %v491 = vunpack.c.l.b16 %v150
  %v492 = vunpack.c.l.b16 %v151
  %v493 = vunpack.c.l.b16 %v152
  %v494 = vunpack.c.l.b16 %v153
  %v495 = vunpack.c.l.b16 %v154
  %v496 = vunpack.c.l.b16 %v155
  %v497 = vunpack.c.l.b16 %v156
  %v498 = vunpack.c.l.b16 %v157
  %v499 = vunpack.c.l.b16 %v158
  %v500 = vunpack.c.l.b16 %v159
  %v501 = vunpack.c.l.b16 %v160
  %v502 = vunpack.c.l.b16 %v161
  %v503 = vunpack.c.l.b16 %v162
  %v504 = vunpack.c.l.b16 %v163
  %v505 = vunpack.c.l.b16 %v164
  %v506 = vunpack.c.l.b16 %v165
  %v507 = vunpack.c.l.b16 %v166
  %v508 = vunpack.c.l.b16 %v167
  %v509 = vunpack.c.l.b16 %v168
  %v510 = vunpack.c.l.b16 %v169
  %v511 = vunpack.c.l.b16 %v170
  %v512 = vunpack.c.l.b16 %v171
  %v513 = vunpack.c.l.b16 %v172
  %v514 = vunpack.c.l.b16 %v173
  %v515 = vunpack.c.l.b16 %v174
  %v516 = vunpack.c.l.b16 %v175
  %v517 = vunpack.c.l.b16 %v176
  %v518 = vunpack.c.l.b16 %v177
  %v519 = vunpack.c.l.b16 %v178
  %v520 = vunpack.c.l.b16 %v179
  %v521 = vunpack.c.l.b16 %v180
  %v522 = vunpack.c.l.b16 %v181
  %v523 = vunpack.c.l.b16 %v182
  %v524 = vunpack.c.l.b16 %v183
  %v525 = vunpack.c.l.b16 %v184
  %v526 = vunpack.c.l.b16 %v185
  %v527 = vunpack.c.l.b16 %v186
  %v528 = vpack.c.b16 %v385, %v384
  %v529 = vpack.c.b16 %v387, %v386
  %v530 = vpack.c.b16 %v389, %v388
  %v531 = vpack.c.b16 %v391, %v390
  %v532 = vpack.c.b16 %v393, %v392
  %v533 = vpack.c.b16 %v395, %v394
  %v534 = vpack.c.b16 %v397, %v396
  %v535 = vpack.c.b16 %v399, %v398
  %v536 = vpack.c.b16 %v401, %v400
  %v537 = vpack.c.b16 %v403, %v402
  %v538 = vpack.c.b16 %v405, %v404
  %v539 = vpack.c.b16 %v407, %v406
  %v540 = vpack.c.b16 %v409, %v408
  %v541 = vpack.c.b16 %v411, %v410
  %v542 = vpack.c.b16 %v413, %v412
  %v543 = vpack.c.b16 %v415, %v414
  %v544 = vpack.c.b16 %v417, %v416
  %v545 = vpack.c.b16 %v419, %v418
  %v546 = vpack.c.b16 %v421, %v420
  %v547 = vpack.c.b16 %v423, %v422
  %v548 = vpack.c.b16 %v425, %v424
  %v549 = vpack.c.b16 %v427, %v426
  %v550 = vpack.c.b16 %v429, %v428
  %v551 = vpack.c.b16 %v431, %v430
  %v552 = vpack.c.b16 %v433, %v432
  %v553 = vpack.c.b16 %v435, %v434
  %v554 = vpack.c.b16 %v437, %v436
  %v555 = vpack.c.b16 %v439, %v438
  %v556 = vpack.c.b16 %v441, %v440
  %v557 = vpack.c.b16 %v443, %v442
  %v558 = vpack.c.b16 %v445, %v444
  %v559 = vpack.c.b16 %v447, %v446
  %v560 = vpack.c.b16 %v449, %v448
  %v561 = vpack.c.b16 %v451, %v450
  %v562 = vpack.c.b16 %v453, %v452
  %v563 = vpack.c.b16 %v455, %v454
  %v564 = vpack.c.b16 %v457, %v456
  %v565 = vpack.c.b16 %v459, %v458
  %v566 = vpack.c.b16 %v461, %v460
  %v567 = vpack.c.b16 %v463, %v462
  %v568 = vpack.c.b16 %v465, %v464
  %v569 = vpack.c.b16 %v467, %v466
  %v570 = vpack.c.b16 %v469, %v468
  %v571 = vpack.c.b16 %v471, %v470
  %v572 = vpack.c.b16 %v473, %v472
  %v573 = vpack.c.b16 %v475, %v474
  %v574 = vpack.c.b16 %v477, %v476
  %v575 = vpack.c.b16 %v479, %v478
  %v576 = vpack.c.b16 %v481, %v480
  %v577 = vpack.c.b16 %v483, %v482
  %v578 = vpack.c.b16 %v485, %v484
  %v579 = vpack.c.b16 %v487, %v486
  %v580 = vpack.c.b16 %v489, %v488
  %v581 = vpack.c.b16 %v491, %v490
  %v582 = vpack.c.b16 %v493, %v492
  %v583 = vpack.c.b16 %v495, %v494
  %v584 = vpack.c.b16 %v497, %v496
  %v585 = vpack.c.b16 %v499, %v498
  %v586 = vpack.c.b16 %v501, %v500
  %v587 = vpack.c.b16 %v503, %v502
  %v588 = vpack.c.b16 %v505, %v504
  %v589 = vpack.c.b16 %v507, %v506
  %v590 = vpack.c.b16 %v509, %v508
  %v591 = vpack.c.b16 %v511, %v510
  %v592 = vpack.c.b16 %v513, %v512
  %v593 = vpack.c.b16 %v515, %v514
  %v594 = vpack.c.b16 %v517, %v516
  %v595 = vpack.c.b16 %v519, %v518
  %v596 = vpack.c.b16 %v521, %v520
  %v597 = vpack.c.b16 %v523, %v522
  %v598 = vpack.c.b16 %v525, %v524
  %v599 = vpack.c.b16 %v527, %v526
  %672 = vmatprep.subr.bf16.mxu0 0
  %673 = vmatpush1.bf16.msra.mxu0 %v528
  %674 = vmatprep.subr.bf16.mxu0 0
  %675 = vmatpush1.bf16.msra.mxu0 %v529
  %676 = vmatprep.subr.bf16.mxu0 0
  %677 = vmatpush1.bf16.msra.mxu0 %v530
  %678 = vmatprep.subr.bf16.mxu0 0
  %679 = vmatpush1.bf16.msra.mxu0 %v531
  %680 = vmatprep.subr.bf16.mxu0 0
  %681 = vmatpush1.bf16.msra.mxu0 %v532
  %682 = vmatprep.subr.bf16.mxu0 0
  %683 = vmatpush1.bf16.msra.mxu0 %v533
  %684 = vmatprep.subr.bf16.mxu0 0
  %685 = vmatpush1.bf16.msra.mxu0 %v534
  %686 = vmatprep.subr.bf16.mxu0 0
  %687 = vmatpush1.bf16.msra.mxu0 %v535
  %688 = vmatprep.subr.bf16.mxu0 0
  %689 = vmatpush1.bf16.msra.mxu0 %v536
  %690 = vmatprep.subr.bf16.mxu0 0
  %691 = vmatpush1.bf16.msra.mxu0 %v537
  %692 = vmatprep.subr.bf16.mxu0 0
  %693 = vmatpush1.bf16.msra.mxu0 %v538
  %694 = vmatprep.subr.bf16.mxu0 0
  %695 = vmatpush1.bf16.msra.mxu0 %v539
  %696 = vmatprep.subr.bf16.mxu0 0
  %697 = vmatpush1.bf16.msra.mxu0 %v540
  %698 = vmatprep.subr.bf16.mxu0 0
  %699 = vmatpush1.bf16.msra.mxu0 %v541
  %700 = vmatprep.subr.bf16.mxu0 0
  %701 = vmatpush1.bf16.msra.mxu0 %v542
  %702 = vmatprep.subr.bf16.mxu0 0
  %703 = vmatpush1.bf16.msra.mxu0 %v543
  %704 = vmatprep.mubr.bf16.mxu0 %v223
  %705 = vmatmul.mubr.bf16.gmra.mrb[0].mxu0 %v222
  %v706 = vpop.f32.mrb[0].mxu0
  %v707 = vadd.f32 %v192, %v706
  %v708 = vpop.f32.mrb[0].mxu0
  %v709 = vpop.f32.mrb[0].mxu0
  %v710 = vadd.f32 %v192, %v709
  %v711 = vpop.f32.mrb[0].mxu0
  %712 = vdwg.mxu0
  %713 = vmatprep.subr.bf16.mxu0 0
  %714 = vmatpush1.bf16.msra.mxu0 %v544
  %715 = vmatprep.subr.bf16.mxu0 0
  %716 = vmatpush1.bf16.msra.mxu0 %v545
  %717 = vmatprep.subr.bf16.mxu0 0
  %718 = vmatpush1.bf16.msra.mxu0 %v546
  %719 = vmatprep.subr.bf16.mxu0 0
  %720 = vmatpush1.bf16.msra.mxu0 %v547
  %721 = vmatprep.subr.bf16.mxu0 0
  %722 = vmatpush1.bf16.msra.mxu0 %v548
  %723 = vmatprep.subr.bf16.mxu0 0
  %724 = vmatpush1.bf16.msra.mxu0 %v549
  %725 = vmatprep.subr.bf16.mxu0 0
  %726 = vmatpush1.bf16.msra.mxu0 %v550
  %727 = vmatprep.subr.bf16.mxu0 0
  %728 = vmatpush1.bf16.msra.mxu0 %v551
  %729 = vmatprep.subr.bf16.mxu0 0
  %730 = vmatpush1.bf16.msra.mxu0 %v552
  %731 = vmatprep.subr.bf16.mxu0 0
  %732 = vmatpush1.bf16.msra.mxu0 %v553
  %733 = vmatprep.subr.bf16.mxu0 0
  %734 = vmatpush1.bf16.msra.mxu0 %v554
  %735 = vmatprep.subr.bf16.mxu0 0
  %736 = vmatpush1.bf16.msra.mxu0 %v555
  %737 = vmatprep.subr.bf16.mxu0 0
  %738 = vmatpush1.bf16.msra.mxu0 %v556
  %739 = vmatprep.subr.bf16.mxu0 0
  %740 = vmatpush1.bf16.msra.mxu0 %v557
  %741 = vmatprep.subr.bf16.mxu0 0
  %742 = vmatpush1.bf16.msra.mxu0 %v558
  %743 = vmatprep.subr.bf16.mxu0 0
  %744 = vmatpush1.bf16.msra.mxu0 %v559
  %745 = vmatprep.mubr.bf16.mxu0 %v225
  %746 = vmatmul.mubr.bf16.gmra.mrb[0].mxu0 %v224
  %v747 = vpop.f32.mrb[0].mxu0
  %v748 = vadd.f32 %v707, %v747
  %v749 = vpop.f32.mrb[0].mxu0
  %v750 = vpop.f32.mrb[0].mxu0
  %v751 = vadd.f32 %v710, %v750
  %v752 = vpop.f32.mrb[0].mxu0
  %753 = vdwg.mxu0
  %754 = vmatprep.subr.bf16.mxu0 0
  %755 = vmatpush1.bf16.msra.mxu0 %v560
  %756 = vmatprep.subr.bf16.mxu0 0
  %757 = vmatpush1.bf16.msra.mxu0 %v561
  %758 = vmatprep.subr.bf16.mxu0 0
  %759 = vmatpush1.bf16.msra.mxu0 %v562
  %760 = vmatprep.subr.bf16.mxu0 0
  %761 = vmatpush1.bf16.msra.mxu0 %v563
  %762 = vmatprep.subr.bf16.mxu0 0
  %763 = vmatpush1.bf16.msra.mxu0 %v564
  %764 = vmatprep.subr.bf16.mxu0 0
  %765 = vmatpush1.bf16.msra.mxu0 %v565
  %766 = vmatprep.subr.bf16.mxu0 0
  %767 = vmatpush1.bf16.msra.mxu0 %v566
  %768 = vmatprep.subr.bf16.mxu0 0
  %769 = vmatpush1.bf16.msra.mxu0 %v567
  %770 = vmatprep.subr.bf16.mxu0 0
  %771 = vmatpush1.bf16.msra.mxu0 %v568
  %772 = vmatprep.subr.bf16.mxu0 0
  %773 = vmatpush1.bf16.msra.mxu0 %v569
  %774 = vmatprep.subr.bf16.mxu0 0
  %775 = vmatpush1.bf16.msra.mxu0 %v570
  %776 = vmatprep.subr.bf16.mxu0 0
  %777 = vmatpush1.bf16.msra.mxu0 %v571
  %778 = vmatprep.subr.bf16.mxu0 0
  %779 = vmatpush1.bf16.msra.mxu0 %v572
  %780 = vmatprep.subr.bf16.mxu0 0
  %781 = vmatpush1.bf16.msra.mxu0 %v573
  %782 = vmatprep.subr.bf16.mxu0 0
  %783 = vmatpush1.bf16.msra.mxu0 %v574
  %784 = vmatprep.subr.bf16.mxu0 0
  %785 = vmatpush1.bf16.msra.mxu0 %v575
  %786 = vmatprep.mubr.bf16.mxu0 %v227
  %787 = vmatmul.mubr.bf16.gmra.mrb[0].mxu0 %v226
  %v788 = vpop.f32.mrb[0].mxu0
  %v789 = vadd.f32 %v748, %v788
  %v790 = vpop.f32.mrb[0].mxu0
  %v791 = vpop.f32.mrb[0].mxu0
  %v792 = vadd.f32 %v751, %v791
  %v793 = vpop.f32.mrb[0].mxu0
  %794 = vdwg.mxu0
  %795 = vmatprep.subr.bf16.mxu0 0
  %796 = vmatpush1.bf16.msra.mxu0 %v576
  %797 = vmatprep.subr.bf16.mxu0 0
  %798 = vmatpush1.bf16.msra.mxu0 %v577
  %799 = vmatprep.subr.bf16.mxu0 0
  %800 = vmatpush1.bf16.msra.mxu0 %v578
  %801 = vmatprep.subr.bf16.mxu0 0
  %802 = vmatpush1.bf16.msra.mxu0 %v579
  %803 = vmatprep.subr.bf16.mxu0 0
  %804 = vmatpush1.bf16.msra.mxu0 %v580
  %805 = vmatprep.subr.bf16.mxu0 0
  %806 = vmatpush1.bf16.msra.mxu0 %v581
  %807 = vmatprep.subr.bf16.mxu0 0
  %808 = vmatpush1.bf16.msra.mxu0 %v582
  %809 = vmatprep.subr.bf16.mxu0 0
  %810 = vmatpush1.bf16.msra.mxu0 %v583
  %811 = vmatprep.subr.bf16.mxu0 0
  %812 = vmatpush1.bf16.msra.mxu0 %v584
  %813 = vmatprep.subr.bf16.mxu0 0
  %814 = vmatpush1.bf16.msra.mxu0 %v585
  %815 = vmatprep.subr.bf16.mxu0 0
  %816 = vmatpush1.bf16.msra.mxu0 %v586
  %817 = vmatprep.subr.bf16.mxu0 0
  %818 = vmatpush1.bf16.msra.mxu0 %v587
  %819 = vmatprep.subr.bf16.mxu0 0
  %820 = vmatpush1.bf16.msra.mxu0 %v588
  %821 = vmatprep.subr.bf16.mxu0 0
  %822 = vmatpush1.bf16.msra.mxu0 %v589
  %823 = vmatprep.subr.bf16.mxu0 0
  %824 = vmatpush1.bf16.msra.mxu0 %v590
  %825 = vmatprep.subr.bf16.mxu0 0
  %826 = vmatpush1.bf16.msra.mxu0 %v591
  %827 = vmatprep.mubr.bf16.mxu0 %v229
  %828 = vmatmul.mubr.bf16.gmra.mrb[0].mxu0 %v228
  %v829 = vpop.f32.mrb[0].mxu0
  %v830 = vadd.f32 %v789, %v829
  %v831 = vpop.f32.mrb[0].mxu0
  %v832 = vpop.f32.mrb[0].mxu0
  %v833 = vadd.f32 %v792, %v832
  %v834 = vpop.f32.mrb[0].mxu0
  %835 = vdwg.mxu0
  %836 = vmatprep.subr.bf16.mxu0 0
  %837 = vmatpush1.bf16.msra.mxu0 %v592
  %838 = vmatprep.subr.bf16.mxu0 0
  %839 = vmatpush1.bf16.msra.mxu0 %v593
  %840 = vmatprep.subr.bf16.mxu0 0
  %841 = vmatpush1.bf16.msra.mxu0 %v594
  %842 = vmatprep.subr.bf16.mxu0 0
  %843 = vmatpush1.bf16.msra.mxu0 %v595
  %844 = vmatprep.subr.bf16.mxu0 0
  %845 = vmatpush1.bf16.msra.mxu0 %v596
  %846 = vmatprep.subr.bf16.mxu0 0
  %847 = vmatpush1.bf16.msra.mxu0 %v597
  %848 = vmatprep.subr.bf16.mxu0 0
  %849 = vmatpush1.bf16.msra.mxu0 %v598
  %850 = vmatprep.subr.bf16.mxu0 0
  %851 = vmatpush1.bf16.msra.mxu0 %v599
  %852 = vmatprep.subr.bf16.mxu0 0
  %853 = vmatpush1.bf16.msra.mxu0 0
  %854 = vmatprep.subr.bf16.mxu0 0
  %855 = vmatpush1.bf16.msra.mxu0 0
  %856 = vmatprep.subr.bf16.mxu0 0
  %857 = vmatpush1.bf16.msra.mxu0 0
  %858 = vmatprep.subr.bf16.mxu0 0
  %859 = vmatpush1.bf16.msra.mxu0 0
  %860 = vmatprep.subr.bf16.mxu0 0
  %861 = vmatpush1.bf16.msra.mxu0 0
  %862 = vmatprep.subr.bf16.mxu0 0
  %863 = vmatpush1.bf16.msra.mxu0 0
  %864 = vmatprep.subr.bf16.mxu0 0
  %865 = vmatpush1.bf16.msra.mxu0 0
  %866 = vmatprep.subr.bf16.mxu0 0
  %867 = vmatpush1.bf16.msra.mxu0 0
  %868 = vmatprep.mubr.bf16.mxu0 0
  %869 = vmatmul.mubr.bf16.gmra.mrb[0].mxu0 %v230
  %v870 = vpop.f32.mrb[0].mxu0
  %v871 = vadd.f32 %v830, %v870
  %v872 = vpop.f32.mrb[0].mxu0
  %v873 = vpop.f32.mrb[0].mxu0
  %v874 = vadd.f32 %v833, %v873
  %v875 = vpop.f32.mrb[0].mxu0
  %876 = vdwg.mxu0
  %vm877 = vcmp.gt.f32.partialorder %v871, 0.0
  %vm878 = vcmp.gt.f32.partialorder %v874, 0.0
  %v879 = vmin.f32 %v871, 0.0
  %v880 = vmin.f32 %v874, 0.0
  %v881 = vmul.f32 %v879, 1.442695
  %v882 = vpow.pop %v881
  %v883 = vmul.f32 %v880, 1.442695
  %v884 = vpow.pop %v883
  %v885 = vsub.f32 %v882, 1.0
  %v886 = vsub.f32 %v884, 1.0
  %v887 = vsel %vm877, %v871, %v885
  %v888 = vsel %vm878, %v874, %v886
  %v889 = vpack.c.bf16 %v888, %v887
  %v890 = vld [vmem:[%s3] sm:$0xf]
  %v891 = vld [vmem:[%s3 + $0x4] sm:$0xf]
  %v892 = vld [vmem:[%s3 + $0x8] sm:$0xf]
  %v893 = vld [vmem:[%s3 + $0xc] sm:$0xf]
  %v894 = vld [vmem:[%s3 + $0x10] sm:$0xf]
  %v895 = vld [vmem:[%s3 + $0x14] sm:$0xf]
  %v896 = vld [vmem:[%s3 + $0x18] sm:$0xf]
  %v897 = vld [vmem:[%s3 + $0x1c] sm:$0xf]
  %v898 = vld [vmem:[%s3 + $0x20] sm:$0xf]
  %v899 = vld [vmem:[%s3 + $0x24] sm:$0xf]
  %v900 = vld [vmem:[%s3 + $0x28] sm:$0xf]
  %v901 = vld [vmem:[%s3 + $0x2c] sm:$0xf]
  %v902 = vld [vmem:[%s3 + $0x30] sm:$0xf]
  %v903 = vld [vmem:[%s3 + $0x34] sm:$0xf]
  %v904 = vld [vmem:[%s3 + $0x38] sm:$0xf]
  %v905 = vld [vmem:[%s3 + $0x3c] sm:$0xf]
  %v906 = vld [vmem:[%s4] sm:$0x1]
  %v908 = vlaneseq
  %v909 = vshrl.u32 %v908, 7
  %v910 = vsub.s32 0, %v909
  %v911 = vrot.slane %v906, %v910
  %v929 = vunpack.c.l.b16 %v890
  %v930 = vunpack.c.l.b16 %v891
  %v931 = vunpack.c.l.b16 %v892
  %v932 = vunpack.c.l.b16 %v893
  %v933 = vunpack.c.l.b16 %v894
  %v934 = vunpack.c.l.b16 %v895
  %v935 = vunpack.c.l.b16 %v896
  %v936 = vunpack.c.l.b16 %v897
  %v937 = vunpack.c.l.b16 %v898
  %v938 = vunpack.c.l.b16 %v899
  %v939 = vunpack.c.l.b16 %v900
  %v940 = vunpack.c.l.b16 %v901
  %v941 = vunpack.c.l.b16 %v902
  %v942 = vunpack.c.l.b16 %v903
  %v943 = vunpack.c.l.b16 %v904
  %v944 = vunpack.c.l.b16 %v905
  %v945 = vpack.c.b16 %v930, %v929
  %v946 = vpack.c.b16 %v932, %v931
  %v947 = vpack.c.b16 %v934, %v933
  %v948 = vpack.c.b16 %v936, %v935
  %v949 = vpack.c.b16 %v938, %v937
  %v950 = vpack.c.b16 %v940, %v939
  %v951 = vpack.c.b16 %v942, %v941
  %v952 = vpack.c.b16 %v944, %v943
  %961 = vmatprep.subr.bf16.mxu0 0
  %962 = vmatpush1.bf16.msra.mxu0 %v945
  %963 = vmatprep.subr.bf16.mxu0 0
  %964 = vmatpush1.bf16.msra.mxu0 %v946
  %965 = vmatprep.subr.bf16.mxu0 0
  %966 = vmatpush1.bf16.msra.mxu0 %v947
  %967 = vmatprep.subr.bf16.mxu0 0
  %968 = vmatpush1.bf16.msra.mxu0 %v948
  %969 = vmatprep.subr.bf16.mxu0 0
  %970 = vmatpush1.bf16.msra.mxu0 %v949
  %971 = vmatprep.subr.bf16.mxu0 0
  %972 = vmatpush1.bf16.msra.mxu0 %v950
  %973 = vmatprep.subr.bf16.mxu0 0
  %974 = vmatpush1.bf16.msra.mxu0 %v951
  %975 = vmatprep.subr.bf16.mxu0 0
  %976 = vmatpush1.bf16.msra.mxu0 %v952
  %977 = vmatprep.subr.bf16.mxu0 0
  %978 = vmatpush1.bf16.msra.mxu0 0
  %979 = vmatprep.subr.bf16.mxu0 0
  %980 = vmatpush1.bf16.msra.mxu0 0
  %981 = vmatprep.subr.bf16.mxu0 0
  %982 = vmatpush1.bf16.msra.mxu0 0
  %983 = vmatprep.subr.bf16.mxu0 0
  %984 = vmatpush1.bf16.msra.mxu0 0
  %985 = vmatprep.subr.bf16.mxu0 0
  %986 = vmatpush1.bf16.msra.mxu0 0
  %987 = vmatprep.subr.bf16.mxu0 0
  %988 = vmatpush1.bf16.msra.mxu0 0
  %989 = vmatprep.subr.bf16.mxu0 0
  %990 = vmatpush1.bf16.msra.mxu0 0
  %991 = vmatprep.subr.bf16.mxu0 0
  %992 = vmatpush1.bf16.msra.mxu0 0
  %993 = vmatprep.mubr.bf16.mxu0 0
  %994 = vmatmul.mubr.bf16.gmra.mrb[0].mxu0 %v889
  %v995 = vpop.f32.mrb[0].mxu0
  %v996 = vadd.f32 %v911, %v995
  %v997 = vpop.f32.mrb[0].mxu0
  %v998 = vpop.f32.mrb[0].mxu0
  %v999 = vadd.f32 %v911, %v998
  %v1000 = vpop.f32.mrb[0].mxu0
  %1001 = vdwg.mxu0
  %vm1002 = vcmp.gt.f32.partialorder %v996, 0.0
  %vm1003 = vcmp.gt.f32.partialorder %v999, 0.0
  %v1004 = vmin.f32 %v996, 0.0
  %v1005 = vmin.f32 %v999, 0.0
  %v1006 = vmul.f32 %v1004, 1.442695
  %v1007 = vpow.pop %v1006
  %v1008 = vmul.f32 %v1005, 1.442695
  %v1009 = vpow.pop %v1008
  %v1010 = vsub.f32 %v1007, 1.0
  %v1011 = vsub.f32 %v1009, 1.0
  %v1012 = vsel %vm1002, %v996, %v1010
  %v1013 = vsel %vm1003, %v999, %v1011
  %v1014 = vpack.c.bf16 %v1013, %v1012
  %v1015 = vld [vmem:[%s5] sm:$0xf]
  %v1016 = vld [vmem:[%s5 + $0x4] sm:$0xf]
  %v1017 = vld [vmem:[%s5 + $0x8] sm:$0xf]
  %v1018 = vld [vmem:[%s5 + $0xc] sm:$0xf]
  %v1019 = vld [vmem:[%s5 + $0x10] sm:$0xf]
  %v1020 = vld [vmem:[%s5 + $0x14] sm:$0xf]
  %v1021 = vld [vmem:[%s5 + $0x18] sm:$0xf]
  %v1022 = vld [vmem:[%s5 + $0x1c] sm:$0xf]
  %v1023 = vld [vmem:[%s5 + $0x20] sm:$0xf]
  %v1024 = vld [vmem:[%s5 + $0x24] sm:$0xf]
  %v1025 = vld [vmem:[%s5 + $0x28] sm:$0xf]
  %v1026 = vld [vmem:[%s5 + $0x2c] sm:$0xf]
  %v1027 = vld [vmem:[%s5 + $0x30] sm:$0xf]
  %v1028 = vld [vmem:[%s5 + $0x34] sm:$0xf]
  %v1029 = vld [vmem:[%s5 + $0x38] sm:$0xf]
  %v1030 = vld [vmem:[%s5 + $0x3c] sm:$0xf]
  %v1031 = vld [vmem:[%s6] sm:$0x1]
  %v1033 = vlaneseq
  %v1034 = vshrl.u32 %v1033, 7
  %v1035 = vsub.s32 0, %v1034
  %v1036 = vrot.slane %v1031, %v1035
  %v1054 = vunpack.c.l.b16 %v1015
  %v1055 = vunpack.c.l.b16 %v1016
  %v1056 = vunpack.c.l.b16 %v1017
  %v1057 = vunpack.c.l.b16 %v1018
  %v1058 = vunpack.c.l.b16 %v1019
  %v1059 = vunpack.c.l.b16 %v1020
  %v1060 = vunpack.c.l.b16 %v1021
  %v1061 = vunpack.c.l.b16 %v1022
  %v1062 = vunpack.c.l.b16 %v1023
  %v1063 = vunpack.c.l.b16 %v1024
  %v1064 = vunpack.c.l.b16 %v1025
  %v1065 = vunpack.c.l.b16 %v1026
  %v1066 = vunpack.c.l.b16 %v1027
  %v1067 = vunpack.c.l.b16 %v1028
  %v1068 = vunpack.c.l.b16 %v1029
  %v1069 = vunpack.c.l.b16 %v1030
  %v1070 = vpack.c.b16 %v1055, %v1054
  %v1071 = vpack.c.b16 %v1057, %v1056
  %v1072 = vpack.c.b16 %v1059, %v1058
  %v1073 = vpack.c.b16 %v1061, %v1060
  %v1074 = vpack.c.b16 %v1063, %v1062
  %v1075 = vpack.c.b16 %v1065, %v1064
  %v1076 = vpack.c.b16 %v1067, %v1066
  %v1077 = vpack.c.b16 %v1069, %v1068
  %1086 = vmatprep.subr.bf16.mxu0 0
  %1087 = vmatpush1.bf16.msra.mxu0 %v1070
  %1088 = vmatprep.subr.bf16.mxu0 0
  %1089 = vmatpush1.bf16.msra.mxu0 %v1071
  %1090 = vmatprep.subr.bf16.mxu0 0
  %1091 = vmatpush1.bf16.msra.mxu0 %v1072
  %1092 = vmatprep.subr.bf16.mxu0 0
  %1093 = vmatpush1.bf16.msra.mxu0 %v1073
  %1094 = vmatprep.subr.bf16.mxu0 0
  %1095 = vmatpush1.bf16.msra.mxu0 %v1074
  %1096 = vmatprep.subr.bf16.mxu0 0
  %1097 = vmatpush1.bf16.msra.mxu0 %v1075
  %1098 = vmatprep.subr.bf16.mxu0 0
  %1099 = vmatpush1.bf16.msra.mxu0 %v1076
  %1100 = vmatprep.subr.bf16.mxu0 0
  %1101 = vmatpush1.bf16.msra.mxu0 %v1077
  %1102 = vmatprep.subr.bf16.mxu0 0
  %1103 = vmatpush1.bf16.msra.mxu0 0
  %1104 = vmatprep.subr.bf16.mxu0 0
  %1105 = vmatpush1.bf16.msra.mxu0 0
  %1106 = vmatprep.subr.bf16.mxu0 0
  %1107 = vmatpush1.bf16.msra.mxu0 0
  %1108 = vmatprep.subr.bf16.mxu0 0
  %1109 = vmatpush1.bf16.msra.mxu0 0
  %1110 = vmatprep.subr.bf16.mxu0 0
  %1111 = vmatpush1.bf16.msra.mxu0 0
  %1112 = vmatprep.subr.bf16.mxu0 0
  %1113 = vmatpush1.bf16.msra.mxu0 0
  %1114 = vmatprep.subr.bf16.mxu0 0
  %1115 = vmatpush1.bf16.msra.mxu0 0
  %1116 = vmatprep.subr.bf16.mxu0 0
  %1117 = vmatpush1.bf16.msra.mxu0 0
  %1118 = vmatprep.mubr.bf16.mxu0 0
  %1119 = vmatmul.mubr.bf16.gmra.mrb[0].mxu0 %v1014
  %v1120 = vpop.f32.mrb[0].mxu0
  %v1121 = vadd.f32 %v1036, %v1120
  %v1122 = vpop.f32.mrb[0].mxu0
  %v1123 = vpop.f32.mrb[0].mxu0
  %v1124 = vadd.f32 %v1036, %v1123
  %v1125 = vpop.f32.mrb[0].mxu0
  %1126 = vdwg.mxu0
  %vm1127 = vcmp.gt.f32.partialorder %v1121, 0.0
  %vm1128 = vcmp.gt.f32.partialorder %v1124, 0.0
  %v1129 = vmin.f32 %v1121, 0.0
  %v1130 = vmin.f32 %v1124, 0.0
  %v1131 = vmul.f32 %v1129, 1.442695
  %v1132 = vpow.pop %v1131
  %v1133 = vmul.f32 %v1130, 1.442695
  %v1134 = vpow.pop %v1133
  %v1135 = vsub.f32 %v1132, 1.0
  %v1136 = vsub.f32 %v1134, 1.0
  %v1137 = vsel %vm1127, %v1121, %v1135
  %v1138 = vsel %vm1128, %v1124, %v1136
  %v1139 = vpack.c.bf16 %v1138, %v1137
  %v1140 = vld [vmem:[%s7] sm:$0xf]
  %v1141 = vld [vmem:[%s7 + $0x4] sm:$0xf]
  %v1142 = vld [vmem:[%s7 + $0x8] sm:$0xf]
  %v1143 = vld [vmem:[%s7 + $0xc] sm:$0xf]
  %v1144 = vld [vmem:[%s7 + $0x10] sm:$0xf]
  %v1145 = vld [vmem:[%s7 + $0x14] sm:$0xf]
  %v1146 = vld [vmem:[%s7 + $0x18] sm:$0xf]
  %v1147 = vld [vmem:[%s7 + $0x1c] sm:$0xf]
  %v1148 = vld [vmem:[%s7 + $0x20] sm:$0xf]
  %v1149 = vld [vmem:[%s7 + $0x24] sm:$0xf]
  %v1150 = vld [vmem:[%s7 + $0x28] sm:$0xf]
  %v1151 = vld [vmem:[%s7 + $0x2c] sm:$0xf]
  %v1152 = vld [vmem:[%s7 + $0x30] sm:$0xf]
  %v1153 = vld [vmem:[%s7 + $0x34] sm:$0xf]
  %v1154 = vld [vmem:[%s7 + $0x38] sm:$0xf]
  %v1155 = vld [vmem:[%s7 + $0x3c] sm:$0xf]
  %v1156 = vld [vmem:[%s8] sm:$0x1]
  %v1158 = vlaneseq
  %v1159 = vshrl.u32 %v1158, 7
  %v1160 = vsub.s32 0, %v1159
  %v1161 = vrot.slane %v1156, %v1160
  %v1179 = vunpack.c.l.b16 %v1140
  %v1180 = vunpack.c.l.b16 %v1141
  %v1181 = vunpack.c.l.b16 %v1142
  %v1182 = vunpack.c.l.b16 %v1143
  %v1183 = vunpack.c.l.b16 %v1144
  %v1184 = vunpack.c.l.b16 %v1145
  %v1185 = vunpack.c.l.b16 %v1146
  %v1186 = vunpack.c.l.b16 %v1147
  %v1187 = vunpack.c.l.b16 %v1148
  %v1188 = vunpack.c.l.b16 %v1149
  %v1189 = vunpack.c.l.b16 %v1150
  %v1190 = vunpack.c.l.b16 %v1151
  %v1191 = vunpack.c.l.b16 %v1152
  %v1192 = vunpack.c.l.b16 %v1153
  %v1193 = vunpack.c.l.b16 %v1154
  %v1194 = vunpack.c.l.b16 %v1155
  %v1195 = vpack.c.b16 %v1180, %v1179
  %v1196 = vpack.c.b16 %v1182, %v1181
  %v1197 = vpack.c.b16 %v1184, %v1183
  %v1198 = vpack.c.b16 %v1186, %v1185
  %v1199 = vpack.c.b16 %v1188, %v1187
  %v1200 = vpack.c.b16 %v1190, %v1189
  %v1201 = vpack.c.b16 %v1192, %v1191
  %v1202 = vpack.c.b16 %v1194, %v1193
  %1211 = vmatprep.subr.bf16.mxu0 0
  %1212 = vmatpush1.bf16.msra.mxu0 %v1195
  %1213 = vmatprep.subr.bf16.mxu0 0
  %1214 = vmatpush1.bf16.msra.mxu0 %v1196
  %1215 = vmatprep.subr.bf16.mxu0 0
  %1216 = vmatpush1.bf16.msra.mxu0 %v1197
  %1217 = vmatprep.subr.bf16.mxu0 0
  %1218 = vmatpush1.bf16.msra.mxu0 %v1198
  %1219 = vmatprep.subr.bf16.mxu0 0
  %1220 = vmatpush1.bf16.msra.mxu0 %v1199
  %1221 = vmatprep.subr.bf16.mxu0 0
  %1222 = vmatpush1.bf16.msra.mxu0 %v1200
  %1223 = vmatprep.subr.bf16.mxu0 0
  %1224 = vmatpush1.bf16.msra.mxu0 %v1201
  %1225 = vmatprep.subr.bf16.mxu0 0
  %1226 = vmatpush1.bf16.msra.mxu0 %v1202
  %1227 = vmatprep.subr.bf16.mxu0 0
  %1228 = vmatpush1.bf16.msra.mxu0 0
  %1229 = vmatprep.subr.bf16.mxu0 0
  %1230 = vmatpush1.bf16.msra.mxu0 0
  %1231 = vmatprep.subr.bf16.mxu0 0
  %1232 = vmatpush1.bf16.msra.mxu0 0
  %1233 = vmatprep.subr.bf16.mxu0 0
  %1234 = vmatpush1.bf16.msra.mxu0 0
  %1235 = vmatprep.subr.bf16.mxu0 0
  %1236 = vmatpush1.bf16.msra.mxu0 0
  %1237 = vmatprep.subr.bf16.mxu0 0
  %1238 = vmatpush1.bf16.msra.mxu0 0
  %1239 = vmatprep.subr.bf16.mxu0 0
  %1240 = vmatpush1.bf16.msra.mxu0 0
  %1241 = vmatprep.subr.bf16.mxu0 0
  %1242 = vmatpush1.bf16.msra.mxu0 0
  %1243 = vmatprep.mubr.bf16.mxu0 0
  %1244 = vmatmul.mubr.bf16.gmra.mrb[0].mxu0 %v1139
  %v1245 = vpop.f32.mrb[0].mxu0
  %v1246 = vadd.f32 %v1161, %v1245
  %v1247 = vpop.f32.mrb[0].mxu0
  %v1248 = vpop.f32.mrb[0].mxu0
  %v1249 = vadd.f32 %v1161, %v1248
  %v1250 = vpop.f32.mrb[0].mxu0
  %1251 = vdwg.mxu0
  %1252 = vst [vmem:[%s9] sm:$0xff] %v1246
  %1253 = vst [vmem:[%s9 + $0x8] sm:$0xff] %v1249
  // Predicated region
  $region38: #{end2end_forward.11} parent=0 // pred_check
    _
  $region39: #{end2end_forward.11} parent=0 // pred_check_branch
    %1255 = sbr.rel (0) target = $region41
  $region40: #{end2end_forward.11} parent=0 // pred_region
    _
  $region41: #{end2end_forward.11} parent=0 // pred_fallthru
    _
  // Predicated region
  $region42: #{end2end_forward.11} parent=0 // pred_check
    _
  $region43: #{end2end_forward.11} parent=0 // pred_check_branch
    %1257 = sbr.rel (0) target = $region45
  $region44: #{end2end_forward.11} parent=0 // pred_region
    _
  $region45: #{end2end_forward.11} parent=0 // pred_fallthru
    _

</llo_original>
